<compile_context>
chip_gen: v7x
topology: tpu7x:2x2x1
jax: 0.10.0
libtpu: 0.0.40
codegen_flags: <defaults>
</compile_context>

<pallas_src>
import numpy as np
import jax
import jax.numpy as jnp
from jax.experimental import pallas as pl
from jax.experimental.pallas import tpu as pltpu


# ----------------------------------------------------------------------------
# Fused kernel: the entire EncoderNet forward for one batch TILE per grid step.
# All operands are full-array VMEM blocks; only 2D matmuls + bias + ReLU.
# ----------------------------------------------------------------------------
def _fused_encoder_kernel(x_ref,
                          r0, k0, b0, r1, k1, b1, r2, k2, b2, r3, k3, b3,
                          w4, b4, w5, b5, o_ref):
    # Activation for this batch tile, channels-last rows: (Bt*H0, W0*C0).
    a = x_ref[...]

    # 4 conv layers:  Y = sum_kh (R_kh @ A) @ K_kh ;  A' = ReLU(Y + bias)
    #   R_kh : block-diagonal stride-2 row selection  (Bt*oh, Bt*H)
    #   K_kh : block-Toeplitz conv weight (stride-2 column im2col baked in),
    #          columns lane-padded to a multiple of 128.
    for r_ref, k_ref, bias_ref in ((r0, k0, b0), (r1, k1, b1),
                                   (r2, k2, b2), (r3, k3, b3)):
        acc = None
        for kh in range(3):
            rows = jnp.dot(r_ref[kh], a, preferred_element_type=jnp.float32)
            part = jnp.dot(rows, k_ref[kh], preferred_element_type=jnp.float32)
            acc = part if acc is None else acc + part
        a = jnp.maximum(acc + bias_ref[...], 0.0)      # (Bt*oh, out_pad)

    # fc0: per image, flatten the (oh3, pad3) block row-major and matmul.
    # With the batch fold this is ONE well-shaped (Bt, d) @ (d, 256) matmul
    # when oh3 == 1 (true for 32..61 px inputs); for oh3 > 1 accumulate one
    # M=Bt matmul per spatial row (no M=1 matmuls anywhere).
    d = a.shape[1]
    oh3 = w4.shape[0] // d
    if oh3 == 1:
        h = jnp.dot(a, w4[...], preferred_element_type=jnp.float32)
    else:
        h = None
        for r in range(oh3):
            rows = a[r::oh3, :]                        # row r of every image
            part = jnp.dot(rows, w4[r * d:(r + 1) * d, :],
                           preferred_element_type=jnp.float32)
            h = part if h is None else h + part
    h = jnp.maximum(h + b4[...], 0.0)                  # (Bt, 256)

    # fc1
    y = jnp.dot(h, w5[...], preferred_element_type=jnp.float32) + b5[...]
    o_ref[...] = y.astype(o_ref.dtype)                 # (Bt, 32)


# ----------------------------------------------------------------------------
# Parameter init (deterministic, shapes per EncoderNet.__init__, PyTorch layout)
# ----------------------------------------------------------------------------
def init_params(key, width, height):
    conv_dims = [(4, 32), (32, 32), (32, 64), (64, 64)]
    w_, h_ = width, height
    for _ in range(4):
        w_ = (w_ - 1) // 2
        h_ = (h_ - 1) // 2
    flat = 64 * w_ * h_

    params = {}
    keys = jax.random.split(key, 12)
    ki = 0
    for li, (cin, cout) in enumerate(conv_dims):
        fan_in = cin * 9
        scale = 1.0 / jnp.sqrt(fan_in)
        params[f"conv{li}_w"] = scale * jax.random.normal(
            keys[ki], (cout, cin, 3, 3), jnp.float32); ki += 1
        params[f"conv{li}_b"] = scale * jax.random.normal(
            keys[ki], (cout,), jnp.float32); ki += 1
    for li, (din, dout) in enumerate([(flat, 256), (256, 32)]):
        scale = 1.0 / jnp.sqrt(din)
        params[f"fc{li}_w"] = scale * jax.random.normal(
            keys[ki], (dout, din), jnp.float32); ki += 1   # PyTorch (out, in)
        params[f"fc{li}_b"] = scale * jax.random.normal(
            keys[ki], (dout,), jnp.float32); ki += 1
    return params


# ----------------------------------------------------------------------------
# One-time weight packing (host side, outside the jitted forward).
#   R_kh : (Bt*oh, Bt*H)        block-diagonal 0/1 stride-2 row-selection
#   K_kh : (in_pad, out_pad)    conv weight expanded with the stride-2 column
#                               im2col; out columns padded to multiple of 128
#   bias : (1, out_pad)         bias tiled across output columns, zero-padded
#   fc0  : rows reordered from PyTorch NCHW flatten order to the kernel's
#          (h, w, c) lane layout, with zero rows at the lane-pad positions
# ----------------------------------------------------------------------------
def _conv_out(s):
    return (s - 3) // 2 + 1


def _round_up(n, m):
    return ((n + m - 1) // m) * m


def pack_params(params, height, width, b_tile=8):
    conv_dims = [(4, 32), (32, 32), (32, 64), (64, 64)]
    packed = {}
    H, W = height, width
    cur_width = W * conv_dims[0][0]          # lane width entering layer 0
    eye = np.eye(b_tile, dtype=np.float32)

    for l, (cin, cout) in enumerate(conv_dims):
        w = np.asarray(params[f"conv{l}_w"], np.float32)      # (O, C, 3, 3)
        b = np.asarray(params[f"conv{l}_b"], np.float32)      # (O,)
        oh, ow = _conv_out(H), _conv_out(W)
        out_pad = _round_up(ow * cout, 128)                   # lane-dense out

        # Block-diagonal stride-2 row selection (one block per image in tile).
        R1 = np.zeros((3, oh, H), np.float32)
        for kh in range(3):
            R1[kh, np.arange(oh), 2 * np.arange(oh) + kh] = 1.0
        R = np.stack([np.kron(eye, R1[kh]) for kh in range(3)])

        # Block-Toeplitz conv weight; rows sized to the (possibly padded)
        # incoming lane width -> padded activation columns hit zero rows.
        K = np.zeros((3, cur_width, out_pad), np.float32)
        wt = np.transpose(w, (2, 3, 1, 0))                    # (kh, kw, C, O)
        for kh in range(3):
            for kw in range(3):
                for j in range(ow):
                    r0 = (2 * j + kw) * cin
                    K[kh, r0:r0 + cin, j * cout:(j + 1) * cout] = wt[kh, kw]

        bias = np.zeros((1, out_pad), np.float32)
        bias[0, :ow * cout] = np.tile(b, ow)

        packed[f"conv{l}_R"] = jnp.asarray(R)
        packed[f"conv{l}_K"] = jnp.asarray(K)
        packed[f"conv{l}_b"] = jnp.asarray(bias)
        H, W, cur_width = oh, ow, out_pad

    h3, w3, c3 = H, W, conv_dims[-1][1]
    pad3 = cur_width
    fc0 = np.asarray(params["fc0_w"], np.float32)             # (256, c3*h3*w3)
    fc0_hwc = fc0.reshape(256, c3, h3, w3).transpose(2, 3, 1, 0)  # (h3,w3,c3,256)
    W4 = np.zeros((h3 * pad3, 256), np.float32)
    for r in range(h3):
        W4[r * pad3:r * pad3 + w3 * c3, :] = fc0_hwc[r].reshape(w3 * c3, 256)
    packed["fc0_w"] = jnp.asarray(W4)
    packed["fc0_b"] = jnp.asarray(
        np.asarray(params["fc0_b"], np.float32)[None, :])
    packed["fc1_w"] = jnp.asarray(
        np.asarray(params["fc1_w"], np.float32).T)            # (256, 32)
    packed["fc1_b"] = jnp.asarray(
        np.asarray(params["fc1_b"], np.float32)[None, :])
    return packed


# ----------------------------------------------------------------------------
# EncoderNet forward: single fused pallas_call, grid over batch TILES
# ("parallel" so v7x shards tiles across its 2 TensorCores).
# ----------------------------------------------------------------------------
def encoder_net_forward(packed, x):
    B, C, H, W = x.shape
    Bt = packed["conv0_R"].shape[2] // H          # tile size baked into R
    Bp = ((B + Bt - 1) // Bt) * Bt
    x32 = x.astype(jnp.float32)
    if Bp != B:                                   # pad ragged batch with zeros
        x32 = jnp.concatenate(
            [x32, jnp.zeros((Bp - B, C, H, W), jnp.float32)], axis=0)

    # One small NCHW -> channels-last layout transform of the input only.
    x_rows = jnp.transpose(x32, (0, 2, 3, 1)).reshape(Bp * H, W * C)

    def const_spec(a):
        zeros = (0,) * a.ndim
        return pl.BlockSpec(a.shape, lambda b: zeros)

    inputs = [x_rows]
    in_specs = [pl.BlockSpec((Bt * H, W * C), lambda b: (b, 0))]
    for l in range(4):
        for suffix in ("R", "K", "b"):
            a = packed[f"conv{l}_{suffix}"]
            inputs.append(a)
            in_specs.append(const_spec(a))
    for name in ("fc0_w", "fc0_b", "fc1_w", "fc1_b"):
        a = packed[name]
        inputs.append(a)
        in_specs.append(const_spec(a))

    out = pl.pallas_call(
        _fused_encoder_kernel,
        out_shape=jax.ShapeDtypeStruct((Bp, 32), jnp.float32),
        grid=(Bp // Bt,),
        in_specs=in_specs,
        out_specs=pl.BlockSpec((Bt, 32), lambda b: (b, 0)),
        compiler_params=pltpu.CompilerParams(
            dimension_semantics=("parallel",)),
    )(*inputs)
    return out[:B]


# ----------------------------------------------------------------------------
# Pure-JAX reference (correctness check against the original semantics)
# ----------------------------------------------------------------------------
def encoder_net_reference(params, x):
    for li in range(4):
        y = jax.lax.conv_general_dilated(
            x, params[f"conv{li}_w"], window_strides=(2, 2), padding="VALID",
            dimension_numbers=("NCHW", "OIHW", "NCHW"))
        x = jax.nn.relu(y + params[f"conv{li}_b"][None, :, None, None])
    B = x.shape[0]
    x = x.reshape(B, -1)
    x = jax.nn.relu(x @ params["fc0_w"].T + params["fc0_b"])
    x = x @ params["fc1_w"].T + params["fc1_b"]
    return x


if __name__ == "__main__":
    # 32 is the smallest spatial size that survives 4 stride-2 valid 3x3
    # convs with nonzero output: 32 -> 15 -> 7 -> 3 -> 1 (MLP flat dim 64).
    B, C, H, W = 16, 4, 32, 32
    B_TILE = 8    # ~fills the 128-row MXU (v5e); 16 also fine on v6e/v7x
                  # as long as the grid stays >= 2 tiles for v7x's 2 TCs.
    key = jax.random.PRNGKey(0)
    k_param, k_x = jax.random.split(key)
    params = init_params(k_param, W, H)
    packed = pack_params(params, H, W, b_tile=B_TILE)   # pack ONCE, outside jit
    x = jax.random.normal(k_x, (B, C, H, W), jnp.float32)

    fwd = jax.jit(encoder_net_forward)
    out = jax.block_until_ready(fwd(packed, x))
    assert out.shape == (B, 32), out.shape

    ref = jax.block_until_ready(jax.jit(encoder_net_reference)(params, x))
    max_err = float(jnp.max(jnp.abs(out - ref)))
    assert jnp.allclose(out, ref, atol=2e-3, rtol=2e-3), max_err

    print("KERNEL_OK")
</pallas_src>

<mosaic_0001>
module attributes {stable_mosaic.version = 11 : i64} {
  func.func @_fused_encoder_kernel(%arg0: i32, %arg1: memref<256x128xf32, #tpu.memory_space<vmem>>, %arg2: memref<3x120x256xf32, #tpu.memory_space<vmem>>, %arg3: memref<3x128x512xf32, #tpu.memory_space<vmem>>, %arg4: memref<1x512xf32, #tpu.memory_space<vmem>>, %arg5: memref<3x56x120xf32, #tpu.memory_space<vmem>>, %arg6: memref<3x512x256xf32, #tpu.memory_space<vmem>>, %arg7: memref<1x256xf32, #tpu.memory_space<vmem>>, %arg8: memref<3x24x56xf32, #tpu.memory_space<vmem>>, %arg9: memref<3x256x256xf32, #tpu.memory_space<vmem>>, %arg10: memref<1x256xf32, #tpu.memory_space<vmem>>, %arg11: memref<3x8x24xf32, #tpu.memory_space<vmem>>, %arg12: memref<3x256x128xf32, #tpu.memory_space<vmem>>, %arg13: memref<1x128xf32, #tpu.memory_space<vmem>>, %arg14: memref<128x256xf32, #tpu.memory_space<vmem>>, %arg15: memref<1x256xf32, #tpu.memory_space<vmem>>, %arg16: memref<256x32xf32, #tpu.memory_space<vmem>>, %arg17: memref<1x32xf32, #tpu.memory_space<vmem>>, %arg18: memref<8x32xf32, #tpu.memory_space<vmem>>) attributes {dimension_semantics = [#tpu.dimension_semantics<parallel>], iteration_bounds = array<i64: 2>, scalar_prefetch = 0 : i64, scratch_operands = 0 : i64, tpu.core_type = #tpu.core_type<tc>, window_params = [{transform_indices = @transform_0, window_bounds = array<i64: 256, 128>}, {pipeline_mode = #tpu.pipeline_mode<synchronous>, transform_indices = @transform_1, window_bounds = array<i64: 3, 120, 256>}, {pipeline_mode = #tpu.pipeline_mode<synchronous>, transform_indices = @transform_2, window_bounds = array<i64: 3, 128, 512>}, {pipeline_mode = #tpu.pipeline_mode<synchronous>, transform_indices = @transform_3, window_bounds = array<i64: 1, 512>}, {pipeline_mode = #tpu.pipeline_mode<synchronous>, transform_indices = @transform_4, window_bounds = array<i64: 3, 56, 120>}, {pipeline_mode = #tpu.pipeline_mode<synchronous>, transform_indices = @transform_5, window_bounds = array<i64: 3, 512, 256>}, {pipeline_mode = #tpu.pipeline_mode<synchronous>, transform_indices = @transform_6, window_bounds = array<i64: 1, 256>}, {pipeline_mode = #tpu.pipeline_mode<synchronous>, transform_indices = @transform_7, window_bounds = array<i64: 3, 24, 56>}, {pipeline_mode = #tpu.pipeline_mode<synchronous>, transform_indices = @transform_8, window_bounds = array<i64: 3, 256, 256>}, {pipeline_mode = #tpu.pipeline_mode<synchronous>, transform_indices = @transform_9, window_bounds = array<i64: 1, 256>}, {pipeline_mode = #tpu.pipeline_mode<synchronous>, transform_indices = @transform_10, window_bounds = array<i64: 3, 8, 24>}, {pipeline_mode = #tpu.pipeline_mode<synchronous>, transform_indices = @transform_11, window_bounds = array<i64: 3, 256, 128>}, {pipeline_mode = #tpu.pipeline_mode<synchronous>, transform_indices = @transform_12, window_bounds = array<i64: 1, 128>}, {pipeline_mode = #tpu.pipeline_mode<synchronous>, transform_indices = @transform_13, window_bounds = array<i64: 128, 256>}, {pipeline_mode = #tpu.pipeline_mode<synchronous>, transform_indices = @transform_14, window_bounds = array<i64: 1, 256>}, {pipeline_mode = #tpu.pipeline_mode<synchronous>, transform_indices = @transform_15, window_bounds = array<i64: 256, 32>}, {pipeline_mode = #tpu.pipeline_mode<synchronous>, transform_indices = @transform_16, window_bounds = array<i64: 1, 32>}, {transform_indices = @transform_17, window_bounds = array<i64: 8, 32>}]} {
    %c0 = arith.constant 0 : index
    %c0_0 = arith.constant 0 : index
    %0 = vector.load %arg1[%c0, %c0_0] : memref<256x128xf32, #tpu.memory_space<vmem>>, vector<256x128xf32>
    %c0_1 = arith.constant 0 : index
    %c0_2 = arith.constant 0 : index
    %c0_3 = arith.constant 0 : index
    %1 = vector.load %arg2[%c0_1, %c0_2, %c0_3] : memref<3x120x256xf32, #tpu.memory_space<vmem>>, vector<1x120x256xf32>
    %2 = vector.shape_cast %1 : vector<1x120x256xf32> to vector<120x256xf32>
    %cst = arith.constant dense<0.000000e+00> : vector<120x128xf32>
    %3 = tpu.matmul %2, %0, %cst {dimension_numbers = #tpu.dot_dimension_numbers<[1], [0], [0], [1], [0, 0, 1, 1], [], []>} : vector<120x256xf32>, vector<256x128xf32>, vector<120x128xf32> -> vector<120x128xf32>
    %c0_4 = arith.constant 0 : index
    %c0_5 = arith.constant 0 : index
    %c0_6 = arith.constant 0 : index
    %4 = vector.load %arg3[%c0_4, %c0_5, %c0_6] : memref<3x128x512xf32, #tpu.memory_space<vmem>>, vector<1x128x512xf32>
    %5 = vector.shape_cast %4 : vector<1x128x512xf32> to vector<128x512xf32>
    %cst_7 = arith.constant dense<0.000000e+00> : vector<120x512xf32>
    %6 = tpu.matmul %3, %5, %cst_7 {dimension_numbers = #tpu.dot_dimension_numbers<[1], [0], [0], [1], [0, 0, 1, 1], [], []>} : vector<120x128xf32>, vector<128x512xf32>, vector<120x512xf32> -> vector<120x512xf32>
    %c1 = arith.constant 1 : index
    %c0_8 = arith.constant 0 : index
    %c0_9 = arith.constant 0 : index
    %7 = vector.load %arg2[%c1, %c0_8, %c0_9] : memref<3x120x256xf32, #tpu.memory_space<vmem>>, vector<1x120x256xf32>
    %8 = vector.shape_cast %7 : vector<1x120x256xf32> to vector<120x256xf32>
    %cst_10 = arith.constant dense<0.000000e+00> : vector<120x128xf32>
    %9 = tpu.matmul %8, %0, %cst_10 {dimension_numbers = #tpu.dot_dimension_numbers<[1], [0], [0], [1], [0, 0, 1, 1], [], []>} : vector<120x256xf32>, vector<256x128xf32>, vector<120x128xf32> -> vector<120x128xf32>
    %c1_11 = arith.constant 1 : index
    %c0_12 = arith.constant 0 : index
    %c0_13 = arith.constant 0 : index
    %10 = vector.load %arg3[%c1_11, %c0_12, %c0_13] : memref<3x128x512xf32, #tpu.memory_space<vmem>>, vector<1x128x512xf32>
    %11 = vector.shape_cast %10 : vector<1x128x512xf32> to vector<128x512xf32>
    %cst_14 = arith.constant dense<0.000000e+00> : vector<120x512xf32>
    %12 = tpu.matmul %9, %11, %cst_14 {dimension_numbers = #tpu.dot_dimension_numbers<[1], [0], [0], [1], [0, 0, 1, 1], [], []>} : vector<120x128xf32>, vector<128x512xf32>, vector<120x512xf32> -> vector<120x512xf32>
    %13 = arith.addf %6, %12 : vector<120x512xf32>
    %c2 = arith.constant 2 : index
    %c0_15 = arith.constant 0 : index
    %c0_16 = arith.constant 0 : index
    %14 = vector.load %arg2[%c2, %c0_15, %c0_16] : memref<3x120x256xf32, #tpu.memory_space<vmem>>, vector<1x120x256xf32>
    %15 = vector.shape_cast %14 : vector<1x120x256xf32> to vector<120x256xf32>
    %cst_17 = arith.constant dense<0.000000e+00> : vector<120x128xf32>
    %16 = tpu.matmul %15, %0, %cst_17 {dimension_numbers = #tpu.dot_dimension_numbers<[1], [0], [0], [1], [0, 0, 1, 1], [], []>} : vector<120x256xf32>, vector<256x128xf32>, vector<120x128xf32> -> vector<120x128xf32>
    %c2_18 = arith.constant 2 : index
    %c0_19 = arith.constant 0 : index
    %c0_20 = arith.constant 0 : index
    %17 = vector.load %arg3[%c2_18, %c0_19, %c0_20] : memref<3x128x512xf32, #tpu.memory_space<vmem>>, vector<1x128x512xf32>
    %18 = vector.shape_cast %17 : vector<1x128x512xf32> to vector<128x512xf32>
    %cst_21 = arith.constant dense<0.000000e+00> : vector<120x512xf32>
    %19 = tpu.matmul %16, %18, %cst_21 {dimension_numbers = #tpu.dot_dimension_numbers<[1], [0], [0], [1], [0, 0, 1, 1], [], []>} : vector<120x128xf32>, vector<128x512xf32>, vector<120x512xf32> -> vector<120x512xf32>
    %20 = arith.addf %13, %19 : vector<120x512xf32>
    %c0_22 = arith.constant 0 : index
    %c0_23 = arith.constant 0 : index
    %21 = vector.load %arg4[%c0_22, %c0_23] : memref<1x512xf32, #tpu.memory_space<vmem>>, vector<1x512xf32>
    %22 = vector.broadcast %21 : vector<1x512xf32> to vector<120x512xf32>
    %23 = arith.addf %20, %22 : vector<120x512xf32>
    %cst_24 = arith.constant 0.000000e+00 : f32
    %24 = vector.broadcast %cst_24 : f32 to vector<120x512xf32>
    %25 = arith.maximumf %23, %24 : vector<120x512xf32>
    %c0_25 = arith.constant 0 : index
    %c0_26 = arith.constant 0 : index
    %c0_27 = arith.constant 0 : index
    %26 = vector.load %arg5[%c0_25, %c0_26, %c0_27] : memref<3x56x120xf32, #tpu.memory_space<vmem>>, vector<1x56x120xf32>
    %27 = vector.shape_cast %26 : vector<1x56x120xf32> to vector<56x120xf32>
    %cst_28 = arith.constant dense<0.000000e+00> : vector<56x512xf32>
    %28 = tpu.matmul %27, %25, %cst_28 {dimension_numbers = #tpu.dot_dimension_numbers<[1], [0], [0], [1], [0, 0, 1, 1], [], []>} : vector<56x120xf32>, vector<120x512xf32>, vector<56x512xf32> -> vector<56x512xf32>
    %c0_29 = arith.constant 0 : index
    %c0_30 = arith.constant 0 : index
    %c0_31 = arith.constant 0 : index
    %29 = vector.load %arg6[%c0_29, %c0_30, %c0_31] : memref<3x512x256xf32, #tpu.memory_space<vmem>>, vector<1x512x256xf32>
    %30 = vector.shape_cast %29 : vector<1x512x256xf32> to vector<512x256xf32>
    %cst_32 = arith.constant dense<0.000000e+00> : vector<56x256xf32>
    %31 = tpu.matmul %28, %30, %cst_32 {dimension_numbers = #tpu.dot_dimension_numbers<[1], [0], [0], [1], [0, 0, 1, 1], [], []>} : vector<56x512xf32>, vector<512x256xf32>, vector<56x256xf32> -> vector<56x256xf32>
    %c1_33 = arith.constant 1 : index
    %c0_34 = arith.constant 0 : index
    %c0_35 = arith.constant 0 : index
    %32 = vector.load %arg5[%c1_33, %c0_34, %c0_35] : memref<3x56x120xf32, #tpu.memory_space<vmem>>, vector<1x56x120xf32>
    %33 = vector.shape_cast %32 : vector<1x56x120xf32> to vector<56x120xf32>
    %cst_36 = arith.constant dense<0.000000e+00> : vector<56x512xf32>
    %34 = tpu.matmul %33, %25, %cst_36 {dimension_numbers = #tpu.dot_dimension_numbers<[1], [0], [0], [1], [0, 0, 1, 1], [], []>} : vector<56x120xf32>, vector<120x512xf32>, vector<56x512xf32> -> vector<56x512xf32>
    %c1_37 = arith.constant 1 : index
    %c0_38 = arith.constant 0 : index
    %c0_39 = arith.constant 0 : index
    %35 = vector.load %arg6[%c1_37, %c0_38, %c0_39] : memref<3x512x256xf32, #tpu.memory_space<vmem>>, vector<1x512x256xf32>
    %36 = vector.shape_cast %35 : vector<1x512x256xf32> to vector<512x256xf32>
    %cst_40 = arith.constant dense<0.000000e+00> : vector<56x256xf32>
    %37 = tpu.matmul %34, %36, %cst_40 {dimension_numbers = #tpu.dot_dimension_numbers<[1], [0], [0], [1], [0, 0, 1, 1], [], []>} : vector<56x512xf32>, vector<512x256xf32>, vector<56x256xf32> -> vector<56x256xf32>
    %38 = arith.addf %31, %37 : vector<56x256xf32>
    %c2_41 = arith.constant 2 : index
    %c0_42 = arith.constant 0 : index
    %c0_43 = arith.constant 0 : index
    %39 = vector.load %arg5[%c2_41, %c0_42, %c0_43] : memref<3x56x120xf32, #tpu.memory_space<vmem>>, vector<1x56x120xf32>
    %40 = vector.shape_cast %39 : vector<1x56x120xf32> to vector<56x120xf32>
    %cst_44 = arith.constant dense<0.000000e+00> : vector<56x512xf32>
    %41 = tpu.matmul %40, %25, %cst_44 {dimension_numbers = #tpu.dot_dimension_numbers<[1], [0], [0], [1], [0, 0, 1, 1], [], []>} : vector<56x120xf32>, vector<120x512xf32>, vector<56x512xf32> -> vector<56x512xf32>
    %c2_45 = arith.constant 2 : index
    %c0_46 = arith.constant 0 : index
    %c0_47 = arith.constant 0 : index
    %42 = vector.load %arg6[%c2_45, %c0_46, %c0_47] : memref<3x512x256xf32, #tpu.memory_space<vmem>>, vector<1x512x256xf32>
    %43 = vector.shape_cast %42 : vector<1x512x256xf32> to vector<512x256xf32>
    %cst_48 = arith.constant dense<0.000000e+00> : vector<56x256xf32>
    %44 = tpu.matmul %41, %43, %cst_48 {dimension_numbers = #tpu.dot_dimension_numbers<[1], [0], [0], [1], [0, 0, 1, 1], [], []>} : vector<56x512xf32>, vector<512x256xf32>, vector<56x256xf32> -> vector<56x256xf32>
    %45 = arith.addf %38, %44 : vector<56x256xf32>
    %c0_49 = arith.constant 0 : index
    %c0_50 = arith.constant 0 : index
    %46 = vector.load %arg7[%c0_49, %c0_50] : memref<1x256xf32, #tpu.memory_space<vmem>>, vector<1x256xf32>
    %47 = vector.broadcast %46 : vector<1x256xf32> to vector<56x256xf32>
    %48 = arith.addf %45, %47 : vector<56x256xf32>
    %cst_51 = arith.constant 0.000000e+00 : f32
    %49 = vector.broadcast %cst_51 : f32 to vector<56x256xf32>
    %50 = arith.maximumf %48, %49 : vector<56x256xf32>
    %c0_52 = arith.constant 0 : index
    %c0_53 = arith.constant 0 : index
    %c0_54 = arith.constant 0 : index
    %51 = vector.load %arg8[%c0_52, %c0_53, %c0_54] : memref<3x24x56xf32, #tpu.memory_space<vmem>>, vector<1x24x56xf32>
    %52 = vector.shape_cast %51 : vector<1x24x56xf32> to vector<24x56xf32>
    %cst_55 = arith.constant dense<0.000000e+00> : vector<24x256xf32>
    %53 = tpu.matmul %52, %50, %cst_55 {dimension_numbers = #tpu.dot_dimension_numbers<[1], [0], [0], [1], [0, 0, 1, 1], [], []>} : vector<24x56xf32>, vector<56x256xf32>, vector<24x256xf32> -> vector<24x256xf32>
    %c0_56 = arith.constant 0 : index
    %c0_57 = arith.constant 0 : index
    %c0_58 = arith.constant 0 : index
    %54 = vector.load %arg9[%c0_56, %c0_57, %c0_58] : memref<3x256x256xf32, #tpu.memory_space<vmem>>, vector<1x256x256xf32>
    %55 = vector.shape_cast %54 : vector<1x256x256xf32> to vector<256x256xf32>
    %cst_59 = arith.constant dense<0.000000e+00> : vector<24x256xf32>
    %56 = tpu.matmul %53, %55, %cst_59 {dimension_numbers = #tpu.dot_dimension_numbers<[1], [0], [0], [1], [0, 0, 1, 1], [], []>} : vector<24x256xf32>, vector<256x256xf32>, vector<24x256xf32> -> vector<24x256xf32>
    %c1_60 = arith.constant 1 : index
    %c0_61 = arith.constant 0 : index
    %c0_62 = arith.constant 0 : index
    %57 = vector.load %arg8[%c1_60, %c0_61, %c0_62] : memref<3x24x56xf32, #tpu.memory_space<vmem>>, vector<1x24x56xf32>
    %58 = vector.shape_cast %57 : vector<1x24x56xf32> to vector<24x56xf32>
    %cst_63 = arith.constant dense<0.000000e+00> : vector<24x256xf32>
    %59 = tpu.matmul %58, %50, %cst_63 {dimension_numbers = #tpu.dot_dimension_numbers<[1], [0], [0], [1], [0, 0, 1, 1], [], []>} : vector<24x56xf32>, vector<56x256xf32>, vector<24x256xf32> -> vector<24x256xf32>
    %c1_64 = arith.constant 1 : index
    %c0_65 = arith.constant 0 : index
    %c0_66 = arith.constant 0 : index
    %60 = vector.load %arg9[%c1_64, %c0_65, %c0_66] : memref<3x256x256xf32, #tpu.memory_space<vmem>>, vector<1x256x256xf32>
    %61 = vector.shape_cast %60 : vector<1x256x256xf32> to vector<256x256xf32>
    %cst_67 = arith.constant dense<0.000000e+00> : vector<24x256xf32>
    %62 = tpu.matmul %59, %61, %cst_67 {dimension_numbers = #tpu.dot_dimension_numbers<[1], [0], [0], [1], [0, 0, 1, 1], [], []>} : vector<24x256xf32>, vector<256x256xf32>, vector<24x256xf32> -> vector<24x256xf32>
    %63 = arith.addf %56, %62 : vector<24x256xf32>
    %c2_68 = arith.constant 2 : index
    %c0_69 = arith.constant 0 : index
    %c0_70 = arith.constant 0 : index
    %64 = vector.load %arg8[%c2_68, %c0_69, %c0_70] : memref<3x24x56xf32, #tpu.memory_space<vmem>>, vector<1x24x56xf32>
    %65 = vector.shape_cast %64 : vector<1x24x56xf32> to vector<24x56xf32>
    %cst_71 = arith.constant dense<0.000000e+00> : vector<24x256xf32>
    %66 = tpu.matmul %65, %50, %cst_71 {dimension_numbers = #tpu.dot_dimension_numbers<[1], [0], [0], [1], [0, 0, 1, 1], [], []>} : vector<24x56xf32>, vector<56x256xf32>, vector<24x256xf32> -> vector<24x256xf32>
    %c2_72 = arith.constant 2 : index
    %c0_73 = arith.constant 0 : index
    %c0_74 = arith.constant 0 : index
    %67 = vector.load %arg9[%c2_72, %c0_73, %c0_74] : memref<3x256x256xf32, #tpu.memory_space<vmem>>, vector<1x256x256xf32>
    %68 = vector.shape_cast %67 : vector<1x256x256xf32> to vector<256x256xf32>
    %cst_75 = arith.constant dense<0.000000e+00> : vector<24x256xf32>
    %69 = tpu.matmul %66, %68, %cst_75 {dimension_numbers = #tpu.dot_dimension_numbers<[1], [0], [0], [1], [0, 0, 1, 1], [], []>} : vector<24x256xf32>, vector<256x256xf32>, vector<24x256xf32> -> vector<24x256xf32>
    %70 = arith.addf %63, %69 : vector<24x256xf32>
    %c0_76 = arith.constant 0 : index
    %c0_77 = arith.constant 0 : index
    %71 = vector.load %arg10[%c0_76, %c0_77] : memref<1x256xf32, #tpu.memory_space<vmem>>, vector<1x256xf32>
    %72 = vector.broadcast %71 : vector<1x256xf32> to vector<24x256xf32>
    %73 = arith.addf %70, %72 : vector<24x256xf32>
    %cst_78 = arith.constant 0.000000e+00 : f32
    %74 = vector.broadcast %cst_78 : f32 to vector<24x256xf32>
    %75 = arith.maximumf %73, %74 : vector<24x256xf32>
    %c0_79 = arith.constant 0 : index
    %c0_80 = arith.constant 0 : index
    %c0_81 = arith.constant 0 : index
    %76 = vector.load %arg11[%c0_79, %c0_80, %c0_81] : memref<3x8x24xf32, #tpu.memory_space<vmem>>, vector<1x8x24xf32>
    %77 = vector.shape_cast %76 : vector<1x8x24xf32> to vector<8x24xf32>
    %cst_82 = arith.constant dense<0.000000e+00> : vector<8x256xf32>
    %78 = tpu.matmul %77, %75, %cst_82 {dimension_numbers = #tpu.dot_dimension_numbers<[1], [0], [0], [1], [0, 0, 1, 1], [], []>} : vector<8x24xf32>, vector<24x256xf32>, vector<8x256xf32> -> vector<8x256xf32>
    %c0_83 = arith.constant 0 : index
    %c0_84 = arith.constant 0 : index
    %c0_85 = arith.constant 0 : index
    %79 = vector.load %arg12[%c0_83, %c0_84, %c0_85] : memref<3x256x128xf32, #tpu.memory_space<vmem>>, vector<1x256x128xf32>
    %80 = vector.shape_cast %79 : vector<1x256x128xf32> to vector<256x128xf32>
    %cst_86 = arith.constant dense<0.000000e+00> : vector<8x128xf32>
    %81 = tpu.matmul %78, %80, %cst_86 {dimension_numbers = #tpu.dot_dimension_numbers<[1], [0], [0], [1], [0, 0, 1, 1], [], []>} : vector<8x256xf32>, vector<256x128xf32>, vector<8x128xf32> -> vector<8x128xf32>
    %c1_87 = arith.constant 1 : index
    %c0_88 = arith.constant 0 : index
    %c0_89 = arith.constant 0 : index
    %82 = vector.load %arg11[%c1_87, %c0_88, %c0_89] : memref<3x8x24xf32, #tpu.memory_space<vmem>>, vector<1x8x24xf32>
    %83 = vector.shape_cast %82 : vector<1x8x24xf32> to vector<8x24xf32>
    %cst_90 = arith.constant dense<0.000000e+00> : vector<8x256xf32>
    %84 = tpu.matmul %83, %75, %cst_90 {dimension_numbers = #tpu.dot_dimension_numbers<[1], [0], [0], [1], [0, 0, 1, 1], [], []>} : vector<8x24xf32>, vector<24x256xf32>, vector<8x256xf32> -> vector<8x256xf32>
    %c1_91 = arith.constant 1 : index
    %c0_92 = arith.constant 0 : index
    %c0_93 = arith.constant 0 : index
    %85 = vector.load %arg12[%c1_91, %c0_92, %c0_93] : memref<3x256x128xf32, #tpu.memory_space<vmem>>, vector<1x256x128xf32>
    %86 = vector.shape_cast %85 : vector<1x256x128xf32> to vector<256x128xf32>
    %cst_94 = arith.constant dense<0.000000e+00> : vector<8x128xf32>
    %87 = tpu.matmul %84, %86, %cst_94 {dimension_numbers = #tpu.dot_dimension_numbers<[1], [0], [0], [1], [0, 0, 1, 1], [], []>} : vector<8x256xf32>, vector<256x128xf32>, vector<8x128xf32> -> vector<8x128xf32>
    %88 = arith.addf %81, %87 : vector<8x128xf32>
    %c2_95 = arith.constant 2 : index
    %c0_96 = arith.constant 0 : index
    %c0_97 = arith.constant 0 : index
    %89 = vector.load %arg11[%c2_95, %c0_96, %c0_97] : memref<3x8x24xf32, #tpu.memory_space<vmem>>, vector<1x8x24xf32>
    %90 = vector.shape_cast %89 : vector<1x8x24xf32> to vector<8x24xf32>
    %cst_98 = arith.constant dense<0.000000e+00> : vector<8x256xf32>
    %91 = tpu.matmul %90, %75, %cst_98 {dimension_numbers = #tpu.dot_dimension_numbers<[1], [0], [0], [1], [0, 0, 1, 1], [], []>} : vector<8x24xf32>, vector<24x256xf32>, vector<8x256xf32> -> vector<8x256xf32>
    %c2_99 = arith.constant 2 : index
    %c0_100 = arith.constant 0 : index
    %c0_101 = arith.constant 0 : index
    %92 = vector.load %arg12[%c2_99, %c0_100, %c0_101] : memref<3x256x128xf32, #tpu.memory_space<vmem>>, vector<1x256x128xf32>
    %93 = vector.shape_cast %92 : vector<1x256x128xf32> to vector<256x128xf32>
    %cst_102 = arith.constant dense<0.000000e+00> : vector<8x128xf32>
    %94 = tpu.matmul %91, %93, %cst_102 {dimension_numbers = #tpu.dot_dimension_numbers<[1], [0], [0], [1], [0, 0, 1, 1], [], []>} : vector<8x256xf32>, vector<256x128xf32>, vector<8x128xf32> -> vector<8x128xf32>
    %95 = arith.addf %88, %94 : vector<8x128xf32>
    %c0_103 = arith.constant 0 : index
    %c0_104 = arith.constant 0 : index
    %96 = vector.load %arg13[%c0_103, %c0_104] : memref<1x128xf32, #tpu.memory_space<vmem>>, vector<1x128xf32>
    %97 = vector.broadcast %96 : vector<1x128xf32> to vector<8x128xf32>
    %98 = arith.addf %95, %97 : vector<8x128xf32>
    %cst_105 = arith.constant 0.000000e+00 : f32
    %99 = vector.broadcast %cst_105 : f32 to vector<8x128xf32>
    %100 = arith.maximumf %98, %99 : vector<8x128xf32>
    %c0_106 = arith.constant 0 : index
    %c0_107 = arith.constant 0 : index
    %101 = vector.load %arg14[%c0_106, %c0_107] : memref<128x256xf32, #tpu.memory_space<vmem>>, vector<128x256xf32>
    %cst_108 = arith.constant dense<0.000000e+00> : vector<8x256xf32>
    %102 = tpu.matmul %100, %101, %cst_108 {dimension_numbers = #tpu.dot_dimension_numbers<[1], [0], [0], [1], [0, 0, 1, 1], [], []>} : vector<8x128xf32>, vector<128x256xf32>, vector<8x256xf32> -> vector<8x256xf32>
    %c0_109 = arith.constant 0 : index
    %c0_110 = arith.constant 0 : index
    %103 = vector.load %arg15[%c0_109, %c0_110] : memref<1x256xf32, #tpu.memory_space<vmem>>, vector<1x256xf32>
    %104 = vector.broadcast %103 : vector<1x256xf32> to vector<8x256xf32>
    %105 = arith.addf %102, %104 : vector<8x256xf32>
    %cst_111 = arith.constant 0.000000e+00 : f32
    %106 = vector.broadcast %cst_111 : f32 to vector<8x256xf32>
    %107 = arith.maximumf %105, %106 : vector<8x256xf32>
    %c0_112 = arith.constant 0 : index
    %c0_113 = arith.constant 0 : index
    %108 = vector.load %arg16[%c0_112, %c0_113] : memref<256x32xf32, #tpu.memory_space<vmem>>, vector<256x32xf32>
    %cst_114 = arith.constant dense<0.000000e+00> : vector<8x32xf32>
    %109 = tpu.matmul %107, %108, %cst_114 {dimension_numbers = #tpu.dot_dimension_numbers<[1], [0], [0], [1], [0, 0, 1, 1], [], []>} : vector<8x256xf32>, vector<256x32xf32>, vector<8x32xf32> -> vector<8x32xf32>
    %c0_115 = arith.constant 0 : index
    %c0_116 = arith.constant 0 : index
    %110 = vector.load %arg17[%c0_115, %c0_116] : memref<1x32xf32, #tpu.memory_space<vmem>>, vector<1x32xf32>
    %111 = vector.broadcast %110 : vector<1x32xf32> to vector<8x32xf32>
    %112 = arith.addf %109, %111 : vector<8x32xf32>
    %c0_117 = arith.constant 0 : index
    %c0_118 = arith.constant 0 : index
    %113 = vector.load %arg18[%c0_117, %c0_118] : memref<8x32xf32, #tpu.memory_space<vmem>>, vector<8x32xf32>
    tpu.vector_store %arg18[%c0_117, %c0_118], %112 {strides = array<i32>} : memref<8x32xf32, #tpu.memory_space<vmem>>, vector<8x32xf32>,
    return
  }
  func.func @transform_0(%arg0: i32) -> (i32, i32) {
    %c0_i32 = arith.constant 0 : i32
    %c0_i32_0 = arith.constant 0 : i32
    return %arg0, %c0_i32 : i32, i32
  }
  func.func @transform_1(%arg0: i32) -> (i32, i32, i32) {
    %c0_i32 = arith.constant 0 : i32
    %c0_i32_0 = arith.constant 0 : i32
    %c0_i32_1 = arith.constant 0 : i32
    %c0_i32_2 = arith.constant 0 : i32
    return %c0_i32, %c0_i32_0, %c0_i32_1 : i32, i32, i32
  }
  func.func @transform_2(%arg0: i32) -> (i32, i32, i32) {
    %c0_i32 = arith.constant 0 : i32
    %c0_i32_0 = arith.constant 0 : i32
    %c0_i32_1 = arith.constant 0 : i32
    %c0_i32_2 = arith.constant 0 : i32
    return %c0_i32, %c0_i32_0, %c0_i32_1 : i32, i32, i32
  }
  func.func @transform_3(%arg0: i32) -> (i32, i32) {
    %c0_i32 = arith.constant 0 : i32
    %c0_i32_0 = arith.constant 0 : i32
    %c0_i32_1 = arith.constant 0 : i32
    return %c0_i32, %c0_i32_0 : i32, i32
  }
  func.func @transform_4(%arg0: i32) -> (i32, i32, i32) {
    %c0_i32 = arith.constant 0 : i32
    %c0_i32_0 = arith.constant 0 : i32
    %c0_i32_1 = arith.constant 0 : i32
    %c0_i32_2 = arith.constant 0 : i32
    return %c0_i32, %c0_i32_0, %c0_i32_1 : i32, i32, i32
  }
  func.func @transform_5(%arg0: i32) -> (i32, i32, i32) {
    %c0_i32 = arith.constant 0 : i32
    %c0_i32_0 = arith.constant 0 : i32
    %c0_i32_1 = arith.constant 0 : i32
    %c0_i32_2 = arith.constant 0 : i32
    return %c0_i32, %c0_i32_0, %c0_i32_1 : i32, i32, i32
  }
  func.func @transform_6(%arg0: i32) -> (i32, i32) {
    %c0_i32 = arith.constant 0 : i32
    %c0_i32_0 = arith.constant 0 : i32
    %c0_i32_1 = arith.constant 0 : i32
    return %c0_i32, %c0_i32_0 : i32, i32
  }
  func.func @transform_7(%arg0: i32) -> (i32, i32, i32) {
    %c0_i32 = arith.constant 0 : i32
    %c0_i32_0 = arith.constant 0 : i32
    %c0_i32_1 = arith.constant 0 : i32
    %c0_i32_2 = arith.constant 0 : i32
    return %c0_i32, %c0_i32_0, %c0_i32_1 : i32, i32, i32
  }
  func.func @transform_8(%arg0: i32) -> (i32, i32, i32) {
    %c0_i32 = arith.constant 0 : i32
    %c0_i32_0 = arith.constant 0 : i32
    %c0_i32_1 = arith.constant 0 : i32
    %c0_i32_2 = arith.constant 0 : i32
    return %c0_i32, %c0_i32_0, %c0_i32_1 : i32, i32, i32
  }
  func.func @transform_9(%arg0: i32) -> (i32, i32) {
    %c0_i32 = arith.constant 0 : i32
    %c0_i32_0 = arith.constant 0 : i32
    %c0_i32_1 = arith.constant 0 : i32
    return %c0_i32, %c0_i32_0 : i32, i32
  }
  func.func @transform_10(%arg0: i32) -> (i32, i32, i32) {
    %c0_i32 = arith.constant 0 : i32
    %c0_i32_0 = arith.constant 0 : i32
    %c0_i32_1 = arith.constant 0 : i32
    %c0_i32_2 = arith.constant 0 : i32
    return %c0_i32, %c0_i32_0, %c0_i32_1 : i32, i32, i32
  }
  func.func @transform_11(%arg0: i32) -> (i32, i32, i32) {
    %c0_i32 = arith.constant 0 : i32
    %c0_i32_0 = arith.constant 0 : i32
    %c0_i32_1 = arith.constant 0 : i32
    %c0_i32_2 = arith.constant 0 : i32
    return %c0_i32, %c0_i32_0, %c0_i32_1 : i32, i32, i32
  }
  func.func @transform_12(%arg0: i32) -> (i32, i32) {
    %c0_i32 = arith.constant 0 : i32
    %c0_i32_0 = arith.constant 0 : i32
    %c0_i32_1 = arith.constant 0 : i32
    return %c0_i32, %c0_i32_0 : i32, i32
  }
  func.func @transform_13(%arg0: i32) -> (i32, i32) {
    %c0_i32 = arith.constant 0 : i32
    %c0_i32_0 = arith.constant 0 : i32
    %c0_i32_1 = arith.constant 0 : i32
    return %c0_i32, %c0_i32_0 : i32, i32
  }
  func.func @transform_14(%arg0: i32) -> (i32, i32) {
    %c0_i32 = arith.constant 0 : i32
    %c0_i32_0 = arith.constant 0 : i32
    %c0_i32_1 = arith.constant 0 : i32
    return %c0_i32, %c0_i32_0 : i32, i32
  }
  func.func @transform_15(%arg0: i32) -> (i32, i32) {
    %c0_i32 = arith.constant 0 : i32
    %c0_i32_0 = arith.constant 0 : i32
    %c0_i32_1 = arith.constant 0 : i32
    return %c0_i32, %c0_i32_0 : i32, i32
  }
  func.func @transform_16(%arg0: i32) -> (i32, i32) {
    %c0_i32 = arith.constant 0 : i32
    %c0_i32_0 = arith.constant 0 : i32
    %c0_i32_1 = arith.constant 0 : i32
    return %c0_i32, %c0_i32_0 : i32, i32
  }
  func.func @transform_17(%arg0: i32) -> (i32, i32) {
    %c0_i32 = arith.constant 0 : i32
    %c0_i32_0 = arith.constant 0 : i32
    return %arg0, %c0_i32 : i32, i32
  }
}

</mosaic_0001>

<llo_original>
// kernel: encoder_net_forward.1
$region0: #{encoder_net_forward.1}
  #allocation0 [shape = 'u32[]', space=smem, size = 0x4, offset = 0x4, fixed_abs, tag = 'smem constant byte address 0x4 - core index']
  #allocation1 [shape = 'u32[144,128]{1,0:T(1,128)}', space=vmem, size = 0x12000, scoped, tag = 'internal scratch']
  %s0 = inlined_call_operand.vmem [shape: f32[512,128], index: 0, kind: input, shape index: {}]
  %s1 = inlined_call_operand.vmem [shape: f32[3,120,256], index: 1, kind: input, shape index: {}]
  %s2 = inlined_call_operand.vmem [shape: f32[3,128,512], index: 2, kind: input, shape index: {}]
  %s3 = inlined_call_operand.vmem [shape: f32[1,512], index: 3, kind: input, shape index: {}]
  %s4 = inlined_call_operand.hbm [shape: f32[3,56,120], index: 4, kind: input, shape index: {}]
  %s5 = inlined_call_operand.vmem [shape: f32[3,512,256], index: 5, kind: input, shape index: {}]
  %s6 = inlined_call_operand.vmem [shape: f32[1,256], index: 6, kind: input, shape index: {}]
  %s7 = inlined_call_operand.vmem [shape: f32[3,24,56], index: 7, kind: input, shape index: {}]
  %s8 = inlined_call_operand.vmem [shape: f32[3,256,256], index: 8, kind: input, shape index: {}]
  %s9 = inlined_call_operand.vmem [shape: f32[1,256], index: 9, kind: input, shape index: {}]
  %s10 = inlined_call_operand.vmem [shape: f32[3,8,24], index: 10, kind: input, shape index: {}]
  %s11 = inlined_call_operand.vmem [shape: f32[3,256,128], index: 11, kind: input, shape index: {}]
  %s12 = inlined_call_operand.vmem [shape: f32[1,128], index: 12, kind: input, shape index: {}]
  %s13 = inlined_call_operand.vmem [shape: f32[128,256], index: 13, kind: input, shape index: {}]
  %s14 = inlined_call_operand.vmem [shape: f32[1,256], index: 14, kind: input, shape index: {}]
  %s15 = inlined_call_operand.vmem [shape: f32[256,32], index: 15, kind: input, shape index: {}]
  %s16 = inlined_call_operand.vmem [shape: f32[1,32], index: 16, kind: input, shape index: {}]
  %s17 = inlined_call_operand.hbm [shape: f32[16,32], index: 17, kind: output, shape index: {}]
  %s18 = sld [smem:[#allocation0]]
  $region105: #{encoder_net_forward.1} parent=0
    _
  %s20 = ssub.s32 1, %s18
  %s21 = scalar_select 0, %s20, %s18
  $region1: #{encoder_net_forward.1} parent=0
    #allocation2 [shape = 'u8[86016]{0}', space=vmem, size = 0x15000, scoped, tag = 'input window, operand 4, single buffered']
    #allocation3 [shape = 's32[2]{0}', space=sflag, size = 0x8, scoped, tag = 'scoped memory for encoder_net_forward.1']
    #allocation4 [shape = 's32[2]{0}', space=sflag, size = 0x8, scoped, tag = 'scoped memory for encoder_net_forward.1']
    #allocation5 [shape = 'u8[8192]{0}', space=vmem, size = 0x2000, scoped, tag = 'output window, operand 0']
    %22 = vsyncpa [#allocation3], 0
    %23 = vsyncpa [#allocation4], 0
    %s24 = scalar_lea.sflag [#allocation4], 1
    %25 = vsyncpa %s24, 0
    loop: start=0, step=1, limit=4
    $region2: #{encoder_net_forward.1} parent=1 // loop_pre_header
      _
    $region3: #{encoder_net_forward.1} parent=1 // loop_header
      %s27 = sphi 0, %s31
      %p28 = scmp.ge.s32.totalorder %s27, 4
      %s37 = sphi 0, %s39
      %s40 = sphi 0, %s37
      %s41 = sphi 0, %s40
      %s57 = sphi 0, %s41
      %s61 = sphi 0, %s61
      %s63 = sphi 0, %s61
      %s64 = sphi 0, %s63
      %s78 = sphi 0, %s64
      %s82 = sphi 0, %s82
      %s84 = sphi 0, %s82
      %s85 = sphi 0, %s84
      %s99 = sphi 0, %s85
      %s103 = sphi 0, %s103
      %s105 = sphi 0, %s103
      %s106 = sphi 0, %s105
      %s120 = sphi 0, %s106
      %s124 = sphi 0, %s124
      %s126 = sphi 0, %s124
      %s127 = sphi 0, %s126
      %s141 = sphi 0, %s127
      %s145 = sphi 0, %s145
      %s147 = sphi 0, %s145
      %s148 = sphi 0, %s147
      %s162 = sphi 0, %s148
      %s166 = sphi 0, %s166
      %s168 = sphi 0, %s166
      %s169 = sphi 0, %s168
      %s183 = sphi 0, %s169
      %s187 = sphi 0, %s187
      %s189 = sphi 0, %s187
      %s190 = sphi 0, %s189
      %s204 = sphi 0, %s190
      %s208 = sphi 0, %s208
      %s210 = sphi 0, %s208
      %s211 = sphi 0, %s210
      %s225 = sphi 0, %s211
      %s229 = sphi 0, %s229
      %s231 = sphi 0, %s229
      %s232 = sphi 0, %s231
      %s246 = sphi 0, %s232
      %s250 = sphi 0, %s250
      %s252 = sphi 0, %s250
      %s253 = sphi 0, %s252
      %s267 = sphi 0, %s253
      %s271 = sphi 0, %s271
      %s273 = sphi 0, %s271
      %s274 = sphi 0, %s273
      %s288 = sphi 0, %s274
      %s292 = sphi 0, %s292
      %s294 = sphi 0, %s292
      %s295 = sphi 0, %s294
      %s309 = sphi 0, %s295
      %s313 = sphi 0, %s313
      %s315 = sphi 0, %s313
      %s316 = sphi 0, %s315
      %s330 = sphi 0, %s316
      %s334 = sphi 0, %s334
      %s336 = sphi 0, %s334
      %s337 = sphi 0, %s336
      %s351 = sphi 0, %s337
      %s355 = sphi 0, %s355
      %s357 = sphi 0, %s355
      %s358 = sphi 0, %s357
      %s372 = sphi 0, %s358
      %s376 = sphi 0, %s376
      %s378 = sphi 0, %s376
      %s379 = sphi 0, %s378
      %s393 = sphi 0, %s379
      %s399 = sphi 0, %s401
      %s402 = sphi 0, %s399
      %s403 = sphi 0, %s402
      %s419 = sphi 0, %s403
    $region4: #{encoder_net_forward.1} parent=1 // loop_header_branch
      %30 = sbr.rel (%p28) target = $region8
    $region5: #{encoder_net_forward.1} parent=1 // loop_body
      %s32 = ssub.s32 %s27, 1
      %s33 = ssub.s32 %s27, 2
      %s34 = sadd.s32 %s27, 1
      %s35 = ssub.s32 %s27, %s34
      %p36 = scmp.eq.s32.totalorder %s35, 0
      %s38 = sadd.s32 %s37, 1
      %s39 = scalar_select %p36, %s37, %s38
      %p42 = pneg %p36
      %p43 = scmp.eq.s32.totalorder %s27, 1
      %p44 = por %p42, %p43
      %p45 = scmp.ne.s32.totalorder %s37, %s40
      %p46 = scmp.eq.s32.totalorder %s27, 0
      %p47 = por %p45, %p46
      %p48 = scmp.ne.s32.totalorder %s37, %s40
      %p49 = scmp.eq.s32.totalorder %s32, 1
      %p50 = por %p48, %p49
      %p51 = scmp.ne.s32.totalorder %s40, %s41
      %p52 = scmp.eq.s32.totalorder %s32, 0
      %p53 = por %p51, %p52
      %p54 = scmp.ne.s32.totalorder %s40, %s41
      %p55 = scmp.eq.s32.totalorder %s33, 1
      %p56 = por %p54, %p55
      %p58 = scmp.ne.s32.totalorder %s41, %s57
      %p59 = scmp.eq.s32.totalorder %s33, 0
      %p60 = por %p58, %p59
      %s62 = sadd.s32 %s61, 1
      %p65 = scmp.eq.s32.totalorder %s27, 1
      %p66 = scmp.ne.s32.totalorder %s61, %s63
      %p67 = scmp.eq.s32.totalorder %s27, 0
      %p68 = por %p66, %p67
      %p69 = scmp.ne.s32.totalorder %s61, %s63
      %p70 = scmp.eq.s32.totalorder %s32, 1
      %p71 = por %p69, %p70
      %p72 = scmp.ne.s32.totalorder %s63, %s64
      %p73 = scmp.eq.s32.totalorder %s32, 0
      %p74 = por %p72, %p73
      %p75 = scmp.ne.s32.totalorder %s63, %s64
      %p76 = scmp.eq.s32.totalorder %s33, 1
      %p77 = por %p75, %p76
      %p79 = scmp.ne.s32.totalorder %s64, %s78
      %p80 = scmp.eq.s32.totalorder %s33, 0
      %p81 = por %p79, %p80
      %s83 = sadd.s32 %s82, 1
      %p86 = scmp.eq.s32.totalorder %s27, 1
      %p87 = scmp.ne.s32.totalorder %s82, %s84
      %p88 = scmp.eq.s32.totalorder %s27, 0
      %p89 = por %p87, %p88
      %p90 = scmp.ne.s32.totalorder %s82, %s84
      %p91 = scmp.eq.s32.totalorder %s32, 1
      %p92 = por %p90, %p91
      %p93 = scmp.ne.s32.totalorder %s84, %s85
      %p94 = scmp.eq.s32.totalorder %s32, 0
      %p95 = por %p93, %p94
      %p96 = scmp.ne.s32.totalorder %s84, %s85
      %p97 = scmp.eq.s32.totalorder %s33, 1
      %p98 = por %p96, %p97
      %p100 = scmp.ne.s32.totalorder %s85, %s99
      %p101 = scmp.eq.s32.totalorder %s33, 0
      %p102 = por %p100, %p101
      %s104 = sadd.s32 %s103, 1
      %p107 = scmp.eq.s32.totalorder %s27, 1
      %p108 = scmp.ne.s32.totalorder %s103, %s105
      %p109 = scmp.eq.s32.totalorder %s27, 0
      %p110 = por %p108, %p109
      %p111 = scmp.ne.s32.totalorder %s103, %s105
      %p112 = scmp.eq.s32.totalorder %s32, 1
      %p113 = por %p111, %p112
      %p114 = scmp.ne.s32.totalorder %s105, %s106
      %p115 = scmp.eq.s32.totalorder %s32, 0
      %p116 = por %p114, %p115
      %p117 = scmp.ne.s32.totalorder %s105, %s106
      %p118 = scmp.eq.s32.totalorder %s33, 1
      %p119 = por %p117, %p118
      %p121 = scmp.ne.s32.totalorder %s106, %s120
      %p122 = scmp.eq.s32.totalorder %s33, 0
      %p123 = por %p121, %p122
      %s125 = sadd.s32 %s124, 1
      %p128 = scmp.eq.s32.totalorder %s27, 1
      %p129 = scmp.ne.s32.totalorder %s124, %s126
      %p130 = scmp.eq.s32.totalorder %s27, 0
      %p131 = por %p129, %p130
      %p132 = scmp.ne.s32.totalorder %s124, %s126
      %p133 = scmp.eq.s32.totalorder %s32, 1
      %p134 = por %p132, %p133
      %p135 = scmp.ne.s32.totalorder %s126, %s127
      %p136 = scmp.eq.s32.totalorder %s32, 0
      %p137 = por %p135, %p136
      %p138 = scmp.ne.s32.totalorder %s126, %s127
      %p139 = scmp.eq.s32.totalorder %s33, 1
      %p140 = por %p138, %p139
      %p142 = scmp.ne.s32.totalorder %s127, %s141
      %p143 = scmp.eq.s32.totalorder %s33, 0
      %p144 = por %p142, %p143
      %s146 = sadd.s32 %s145, 1
      %p149 = scmp.eq.s32.totalorder %s27, 1
      %p150 = scmp.ne.s32.totalorder %s145, %s147
      %p151 = scmp.eq.s32.totalorder %s27, 0
      %p152 = por %p150, %p151
      %p153 = scmp.ne.s32.totalorder %s145, %s147
      %p154 = scmp.eq.s32.totalorder %s32, 1
      %p155 = por %p153, %p154
      %p156 = scmp.ne.s32.totalorder %s147, %s148
      %p157 = scmp.eq.s32.totalorder %s32, 0
      %p158 = por %p156, %p157
      %p159 = scmp.ne.s32.totalorder %s147, %s148
      %p160 = scmp.eq.s32.totalorder %s33, 1
      %p161 = por %p159, %p160
      %p163 = scmp.ne.s32.totalorder %s148, %s162
      %p164 = scmp.eq.s32.totalorder %s33, 0
      %p165 = por %p163, %p164
      %s167 = sadd.s32 %s166, 1
      %p170 = scmp.eq.s32.totalorder %s27, 1
      %p171 = scmp.ne.s32.totalorder %s166, %s168
      %p172 = scmp.eq.s32.totalorder %s27, 0
      %p173 = por %p171, %p172
      %p174 = scmp.ne.s32.totalorder %s166, %s168
      %p175 = scmp.eq.s32.totalorder %s32, 1
      %p176 = por %p174, %p175
      %p177 = scmp.ne.s32.totalorder %s168, %s169
      %p178 = scmp.eq.s32.totalorder %s32, 0
      %p179 = por %p177, %p178
      %p180 = scmp.ne.s32.totalorder %s168, %s169
      %p181 = scmp.eq.s32.totalorder %s33, 1
      %p182 = por %p180, %p181
      %p184 = scmp.ne.s32.totalorder %s169, %s183
      %p185 = scmp.eq.s32.totalorder %s33, 0
      %p186 = por %p184, %p185
      %s188 = sadd.s32 %s187, 1
      %p191 = scmp.eq.s32.totalorder %s27, 1
      %p192 = scmp.ne.s32.totalorder %s187, %s189
      %p193 = scmp.eq.s32.totalorder %s27, 0
      %p194 = por %p192, %p193
      %p195 = scmp.ne.s32.totalorder %s187, %s189
      %p196 = scmp.eq.s32.totalorder %s32, 1
      %p197 = por %p195, %p196
      %p198 = scmp.ne.s32.totalorder %s189, %s190
      %p199 = scmp.eq.s32.totalorder %s32, 0
      %p200 = por %p198, %p199
      %p201 = scmp.ne.s32.totalorder %s189, %s190
      %p202 = scmp.eq.s32.totalorder %s33, 1
      %p203 = por %p201, %p202
      %p205 = scmp.ne.s32.totalorder %s190, %s204
      %p206 = scmp.eq.s32.totalorder %s33, 0
      %p207 = por %p205, %p206
      %s209 = sadd.s32 %s208, 1
      %p212 = scmp.eq.s32.totalorder %s27, 1
      %p213 = scmp.ne.s32.totalorder %s208, %s210
      %p214 = scmp.eq.s32.totalorder %s27, 0
      %p215 = por %p213, %p214
      %p216 = scmp.ne.s32.totalorder %s208, %s210
      %p217 = scmp.eq.s32.totalorder %s32, 1
      %p218 = por %p216, %p217
      %p219 = scmp.ne.s32.totalorder %s210, %s211
      %p220 = scmp.eq.s32.totalorder %s32, 0
      %p221 = por %p219, %p220
      %p222 = scmp.ne.s32.totalorder %s210, %s211
      %p223 = scmp.eq.s32.totalorder %s33, 1
      %p224 = por %p222, %p223
      %p226 = scmp.ne.s32.totalorder %s211, %s225
      %p227 = scmp.eq.s32.totalorder %s33, 0
      %p228 = por %p226, %p227
      %s230 = sadd.s32 %s229, 1
      %p233 = scmp.eq.s32.totalorder %s27, 1
      %p234 = scmp.ne.s32.totalorder %s229, %s231
      %p235 = scmp.eq.s32.totalorder %s27, 0
      %p236 = por %p234, %p235
      %p237 = scmp.ne.s32.totalorder %s229, %s231
      %p238 = scmp.eq.s32.totalorder %s32, 1
      %p239 = por %p237, %p238
      %p240 = scmp.ne.s32.totalorder %s231, %s232
      %p241 = scmp.eq.s32.totalorder %s32, 0
      %p242 = por %p240, %p241
      %p243 = scmp.ne.s32.totalorder %s231, %s232
      %p244 = scmp.eq.s32.totalorder %s33, 1
      %p245 = por %p243, %p244
      %p247 = scmp.ne.s32.totalorder %s232, %s246
      %p248 = scmp.eq.s32.totalorder %s33, 0
      %p249 = por %p247, %p248
      %s251 = sadd.s32 %s250, 1
      %p254 = scmp.eq.s32.totalorder %s27, 1
      %p255 = scmp.ne.s32.totalorder %s250, %s252
      %p256 = scmp.eq.s32.totalorder %s27, 0
      %p257 = por %p255, %p256
      %p258 = scmp.ne.s32.totalorder %s250, %s252
      %p259 = scmp.eq.s32.totalorder %s32, 1
      %p260 = por %p258, %p259
      %p261 = scmp.ne.s32.totalorder %s252, %s253
      %p262 = scmp.eq.s32.totalorder %s32, 0
      %p263 = por %p261, %p262
      %p264 = scmp.ne.s32.totalorder %s252, %s253
      %p265 = scmp.eq.s32.totalorder %s33, 1
      %p266 = por %p264, %p265
      %p268 = scmp.ne.s32.totalorder %s253, %s267
      %p269 = scmp.eq.s32.totalorder %s33, 0
      %p270 = por %p268, %p269
      %s272 = sadd.s32 %s271, 1
      %p275 = scmp.eq.s32.totalorder %s27, 1
      %p276 = scmp.ne.s32.totalorder %s271, %s273
      %p277 = scmp.eq.s32.totalorder %s27, 0
      %p278 = por %p276, %p277
      %p279 = scmp.ne.s32.totalorder %s271, %s273
      %p280 = scmp.eq.s32.totalorder %s32, 1
      %p281 = por %p279, %p280
      %p282 = scmp.ne.s32.totalorder %s273, %s274
      %p283 = scmp.eq.s32.totalorder %s32, 0
      %p284 = por %p282, %p283
      %p285 = scmp.ne.s32.totalorder %s273, %s274
      %p286 = scmp.eq.s32.totalorder %s33, 1
      %p287 = por %p285, %p286
      %p289 = scmp.ne.s32.totalorder %s274, %s288
      %p290 = scmp.eq.s32.totalorder %s33, 0
      %p291 = por %p289, %p290
      %s293 = sadd.s32 %s292, 1
      %p296 = scmp.eq.s32.totalorder %s27, 1
      %p297 = scmp.ne.s32.totalorder %s292, %s294
      %p298 = scmp.eq.s32.totalorder %s27, 0
      %p299 = por %p297, %p298
      %p300 = scmp.ne.s32.totalorder %s292, %s294
      %p301 = scmp.eq.s32.totalorder %s32, 1
      %p302 = por %p300, %p301
      %p303 = scmp.ne.s32.totalorder %s294, %s295
      %p304 = scmp.eq.s32.totalorder %s32, 0
      %p305 = por %p303, %p304
      %p306 = scmp.ne.s32.totalorder %s294, %s295
      %p307 = scmp.eq.s32.totalorder %s33, 1
      %p308 = por %p306, %p307
      %p310 = scmp.ne.s32.totalorder %s295, %s309
      %p311 = scmp.eq.s32.totalorder %s33, 0
      %p312 = por %p310, %p311
      %s314 = sadd.s32 %s313, 1
      %p317 = scmp.eq.s32.totalorder %s27, 1
      %p318 = scmp.ne.s32.totalorder %s313, %s315
      %p319 = scmp.eq.s32.totalorder %s27, 0
      %p320 = por %p318, %p319
      %p321 = scmp.ne.s32.totalorder %s313, %s315
      %p322 = scmp.eq.s32.totalorder %s32, 1
      %p323 = por %p321, %p322
      %p324 = scmp.ne.s32.totalorder %s315, %s316
      %p325 = scmp.eq.s32.totalorder %s32, 0
      %p326 = por %p324, %p325
      %p327 = scmp.ne.s32.totalorder %s315, %s316
      %p328 = scmp.eq.s32.totalorder %s33, 1
      %p329 = por %p327, %p328
      %p331 = scmp.ne.s32.totalorder %s316, %s330
      %p332 = scmp.eq.s32.totalorder %s33, 0
      %p333 = por %p331, %p332
      %s335 = sadd.s32 %s334, 1
      %p338 = scmp.eq.s32.totalorder %s27, 1
      %p339 = scmp.ne.s32.totalorder %s334, %s336
      %p340 = scmp.eq.s32.totalorder %s27, 0
      %p341 = por %p339, %p340
      %p342 = scmp.ne.s32.totalorder %s334, %s336
      %p343 = scmp.eq.s32.totalorder %s32, 1
      %p344 = por %p342, %p343
      %p345 = scmp.ne.s32.totalorder %s336, %s337
      %p346 = scmp.eq.s32.totalorder %s32, 0
      %p347 = por %p345, %p346
      %p348 = scmp.ne.s32.totalorder %s336, %s337
      %p349 = scmp.eq.s32.totalorder %s33, 1
      %p350 = por %p348, %p349
      %p352 = scmp.ne.s32.totalorder %s337, %s351
      %p353 = scmp.eq.s32.totalorder %s33, 0
      %p354 = por %p352, %p353
      %s356 = sadd.s32 %s355, 1
      %p359 = scmp.eq.s32.totalorder %s27, 1
      %p360 = scmp.ne.s32.totalorder %s355, %s357
      %p361 = scmp.eq.s32.totalorder %s27, 0
      %p362 = por %p360, %p361
      %p363 = scmp.ne.s32.totalorder %s355, %s357
      %p364 = scmp.eq.s32.totalorder %s32, 1
      %p365 = por %p363, %p364
      %p366 = scmp.ne.s32.totalorder %s357, %s358
      %p367 = scmp.eq.s32.totalorder %s32, 0
      %p368 = por %p366, %p367
      %p369 = scmp.ne.s32.totalorder %s357, %s358
      %p370 = scmp.eq.s32.totalorder %s33, 1
      %p371 = por %p369, %p370
      %p373 = scmp.ne.s32.totalorder %s358, %s372
      %p374 = scmp.eq.s32.totalorder %s33, 0
      %p375 = por %p373, %p374
      %s377 = sadd.s32 %s376, 1
      %p380 = scmp.eq.s32.totalorder %s27, 1
      %p381 = scmp.ne.s32.totalorder %s376, %s378
      %p382 = scmp.eq.s32.totalorder %s27, 0
      %p383 = por %p381, %p382
      %p384 = scmp.ne.s32.totalorder %s376, %s378
      %p385 = scmp.eq.s32.totalorder %s32, 1
      %p386 = por %p384, %p385
      %p387 = scmp.ne.s32.totalorder %s378, %s379
      %p388 = scmp.eq.s32.totalorder %s32, 0
      %p389 = por %p387, %p388
      %p390 = scmp.ne.s32.totalorder %s378, %s379
      %p391 = scmp.eq.s32.totalorder %s33, 1
      %p392 = por %p390, %p391
      %p394 = scmp.ne.s32.totalorder %s379, %s393
      %p395 = scmp.eq.s32.totalorder %s33, 0
      %p396 = por %p394, %p395
      %s397 = ssub.s32 %s27, %s34
      %p398 = scmp.eq.s32.totalorder %s397, 0
      %s400 = sadd.s32 %s399, 1
      %s401 = scalar_select %p398, %s399, %s400
      %p404 = pneg %p398
      %p405 = scmp.eq.s32.totalorder %s27, 1
      %p406 = por %p404, %p405
      %p407 = scmp.ne.s32.totalorder %s399, %s402
      %p408 = scmp.eq.s32.totalorder %s27, 0
      %p409 = por %p407, %p408
      %p410 = scmp.ne.s32.totalorder %s399, %s402
      %p411 = scmp.eq.s32.totalorder %s32, 1
      %p412 = por %p410, %p411
      %p413 = scmp.ne.s32.totalorder %s402, %s403
      %p414 = scmp.eq.s32.totalorder %s32, 0
      %p415 = por %p413, %p414
      %p416 = scmp.ne.s32.totalorder %s402, %s403
      %p417 = scmp.eq.s32.totalorder %s33, 1
      %p418 = por %p416, %p417
      %p420 = scmp.ne.s32.totalorder %s403, %s419
      %p421 = scmp.eq.s32.totalorder %s33, 0
      %p422 = por %p420, %p421
      %p423 = scmp.le.s32.totalorder 1, %s27
      %p424 = scmp.lt.s32.totalorder %s27, 3
      %p425 = pnand %p423, %p424
      %p426 = pneg %p425
      // Predicated region
      $region9: #{encoder_net_forward.1} parent=5 // pred_check
        _
      $region10: #{encoder_net_forward.1} parent=5 // pred_check_branch
        %428 = sbr.rel (%p425) target = $region12
      $region11: #{encoder_net_forward.1} parent=5 // pred_region
        %s429 = ssub.s32 %s27, 1
        // Predicated region
        $region13: #{encoder_net_forward.1} parent=11 // pred_check
          %p430 = pneg %p74
        $region14: #{encoder_net_forward.1} parent=11 // pred_check_branch
          %432 = sbr.rel (%p430) target = $region16
        $region15: #{encoder_net_forward.1} parent=11 // pred_region
          _
        $region16: #{encoder_net_forward.1} parent=11 // pred_fallthru
          _
        // Predicated region
        $region17: #{encoder_net_forward.1} parent=11 // pred_check
          %p433 = pneg %p95
        $region18: #{encoder_net_forward.1} parent=11 // pred_check_branch
          %435 = sbr.rel (%p433) target = $region20
        $region19: #{encoder_net_forward.1} parent=11 // pred_region
          _
        $region20: #{encoder_net_forward.1} parent=11 // pred_fallthru
          _
        // Predicated region
        $region21: #{encoder_net_forward.1} parent=11 // pred_check
          %p436 = pneg %p116
        $region22: #{encoder_net_forward.1} parent=11 // pred_check_branch
          %438 = sbr.rel (%p436) target = $region24
        $region23: #{encoder_net_forward.1} parent=11 // pred_region
          _
        $region24: #{encoder_net_forward.1} parent=11 // pred_fallthru
          _
        // Predicated region
        $region25: #{encoder_net_forward.1} parent=11 // pred_check
          %p439 = pneg %p137
        $region26: #{encoder_net_forward.1} parent=11 // pred_check_branch
          %441 = sbr.rel (%p439) target = $region28
        $region27: #{encoder_net_forward.1} parent=11 // pred_region
          %s443 = ssub.s32 2688, 2688
          %444 = vsyncadd [#allocation3], %s443
          %s445 = sshll.u32 [#allocation2], 4
          %s446 = int_to_ptr.vmem [resolvable:$true] %s445
          %451 = dma.hbm_to_vmem [thread:$0]  %s4, 2688, %s446, [#allocation3], 128, 128, 8
        $region28: #{encoder_net_forward.1} parent=11 // pred_fallthru
          _
        // Predicated region
        $region29: #{encoder_net_forward.1} parent=11 // pred_check
          %p452 = pneg %p158
        $region30: #{encoder_net_forward.1} parent=11 // pred_check_branch
          %454 = sbr.rel (%p452) target = $region32
        $region31: #{encoder_net_forward.1} parent=11 // pred_region
          _
        $region32: #{encoder_net_forward.1} parent=11 // pred_fallthru
          _
        // Predicated region
        $region33: #{encoder_net_forward.1} parent=11 // pred_check
          %p455 = pneg %p179
        $region34: #{encoder_net_forward.1} parent=11 // pred_check_branch
          %457 = sbr.rel (%p455) target = $region36
        $region35: #{encoder_net_forward.1} parent=11 // pred_region
          _
        $region36: #{encoder_net_forward.1} parent=11 // pred_fallthru
          _
        // Predicated region
        $region37: #{encoder_net_forward.1} parent=11 // pred_check
          %p458 = pneg %p200
        $region38: #{encoder_net_forward.1} parent=11 // pred_check_branch
          %460 = sbr.rel (%p458) target = $region40
        $region39: #{encoder_net_forward.1} parent=11 // pred_region
          _
        $region40: #{encoder_net_forward.1} parent=11 // pred_fallthru
          _
        // Predicated region
        $region41: #{encoder_net_forward.1} parent=11 // pred_check
          %p461 = pneg %p221
        $region42: #{encoder_net_forward.1} parent=11 // pred_check_branch
          %463 = sbr.rel (%p461) target = $region44
        $region43: #{encoder_net_forward.1} parent=11 // pred_region
          _
        $region44: #{encoder_net_forward.1} parent=11 // pred_fallthru
          _
        // Predicated region
        $region45: #{encoder_net_forward.1} parent=11 // pred_check
          %p464 = pneg %p242
        $region46: #{encoder_net_forward.1} parent=11 // pred_check_branch
          %466 = sbr.rel (%p464) target = $region48
        $region47: #{encoder_net_forward.1} parent=11 // pred_region
          _
        $region48: #{encoder_net_forward.1} parent=11 // pred_fallthru
          _
        // Predicated region
        $region49: #{encoder_net_forward.1} parent=11 // pred_check
          %p467 = pneg %p263
        $region50: #{encoder_net_forward.1} parent=11 // pred_check_branch
          %469 = sbr.rel (%p467) target = $region52
        $region51: #{encoder_net_forward.1} parent=11 // pred_region
          _
        $region52: #{encoder_net_forward.1} parent=11 // pred_fallthru
          _
        // Predicated region
        $region53: #{encoder_net_forward.1} parent=11 // pred_check
          %p470 = pneg %p284
        $region54: #{encoder_net_forward.1} parent=11 // pred_check_branch
          %472 = sbr.rel (%p470) target = $region56
        $region55: #{encoder_net_forward.1} parent=11 // pred_region
          _
        $region56: #{encoder_net_forward.1} parent=11 // pred_fallthru
          _
        // Predicated region
        $region57: #{encoder_net_forward.1} parent=11 // pred_check
          %p473 = pneg %p305
        $region58: #{encoder_net_forward.1} parent=11 // pred_check_branch
          %475 = sbr.rel (%p473) target = $region60
        $region59: #{encoder_net_forward.1} parent=11 // pred_region
          _
        $region60: #{encoder_net_forward.1} parent=11 // pred_fallthru
          _
        // Predicated region
        $region61: #{encoder_net_forward.1} parent=11 // pred_check
          %p476 = pneg %p326
        $region62: #{encoder_net_forward.1} parent=11 // pred_check_branch
          %478 = sbr.rel (%p476) target = $region64
        $region63: #{encoder_net_forward.1} parent=11 // pred_region
          _
        $region64: #{encoder_net_forward.1} parent=11 // pred_fallthru
          _
        // Predicated region
        $region65: #{encoder_net_forward.1} parent=11 // pred_check
          %p479 = pneg %p347
        $region66: #{encoder_net_forward.1} parent=11 // pred_check_branch
          %481 = sbr.rel (%p479) target = $region68
        $region67: #{encoder_net_forward.1} parent=11 // pred_region
          _
        $region68: #{encoder_net_forward.1} parent=11 // pred_fallthru
          _
        // Predicated region
        $region69: #{encoder_net_forward.1} parent=11 // pred_check
          %p482 = pneg %p368
        $region70: #{encoder_net_forward.1} parent=11 // pred_check_branch
          %484 = sbr.rel (%p482) target = $region72
        $region71: #{encoder_net_forward.1} parent=11 // pred_region
          _
        $region72: #{encoder_net_forward.1} parent=11 // pred_fallthru
          _
        // Predicated region
        $region73: #{encoder_net_forward.1} parent=11 // pred_check
          %p485 = pneg %p389
        $region74: #{encoder_net_forward.1} parent=11 // pred_check_branch
          %487 = sbr.rel (%p485) target = $region76
        $region75: #{encoder_net_forward.1} parent=11 // pred_region
          _
        $region76: #{encoder_net_forward.1} parent=11 // pred_fallthru
          _
      $region12: #{encoder_net_forward.1} parent=5 // pred_fallthru
        _
      %p488 = scmp.lt.s32.totalorder %s27, 2
      // Predicated region
      $region77: #{encoder_net_forward.1} parent=5 // pred_check
        %p489 = pneg %p488
      $region78: #{encoder_net_forward.1} parent=5 // pred_check_branch
        %491 = sbr.rel (%p489) target = $region80
      $region79: #{encoder_net_forward.1} parent=5 // pred_region
        // Predicated region
        $region81: #{encoder_net_forward.1} parent=79 // pred_check
          %p492 = pneg %p47
        $region82: #{encoder_net_forward.1} parent=79 // pred_check_branch
          %494 = sbr.rel (%p492) target = $region84
        $region83: #{encoder_net_forward.1} parent=79 // pred_region
          %s495 = smul.u32 32, %s27
          %p496 = scmp.lt.s32.totalorder %s495, 63
          %s497 = scalar_select %p496, %s495, 63
          %s498 = smul.addr %s497, 8
          %s499 = scalar_lea.vmem %s0, %s498
          %s500 = smul.u32 32, %s27
        $region84: #{encoder_net_forward.1} parent=79 // pred_fallthru
          _
      $region80: #{encoder_net_forward.1} parent=5 // pred_fallthru
        _
      %p501 = scmp.le.s32.totalorder 1, %s27
      %p502 = scmp.lt.s32.totalorder %s27, 3
      %p503 = pnand %p501, %p502
      %p504 = pneg %p503
      // Predicated region
      $region85: #{encoder_net_forward.1} parent=5 // pred_check
        _
      $region86: #{encoder_net_forward.1} parent=5 // pred_check_branch
        %506 = sbr.rel (%p503) target = $region88
      $region87: #{encoder_net_forward.1} parent=5 // pred_region
        %s507 = ssub.s32 %s27, 1
        // Predicated region
        $region89: #{encoder_net_forward.1} parent=87 // pred_check
          %p508 = pneg %p137
        $region90: #{encoder_net_forward.1} parent=87 // pred_check_branch
          %510 = sbr.rel (%p508) target = $region92
        $region91: #{encoder_net_forward.1} parent=87 // pred_region
          %511 = dma.done [#allocation3], 2688
        $region92: #{encoder_net_forward.1} parent=87 // pred_fallthru
          _
        %s512 = smul.u32 32, %s32
        %p513 = scmp.lt.s32.totalorder %s512, 63
        %s514 = scalar_select %p513, %s512, 63
        %s515 = smul.addr %s514, 8
        %s516 = scalar_lea.vmem %s0, %s515
        %p517 = pneg %p53
        %p518 = pneg %p50
        %p519 = pneg %p74
        %p520 = pneg %p71
        %p521 = pneg %p95
        %p522 = pneg %p92
        %p523 = pneg %p116
        %p524 = pneg %p113
        %p525 = pneg %p137
        %p526 = pneg %p134
        %p527 = pneg %p158
        %p528 = pneg %p155
        %p529 = pneg %p179
        %p530 = pneg %p176
        %p531 = pneg %p200
        %p532 = pneg %p197
        %p533 = pneg %p221
        %p534 = pneg %p218
        %p535 = pneg %p242
        %p536 = pneg %p239
        %p537 = pneg %p263
        %p538 = pneg %p260
        %p539 = pneg %p284
        %p540 = pneg %p281
        %p541 = pneg %p305
        %p542 = pneg %p302
        %p543 = pneg %p326
        %p544 = pneg %p323
        %p545 = pneg %p347
        %p546 = pneg %p344
        %p547 = pneg %p368
        %p548 = pneg %p365
        %p549 = pneg %p389
        %p550 = pneg %p386
        %p551 = pneg %p415
        %p552 = pneg %p412
        %s553 = sand.u32 %s402, 1
        %s554 = scalar_lea.sflag [#allocation4], %s553
        %s555 = sand.u32 %s402, 1
        %s556 = smul.addr %s555, 8
        %s557 = scalar_lea.vmem [#allocation5], %s556
        %s558 = smul.u32 32, %s32
        %p559 = scmp.lt.s32.totalorder %s558, 63
        %s560 = scalar_select %p559, %s558, 63
        %s561 = smul.addr %s560, 8
        %s562 = scalar_lea.vmem %s0, %s561
        %s563 = smul.u32 32, %s32
        %v564 = vld [vmem:[%s562] sm:$0xff]
        %v565 = vld [vmem:[%s562 + $0x8] sm:$0xff]
        %v566 = vld [vmem:[%s562 + $0x10] sm:$0xff]
        %v567 = vld [vmem:[%s562 + $0x18] sm:$0xff]
        %v568 = vld [vmem:[%s562 + $0x20] sm:$0xff]
        %v569 = vld [vmem:[%s562 + $0x28] sm:$0xff]
        %v570 = vld [vmem:[%s562 + $0x30] sm:$0xff]
        %v571 = vld [vmem:[%s562 + $0x38] sm:$0xff]
        %v572 = vld [vmem:[%s562 + $0x40] sm:$0xff]
        %v573 = vld [vmem:[%s562 + $0x48] sm:$0xff]
        %v574 = vld [vmem:[%s562 + $0x50] sm:$0xff]
        %v575 = vld [vmem:[%s562 + $0x58] sm:$0xff]
        %v576 = vld [vmem:[%s562 + $0x60] sm:$0xff]
        %v577 = vld [vmem:[%s562 + $0x68] sm:$0xff]
        %v578 = vld [vmem:[%s562 + $0x70] sm:$0xff]
        %v579 = vld [vmem:[%s562 + $0x78] sm:$0xff]
        %v580 = vld [vmem:[%s562 + $0x80] sm:$0xff]
        %v581 = vld [vmem:[%s562 + $0x88] sm:$0xff]
        %v582 = vld [vmem:[%s562 + $0x90] sm:$0xff]
        %v583 = vld [vmem:[%s562 + $0x98] sm:$0xff]
        %v584 = vld [vmem:[%s562 + $0xa0] sm:$0xff]
        %v585 = vld [vmem:[%s562 + $0xa8] sm:$0xff]
        %v586 = vld [vmem:[%s562 + $0xb0] sm:$0xff]
        %v587 = vld [vmem:[%s562 + $0xb8] sm:$0xff]
        %v588 = vld [vmem:[%s562 + $0xc0] sm:$0xff]
        %v589 = vld [vmem:[%s562 + $0xc8] sm:$0xff]
        %v590 = vld [vmem:[%s562 + $0xd0] sm:$0xff]
        %v591 = vld [vmem:[%s562 + $0xd8] sm:$0xff]
        %v592 = vld [vmem:[%s562 + $0xe0] sm:$0xff]
        %v593 = vld [vmem:[%s562 + $0xe8] sm:$0xff]
        %v594 = vld [vmem:[%s562 + $0xf0] sm:$0xff]
        %v595 = vld [vmem:[%s562 + $0xf8] sm:$0xff]
        %v596 = vld [vmem:[%s1] sm:$0xff]
        %v597 = vld [vmem:[%s1 + $0x8] sm:$0xff]
        %v598 = vld [vmem:[%s1 + $0x10] sm:$0xff]
        %v599 = vld [vmem:[%s1 + $0x18] sm:$0xff]
        %v600 = vld [vmem:[%s1 + $0x20] sm:$0xff]
        %v601 = vld [vmem:[%s1 + $0x28] sm:$0xff]
        %v602 = vld [vmem:[%s1 + $0x30] sm:$0xff]
        %v603 = vld [vmem:[%s1 + $0x38] sm:$0xff]
        %v604 = vld [vmem:[%s1 + $0x40] sm:$0xff]
        %v605 = vld [vmem:[%s1 + $0x48] sm:$0xff]
        %v606 = vld [vmem:[%s1 + $0x50] sm:$0xff]
        %v607 = vld [vmem:[%s1 + $0x58] sm:$0xff]
        %v608 = vld [vmem:[%s1 + $0x60] sm:$0xff]
        %v609 = vld [vmem:[%s1 + $0x68] sm:$0xff]
        %v610 = vld [vmem:[%s1 + $0x70] sm:$0xff]
        %v611 = vld [vmem:[%s1 + $0x78] sm:$0xff]
        %v612 = vld [vmem:[%s1 + $0x80] sm:$0xff]
        %v613 = vld [vmem:[%s1 + $0x88] sm:$0xff]
        %v614 = vld [vmem:[%s1 + $0x90] sm:$0xff]
        %v615 = vld [vmem:[%s1 + $0x98] sm:$0xff]
        %v616 = vld [vmem:[%s1 + $0xa0] sm:$0xff]
        %v617 = vld [vmem:[%s1 + $0xa8] sm:$0xff]
        %v618 = vld [vmem:[%s1 + $0xb0] sm:$0xff]
        %v619 = vld [vmem:[%s1 + $0xb8] sm:$0xff]
        %v620 = vld [vmem:[%s1 + $0xc0] sm:$0xff]
        %v621 = vld [vmem:[%s1 + $0xc8] sm:$0xff]
        %v622 = vld [vmem:[%s1 + $0xd0] sm:$0xff]
        %v623 = vld [vmem:[%s1 + $0xd8] sm:$0xff]
        %v624 = vld [vmem:[%s1 + $0xe0] sm:$0xff]
        %v625 = vld [vmem:[%s1 + $0xe8] sm:$0xff]
        %626 = vmatprep.subr.mxu0 0.0
        %627 = vmatpush1.msra.mxu0 %v564
        %628 = vmatprep.subr.mxu0 0.0
        %629 = vmatpush1.msra.mxu0 %v565
        %630 = vmatprep.subr.mxu0 0.0
        %631 = vmatpush1.msra.mxu0 %v566
        %632 = vmatprep.subr.mxu0 0.0
        %633 = vmatpush1.msra.mxu0 %v567
        %634 = vmatprep.subr.mxu0 0.0
        %635 = vmatpush1.msra.mxu0 %v568
        %636 = vmatprep.subr.mxu0 0.0
        %637 = vmatpush1.msra.mxu0 %v569
        %638 = vmatprep.subr.mxu0 0.0
        %639 = vmatpush1.msra.mxu0 %v570
        %640 = vmatprep.subr.mxu0 0.0
        %641 = vmatpush1.msra.mxu0 %v571
        %642 = vmatprep.subr.mxu0 0.0
        %643 = vmatpush1.msra.mxu0 %v572
        %644 = vmatprep.subr.mxu0 0.0
        %645 = vmatpush1.msra.mxu0 %v573
        %646 = vmatprep.subr.mxu0 0.0
        %647 = vmatpush1.msra.mxu0 %v574
        %648 = vmatprep.subr.mxu0 0.0
        %649 = vmatpush1.msra.mxu0 %v575
        %650 = vmatprep.subr.mxu0 0.0
        %651 = vmatpush1.msra.mxu0 %v576
        %652 = vmatprep.subr.mxu0 0.0
        %653 = vmatpush1.msra.mxu0 %v577
        %654 = vmatprep.subr.mxu0 0.0
        %655 = vmatpush1.msra.mxu0 %v578
        %656 = vmatprep.subr.mxu0 0.0
        %657 = vmatpush1.msra.mxu0 %v579
        %658 = vmatprep.subr.mxu0 0.0
        %659 = vmatpush1.msra.mxu0 %v580
        %660 = vmatprep.subr.mxu0 0.0
        %661 = vmatpush1.msra.mxu0 %v581
        %662 = vmatprep.subr.mxu0 0.0
        %663 = vmatpush1.msra.mxu0 %v582
        %664 = vmatprep.subr.mxu0 0.0
        %665 = vmatpush1.msra.mxu0 %v583
        %666 = vmatprep.subr.mxu0 0.0
        %667 = vmatpush1.msra.mxu0 %v584
        %668 = vmatprep.subr.mxu0 0.0
        %669 = vmatpush1.msra.mxu0 %v585
        %670 = vmatprep.subr.mxu0 0.0
        %671 = vmatpush1.msra.mxu0 %v586
        %672 = vmatprep.subr.mxu0 0.0
        %673 = vmatpush1.msra.mxu0 %v587
        %674 = vmatprep.subr.mxu0 0.0
        %675 = vmatpush1.msra.mxu0 %v588
        %676 = vmatprep.subr.mxu0 0.0
        %677 = vmatpush1.msra.mxu0 %v589
        %678 = vmatprep.subr.mxu0 0.0
        %679 = vmatpush1.msra.mxu0 %v590
        %680 = vmatprep.subr.mxu0 0.0
        %681 = vmatpush1.msra.mxu0 %v591
        %682 = vmatprep.subr.mxu0 0.0
        %683 = vmatpush1.msra.mxu0 %v592
        %684 = vmatprep.subr.mxu0 0.0
        %685 = vmatpush1.msra.mxu0 %v593
        %686 = vmatprep.subr.mxu0 0.0
        %687 = vmatpush1.msra.mxu0 %v594
        %688 = vmatprep.subr.mxu0 0.0
        %689 = vmatpush1.msra.mxu0 %v595
        %690 = vmatprep.mubr.f32.mxu0 %v597
        %691 = vmatmul.mubr.f32.gmra.mrb[0].mxu0 %v596
        %v692 = vpop.f32.mrb[0].mxu0
        %v693 = vadd.f32 0.0, %v692
        %v694 = vpop.f32.mrb[0].mxu0
        %695 = vmatprep.mubr.f32.mxu0 %v599
        %696 = vmatmul.mubr.f32.gmra.mrb[0].mxu0 %v598
        %v697 = vpop.f32.mrb[0].mxu0
        %v698 = vadd.f32 0.0, %v697
        %v699 = vpop.f32.mrb[0].mxu0
        %700 = vmatprep.mubr.f32.mxu0 %v601
        %701 = vmatmul.mubr.f32.gmra.mrb[0].mxu0 %v600
        %v702 = vpop.f32.mrb[0].mxu0
        %v703 = vadd.f32 0.0, %v702
        %v704 = vpop.f32.mrb[0].mxu0
        %705 = vmatprep.mubr.f32.mxu0 %v603
        %706 = vmatmul.mubr.f32.gmra.mrb[0].mxu0 %v602
        %v707 = vpop.f32.mrb[0].mxu0
        %v708 = vadd.f32 0.0, %v707
        %v709 = vpop.f32.mrb[0].mxu0
        %710 = vmatprep.mubr.f32.mxu0 %v605
        %711 = vmatmul.mubr.f32.gmra.mrb[0].mxu0 %v604
        %v712 = vpop.f32.mrb[0].mxu0
        %v713 = vadd.f32 0.0, %v712
        %v714 = vpop.f32.mrb[0].mxu0
        %715 = vmatprep.mubr.f32.mxu0 %v607
        %716 = vmatmul.mubr.f32.gmra.mrb[0].mxu0 %v606
        %v717 = vpop.f32.mrb[0].mxu0
        %v718 = vadd.f32 0.0, %v717
        %v719 = vpop.f32.mrb[0].mxu0
        %720 = vmatprep.mubr.f32.mxu0 %v609
        %721 = vmatmul.mubr.f32.gmra.mrb[0].mxu0 %v608
        %v722 = vpop.f32.mrb[0].mxu0
        %v723 = vadd.f32 0.0, %v722
        %v724 = vpop.f32.mrb[0].mxu0
        %725 = vmatprep.mubr.f32.mxu0 %v611
        %726 = vmatmul.mubr.f32.gmra.mrb[0].mxu0 %v610
        %v727 = vpop.f32.mrb[0].mxu0
        %v728 = vadd.f32 0.0, %v727
        %v729 = vpop.f32.mrb[0].mxu0
        %730 = vmatprep.mubr.f32.mxu0 %v613
        %731 = vmatmul.mubr.f32.gmra.mrb[0].mxu0 %v612
        %v732 = vpop.f32.mrb[0].mxu0
        %v733 = vadd.f32 0.0, %v732
        %v734 = vpop.f32.mrb[0].mxu0
        %735 = vmatprep.mubr.f32.mxu0 %v615
        %736 = vmatmul.mubr.f32.gmra.mrb[0].mxu0 %v614
        %v737 = vpop.f32.mrb[0].mxu0
        %v738 = vadd.f32 0.0, %v737
        %v739 = vpop.f32.mrb[0].mxu0
        %740 = vmatprep.mubr.f32.mxu0 %v617
        %741 = vmatmul.mubr.f32.gmra.mrb[0].mxu0 %v616
        %v742 = vpop.f32.mrb[0].mxu0
        %v743 = vadd.f32 0.0, %v742
        %v744 = vpop.f32.mrb[0].mxu0
        %745 = vmatprep.mubr.f32.mxu0 %v619
        %746 = vmatmul.mubr.f32.gmra.mrb[0].mxu0 %v618
        %v747 = vpop.f32.mrb[0].mxu0
        %v748 = vadd.f32 0.0, %v747
        %v749 = vpop.f32.mrb[0].mxu0
        %750 = vmatprep.mubr.f32.mxu0 %v621
        %751 = vmatmul.mubr.f32.gmra.mrb[0].mxu0 %v620
        %v752 = vpop.f32.mrb[0].mxu0
        %v753 = vadd.f32 0.0, %v752
        %v754 = vpop.f32.mrb[0].mxu0
        %755 = vmatprep.mubr.f32.mxu0 %v623
        %756 = vmatmul.mubr.f32.gmra.mrb[0].mxu0 %v622
        %v757 = vpop.f32.mrb[0].mxu0
        %v758 = vadd.f32 0.0, %v757
        %v759 = vpop.f32.mrb[0].mxu0
        %760 = vmatprep.mubr.f32.mxu0 %v625
        %761 = vmatmul.mubr.f32.gmra.mrb[0].mxu0 %v624
        %v762 = vpop.f32.mrb[0].mxu0
        %v763 = vadd.f32 0.0, %v762
        %v764 = vpop.f32.mrb[0].mxu0
        %765 = vdwg.mxu0
        %v766 = vld [vmem:[%s2] sm:$0xff]
        %v767 = vld [vmem:[%s2 + $0x8] sm:$0xff]
        %v768 = vld [vmem:[%s2 + $0x10] sm:$0xff]
        %v769 = vld [vmem:[%s2 + $0x18] sm:$0xff]
        %v770 = vld [vmem:[%s2 + $0x20] sm:$0xff]
        %v771 = vld [vmem:[%s2 + $0x28] sm:$0xff]
        %v772 = vld [vmem:[%s2 + $0x30] sm:$0xff]
        %v773 = vld [vmem:[%s2 + $0x38] sm:$0xff]
        %v774 = vld [vmem:[%s2 + $0x40] sm:$0xff]
        %v775 = vld [vmem:[%s2 + $0x48] sm:$0xff]
        %v776 = vld [vmem:[%s2 + $0x50] sm:$0xff]
        %v777 = vld [vmem:[%s2 + $0x58] sm:$0xff]
        %v778 = vld [vmem:[%s2 + $0x60] sm:$0xff]
        %v779 = vld [vmem:[%s2 + $0x68] sm:$0xff]
        %v780 = vld [vmem:[%s2 + $0x70] sm:$0xff]
        %v781 = vld [vmem:[%s2 + $0x78] sm:$0xff]
        %v782 = vld [vmem:[%s2 + $0x80] sm:$0xff]
        %v783 = vld [vmem:[%s2 + $0x88] sm:$0xff]
        %v784 = vld [vmem:[%s2 + $0x90] sm:$0xff]
        %v785 = vld [vmem:[%s2 + $0x98] sm:$0xff]
        %v786 = vld [vmem:[%s2 + $0xa0] sm:$0xff]
        %v787 = vld [vmem:[%s2 + $0xa8] sm:$0xff]
        %v788 = vld [vmem:[%s2 + $0xb0] sm:$0xff]
        %v789 = vld [vmem:[%s2 + $0xb8] sm:$0xff]
        %v790 = vld [vmem:[%s2 + $0xc0] sm:$0xff]
        %v791 = vld [vmem:[%s2 + $0xc8] sm:$0xff]
        %v792 = vld [vmem:[%s2 + $0xd0] sm:$0xff]
        %v793 = vld [vmem:[%s2 + $0xd8] sm:$0xff]
        %v794 = vld [vmem:[%s2 + $0xe0] sm:$0xff]
        %v795 = vld [vmem:[%s2 + $0xe8] sm:$0xff]
        %v796 = vld [vmem:[%s2 + $0xf0] sm:$0xff]
        %v797 = vld [vmem:[%s2 + $0xf8] sm:$0xff]
        %v798 = vld [vmem:[%s2 + $0x100] sm:$0xff]
        %v799 = vld [vmem:[%s2 + $0x108] sm:$0xff]
        %v800 = vld [vmem:[%s2 + $0x110] sm:$0xff]
        %v801 = vld [vmem:[%s2 + $0x118] sm:$0xff]
        %v802 = vld [vmem:[%s2 + $0x120] sm:$0xff]
        %v803 = vld [vmem:[%s2 + $0x128] sm:$0xff]
        %v804 = vld [vmem:[%s2 + $0x130] sm:$0xff]
        %v805 = vld [vmem:[%s2 + $0x138] sm:$0xff]
        %v806 = vld [vmem:[%s2 + $0x140] sm:$0xff]
        %v807 = vld [vmem:[%s2 + $0x148] sm:$0xff]
        %v808 = vld [vmem:[%s2 + $0x150] sm:$0xff]
        %v809 = vld [vmem:[%s2 + $0x158] sm:$0xff]
        %v810 = vld [vmem:[%s2 + $0x160] sm:$0xff]
        %v811 = vld [vmem:[%s2 + $0x168] sm:$0xff]
        %v812 = vld [vmem:[%s2 + $0x170] sm:$0xff]
        %v813 = vld [vmem:[%s2 + $0x178] sm:$0xff]
        %v814 = vld [vmem:[%s2 + $0x180] sm:$0xff]
        %v815 = vld [vmem:[%s2 + $0x188] sm:$0xff]
        %v816 = vld [vmem:[%s2 + $0x190] sm:$0xff]
        %v817 = vld [vmem:[%s2 + $0x198] sm:$0xff]
        %v818 = vld [vmem:[%s2 + $0x1a0] sm:$0xff]
        %v819 = vld [vmem:[%s2 + $0x1a8] sm:$0xff]
        %v820 = vld [vmem:[%s2 + $0x1b0] sm:$0xff]
        %v821 = vld [vmem:[%s2 + $0x1b8] sm:$0xff]
        %v822 = vld [vmem:[%s2 + $0x1c0] sm:$0xff]
        %v823 = vld [vmem:[%s2 + $0x1c8] sm:$0xff]
        %v824 = vld [vmem:[%s2 + $0x1d0] sm:$0xff]
        %v825 = vld [vmem:[%s2 + $0x1d8] sm:$0xff]
        %v826 = vld [vmem:[%s2 + $0x1e0] sm:$0xff]
        %v827 = vld [vmem:[%s2 + $0x1e8] sm:$0xff]
        %v828 = vld [vmem:[%s2 + $0x1f0] sm:$0xff]
        %v829 = vld [vmem:[%s2 + $0x1f8] sm:$0xff]
        %s830 = scalar_lea.vmem %s1, 240
        %v831 = vld [vmem:[%s830] sm:$0xff]
        %v832 = vld [vmem:[%s830 + $0x8] sm:$0xff]
        %v833 = vld [vmem:[%s830 + $0x10] sm:$0xff]
        %v834 = vld [vmem:[%s830 + $0x18] sm:$0xff]
        %v835 = vld [vmem:[%s830 + $0x20] sm:$0xff]
        %v836 = vld [vmem:[%s830 + $0x28] sm:$0xff]
        %v837 = vld [vmem:[%s830 + $0x30] sm:$0xff]
        %v838 = vld [vmem:[%s830 + $0x38] sm:$0xff]
        %v839 = vld [vmem:[%s830 + $0x40] sm:$0xff]
        %v840 = vld [vmem:[%s830 + $0x48] sm:$0xff]
        %v841 = vld [vmem:[%s830 + $0x50] sm:$0xff]
        %v842 = vld [vmem:[%s830 + $0x58] sm:$0xff]
        %v843 = vld [vmem:[%s830 + $0x60] sm:$0xff]
        %v844 = vld [vmem:[%s830 + $0x68] sm:$0xff]
        %v845 = vld [vmem:[%s830 + $0x70] sm:$0xff]
        %v846 = vld [vmem:[%s830 + $0x78] sm:$0xff]
        %v847 = vld [vmem:[%s830 + $0x80] sm:$0xff]
        %v848 = vld [vmem:[%s830 + $0x88] sm:$0xff]
        %v849 = vld [vmem:[%s830 + $0x90] sm:$0xff]
        %v850 = vld [vmem:[%s830 + $0x98] sm:$0xff]
        %v851 = vld [vmem:[%s830 + $0xa0] sm:$0xff]
        %v852 = vld [vmem:[%s830 + $0xa8] sm:$0xff]
        %v853 = vld [vmem:[%s830 + $0xb0] sm:$0xff]
        %v854 = vld [vmem:[%s830 + $0xb8] sm:$0xff]
        %v855 = vld [vmem:[%s830 + $0xc0] sm:$0xff]
        %v856 = vld [vmem:[%s830 + $0xc8] sm:$0xff]
        %v857 = vld [vmem:[%s830 + $0xd0] sm:$0xff]
        %v858 = vld [vmem:[%s830 + $0xd8] sm:$0xff]
        %v859 = vld [vmem:[%s830 + $0xe0] sm:$0xff]
        %v860 = vld [vmem:[%s830 + $0xe8] sm:$0xff]
        %861 = vmatprep.subr.mxu0 0.0
        %862 = vmatpush1.msra.mxu0 %v564
        %863 = vmatprep.subr.mxu0 0.0
        %864 = vmatpush1.msra.mxu0 %v565
        %865 = vmatprep.subr.mxu0 0.0
        %866 = vmatpush1.msra.mxu0 %v566
        %867 = vmatprep.subr.mxu0 0.0
        %868 = vmatpush1.msra.mxu0 %v567
        %869 = vmatprep.subr.mxu0 0.0
        %870 = vmatpush1.msra.mxu0 %v568
        %871 = vmatprep.subr.mxu0 0.0
        %872 = vmatpush1.msra.mxu0 %v569
        %873 = vmatprep.subr.mxu0 0.0
        %874 = vmatpush1.msra.mxu0 %v570
        %875 = vmatprep.subr.mxu0 0.0
        %876 = vmatpush1.msra.mxu0 %v571
        %877 = vmatprep.subr.mxu0 0.0
        %878 = vmatpush1.msra.mxu0 %v572
        %879 = vmatprep.subr.mxu0 0.0
        %880 = vmatpush1.msra.mxu0 %v573
        %881 = vmatprep.subr.mxu0 0.0
        %882 = vmatpush1.msra.mxu0 %v574
        %883 = vmatprep.subr.mxu0 0.0
        %884 = vmatpush1.msra.mxu0 %v575
        %885 = vmatprep.subr.mxu0 0.0
        %886 = vmatpush1.msra.mxu0 %v576
        %887 = vmatprep.subr.mxu0 0.0
        %888 = vmatpush1.msra.mxu0 %v577
        %889 = vmatprep.subr.mxu0 0.0
        %890 = vmatpush1.msra.mxu0 %v578
        %891 = vmatprep.subr.mxu0 0.0
        %892 = vmatpush1.msra.mxu0 %v579
        %893 = vmatprep.subr.mxu0 0.0
        %894 = vmatpush1.msra.mxu0 %v580
        %895 = vmatprep.subr.mxu0 0.0
        %896 = vmatpush1.msra.mxu0 %v581
        %897 = vmatprep.subr.mxu0 0.0
        %898 = vmatpush1.msra.mxu0 %v582
        %899 = vmatprep.subr.mxu0 0.0
        %900 = vmatpush1.msra.mxu0 %v583
        %901 = vmatprep.subr.mxu0 0.0
        %902 = vmatpush1.msra.mxu0 %v584
        %903 = vmatprep.subr.mxu0 0.0
        %904 = vmatpush1.msra.mxu0 %v585
        %905 = vmatprep.subr.mxu0 0.0
        %906 = vmatpush1.msra.mxu0 %v586
        %907 = vmatprep.subr.mxu0 0.0
        %908 = vmatpush1.msra.mxu0 %v587
        %909 = vmatprep.subr.mxu0 0.0
        %910 = vmatpush1.msra.mxu0 %v588
        %911 = vmatprep.subr.mxu0 0.0
        %912 = vmatpush1.msra.mxu0 %v589
        %913 = vmatprep.subr.mxu0 0.0
        %914 = vmatpush1.msra.mxu0 %v590
        %915 = vmatprep.subr.mxu0 0.0
        %916 = vmatpush1.msra.mxu0 %v591
        %917 = vmatprep.subr.mxu0 0.0
        %918 = vmatpush1.msra.mxu0 %v592
        %919 = vmatprep.subr.mxu0 0.0
        %920 = vmatpush1.msra.mxu0 %v593
        %921 = vmatprep.subr.mxu0 0.0
        %922 = vmatpush1.msra.mxu0 %v594
        %923 = vmatprep.subr.mxu0 0.0
        %924 = vmatpush1.msra.mxu0 %v595
        %925 = vmatprep.mubr.f32.mxu0 %v832
        %926 = vmatmul.mubr.f32.gmra.mrb[0].mxu0 %v831
        %v927 = vpop.f32.mrb[0].mxu0
        %v928 = vadd.f32 0.0, %v927
        %v929 = vpop.f32.mrb[0].mxu0
        %930 = vmatprep.mubr.f32.mxu0 %v834
        %931 = vmatmul.mubr.f32.gmra.mrb[0].mxu0 %v833
        %v932 = vpop.f32.mrb[0].mxu0
        %v933 = vadd.f32 0.0, %v932
        %v934 = vpop.f32.mrb[0].mxu0
        %935 = vmatprep.mubr.f32.mxu0 %v836
        %936 = vmatmul.mubr.f32.gmra.mrb[0].mxu0 %v835
        %v937 = vpop.f32.mrb[0].mxu0
        %v938 = vadd.f32 0.0, %v937
        %v939 = vpop.f32.mrb[0].mxu0
        %940 = vmatprep.mubr.f32.mxu0 %v838
        %941 = vmatmul.mubr.f32.gmra.mrb[0].mxu0 %v837
        %v942 = vpop.f32.mrb[0].mxu0
        %v943 = vadd.f32 0.0, %v942
        %v944 = vpop.f32.mrb[0].mxu0
        %945 = vmatprep.mubr.f32.mxu0 %v840
        %946 = vmatmul.mubr.f32.gmra.mrb[0].mxu0 %v839
        %v947 = vpop.f32.mrb[0].mxu0
        %v948 = vadd.f32 0.0, %v947
        %v949 = vpop.f32.mrb[0].mxu0
        %950 = vmatprep.mubr.f32.mxu0 %v842
        %951 = vmatmul.mubr.f32.gmra.mrb[0].mxu0 %v841
        %v952 = vpop.f32.mrb[0].mxu0
        %v953 = vadd.f32 0.0, %v952
        %v954 = vpop.f32.mrb[0].mxu0
        %955 = vmatprep.mubr.f32.mxu0 %v844
        %956 = vmatmul.mubr.f32.gmra.mrb[0].mxu0 %v843
        %v957 = vpop.f32.mrb[0].mxu0
        %v958 = vadd.f32 0.0, %v957
        %v959 = vpop.f32.mrb[0].mxu0
        %960 = vmatprep.mubr.f32.mxu0 %v846
        %961 = vmatmul.mubr.f32.gmra.mrb[0].mxu0 %v845
        %v962 = vpop.f32.mrb[0].mxu0
        %v963 = vadd.f32 0.0, %v962
        %v964 = vpop.f32.mrb[0].mxu0
        %965 = vmatprep.mubr.f32.mxu0 %v848
        %966 = vmatmul.mubr.f32.gmra.mrb[0].mxu0 %v847
        %v967 = vpop.f32.mrb[0].mxu0
        %v968 = vadd.f32 0.0, %v967
        %v969 = vpop.f32.mrb[0].mxu0
        %970 = vmatprep.mubr.f32.mxu0 %v850
        %971 = vmatmul.mubr.f32.gmra.mrb[0].mxu0 %v849
        %v972 = vpop.f32.mrb[0].mxu0
        %v973 = vadd.f32 0.0, %v972
        %v974 = vpop.f32.mrb[0].mxu0
        %975 = vmatprep.mubr.f32.mxu0 %v852
        %976 = vmatmul.mubr.f32.gmra.mrb[0].mxu0 %v851
        %v977 = vpop.f32.mrb[0].mxu0
        %v978 = vadd.f32 0.0, %v977
        %v979 = vpop.f32.mrb[0].mxu0
        %980 = vmatprep.mubr.f32.mxu0 %v854
        %981 = vmatmul.mubr.f32.gmra.mrb[0].mxu0 %v853
        %v982 = vpop.f32.mrb[0].mxu0
        %v983 = vadd.f32 0.0, %v982
        %v984 = vpop.f32.mrb[0].mxu0
        %985 = vmatprep.mubr.f32.mxu0 %v856
        %986 = vmatmul.mubr.f32.gmra.mrb[0].mxu0 %v855
        %v987 = vpop.f32.mrb[0].mxu0
        %v988 = vadd.f32 0.0, %v987
        %v989 = vpop.f32.mrb[0].mxu0
        %990 = vmatprep.mubr.f32.mxu0 %v858
        %991 = vmatmul.mubr.f32.gmra.mrb[0].mxu0 %v857
        %v992 = vpop.f32.mrb[0].mxu0
        %v993 = vadd.f32 0.0, %v992
        %v994 = vpop.f32.mrb[0].mxu0
        %995 = vmatprep.mubr.f32.mxu0 %v860
        %996 = vmatmul.mubr.f32.gmra.mrb[0].mxu0 %v859
        %v997 = vpop.f32.mrb[0].mxu0
        %v998 = vadd.f32 0.0, %v997
        %v999 = vpop.f32.mrb[0].mxu0
        %1000 = vdwg.mxu0
        %s1001 = scalar_lea.vmem %s2, 512
        %v1002 = vld [vmem:[%s1001] sm:$0xff]
        %v1003 = vld [vmem:[%s1001 + $0x8] sm:$0xff]
        %v1004 = vld [vmem:[%s1001 + $0x10] sm:$0xff]
        %v1005 = vld [vmem:[%s1001 + $0x18] sm:$0xff]
        %v1006 = vld [vmem:[%s1001 + $0x20] sm:$0xff]
        %v1007 = vld [vmem:[%s1001 + $0x28] sm:$0xff]
        %v1008 = vld [vmem:[%s1001 + $0x30] sm:$0xff]
        %v1009 = vld [vmem:[%s1001 + $0x38] sm:$0xff]
        %v1010 = vld [vmem:[%s1001 + $0x40] sm:$0xff]
        %v1011 = vld [vmem:[%s1001 + $0x48] sm:$0xff]
        %v1012 = vld [vmem:[%s1001 + $0x50] sm:$0xff]
        %v1013 = vld [vmem:[%s1001 + $0x58] sm:$0xff]
        %v1014 = vld [vmem:[%s1001 + $0x60] sm:$0xff]
        %v1015 = vld [vmem:[%s1001 + $0x68] sm:$0xff]
        %v1016 = vld [vmem:[%s1001 + $0x70] sm:$0xff]
        %v1017 = vld [vmem:[%s1001 + $0x78] sm:$0xff]
        %v1018 = vld [vmem:[%s1001 + $0x80] sm:$0xff]
        %v1019 = vld [vmem:[%s1001 + $0x88] sm:$0xff]
        %v1020 = vld [vmem:[%s1001 + $0x90] sm:$0xff]
        %v1021 = vld [vmem:[%s1001 + $0x98] sm:$0xff]
        %v1022 = vld [vmem:[%s1001 + $0xa0] sm:$0xff]
        %v1023 = vld [vmem:[%s1001 + $0xa8] sm:$0xff]
        %v1024 = vld [vmem:[%s1001 + $0xb0] sm:$0xff]
        %v1025 = vld [vmem:[%s1001 + $0xb8] sm:$0xff]
        %v1026 = vld [vmem:[%s1001 + $0xc0] sm:$0xff]
        %v1027 = vld [vmem:[%s1001 + $0xc8] sm:$0xff]
        %v1028 = vld [vmem:[%s1001 + $0xd0] sm:$0xff]
        %v1029 = vld [vmem:[%s1001 + $0xd8] sm:$0xff]
        %v1030 = vld [vmem:[%s1001 + $0xe0] sm:$0xff]
        %v1031 = vld [vmem:[%s1001 + $0xe8] sm:$0xff]
        %v1032 = vld [vmem:[%s1001 + $0xf0] sm:$0xff]
        %v1033 = vld [vmem:[%s1001 + $0xf8] sm:$0xff]
        %v1034 = vld [vmem:[%s1001 + $0x100] sm:$0xff]
        %v1035 = vld [vmem:[%s1001 + $0x108] sm:$0xff]
        %v1036 = vld [vmem:[%s1001 + $0x110] sm:$0xff]
        %v1037 = vld [vmem:[%s1001 + $0x118] sm:$0xff]
        %v1038 = vld [vmem:[%s1001 + $0x120] sm:$0xff]
        %v1039 = vld [vmem:[%s1001 + $0x128] sm:$0xff]
        %v1040 = vld [vmem:[%s1001 + $0x130] sm:$0xff]
        %v1041 = vld [vmem:[%s1001 + $0x138] sm:$0xff]
        %v1042 = vld [vmem:[%s1001 + $0x140] sm:$0xff]
        %v1043 = vld [vmem:[%s1001 + $0x148] sm:$0xff]
        %v1044 = vld [vmem:[%s1001 + $0x150] sm:$0xff]
        %v1045 = vld [vmem:[%s1001 + $0x158] sm:$0xff]
        %v1046 = vld [vmem:[%s1001 + $0x160] sm:$0xff]
        %v1047 = vld [vmem:[%s1001 + $0x168] sm:$0xff]
        %v1048 = vld [vmem:[%s1001 + $0x170] sm:$0xff]
        %v1049 = vld [vmem:[%s1001 + $0x178] sm:$0xff]
        %v1050 = vld [vmem:[%s1001 + $0x180] sm:$0xff]
        %v1051 = vld [vmem:[%s1001 + $0x188] sm:$0xff]
        %v1052 = vld [vmem:[%s1001 + $0x190] sm:$0xff]
        %v1053 = vld [vmem:[%s1001 + $0x198] sm:$0xff]
        %v1054 = vld [vmem:[%s1001 + $0x1a0] sm:$0xff]
        %v1055 = vld [vmem:[%s1001 + $0x1a8] sm:$0xff]
        %v1056 = vld [vmem:[%s1001 + $0x1b0] sm:$0xff]
        %v1057 = vld [vmem:[%s1001 + $0x1b8] sm:$0xff]
        %v1058 = vld [vmem:[%s1001 + $0x1c0] sm:$0xff]
        %v1059 = vld [vmem:[%s1001 + $0x1c8] sm:$0xff]
        %v1060 = vld [vmem:[%s1001 + $0x1d0] sm:$0xff]
        %v1061 = vld [vmem:[%s1001 + $0x1d8] sm:$0xff]
        %v1062 = vld [vmem:[%s1001 + $0x1e0] sm:$0xff]
        %v1063 = vld [vmem:[%s1001 + $0x1e8] sm:$0xff]
        %v1064 = vld [vmem:[%s1001 + $0x1f0] sm:$0xff]
        %v1065 = vld [vmem:[%s1001 + $0x1f8] sm:$0xff]
        %1066 = vmatprep.subr.mxu0 %v1003
        %1067 = vmatpush1.msra.mxu0 %v1002
        %1068 = vmatprep.subr.mxu0 %v1007
        %1069 = vmatpush1.msra.mxu0 %v1006
        %1070 = vmatprep.subr.mxu0 %v1011
        %1071 = vmatpush1.msra.mxu0 %v1010
        %1072 = vmatprep.subr.mxu0 %v1015
        %1073 = vmatpush1.msra.mxu0 %v1014
        %1074 = vmatprep.subr.mxu0 %v1019
        %1075 = vmatpush1.msra.mxu0 %v1018
        %1076 = vmatprep.subr.mxu0 %v1023
        %1077 = vmatpush1.msra.mxu0 %v1022
        %1078 = vmatprep.subr.mxu0 %v1027
        %1079 = vmatpush1.msra.mxu0 %v1026
        %1080 = vmatprep.subr.mxu0 %v1031
        %1081 = vmatpush1.msra.mxu0 %v1030
        %1082 = vmatprep.subr.mxu0 %v1035
        %1083 = vmatpush1.msra.mxu0 %v1034
        %1084 = vmatprep.subr.mxu0 %v1039
        %1085 = vmatpush1.msra.mxu0 %v1038
        %1086 = vmatprep.subr.mxu0 %v1043
        %1087 = vmatpush1.msra.mxu0 %v1042
        %1088 = vmatprep.subr.mxu0 %v1047
        %1089 = vmatpush1.msra.mxu0 %v1046
        %1090 = vmatprep.subr.mxu0 %v1051
        %1091 = vmatpush1.msra.mxu0 %v1050
        %1092 = vmatprep.subr.mxu0 %v1055
        %1093 = vmatpush1.msra.mxu0 %v1054
        %1094 = vmatprep.subr.mxu0 %v1059
        %1095 = vmatpush1.msra.mxu0 %v1058
        %1096 = vmatprep.subr.mxu0 %v1063
        %1097 = vmatpush1.msra.mxu0 %v1062
        %1098 = vmatprep.subr.mxu0 0.0
        %1099 = vmatpush1.msra.mxu0 0.0
        %1100 = vmatprep.subr.mxu0 0.0
        %1101 = vmatpush1.msra.mxu0 0.0
        %1102 = vmatprep.subr.mxu0 0.0
        %1103 = vmatpush1.msra.mxu0 0.0
        %1104 = vmatprep.subr.mxu0 0.0
        %1105 = vmatpush1.msra.mxu0 0.0
        %1106 = vmatprep.subr.mxu0 0.0
        %1107 = vmatpush1.msra.mxu0 0.0
        %1108 = vmatprep.subr.mxu0 0.0
        %1109 = vmatpush1.msra.mxu0 0.0
        %1110 = vmatprep.subr.mxu0 0.0
        %1111 = vmatpush1.msra.mxu0 0.0
        %1112 = vmatprep.subr.mxu0 0.0
        %1113 = vmatpush1.msra.mxu0 0.0
        %1114 = vmatprep.subr.mxu0 0.0
        %1115 = vmatpush1.msra.mxu0 0.0
        %1116 = vmatprep.subr.mxu0 0.0
        %1117 = vmatpush1.msra.mxu0 0.0
        %1118 = vmatprep.subr.mxu0 0.0
        %1119 = vmatpush1.msra.mxu0 0.0
        %1120 = vmatprep.subr.mxu0 0.0
        %1121 = vmatpush1.msra.mxu0 0.0
        %1122 = vmatprep.subr.mxu0 0.0
        %1123 = vmatpush1.msra.mxu0 0.0
        %1124 = vmatprep.subr.mxu0 0.0
        %1125 = vmatpush1.msra.mxu0 0.0
        %1126 = vmatprep.subr.mxu0 0.0
        %1127 = vmatpush1.msra.mxu0 0.0
        %1128 = vmatprep.subr.mxu0 0.0
        %1129 = vmatpush1.msra.mxu0 0.0
        %1130 = vmatprep.mubr.f32.mxu0 0.0
        %1131 = vmatmul.mubr.f32.gmra.mrb[0].mxu0 %v928
        %v1132 = vpop.f32.mrb[0].mxu0
        %v1133 = vadd.f32 0.0, %v1132
        %v1134 = vpop.f32.mrb[0].mxu0
        %v1135 = vadd.f32 0.0, %v1134
        %1136 = vmatprep.mubr.f32.mxu0 0.0
        %1137 = vmatmul.mubr.f32.gmra.mrb[0].mxu0 %v933
        %v1138 = vpop.f32.mrb[0].mxu0
        %v1139 = vadd.f32 0.0, %v1138
        %v1140 = vpop.f32.mrb[0].mxu0
        %v1141 = vadd.f32 0.0, %v1140
        %1142 = vmatprep.mubr.f32.mxu0 0.0
        %1143 = vmatmul.mubr.f32.gmra.mrb[0].mxu0 %v938
        %v1144 = vpop.f32.mrb[0].mxu0
        %v1145 = vadd.f32 0.0, %v1144
        %v1146 = vpop.f32.mrb[0].mxu0
        %v1147 = vadd.f32 0.0, %v1146
        %1148 = vmatprep.mubr.f32.mxu0 0.0
        %1149 = vmatmul.mubr.f32.gmra.mrb[0].mxu0 %v943
        %v1150 = vpop.f32.mrb[0].mxu0
        %v1151 = vadd.f32 0.0, %v1150
        %v1152 = vpop.f32.mrb[0].mxu0
        %v1153 = vadd.f32 0.0, %v1152
        %1154 = vmatprep.mubr.f32.mxu0 0.0
        %1155 = vmatmul.mubr.f32.gmra.mrb[0].mxu0 %v948
        %v1156 = vpop.f32.mrb[0].mxu0
        %v1157 = vadd.f32 0.0, %v1156
        %v1158 = vpop.f32.mrb[0].mxu0
        %v1159 = vadd.f32 0.0, %v1158
        %1160 = vmatprep.mubr.f32.mxu0 0.0
        %1161 = vmatmul.mubr.f32.gmra.mrb[0].mxu0 %v953
        %v1162 = vpop.f32.mrb[0].mxu0
        %v1163 = vadd.f32 0.0, %v1162
        %v1164 = vpop.f32.mrb[0].mxu0
        %v1165 = vadd.f32 0.0, %v1164
        %1166 = vmatprep.mubr.f32.mxu0 0.0
        %1167 = vmatmul.mubr.f32.gmra.mrb[0].mxu0 %v958
        %v1168 = vpop.f32.mrb[0].mxu0
        %v1169 = vadd.f32 0.0, %v1168
        %v1170 = vpop.f32.mrb[0].mxu0
        %v1171 = vadd.f32 0.0, %v1170
        %1172 = vmatprep.mubr.f32.mxu0 0.0
        %1173 = vmatmul.mubr.f32.gmra.mrb[0].mxu0 %v963
        %v1174 = vpop.f32.mrb[0].mxu0
        %v1175 = vadd.f32 0.0, %v1174
        %v1176 = vpop.f32.mrb[0].mxu0
        %v1177 = vadd.f32 0.0, %v1176
        %1178 = vmatprep.mubr.f32.mxu0 0.0
        %1179 = vmatmul.mubr.f32.gmra.mrb[0].mxu0 %v968
        %v1180 = vpop.f32.mrb[0].mxu0
        %v1181 = vadd.f32 0.0, %v1180
        %v1182 = vpop.f32.mrb[0].mxu0
        %v1183 = vadd.f32 0.0, %v1182
        %1184 = vmatprep.mubr.f32.mxu0 0.0
        %1185 = vmatmul.mubr.f32.gmra.mrb[0].mxu0 %v973
        %v1186 = vpop.f32.mrb[0].mxu0
        %v1187 = vadd.f32 0.0, %v1186
        %v1188 = vpop.f32.mrb[0].mxu0
        %v1189 = vadd.f32 0.0, %v1188
        %1190 = vmatprep.mubr.f32.mxu0 0.0
        %1191 = vmatmul.mubr.f32.gmra.mrb[0].mxu0 %v978
        %v1192 = vpop.f32.mrb[0].mxu0
        %v1193 = vadd.f32 0.0, %v1192
        %v1194 = vpop.f32.mrb[0].mxu0
        %v1195 = vadd.f32 0.0, %v1194
        %1196 = vmatprep.mubr.f32.mxu0 0.0
        %1197 = vmatmul.mubr.f32.gmra.mrb[0].mxu0 %v983
        %v1198 = vpop.f32.mrb[0].mxu0
        %v1199 = vadd.f32 0.0, %v1198
        %v1200 = vpop.f32.mrb[0].mxu0
        %v1201 = vadd.f32 0.0, %v1200
        %1202 = vmatprep.mubr.f32.mxu0 0.0
        %1203 = vmatmul.mubr.f32.gmra.mrb[0].mxu0 %v988
        %v1204 = vpop.f32.mrb[0].mxu0
        %v1205 = vadd.f32 0.0, %v1204
        %v1206 = vpop.f32.mrb[0].mxu0
        %v1207 = vadd.f32 0.0, %v1206
        %1208 = vmatprep.mubr.f32.mxu0 0.0
        %1209 = vmatmul.mubr.f32.gmra.mrb[0].mxu0 %v993
        %v1210 = vpop.f32.mrb[0].mxu0
        %v1211 = vadd.f32 0.0, %v1210
        %v1212 = vpop.f32.mrb[0].mxu0
        %v1213 = vadd.f32 0.0, %v1212
        %1214 = vmatprep.mubr.f32.mxu0 0.0
        %1215 = vmatmul.mubr.f32.gmra.mrb[0].mxu0 %v998
        %v1216 = vpop.f32.mrb[0].mxu0
        %v1217 = vadd.f32 0.0, %v1216
        %v1218 = vpop.f32.mrb[0].mxu0
        %v1219 = vadd.f32 0.0, %v1218
        %1220 = vdwg.mxu0
        %1221 = vmatprep.subr.mxu0 %v1005
        %1222 = vmatpush1.msra.mxu0 %v1004
        %1223 = vmatprep.subr.mxu0 %v1009
        %1224 = vmatpush1.msra.mxu0 %v1008
        %1225 = vmatprep.subr.mxu0 %v1013
        %1226 = vmatpush1.msra.mxu0 %v1012
        %1227 = vmatprep.subr.mxu0 %v1017
        %1228 = vmatpush1.msra.mxu0 %v1016
        %1229 = vmatprep.subr.mxu0 %v1021
        %1230 = vmatpush1.msra.mxu0 %v1020
        %1231 = vmatprep.subr.mxu0 %v1025
        %1232 = vmatpush1.msra.mxu0 %v1024
        %1233 = vmatprep.subr.mxu0 %v1029
        %1234 = vmatpush1.msra.mxu0 %v1028
        %1235 = vmatprep.subr.mxu0 %v1033
        %1236 = vmatpush1.msra.mxu0 %v1032
        %1237 = vmatprep.subr.mxu0 %v1037
        %1238 = vmatpush1.msra.mxu0 %v1036
        %1239 = vmatprep.subr.mxu0 %v1041
        %1240 = vmatpush1.msra.mxu0 %v1040
        %1241 = vmatprep.subr.mxu0 %v1045
        %1242 = vmatpush1.msra.mxu0 %v1044
        %1243 = vmatprep.subr.mxu0 %v1049
        %1244 = vmatpush1.msra.mxu0 %v1048
        %1245 = vmatprep.subr.mxu0 %v1053
        %1246 = vmatpush1.msra.mxu0 %v1052
        %1247 = vmatprep.subr.mxu0 %v1057
        %1248 = vmatpush1.msra.mxu0 %v1056
        %1249 = vmatprep.subr.mxu0 %v1061
        %1250 = vmatpush1.msra.mxu0 %v1060
        %1251 = vmatprep.subr.mxu0 %v1065
        %1252 = vmatpush1.msra.mxu0 %v1064
        %1253 = vmatprep.subr.mxu0 0.0
        %1254 = vmatpush1.msra.mxu0 0.0
        %1255 = vmatprep.subr.mxu0 0.0
        %1256 = vmatpush1.msra.mxu0 0.0
        %1257 = vmatprep.subr.mxu0 0.0
        %1258 = vmatpush1.msra.mxu0 0.0
        %1259 = vmatprep.subr.mxu0 0.0
        %1260 = vmatpush1.msra.mxu0 0.0
        %1261 = vmatprep.subr.mxu0 0.0
        %1262 = vmatpush1.msra.mxu0 0.0
        %1263 = vmatprep.subr.mxu0 0.0
        %1264 = vmatpush1.msra.mxu0 0.0
        %1265 = vmatprep.subr.mxu0 0.0
        %1266 = vmatpush1.msra.mxu0 0.0
        %1267 = vmatprep.subr.mxu0 0.0
        %1268 = vmatpush1.msra.mxu0 0.0
        %1269 = vmatprep.subr.mxu0 0.0
        %1270 = vmatpush1.msra.mxu0 0.0
        %1271 = vmatprep.subr.mxu0 0.0
        %1272 = vmatpush1.msra.mxu0 0.0
        %1273 = vmatprep.subr.mxu0 0.0
        %1274 = vmatpush1.msra.mxu0 0.0
        %1275 = vmatprep.subr.mxu0 0.0
        %1276 = vmatpush1.msra.mxu0 0.0
        %1277 = vmatprep.subr.mxu0 0.0
        %1278 = vmatpush1.msra.mxu0 0.0
        %1279 = vmatprep.subr.mxu0 0.0
        %1280 = vmatpush1.msra.mxu0 0.0
        %1281 = vmatprep.subr.mxu0 0.0
        %1282 = vmatpush1.msra.mxu0 0.0
        %1283 = vmatprep.subr.mxu0 0.0
        %1284 = vmatpush1.msra.mxu0 0.0
        %1285 = vmatprep.mubr.f32.mxu0 0.0
        %1286 = vmatmul.mubr.f32.gmra.mrb[0].mxu0 %v928
        %v1287 = vpop.f32.mrb[0].mxu0
        %v1288 = vadd.f32 0.0, %v1287
        %v1289 = vpop.f32.mrb[0].mxu0
        %v1290 = vadd.f32 0.0, %v1289
        %1291 = vmatprep.mubr.f32.mxu0 0.0
        %1292 = vmatmul.mubr.f32.gmra.mrb[0].mxu0 %v933
        %v1293 = vpop.f32.mrb[0].mxu0
        %v1294 = vadd.f32 0.0, %v1293
        %v1295 = vpop.f32.mrb[0].mxu0
        %v1296 = vadd.f32 0.0, %v1295
        %1297 = vmatprep.mubr.f32.mxu0 0.0
        %1298 = vmatmul.mubr.f32.gmra.mrb[0].mxu0 %v938
        %v1299 = vpop.f32.mrb[0].mxu0
        %v1300 = vadd.f32 0.0, %v1299
        %v1301 = vpop.f32.mrb[0].mxu0
        %v1302 = vadd.f32 0.0, %v1301
        %1303 = vmatprep.mubr.f32.mxu0 0.0
        %1304 = vmatmul.mubr.f32.gmra.mrb[0].mxu0 %v943
        %v1305 = vpop.f32.mrb[0].mxu0
        %v1306 = vadd.f32 0.0, %v1305
        %v1307 = vpop.f32.mrb[0].mxu0
        %v1308 = vadd.f32 0.0, %v1307
        %1309 = vmatprep.mubr.f32.mxu0 0.0
        %1310 = vmatmul.mubr.f32.gmra.mrb[0].mxu0 %v948
        %v1311 = vpop.f32.mrb[0].mxu0
        %v1312 = vadd.f32 0.0, %v1311
        %v1313 = vpop.f32.mrb[0].mxu0
        %v1314 = vadd.f32 0.0, %v1313
        %1315 = vmatprep.mubr.f32.mxu0 0.0
        %1316 = vmatmul.mubr.f32.gmra.mrb[0].mxu0 %v953
        %v1317 = vpop.f32.mrb[0].mxu0
        %v1318 = vadd.f32 0.0, %v1317
        %v1319 = vpop.f32.mrb[0].mxu0
        %v1320 = vadd.f32 0.0, %v1319
        %1321 = vmatprep.mubr.f32.mxu0 0.0
        %1322 = vmatmul.mubr.f32.gmra.mrb[0].mxu0 %v958
        %v1323 = vpop.f32.mrb[0].mxu0
        %v1324 = vadd.f32 0.0, %v1323
        %v1325 = vpop.f32.mrb[0].mxu0
        %v1326 = vadd.f32 0.0, %v1325
        %1327 = vmatprep.mubr.f32.mxu0 0.0
        %1328 = vmatmul.mubr.f32.gmra.mrb[0].mxu0 %v963
        %v1329 = vpop.f32.mrb[0].mxu0
        %v1330 = vadd.f32 0.0, %v1329
        %v1331 = vpop.f32.mrb[0].mxu0
        %v1332 = vadd.f32 0.0, %v1331
        %1333 = vmatprep.mubr.f32.mxu0 0.0
        %1334 = vmatmul.mubr.f32.gmra.mrb[0].mxu0 %v968
        %v1335 = vpop.f32.mrb[0].mxu0
        %v1336 = vadd.f32 0.0, %v1335
        %v1337 = vpop.f32.mrb[0].mxu0
        %v1338 = vadd.f32 0.0, %v1337
        %1339 = vmatprep.mubr.f32.mxu0 0.0
        %1340 = vmatmul.mubr.f32.gmra.mrb[0].mxu0 %v973
        %v1341 = vpop.f32.mrb[0].mxu0
        %v1342 = vadd.f32 0.0, %v1341
        %v1343 = vpop.f32.mrb[0].mxu0
        %v1344 = vadd.f32 0.0, %v1343
        %1345 = vmatprep.mubr.f32.mxu0 0.0
        %1346 = vmatmul.mubr.f32.gmra.mrb[0].mxu0 %v978
        %v1347 = vpop.f32.mrb[0].mxu0
        %v1348 = vadd.f32 0.0, %v1347
        %v1349 = vpop.f32.mrb[0].mxu0
        %v1350 = vadd.f32 0.0, %v1349
        %1351 = vmatprep.mubr.f32.mxu0 0.0
        %1352 = vmatmul.mubr.f32.gmra.mrb[0].mxu0 %v983
        %v1353 = vpop.f32.mrb[0].mxu0
        %v1354 = vadd.f32 0.0, %v1353
        %v1355 = vpop.f32.mrb[0].mxu0
        %v1356 = vadd.f32 0.0, %v1355
        %1357 = vmatprep.mubr.f32.mxu0 0.0
        %1358 = vmatmul.mubr.f32.gmra.mrb[0].mxu0 %v988
        %v1359 = vpop.f32.mrb[0].mxu0
        %v1360 = vadd.f32 0.0, %v1359
        %v1361 = vpop.f32.mrb[0].mxu0
        %v1362 = vadd.f32 0.0, %v1361
        %1363 = vmatprep.mubr.f32.mxu0 0.0
        %1364 = vmatmul.mubr.f32.gmra.mrb[0].mxu0 %v993
        %v1365 = vpop.f32.mrb[0].mxu0
        %v1366 = vadd.f32 0.0, %v1365
        %v1367 = vpop.f32.mrb[0].mxu0
        %v1368 = vadd.f32 0.0, %v1367
        %1369 = vmatprep.mubr.f32.mxu0 0.0
        %1370 = vmatmul.mubr.f32.gmra.mrb[0].mxu0 %v998
        %v1371 = vpop.f32.mrb[0].mxu0
        %v1372 = vadd.f32 0.0, %v1371
        %v1373 = vpop.f32.mrb[0].mxu0
        %v1374 = vadd.f32 0.0, %v1373
        %1375 = vdwg.mxu0
        %1376 = vmatprep.subr.mxu0 %v767
        %1377 = vmatpush1.msra.mxu0 %v766
        %1378 = vmatprep.subr.mxu0 %v771
        %1379 = vmatpush1.msra.mxu0 %v770
        %1380 = vmatprep.subr.mxu0 %v775
        %1381 = vmatpush1.msra.mxu0 %v774
        %1382 = vmatprep.subr.mxu0 %v779
        %1383 = vmatpush1.msra.mxu0 %v778
        %1384 = vmatprep.subr.mxu0 %v783
        %1385 = vmatpush1.msra.mxu0 %v782
        %1386 = vmatprep.subr.mxu0 %v787
        %1387 = vmatpush1.msra.mxu0 %v786
        %1388 = vmatprep.subr.mxu0 %v791
        %1389 = vmatpush1.msra.mxu0 %v790
        %1390 = vmatprep.subr.mxu0 %v795
        %1391 = vmatpush1.msra.mxu0 %v794
        %1392 = vmatprep.subr.mxu0 %v799
        %1393 = vmatpush1.msra.mxu0 %v798
        %1394 = vmatprep.subr.mxu0 %v803
        %1395 = vmatpush1.msra.mxu0 %v802
        %1396 = vmatprep.subr.mxu0 %v807
        %1397 = vmatpush1.msra.mxu0 %v806
        %1398 = vmatprep.subr.mxu0 %v811
        %1399 = vmatpush1.msra.mxu0 %v810
        %1400 = vmatprep.subr.mxu0 %v815
        %1401 = vmatpush1.msra.mxu0 %v814
        %1402 = vmatprep.subr.mxu0 %v819
        %1403 = vmatpush1.msra.mxu0 %v818
        %1404 = vmatprep.subr.mxu0 %v823
        %1405 = vmatpush1.msra.mxu0 %v822
        %1406 = vmatprep.subr.mxu0 %v827
        %1407 = vmatpush1.msra.mxu0 %v826
        %1408 = vmatprep.subr.mxu0 0.0
        %1409 = vmatpush1.msra.mxu0 0.0
        %1410 = vmatprep.subr.mxu0 0.0
        %1411 = vmatpush1.msra.mxu0 0.0
        %1412 = vmatprep.subr.mxu0 0.0
        %1413 = vmatpush1.msra.mxu0 0.0
        %1414 = vmatprep.subr.mxu0 0.0
        %1415 = vmatpush1.msra.mxu0 0.0
        %1416 = vmatprep.subr.mxu0 0.0
        %1417 = vmatpush1.msra.mxu0 0.0
        %1418 = vmatprep.subr.mxu0 0.0
        %1419 = vmatpush1.msra.mxu0 0.0
        %1420 = vmatprep.subr.mxu0 0.0
        %1421 = vmatpush1.msra.mxu0 0.0
        %1422 = vmatprep.subr.mxu0 0.0
        %1423 = vmatpush1.msra.mxu0 0.0
        %1424 = vmatprep.subr.mxu0 0.0
        %1425 = vmatpush1.msra.mxu0 0.0
        %1426 = vmatprep.subr.mxu0 0.0
        %1427 = vmatpush1.msra.mxu0 0.0
        %1428 = vmatprep.subr.mxu0 0.0
        %1429 = vmatpush1.msra.mxu0 0.0
        %1430 = vmatprep.subr.mxu0 0.0
        %1431 = vmatpush1.msra.mxu0 0.0
        %1432 = vmatprep.subr.mxu0 0.0
        %1433 = vmatpush1.msra.mxu0 0.0
        %1434 = vmatprep.subr.mxu0 0.0
        %1435 = vmatpush1.msra.mxu0 0.0
        %1436 = vmatprep.subr.mxu0 0.0
        %1437 = vmatpush1.msra.mxu0 0.0
        %1438 = vmatprep.subr.mxu0 0.0
        %1439 = vmatpush1.msra.mxu0 0.0
        %1440 = vmatprep.mubr.f32.mxu0 0.0
        %1441 = vmatmul.mubr.f32.gmra.mrb[0].mxu0 %v693
        %v1442 = vpop.f32.mrb[0].mxu0
        %v1443 = vadd.f32 %v1133, %v1442
        %v1444 = vpop.f32.mrb[0].mxu0
        %v1445 = vadd.f32 %v1135, %v1444
        %1446 = vmatprep.mubr.f32.mxu0 0.0
        %1447 = vmatmul.mubr.f32.gmra.mrb[0].mxu0 %v698
        %v1448 = vpop.f32.mrb[0].mxu0
        %v1449 = vadd.f32 %v1139, %v1448
        %v1450 = vpop.f32.mrb[0].mxu0
        %v1451 = vadd.f32 %v1141, %v1450
        %1452 = vmatprep.mubr.f32.mxu0 0.0
        %1453 = vmatmul.mubr.f32.gmra.mrb[0].mxu0 %v703
        %v1454 = vpop.f32.mrb[0].mxu0
        %v1455 = vadd.f32 %v1145, %v1454
        %v1456 = vpop.f32.mrb[0].mxu0
        %v1457 = vadd.f32 %v1147, %v1456
        %1458 = vmatprep.mubr.f32.mxu0 0.0
        %1459 = vmatmul.mubr.f32.gmra.mrb[0].mxu0 %v708
        %v1460 = vpop.f32.mrb[0].mxu0
        %v1461 = vadd.f32 %v1151, %v1460
        %v1462 = vpop.f32.mrb[0].mxu0
        %v1463 = vadd.f32 %v1153, %v1462
        %1464 = vmatprep.mubr.f32.mxu0 0.0
        %1465 = vmatmul.mubr.f32.gmra.mrb[0].mxu0 %v713
        %v1466 = vpop.f32.mrb[0].mxu0
        %v1467 = vadd.f32 %v1157, %v1466
        %v1468 = vpop.f32.mrb[0].mxu0
        %v1469 = vadd.f32 %v1159, %v1468
        %1470 = vmatprep.mubr.f32.mxu0 0.0
        %1471 = vmatmul.mubr.f32.gmra.mrb[0].mxu0 %v718
        %v1472 = vpop.f32.mrb[0].mxu0
        %v1473 = vadd.f32 %v1163, %v1472
        %v1474 = vpop.f32.mrb[0].mxu0
        %v1475 = vadd.f32 %v1165, %v1474
        %1476 = vmatprep.mubr.f32.mxu0 0.0
        %1477 = vmatmul.mubr.f32.gmra.mrb[0].mxu0 %v723
        %v1478 = vpop.f32.mrb[0].mxu0
        %v1479 = vadd.f32 %v1169, %v1478
        %v1480 = vpop.f32.mrb[0].mxu0
        %v1481 = vadd.f32 %v1171, %v1480
        %1482 = vmatprep.mubr.f32.mxu0 0.0
        %1483 = vmatmul.mubr.f32.gmra.mrb[0].mxu0 %v728
        %v1484 = vpop.f32.mrb[0].mxu0
        %v1485 = vadd.f32 %v1175, %v1484
        %v1486 = vpop.f32.mrb[0].mxu0
        %v1487 = vadd.f32 %v1177, %v1486
        %1488 = vmatprep.mubr.f32.mxu0 0.0
        %1489 = vmatmul.mubr.f32.gmra.mrb[0].mxu0 %v733
        %v1490 = vpop.f32.mrb[0].mxu0
        %v1491 = vadd.f32 %v1181, %v1490
        %v1492 = vpop.f32.mrb[0].mxu0
        %v1493 = vadd.f32 %v1183, %v1492
        %1494 = vmatprep.mubr.f32.mxu0 0.0
        %1495 = vmatmul.mubr.f32.gmra.mrb[0].mxu0 %v738
        %v1496 = vpop.f32.mrb[0].mxu0
        %v1497 = vadd.f32 %v1187, %v1496
        %v1498 = vpop.f32.mrb[0].mxu0
        %v1499 = vadd.f32 %v1189, %v1498
        %1500 = vmatprep.mubr.f32.mxu0 0.0
        %1501 = vmatmul.mubr.f32.gmra.mrb[0].mxu0 %v743
        %v1502 = vpop.f32.mrb[0].mxu0
        %v1503 = vadd.f32 %v1193, %v1502
        %v1504 = vpop.f32.mrb[0].mxu0
        %v1505 = vadd.f32 %v1195, %v1504
        %1506 = vmatprep.mubr.f32.mxu0 0.0
        %1507 = vmatmul.mubr.f32.gmra.mrb[0].mxu0 %v748
        %v1508 = vpop.f32.mrb[0].mxu0
        %v1509 = vadd.f32 %v1199, %v1508
        %v1510 = vpop.f32.mrb[0].mxu0
        %v1511 = vadd.f32 %v1201, %v1510
        %1512 = vmatprep.mubr.f32.mxu0 0.0
        %1513 = vmatmul.mubr.f32.gmra.mrb[0].mxu0 %v753
        %v1514 = vpop.f32.mrb[0].mxu0
        %v1515 = vadd.f32 %v1205, %v1514
        %v1516 = vpop.f32.mrb[0].mxu0
        %v1517 = vadd.f32 %v1207, %v1516
        %1518 = vmatprep.mubr.f32.mxu0 0.0
        %1519 = vmatmul.mubr.f32.gmra.mrb[0].mxu0 %v758
        %v1520 = vpop.f32.mrb[0].mxu0
        %v1521 = vadd.f32 %v1211, %v1520
        %v1522 = vpop.f32.mrb[0].mxu0
        %v1523 = vadd.f32 %v1213, %v1522
        %1524 = vmatprep.mubr.f32.mxu0 0.0
        %1525 = vmatmul.mubr.f32.gmra.mrb[0].mxu0 %v763
        %v1526 = vpop.f32.mrb[0].mxu0
        %v1527 = vadd.f32 %v1217, %v1526
        %v1528 = vpop.f32.mrb[0].mxu0
        %v1529 = vadd.f32 %v1219, %v1528
        %1530 = vdwg.mxu0
        %1531 = vmatprep.subr.mxu0 %v769
        %1532 = vmatpush1.msra.mxu0 %v768
        %1533 = vmatprep.subr.mxu0 %v773
        %1534 = vmatpush1.msra.mxu0 %v772
        %1535 = vmatprep.subr.mxu0 %v777
        %1536 = vmatpush1.msra.mxu0 %v776
        %1537 = vmatprep.subr.mxu0 %v781
        %1538 = vmatpush1.msra.mxu0 %v780
        %1539 = vmatprep.subr.mxu0 %v785
        %1540 = vmatpush1.msra.mxu0 %v784
        %1541 = vmatprep.subr.mxu0 %v789
        %1542 = vmatpush1.msra.mxu0 %v788
        %1543 = vmatprep.subr.mxu0 %v793
        %1544 = vmatpush1.msra.mxu0 %v792
        %1545 = vmatprep.subr.mxu0 %v797
        %1546 = vmatpush1.msra.mxu0 %v796
        %1547 = vmatprep.subr.mxu0 %v801
        %1548 = vmatpush1.msra.mxu0 %v800
        %1549 = vmatprep.subr.mxu0 %v805
        %1550 = vmatpush1.msra.mxu0 %v804
        %1551 = vmatprep.subr.mxu0 %v809
        %1552 = vmatpush1.msra.mxu0 %v808
        %1553 = vmatprep.subr.mxu0 %v813
        %1554 = vmatpush1.msra.mxu0 %v812
        %1555 = vmatprep.subr.mxu0 %v817
        %1556 = vmatpush1.msra.mxu0 %v816
        %1557 = vmatprep.subr.mxu0 %v821
        %1558 = vmatpush1.msra.mxu0 %v820
        %1559 = vmatprep.subr.mxu0 %v825
        %1560 = vmatpush1.msra.mxu0 %v824
        %1561 = vmatprep.subr.mxu0 %v829
        %1562 = vmatpush1.msra.mxu0 %v828
        %1563 = vmatprep.subr.mxu0 0.0
        %1564 = vmatpush1.msra.mxu0 0.0
        %1565 = vmatprep.subr.mxu0 0.0
        %1566 = vmatpush1.msra.mxu0 0.0
        %1567 = vmatprep.subr.mxu0 0.0
        %1568 = vmatpush1.msra.mxu0 0.0
        %1569 = vmatprep.subr.mxu0 0.0
        %1570 = vmatpush1.msra.mxu0 0.0
        %1571 = vmatprep.subr.mxu0 0.0
        %1572 = vmatpush1.msra.mxu0 0.0
        %1573 = vmatprep.subr.mxu0 0.0
        %1574 = vmatpush1.msra.mxu0 0.0
        %1575 = vmatprep.subr.mxu0 0.0
        %1576 = vmatpush1.msra.mxu0 0.0
        %1577 = vmatprep.subr.mxu0 0.0
        %1578 = vmatpush1.msra.mxu0 0.0
        %1579 = vmatprep.subr.mxu0 0.0
        %1580 = vmatpush1.msra.mxu0 0.0
        %1581 = vmatprep.subr.mxu0 0.0
        %1582 = vmatpush1.msra.mxu0 0.0
        %1583 = vmatprep.subr.mxu0 0.0
        %1584 = vmatpush1.msra.mxu0 0.0
        %1585 = vmatprep.subr.mxu0 0.0
        %1586 = vmatpush1.msra.mxu0 0.0
        %1587 = vmatprep.subr.mxu0 0.0
        %1588 = vmatpush1.msra.mxu0 0.0
        %1589 = vmatprep.subr.mxu0 0.0
        %1590 = vmatpush1.msra.mxu0 0.0
        %1591 = vmatprep.subr.mxu0 0.0
        %1592 = vmatpush1.msra.mxu0 0.0
        %1593 = vmatprep.subr.mxu0 0.0
        %1594 = vmatpush1.msra.mxu0 0.0
        %1595 = vmatprep.mubr.f32.mxu0 0.0
        %1596 = vmatmul.mubr.f32.gmra.mrb[0].mxu0 %v693
        %v1597 = vpop.f32.mrb[0].mxu0
        %v1598 = vadd.f32 %v1288, %v1597
        %v1599 = vpop.f32.mrb[0].mxu0
        %v1600 = vadd.f32 %v1290, %v1599
        %1601 = vmatprep.mubr.f32.mxu0 0.0
        %1602 = vmatmul.mubr.f32.gmra.mrb[0].mxu0 %v698
        %v1603 = vpop.f32.mrb[0].mxu0
        %v1604 = vadd.f32 %v1294, %v1603
        %v1605 = vpop.f32.mrb[0].mxu0
        %v1606 = vadd.f32 %v1296, %v1605
        %1607 = vmatprep.mubr.f32.mxu0 0.0
        %1608 = vmatmul.mubr.f32.gmra.mrb[0].mxu0 %v703
        %v1609 = vpop.f32.mrb[0].mxu0
        %v1610 = vadd.f32 %v1300, %v1609
        %v1611 = vpop.f32.mrb[0].mxu0
        %v1612 = vadd.f32 %v1302, %v1611
        %1613 = vmatprep.mubr.f32.mxu0 0.0
        %1614 = vmatmul.mubr.f32.gmra.mrb[0].mxu0 %v708
        %v1615 = vpop.f32.mrb[0].mxu0
        %v1616 = vadd.f32 %v1306, %v1615
        %v1617 = vpop.f32.mrb[0].mxu0
        %v1618 = vadd.f32 %v1308, %v1617
        %1619 = vmatprep.mubr.f32.mxu0 0.0
        %1620 = vmatmul.mubr.f32.gmra.mrb[0].mxu0 %v713
        %v1621 = vpop.f32.mrb[0].mxu0
        %v1622 = vadd.f32 %v1312, %v1621
        %v1623 = vpop.f32.mrb[0].mxu0
        %v1624 = vadd.f32 %v1314, %v1623
        %1625 = vmatprep.mubr.f32.mxu0 0.0
        %1626 = vmatmul.mubr.f32.gmra.mrb[0].mxu0 %v718
        %v1627 = vpop.f32.mrb[0].mxu0
        %v1628 = vadd.f32 %v1318, %v1627
        %v1629 = vpop.f32.mrb[0].mxu0
        %v1630 = vadd.f32 %v1320, %v1629
        %1631 = vmatprep.mubr.f32.mxu0 0.0
        %1632 = vmatmul.mubr.f32.gmra.mrb[0].mxu0 %v723
        %v1633 = vpop.f32.mrb[0].mxu0
        %v1634 = vadd.f32 %v1324, %v1633
        %v1635 = vpop.f32.mrb[0].mxu0
        %v1636 = vadd.f32 %v1326, %v1635
        %1637 = vmatprep.mubr.f32.mxu0 0.0
        %1638 = vmatmul.mubr.f32.gmra.mrb[0].mxu0 %v728
        %v1639 = vpop.f32.mrb[0].mxu0
        %v1640 = vadd.f32 %v1330, %v1639
        %v1641 = vpop.f32.mrb[0].mxu0
        %v1642 = vadd.f32 %v1332, %v1641
        %1643 = vmatprep.mubr.f32.mxu0 0.0
        %1644 = vmatmul.mubr.f32.gmra.mrb[0].mxu0 %v733
        %v1645 = vpop.f32.mrb[0].mxu0
        %v1646 = vadd.f32 %v1336, %v1645
        %v1647 = vpop.f32.mrb[0].mxu0
        %v1648 = vadd.f32 %v1338, %v1647
        %1649 = vmatprep.mubr.f32.mxu0 0.0
        %1650 = vmatmul.mubr.f32.gmra.mrb[0].mxu0 %v738
        %v1651 = vpop.f32.mrb[0].mxu0
        %v1652 = vadd.f32 %v1342, %v1651
        %v1653 = vpop.f32.mrb[0].mxu0
        %v1654 = vadd.f32 %v1344, %v1653
        %1655 = vmatprep.mubr.f32.mxu0 0.0
        %1656 = vmatmul.mubr.f32.gmra.mrb[0].mxu0 %v743
        %v1657 = vpop.f32.mrb[0].mxu0
        %v1658 = vadd.f32 %v1348, %v1657
        %v1659 = vpop.f32.mrb[0].mxu0
        %v1660 = vadd.f32 %v1350, %v1659
        %1661 = vmatprep.mubr.f32.mxu0 0.0
        %1662 = vmatmul.mubr.f32.gmra.mrb[0].mxu0 %v748
        %v1663 = vpop.f32.mrb[0].mxu0
        %v1664 = vadd.f32 %v1354, %v1663
        %v1665 = vpop.f32.mrb[0].mxu0
        %v1666 = vadd.f32 %v1356, %v1665
        %1667 = vmatprep.mubr.f32.mxu0 0.0
        %1668 = vmatmul.mubr.f32.gmra.mrb[0].mxu0 %v753
        %v1669 = vpop.f32.mrb[0].mxu0
        %v1670 = vadd.f32 %v1360, %v1669
        %v1671 = vpop.f32.mrb[0].mxu0
        %v1672 = vadd.f32 %v1362, %v1671
        %1673 = vmatprep.mubr.f32.mxu0 0.0
        %1674 = vmatmul.mubr.f32.gmra.mrb[0].mxu0 %v758
        %v1675 = vpop.f32.mrb[0].mxu0
        %v1676 = vadd.f32 %v1366, %v1675
        %v1677 = vpop.f32.mrb[0].mxu0
        %v1678 = vadd.f32 %v1368, %v1677
        %1679 = vmatprep.mubr.f32.mxu0 0.0
        %1680 = vmatmul.mubr.f32.gmra.mrb[0].mxu0 %v763
        %v1681 = vpop.f32.mrb[0].mxu0
        %v1682 = vadd.f32 %v1372, %v1681
        %v1683 = vpop.f32.mrb[0].mxu0
        %v1684 = vadd.f32 %v1374, %v1683
        %1685 = vdwg.mxu0
        %s1686 = scalar_lea.vmem %s1, 480
        %v1687 = vld [vmem:[%s1686] sm:$0xff]
        %v1688 = vld [vmem:[%s1686 + $0x8] sm:$0xff]
        %v1689 = vld [vmem:[%s1686 + $0x10] sm:$0xff]
        %v1690 = vld [vmem:[%s1686 + $0x18] sm:$0xff]
        %v1691 = vld [vmem:[%s1686 + $0x20] sm:$0xff]
        %v1692 = vld [vmem:[%s1686 + $0x28] sm:$0xff]
        %v1693 = vld [vmem:[%s1686 + $0x30] sm:$0xff]
        %v1694 = vld [vmem:[%s1686 + $0x38] sm:$0xff]
        %v1695 = vld [vmem:[%s1686 + $0x40] sm:$0xff]
        %v1696 = vld [vmem:[%s1686 + $0x48] sm:$0xff]
        %v1697 = vld [vmem:[%s1686 + $0x50] sm:$0xff]
        %v1698 = vld [vmem:[%s1686 + $0x58] sm:$0xff]
        %v1699 = vld [vmem:[%s1686 + $0x60] sm:$0xff]
        %v1700 = vld [vmem:[%s1686 + $0x68] sm:$0xff]
        %v1701 = vld [vmem:[%s1686 + $0x70] sm:$0xff]
        %v1702 = vld [vmem:[%s1686 + $0x78] sm:$0xff]
        %v1703 = vld [vmem:[%s1686 + $0x80] sm:$0xff]
        %v1704 = vld [vmem:[%s1686 + $0x88] sm:$0xff]
        %v1705 = vld [vmem:[%s1686 + $0x90] sm:$0xff]
        %v1706 = vld [vmem:[%s1686 + $0x98] sm:$0xff]
        %v1707 = vld [vmem:[%s1686 + $0xa0] sm:$0xff]
        %v1708 = vld [vmem:[%s1686 + $0xa8] sm:$0xff]
        %v1709 = vld [vmem:[%s1686 + $0xb0] sm:$0xff]
        %v1710 = vld [vmem:[%s1686 + $0xb8] sm:$0xff]
        %v1711 = vld [vmem:[%s1686 + $0xc0] sm:$0xff]
        %v1712 = vld [vmem:[%s1686 + $0xc8] sm:$0xff]
        %v1713 = vld [vmem:[%s1686 + $0xd0] sm:$0xff]
        %v1714 = vld [vmem:[%s1686 + $0xd8] sm:$0xff]
        %v1715 = vld [vmem:[%s1686 + $0xe0] sm:$0xff]
        %v1716 = vld [vmem:[%s1686 + $0xe8] sm:$0xff]
        %1717 = vmatprep.subr.mxu0 0.0
        %1718 = vmatpush1.msra.mxu0 %v564
        %1719 = vmatprep.subr.mxu0 0.0
        %1720 = vmatpush1.msra.mxu0 %v565
        %1721 = vmatprep.subr.mxu0 0.0
        %1722 = vmatpush1.msra.mxu0 %v566
        %1723 = vmatprep.subr.mxu0 0.0
        %1724 = vmatpush1.msra.mxu0 %v567
        %1725 = vmatprep.subr.mxu0 0.0
        %1726 = vmatpush1.msra.mxu0 %v568
        %1727 = vmatprep.subr.mxu0 0.0
        %1728 = vmatpush1.msra.mxu0 %v569
        %1729 = vmatprep.subr.mxu0 0.0
        %1730 = vmatpush1.msra.mxu0 %v570
        %1731 = vmatprep.subr.mxu0 0.0
        %1732 = vmatpush1.msra.mxu0 %v571
        %1733 = vmatprep.subr.mxu0 0.0
        %1734 = vmatpush1.msra.mxu0 %v572
        %1735 = vmatprep.subr.mxu0 0.0
        %1736 = vmatpush1.msra.mxu0 %v573
        %1737 = vmatprep.subr.mxu0 0.0
        %1738 = vmatpush1.msra.mxu0 %v574
        %1739 = vmatprep.subr.mxu0 0.0
        %1740 = vmatpush1.msra.mxu0 %v575
        %1741 = vmatprep.subr.mxu0 0.0
        %1742 = vmatpush1.msra.mxu0 %v576
        %1743 = vmatprep.subr.mxu0 0.0
        %1744 = vmatpush1.msra.mxu0 %v577
        %1745 = vmatprep.subr.mxu0 0.0
        %1746 = vmatpush1.msra.mxu0 %v578
        %1747 = vmatprep.subr.mxu0 0.0
        %1748 = vmatpush1.msra.mxu0 %v579
        %1749 = vmatprep.subr.mxu0 0.0
        %1750 = vmatpush1.msra.mxu0 %v580
        %1751 = vmatprep.subr.mxu0 0.0
        %1752 = vmatpush1.msra.mxu0 %v581
        %1753 = vmatprep.subr.mxu0 0.0
        %1754 = vmatpush1.msra.mxu0 %v582
        %1755 = vmatprep.subr.mxu0 0.0
        %1756 = vmatpush1.msra.mxu0 %v583
        %1757 = vmatprep.subr.mxu0 0.0
        %1758 = vmatpush1.msra.mxu0 %v584
        %1759 = vmatprep.subr.mxu0 0.0
        %1760 = vmatpush1.msra.mxu0 %v585
        %1761 = vmatprep.subr.mxu0 0.0
        %1762 = vmatpush1.msra.mxu0 %v586
        %1763 = vmatprep.subr.mxu0 0.0
        %1764 = vmatpush1.msra.mxu0 %v587
        %1765 = vmatprep.subr.mxu0 0.0
        %1766 = vmatpush1.msra.mxu0 %v588
        %1767 = vmatprep.subr.mxu0 0.0
        %1768 = vmatpush1.msra.mxu0 %v589
        %1769 = vmatprep.subr.mxu0 0.0
        %1770 = vmatpush1.msra.mxu0 %v590
        %1771 = vmatprep.subr.mxu0 0.0
        %1772 = vmatpush1.msra.mxu0 %v591
        %1773 = vmatprep.subr.mxu0 0.0
        %1774 = vmatpush1.msra.mxu0 %v592
        %1775 = vmatprep.subr.mxu0 0.0
        %1776 = vmatpush1.msra.mxu0 %v593
        %1777 = vmatprep.subr.mxu0 0.0
        %1778 = vmatpush1.msra.mxu0 %v594
        %1779 = vmatprep.subr.mxu0 0.0
        %1780 = vmatpush1.msra.mxu0 %v595
        %1781 = vmatprep.mubr.f32.mxu0 %v1688
        %1782 = vmatmul.mubr.f32.gmra.mrb[0].mxu0 %v1687
        %v1783 = vpop.f32.mrb[0].mxu0
        %v1784 = vadd.f32 0.0, %v1783
        %v1785 = vpop.f32.mrb[0].mxu0
        %1786 = vmatprep.mubr.f32.mxu0 %v1690
        %1787 = vmatmul.mubr.f32.gmra.mrb[0].mxu0 %v1689
        %v1788 = vpop.f32.mrb[0].mxu0
        %v1789 = vadd.f32 0.0, %v1788
        %v1790 = vpop.f32.mrb[0].mxu0
        %1791 = vmatprep.mubr.f32.mxu0 %v1692
        %1792 = vmatmul.mubr.f32.gmra.mrb[0].mxu0 %v1691
        %v1793 = vpop.f32.mrb[0].mxu0
        %v1794 = vadd.f32 0.0, %v1793
        %v1795 = vpop.f32.mrb[0].mxu0
        %1796 = vmatprep.mubr.f32.mxu0 %v1694
        %1797 = vmatmul.mubr.f32.gmra.mrb[0].mxu0 %v1693
        %v1798 = vpop.f32.mrb[0].mxu0
        %v1799 = vadd.f32 0.0, %v1798
        %v1800 = vpop.f32.mrb[0].mxu0
        %1801 = vmatprep.mubr.f32.mxu0 %v1696
        %1802 = vmatmul.mubr.f32.gmra.mrb[0].mxu0 %v1695
        %v1803 = vpop.f32.mrb[0].mxu0
        %v1804 = vadd.f32 0.0, %v1803
        %v1805 = vpop.f32.mrb[0].mxu0
        %1806 = vmatprep.mubr.f32.mxu0 %v1698
        %1807 = vmatmul.mubr.f32.gmra.mrb[0].mxu0 %v1697
        %v1808 = vpop.f32.mrb[0].mxu0
        %v1809 = vadd.f32 0.0, %v1808
        %v1810 = vpop.f32.mrb[0].mxu0
        %1811 = vmatprep.mubr.f32.mxu0 %v1700
        %1812 = vmatmul.mubr.f32.gmra.mrb[0].mxu0 %v1699
        %v1813 = vpop.f32.mrb[0].mxu0
        %v1814 = vadd.f32 0.0, %v1813
        %v1815 = vpop.f32.mrb[0].mxu0
        %1816 = vmatprep.mubr.f32.mxu0 %v1702
        %1817 = vmatmul.mubr.f32.gmra.mrb[0].mxu0 %v1701
        %v1818 = vpop.f32.mrb[0].mxu0
        %v1819 = vadd.f32 0.0, %v1818
        %v1820 = vpop.f32.mrb[0].mxu0
        %1821 = vmatprep.mubr.f32.mxu0 %v1704
        %1822 = vmatmul.mubr.f32.gmra.mrb[0].mxu0 %v1703
        %v1823 = vpop.f32.mrb[0].mxu0
        %v1824 = vadd.f32 0.0, %v1823
        %v1825 = vpop.f32.mrb[0].mxu0
        %1826 = vmatprep.mubr.f32.mxu0 %v1706
        %1827 = vmatmul.mubr.f32.gmra.mrb[0].mxu0 %v1705
        %v1828 = vpop.f32.mrb[0].mxu0
        %v1829 = vadd.f32 0.0, %v1828
        %v1830 = vpop.f32.mrb[0].mxu0
        %1831 = vmatprep.mubr.f32.mxu0 %v1708
        %1832 = vmatmul.mubr.f32.gmra.mrb[0].mxu0 %v1707
        %v1833 = vpop.f32.mrb[0].mxu0
        %v1834 = vadd.f32 0.0, %v1833
        %v1835 = vpop.f32.mrb[0].mxu0
        %1836 = vmatprep.mubr.f32.mxu0 %v1710
        %1837 = vmatmul.mubr.f32.gmra.mrb[0].mxu0 %v1709
        %v1838 = vpop.f32.mrb[0].mxu0
        %v1839 = vadd.f32 0.0, %v1838
        %v1840 = vpop.f32.mrb[0].mxu0
        %1841 = vmatprep.mubr.f32.mxu0 %v1712
        %1842 = vmatmul.mubr.f32.gmra.mrb[0].mxu0 %v1711
        %v1843 = vpop.f32.mrb[0].mxu0
        %v1844 = vadd.f32 0.0, %v1843
        %v1845 = vpop.f32.mrb[0].mxu0
        %1846 = vmatprep.mubr.f32.mxu0 %v1714
        %1847 = vmatmul.mubr.f32.gmra.mrb[0].mxu0 %v1713
        %v1848 = vpop.f32.mrb[0].mxu0
        %v1849 = vadd.f32 0.0, %v1848
        %v1850 = vpop.f32.mrb[0].mxu0
        %1851 = vmatprep.mubr.f32.mxu0 %v1716
        %1852 = vmatmul.mubr.f32.gmra.mrb[0].mxu0 %v1715
        %v1853 = vpop.f32.mrb[0].mxu0
        %v1854 = vadd.f32 0.0, %v1853
        %v1855 = vpop.f32.mrb[0].mxu0
        %1856 = vdwg.mxu0
        %s1857 = scalar_lea.vmem %s2, 1024
        %v1858 = vld [vmem:[%s1857] sm:$0xff]
        %v1859 = vld [vmem:[%s1857 + $0x8] sm:$0xff]
        %v1860 = vld [vmem:[%s1857 + $0x10] sm:$0xff]
        %v1861 = vld [vmem:[%s1857 + $0x18] sm:$0xff]
        %v1862 = vld [vmem:[%s1857 + $0x20] sm:$0xff]
        %v1863 = vld [vmem:[%s1857 + $0x28] sm:$0xff]
        %v1864 = vld [vmem:[%s1857 + $0x30] sm:$0xff]
        %v1865 = vld [vmem:[%s1857 + $0x38] sm:$0xff]
        %v1866 = vld [vmem:[%s1857 + $0x40] sm:$0xff]
        %v1867 = vld [vmem:[%s1857 + $0x48] sm:$0xff]
        %v1868 = vld [vmem:[%s1857 + $0x50] sm:$0xff]
        %v1869 = vld [vmem:[%s1857 + $0x58] sm:$0xff]
        %v1870 = vld [vmem:[%s1857 + $0x60] sm:$0xff]
        %v1871 = vld [vmem:[%s1857 + $0x68] sm:$0xff]
        %v1872 = vld [vmem:[%s1857 + $0x70] sm:$0xff]
        %v1873 = vld [vmem:[%s1857 + $0x78] sm:$0xff]
        %v1874 = vld [vmem:[%s1857 + $0x80] sm:$0xff]
        %v1875 = vld [vmem:[%s1857 + $0x88] sm:$0xff]
        %v1876 = vld [vmem:[%s1857 + $0x90] sm:$0xff]
        %v1877 = vld [vmem:[%s1857 + $0x98] sm:$0xff]
        %v1878 = vld [vmem:[%s1857 + $0xa0] sm:$0xff]
        %v1879 = vld [vmem:[%s1857 + $0xa8] sm:$0xff]
        %v1880 = vld [vmem:[%s1857 + $0xb0] sm:$0xff]
        %v1881 = vld [vmem:[%s1857 + $0xb8] sm:$0xff]
        %v1882 = vld [vmem:[%s1857 + $0xc0] sm:$0xff]
        %v1883 = vld [vmem:[%s1857 + $0xc8] sm:$0xff]
        %v1884 = vld [vmem:[%s1857 + $0xd0] sm:$0xff]
        %v1885 = vld [vmem:[%s1857 + $0xd8] sm:$0xff]
        %v1886 = vld [vmem:[%s1857 + $0xe0] sm:$0xff]
        %v1887 = vld [vmem:[%s1857 + $0xe8] sm:$0xff]
        %v1888 = vld [vmem:[%s1857 + $0xf0] sm:$0xff]
        %v1889 = vld [vmem:[%s1857 + $0xf8] sm:$0xff]
        %v1890 = vld [vmem:[%s1857 + $0x100] sm:$0xff]
        %v1891 = vld [vmem:[%s1857 + $0x108] sm:$0xff]
        %v1892 = vld [vmem:[%s1857 + $0x110] sm:$0xff]
        %v1893 = vld [vmem:[%s1857 + $0x118] sm:$0xff]
        %v1894 = vld [vmem:[%s1857 + $0x120] sm:$0xff]
        %v1895 = vld [vmem:[%s1857 + $0x128] sm:$0xff]
        %v1896 = vld [vmem:[%s1857 + $0x130] sm:$0xff]
        %v1897 = vld [vmem:[%s1857 + $0x138] sm:$0xff]
        %v1898 = vld [vmem:[%s1857 + $0x140] sm:$0xff]
        %v1899 = vld [vmem:[%s1857 + $0x148] sm:$0xff]
        %v1900 = vld [vmem:[%s1857 + $0x150] sm:$0xff]
        %v1901 = vld [vmem:[%s1857 + $0x158] sm:$0xff]
        %v1902 = vld [vmem:[%s1857 + $0x160] sm:$0xff]
        %v1903 = vld [vmem:[%s1857 + $0x168] sm:$0xff]
        %v1904 = vld [vmem:[%s1857 + $0x170] sm:$0xff]
        %v1905 = vld [vmem:[%s1857 + $0x178] sm:$0xff]
        %v1906 = vld [vmem:[%s1857 + $0x180] sm:$0xff]
        %v1907 = vld [vmem:[%s1857 + $0x188] sm:$0xff]
        %v1908 = vld [vmem:[%s1857 + $0x190] sm:$0xff]
        %v1909 = vld [vmem:[%s1857 + $0x198] sm:$0xff]
        %v1910 = vld [vmem:[%s1857 + $0x1a0] sm:$0xff]
        %v1911 = vld [vmem:[%s1857 + $0x1a8] sm:$0xff]
        %v1912 = vld [vmem:[%s1857 + $0x1b0] sm:$0xff]
        %v1913 = vld [vmem:[%s1857 + $0x1b8] sm:$0xff]
        %v1914 = vld [vmem:[%s1857 + $0x1c0] sm:$0xff]
        %v1915 = vld [vmem:[%s1857 + $0x1c8] sm:$0xff]
        %v1916 = vld [vmem:[%s1857 + $0x1d0] sm:$0xff]
        %v1917 = vld [vmem:[%s1857 + $0x1d8] sm:$0xff]
        %v1918 = vld [vmem:[%s1857 + $0x1e0] sm:$0xff]
        %v1919 = vld [vmem:[%s1857 + $0x1e8] sm:$0xff]
        %v1920 = vld [vmem:[%s1857 + $0x1f0] sm:$0xff]
        %v1921 = vld [vmem:[%s1857 + $0x1f8] sm:$0xff]
        %1922 = vmatprep.subr.mxu0 %v1859
        %1923 = vmatpush1.msra.mxu0 %v1858
        %1924 = vmatprep.subr.mxu0 %v1863
        %1925 = vmatpush1.msra.mxu0 %v1862
        %1926 = vmatprep.subr.mxu0 %v1867
        %1927 = vmatpush1.msra.mxu0 %v1866
        %1928 = vmatprep.subr.mxu0 %v1871
        %1929 = vmatpush1.msra.mxu0 %v1870
        %1930 = vmatprep.subr.mxu0 %v1875
        %1931 = vmatpush1.msra.mxu0 %v1874
        %1932 = vmatprep.subr.mxu0 %v1879
        %1933 = vmatpush1.msra.mxu0 %v1878
        %1934 = vmatprep.subr.mxu0 %v1883
        %1935 = vmatpush1.msra.mxu0 %v1882
        %1936 = vmatprep.subr.mxu0 %v1887
        %1937 = vmatpush1.msra.mxu0 %v1886
        %1938 = vmatprep.subr.mxu0 %v1891
        %1939 = vmatpush1.msra.mxu0 %v1890
        %1940 = vmatprep.subr.mxu0 %v1895
        %1941 = vmatpush1.msra.mxu0 %v1894
        %1942 = vmatprep.subr.mxu0 %v1899
        %1943 = vmatpush1.msra.mxu0 %v1898
        %1944 = vmatprep.subr.mxu0 %v1903
        %1945 = vmatpush1.msra.mxu0 %v1902
        %1946 = vmatprep.subr.mxu0 %v1907
        %1947 = vmatpush1.msra.mxu0 %v1906
        %1948 = vmatprep.subr.mxu0 %v1911
        %1949 = vmatpush1.msra.mxu0 %v1910
        %1950 = vmatprep.subr.mxu0 %v1915
        %1951 = vmatpush1.msra.mxu0 %v1914
        %1952 = vmatprep.subr.mxu0 %v1919
        %1953 = vmatpush1.msra.mxu0 %v1918
        %1954 = vmatprep.subr.mxu0 0.0
        %1955 = vmatpush1.msra.mxu0 0.0
        %1956 = vmatprep.subr.mxu0 0.0
        %1957 = vmatpush1.msra.mxu0 0.0
        %1958 = vmatprep.subr.mxu0 0.0
        %1959 = vmatpush1.msra.mxu0 0.0
        %1960 = vmatprep.subr.mxu0 0.0
        %1961 = vmatpush1.msra.mxu0 0.0
        %1962 = vmatprep.subr.mxu0 0.0
        %1963 = vmatpush1.msra.mxu0 0.0
        %1964 = vmatprep.subr.mxu0 0.0
        %1965 = vmatpush1.msra.mxu0 0.0
        %1966 = vmatprep.subr.mxu0 0.0
        %1967 = vmatpush1.msra.mxu0 0.0
        %1968 = vmatprep.subr.mxu0 0.0
        %1969 = vmatpush1.msra.mxu0 0.0
        %1970 = vmatprep.subr.mxu0 0.0
        %1971 = vmatpush1.msra.mxu0 0.0
        %1972 = vmatprep.subr.mxu0 0.0
        %1973 = vmatpush1.msra.mxu0 0.0
        %1974 = vmatprep.subr.mxu0 0.0
        %1975 = vmatpush1.msra.mxu0 0.0
        %1976 = vmatprep.subr.mxu0 0.0
        %1977 = vmatpush1.msra.mxu0 0.0
        %1978 = vmatprep.subr.mxu0 0.0
        %1979 = vmatpush1.msra.mxu0 0.0
        %1980 = vmatprep.subr.mxu0 0.0
        %1981 = vmatpush1.msra.mxu0 0.0
        %1982 = vmatprep.subr.mxu0 0.0
        %1983 = vmatpush1.msra.mxu0 0.0
        %1984 = vmatprep.subr.mxu0 0.0
        %1985 = vmatpush1.msra.mxu0 0.0
        %1986 = vmatprep.mubr.f32.mxu0 0.0
        %1987 = vmatmul.mubr.f32.gmra.mrb[0].mxu0 %v1784
        %v1988 = vpop.f32.mrb[0].mxu0
        %v1989 = vadd.f32 0.0, %v1988
        %v1990 = vpop.f32.mrb[0].mxu0
        %v1991 = vadd.f32 0.0, %v1990
        %1992 = vmatprep.mubr.f32.mxu0 0.0
        %1993 = vmatmul.mubr.f32.gmra.mrb[0].mxu0 %v1789
        %v1994 = vpop.f32.mrb[0].mxu0
        %v1995 = vadd.f32 0.0, %v1994
        %v1996 = vpop.f32.mrb[0].mxu0
        %v1997 = vadd.f32 0.0, %v1996
        %1998 = vmatprep.mubr.f32.mxu0 0.0
        %1999 = vmatmul.mubr.f32.gmra.mrb[0].mxu0 %v1794
        %v2000 = vpop.f32.mrb[0].mxu0
        %v2001 = vadd.f32 0.0, %v2000
        %v2002 = vpop.f32.mrb[0].mxu0
        %v2003 = vadd.f32 0.0, %v2002
        %2004 = vmatprep.mubr.f32.mxu0 0.0
        %2005 = vmatmul.mubr.f32.gmra.mrb[0].mxu0 %v1799
        %v2006 = vpop.f32.mrb[0].mxu0
        %v2007 = vadd.f32 0.0, %v2006
        %v2008 = vpop.f32.mrb[0].mxu0
        %v2009 = vadd.f32 0.0, %v2008
        %2010 = vmatprep.mubr.f32.mxu0 0.0
        %2011 = vmatmul.mubr.f32.gmra.mrb[0].mxu0 %v1804
        %v2012 = vpop.f32.mrb[0].mxu0
        %v2013 = vadd.f32 0.0, %v2012
        %v2014 = vpop.f32.mrb[0].mxu0
        %v2015 = vadd.f32 0.0, %v2014
        %2016 = vmatprep.mubr.f32.mxu0 0.0
        %2017 = vmatmul.mubr.f32.gmra.mrb[0].mxu0 %v1809
        %v2018 = vpop.f32.mrb[0].mxu0
        %v2019 = vadd.f32 0.0, %v2018
        %v2020 = vpop.f32.mrb[0].mxu0
        %v2021 = vadd.f32 0.0, %v2020
        %2022 = vmatprep.mubr.f32.mxu0 0.0
        %2023 = vmatmul.mubr.f32.gmra.mrb[0].mxu0 %v1814
        %v2024 = vpop.f32.mrb[0].mxu0
        %v2025 = vadd.f32 0.0, %v2024
        %v2026 = vpop.f32.mrb[0].mxu0
        %v2027 = vadd.f32 0.0, %v2026
        %2028 = vmatprep.mubr.f32.mxu0 0.0
        %2029 = vmatmul.mubr.f32.gmra.mrb[0].mxu0 %v1819
        %v2030 = vpop.f32.mrb[0].mxu0
        %v2031 = vadd.f32 0.0, %v2030
        %v2032 = vpop.f32.mrb[0].mxu0
        %v2033 = vadd.f32 0.0, %v2032
        %2034 = vmatprep.mubr.f32.mxu0 0.0
        %2035 = vmatmul.mubr.f32.gmra.mrb[0].mxu0 %v1824
        %v2036 = vpop.f32.mrb[0].mxu0
        %v2037 = vadd.f32 0.0, %v2036
        %v2038 = vpop.f32.mrb[0].mxu0
        %v2039 = vadd.f32 0.0, %v2038
        %2040 = vmatprep.mubr.f32.mxu0 0.0
        %2041 = vmatmul.mubr.f32.gmra.mrb[0].mxu0 %v1829
        %v2042 = vpop.f32.mrb[0].mxu0
        %v2043 = vadd.f32 0.0, %v2042
        %v2044 = vpop.f32.mrb[0].mxu0
        %v2045 = vadd.f32 0.0, %v2044
        %2046 = vmatprep.mubr.f32.mxu0 0.0
        %2047 = vmatmul.mubr.f32.gmra.mrb[0].mxu0 %v1834
        %v2048 = vpop.f32.mrb[0].mxu0
        %v2049 = vadd.f32 0.0, %v2048
        %v2050 = vpop.f32.mrb[0].mxu0
        %v2051 = vadd.f32 0.0, %v2050
        %2052 = vmatprep.mubr.f32.mxu0 0.0
        %2053 = vmatmul.mubr.f32.gmra.mrb[0].mxu0 %v1839
        %v2054 = vpop.f32.mrb[0].mxu0
        %v2055 = vadd.f32 0.0, %v2054
        %v2056 = vpop.f32.mrb[0].mxu0
        %v2057 = vadd.f32 0.0, %v2056
        %2058 = vmatprep.mubr.f32.mxu0 0.0
        %2059 = vmatmul.mubr.f32.gmra.mrb[0].mxu0 %v1844
        %v2060 = vpop.f32.mrb[0].mxu0
        %v2061 = vadd.f32 0.0, %v2060
        %v2062 = vpop.f32.mrb[0].mxu0
        %v2063 = vadd.f32 0.0, %v2062
        %2064 = vmatprep.mubr.f32.mxu0 0.0
        %2065 = vmatmul.mubr.f32.gmra.mrb[0].mxu0 %v1849
        %v2066 = vpop.f32.mrb[0].mxu0
        %v2067 = vadd.f32 0.0, %v2066
        %v2068 = vpop.f32.mrb[0].mxu0
        %v2069 = vadd.f32 0.0, %v2068
        %2070 = vmatprep.mubr.f32.mxu0 0.0
        %2071 = vmatmul.mubr.f32.gmra.mrb[0].mxu0 %v1854
        %v2072 = vpop.f32.mrb[0].mxu0
        %v2073 = vadd.f32 0.0, %v2072
        %v2074 = vpop.f32.mrb[0].mxu0
        %v2075 = vadd.f32 0.0, %v2074
        %2076 = vdwg.mxu0
        %2077 = vmatprep.subr.mxu0 %v1861
        %2078 = vmatpush1.msra.mxu0 %v1860
        %2079 = vmatprep.subr.mxu0 %v1865
        %2080 = vmatpush1.msra.mxu0 %v1864
        %2081 = vmatprep.subr.mxu0 %v1869
        %2082 = vmatpush1.msra.mxu0 %v1868
        %2083 = vmatprep.subr.mxu0 %v1873
        %2084 = vmatpush1.msra.mxu0 %v1872
        %2085 = vmatprep.subr.mxu0 %v1877
        %2086 = vmatpush1.msra.mxu0 %v1876
        %2087 = vmatprep.subr.mxu0 %v1881
        %2088 = vmatpush1.msra.mxu0 %v1880
        %2089 = vmatprep.subr.mxu0 %v1885
        %2090 = vmatpush1.msra.mxu0 %v1884
        %2091 = vmatprep.subr.mxu0 %v1889
        %2092 = vmatpush1.msra.mxu0 %v1888
        %2093 = vmatprep.subr.mxu0 %v1893
        %2094 = vmatpush1.msra.mxu0 %v1892
        %2095 = vmatprep.subr.mxu0 %v1897
        %2096 = vmatpush1.msra.mxu0 %v1896
        %2097 = vmatprep.subr.mxu0 %v1901
        %2098 = vmatpush1.msra.mxu0 %v1900
        %2099 = vmatprep.subr.mxu0 %v1905
        %2100 = vmatpush1.msra.mxu0 %v1904
        %2101 = vmatprep.subr.mxu0 %v1909
        %2102 = vmatpush1.msra.mxu0 %v1908
        %2103 = vmatprep.subr.mxu0 %v1913
        %2104 = vmatpush1.msra.mxu0 %v1912
        %2105 = vmatprep.subr.mxu0 %v1917
        %2106 = vmatpush1.msra.mxu0 %v1916
        %2107 = vmatprep.subr.mxu0 %v1921
        %2108 = vmatpush1.msra.mxu0 %v1920
        %2109 = vmatprep.subr.mxu0 0.0
        %2110 = vmatpush1.msra.mxu0 0.0
        %2111 = vmatprep.subr.mxu0 0.0
        %2112 = vmatpush1.msra.mxu0 0.0
        %2113 = vmatprep.subr.mxu0 0.0
        %2114 = vmatpush1.msra.mxu0 0.0
        %2115 = vmatprep.subr.mxu0 0.0
        %2116 = vmatpush1.msra.mxu0 0.0
        %2117 = vmatprep.subr.mxu0 0.0
        %2118 = vmatpush1.msra.mxu0 0.0
        %2119 = vmatprep.subr.mxu0 0.0
        %2120 = vmatpush1.msra.mxu0 0.0
        %2121 = vmatprep.subr.mxu0 0.0
        %2122 = vmatpush1.msra.mxu0 0.0
        %2123 = vmatprep.subr.mxu0 0.0
        %2124 = vmatpush1.msra.mxu0 0.0
        %2125 = vmatprep.subr.mxu0 0.0
        %2126 = vmatpush1.msra.mxu0 0.0
        %2127 = vmatprep.subr.mxu0 0.0
        %2128 = vmatpush1.msra.mxu0 0.0
        %2129 = vmatprep.subr.mxu0 0.0
        %2130 = vmatpush1.msra.mxu0 0.0
        %2131 = vmatprep.subr.mxu0 0.0
        %2132 = vmatpush1.msra.mxu0 0.0
        %2133 = vmatprep.subr.mxu0 0.0
        %2134 = vmatpush1.msra.mxu0 0.0
        %2135 = vmatprep.subr.mxu0 0.0
        %2136 = vmatpush1.msra.mxu0 0.0
        %2137 = vmatprep.subr.mxu0 0.0
        %2138 = vmatpush1.msra.mxu0 0.0
        %2139 = vmatprep.subr.mxu0 0.0
        %2140 = vmatpush1.msra.mxu0 0.0
        %2141 = vmatprep.mubr.f32.mxu0 0.0
        %2142 = vmatmul.mubr.f32.gmra.mrb[0].mxu0 %v1784
        %v2143 = vpop.f32.mrb[0].mxu0
        %v2144 = vadd.f32 0.0, %v2143
        %v2145 = vpop.f32.mrb[0].mxu0
        %v2146 = vadd.f32 0.0, %v2145
        %2147 = vmatprep.mubr.f32.mxu0 0.0
        %2148 = vmatmul.mubr.f32.gmra.mrb[0].mxu0 %v1789
        %v2149 = vpop.f32.mrb[0].mxu0
        %v2150 = vadd.f32 0.0, %v2149
        %v2151 = vpop.f32.mrb[0].mxu0
        %v2152 = vadd.f32 0.0, %v2151
        %2153 = vmatprep.mubr.f32.mxu0 0.0
        %2154 = vmatmul.mubr.f32.gmra.mrb[0].mxu0 %v1794
        %v2155 = vpop.f32.mrb[0].mxu0
        %v2156 = vadd.f32 0.0, %v2155
        %v2157 = vpop.f32.mrb[0].mxu0
        %v2158 = vadd.f32 0.0, %v2157
        %2159 = vmatprep.mubr.f32.mxu0 0.0
        %2160 = vmatmul.mubr.f32.gmra.mrb[0].mxu0 %v1799
        %v2161 = vpop.f32.mrb[0].mxu0
        %v2162 = vadd.f32 0.0, %v2161
        %v2163 = vpop.f32.mrb[0].mxu0
        %v2164 = vadd.f32 0.0, %v2163
        %2165 = vmatprep.mubr.f32.mxu0 0.0
        %2166 = vmatmul.mubr.f32.gmra.mrb[0].mxu0 %v1804
        %v2167 = vpop.f32.mrb[0].mxu0
        %v2168 = vadd.f32 0.0, %v2167
        %v2169 = vpop.f32.mrb[0].mxu0
        %v2170 = vadd.f32 0.0, %v2169
        %2171 = vmatprep.mubr.f32.mxu0 0.0
        %2172 = vmatmul.mubr.f32.gmra.mrb[0].mxu0 %v1809
        %v2173 = vpop.f32.mrb[0].mxu0
        %v2174 = vadd.f32 0.0, %v2173
        %v2175 = vpop.f32.mrb[0].mxu0
        %v2176 = vadd.f32 0.0, %v2175
        %2177 = vmatprep.mubr.f32.mxu0 0.0
        %2178 = vmatmul.mubr.f32.gmra.mrb[0].mxu0 %v1814
        %v2179 = vpop.f32.mrb[0].mxu0
        %v2180 = vadd.f32 0.0, %v2179
        %v2181 = vpop.f32.mrb[0].mxu0
        %v2182 = vadd.f32 0.0, %v2181
        %2183 = vmatprep.mubr.f32.mxu0 0.0
        %2184 = vmatmul.mubr.f32.gmra.mrb[0].mxu0 %v1819
        %v2185 = vpop.f32.mrb[0].mxu0
        %v2186 = vadd.f32 0.0, %v2185
        %v2187 = vpop.f32.mrb[0].mxu0
        %v2188 = vadd.f32 0.0, %v2187
        %2189 = vmatprep.mubr.f32.mxu0 0.0
        %2190 = vmatmul.mubr.f32.gmra.mrb[0].mxu0 %v1824
        %v2191 = vpop.f32.mrb[0].mxu0
        %v2192 = vadd.f32 0.0, %v2191
        %v2193 = vpop.f32.mrb[0].mxu0
        %v2194 = vadd.f32 0.0, %v2193
        %2195 = vmatprep.mubr.f32.mxu0 0.0
        %2196 = vmatmul.mubr.f32.gmra.mrb[0].mxu0 %v1829
        %v2197 = vpop.f32.mrb[0].mxu0
        %v2198 = vadd.f32 0.0, %v2197
        %v2199 = vpop.f32.mrb[0].mxu0
        %v2200 = vadd.f32 0.0, %v2199
        %2201 = vmatprep.mubr.f32.mxu0 0.0
        %2202 = vmatmul.mubr.f32.gmra.mrb[0].mxu0 %v1834
        %v2203 = vpop.f32.mrb[0].mxu0
        %v2204 = vadd.f32 0.0, %v2203
        %v2205 = vpop.f32.mrb[0].mxu0
        %v2206 = vadd.f32 0.0, %v2205
        %2207 = vmatprep.mubr.f32.mxu0 0.0
        %2208 = vmatmul.mubr.f32.gmra.mrb[0].mxu0 %v1839
        %v2209 = vpop.f32.mrb[0].mxu0
        %v2210 = vadd.f32 0.0, %v2209
        %v2211 = vpop.f32.mrb[0].mxu0
        %v2212 = vadd.f32 0.0, %v2211
        %2213 = vmatprep.mubr.f32.mxu0 0.0
        %2214 = vmatmul.mubr.f32.gmra.mrb[0].mxu0 %v1844
        %v2215 = vpop.f32.mrb[0].mxu0
        %v2216 = vadd.f32 0.0, %v2215
        %v2217 = vpop.f32.mrb[0].mxu0
        %v2218 = vadd.f32 0.0, %v2217
        %2219 = vmatprep.mubr.f32.mxu0 0.0
        %2220 = vmatmul.mubr.f32.gmra.mrb[0].mxu0 %v1849
        %v2221 = vpop.f32.mrb[0].mxu0
        %v2222 = vadd.f32 0.0, %v2221
        %v2223 = vpop.f32.mrb[0].mxu0
        %v2224 = vadd.f32 0.0, %v2223
        %2225 = vmatprep.mubr.f32.mxu0 0.0
        %2226 = vmatmul.mubr.f32.gmra.mrb[0].mxu0 %v1854
        %v2227 = vpop.f32.mrb[0].mxu0
        %v2228 = vadd.f32 0.0, %v2227
        %v2229 = vpop.f32.mrb[0].mxu0
        %v2230 = vadd.f32 0.0, %v2229
        %2231 = vdwg.mxu0
        %v2232 = vadd.f32 %v1443, %v1989
        %v2233 = vadd.f32 %v1445, %v1991
        %v2234 = vadd.f32 %v1598, %v2144
        %v2235 = vadd.f32 %v1600, %v2146
        %v2236 = vadd.f32 %v1449, %v1995
        %v2237 = vadd.f32 %v1451, %v1997
        %v2238 = vadd.f32 %v1604, %v2150
        %v2239 = vadd.f32 %v1606, %v2152
        %v2240 = vadd.f32 %v1455, %v2001
        %v2241 = vadd.f32 %v1457, %v2003
        %v2242 = vadd.f32 %v1610, %v2156
        %v2243 = vadd.f32 %v1612, %v2158
        %v2244 = vadd.f32 %v1461, %v2007
        %v2245 = vadd.f32 %v1463, %v2009
        %v2246 = vadd.f32 %v1616, %v2162
        %v2247 = vadd.f32 %v1618, %v2164
        %v2248 = vadd.f32 %v1467, %v2013
        %v2249 = vadd.f32 %v1469, %v2015
        %v2250 = vadd.f32 %v1622, %v2168
        %v2251 = vadd.f32 %v1624, %v2170
        %v2252 = vadd.f32 %v1473, %v2019
        %v2253 = vadd.f32 %v1475, %v2021
        %v2254 = vadd.f32 %v1628, %v2174
        %v2255 = vadd.f32 %v1630, %v2176
        %v2256 = vadd.f32 %v1479, %v2025
        %v2257 = vadd.f32 %v1481, %v2027
        %v2258 = vadd.f32 %v1634, %v2180
        %v2259 = vadd.f32 %v1636, %v2182
        %v2260 = vadd.f32 %v1485, %v2031
        %v2261 = vadd.f32 %v1487, %v2033
        %v2262 = vadd.f32 %v1640, %v2186
        %v2263 = vadd.f32 %v1642, %v2188
        %v2264 = vadd.f32 %v1491, %v2037
        %v2265 = vadd.f32 %v1493, %v2039
        %v2266 = vadd.f32 %v1646, %v2192
        %v2267 = vadd.f32 %v1648, %v2194
        %v2268 = vadd.f32 %v1497, %v2043
        %v2269 = vadd.f32 %v1499, %v2045
        %v2270 = vadd.f32 %v1652, %v2198
        %v2271 = vadd.f32 %v1654, %v2200
        %v2272 = vadd.f32 %v1503, %v2049
        %v2273 = vadd.f32 %v1505, %v2051
        %v2274 = vadd.f32 %v1658, %v2204
        %v2275 = vadd.f32 %v1660, %v2206
        %v2276 = vadd.f32 %v1509, %v2055
        %v2277 = vadd.f32 %v1511, %v2057
        %v2278 = vadd.f32 %v1664, %v2210
        %v2279 = vadd.f32 %v1666, %v2212
        %v2280 = vadd.f32 %v1515, %v2061
        %v2281 = vadd.f32 %v1517, %v2063
        %v2282 = vadd.f32 %v1670, %v2216
        %v2283 = vadd.f32 %v1672, %v2218
        %v2284 = vadd.f32 %v1521, %v2067
        %v2285 = vadd.f32 %v1523, %v2069
        %v2286 = vadd.f32 %v1676, %v2222
        %v2287 = vadd.f32 %v1678, %v2224
        %v2288 = vadd.f32 %v1527, %v2073
        %v2289 = vadd.f32 %v1529, %v2075
        %v2290 = vadd.f32 %v1682, %v2228
        %v2291 = vadd.f32 %v1684, %v2230
        %v2292 = vld [vmem:[%s3] sm:$0xf]
        %v2294 = vlaneseq
        %v2295 = vshrl.u32 %v2294, 7
        %v2296 = vsub.s32 0, %v2295
        %v2297 = vrot.slane %v2292, %v2296
        %v2298 = vlaneseq
        %v2299 = vshrl.u32 %v2298, 7
        %v2300 = vsub.s32 1, %v2299
        %v2301 = vrot.slane %v2292, %v2300
        %v2302 = vlaneseq
        %v2303 = vshrl.u32 %v2302, 7
        %v2304 = vsub.s32 2, %v2303
        %v2305 = vrot.slane %v2292, %v2304
        %v2306 = vlaneseq
        %v2307 = vshrl.u32 %v2306, 7
        %v2308 = vsub.s32 3, %v2307
        %v2309 = vrot.slane %v2292, %v2308
        %v2314 = vadd.f32 %v2232, %v2297
        %v2315 = vadd.f32 %v2233, %v2301
        %v2316 = vadd.f32 %v2234, %v2305
        %v2317 = vadd.f32 %v2235, %v2309
        %v2318 = vadd.f32 %v2236, %v2297
        %v2319 = vadd.f32 %v2237, %v2301
        %v2320 = vadd.f32 %v2238, %v2305
        %v2321 = vadd.f32 %v2239, %v2309
        %v2322 = vadd.f32 %v2240, %v2297
        %v2323 = vadd.f32 %v2241, %v2301
        %v2324 = vadd.f32 %v2242, %v2305
        %v2325 = vadd.f32 %v2243, %v2309
        %v2326 = vadd.f32 %v2244, %v2297
        %v2327 = vadd.f32 %v2245, %v2301
        %v2328 = vadd.f32 %v2246, %v2305
        %v2329 = vadd.f32 %v2247, %v2309
        %v2330 = vadd.f32 %v2248, %v2297
        %v2331 = vadd.f32 %v2249, %v2301
        %v2332 = vadd.f32 %v2250, %v2305
        %v2333 = vadd.f32 %v2251, %v2309
        %v2334 = vadd.f32 %v2252, %v2297
        %v2335 = vadd.f32 %v2253, %v2301
        %v2336 = vadd.f32 %v2254, %v2305
        %v2337 = vadd.f32 %v2255, %v2309
        %v2338 = vadd.f32 %v2256, %v2297
        %v2339 = vadd.f32 %v2257, %v2301
        %v2340 = vadd.f32 %v2258, %v2305
        %v2341 = vadd.f32 %v2259, %v2309
        %v2342 = vadd.f32 %v2260, %v2297
        %v2343 = vadd.f32 %v2261, %v2301
        %v2344 = vadd.f32 %v2262, %v2305
        %v2345 = vadd.f32 %v2263, %v2309
        %v2346 = vadd.f32 %v2264, %v2297
        %v2347 = vadd.f32 %v2265, %v2301
        %v2348 = vadd.f32 %v2266, %v2305
        %v2349 = vadd.f32 %v2267, %v2309
        %v2350 = vadd.f32 %v2268, %v2297
        %v2351 = vadd.f32 %v2269, %v2301
        %v2352 = vadd.f32 %v2270, %v2305
        %v2353 = vadd.f32 %v2271, %v2309
        %v2354 = vadd.f32 %v2272, %v2297
        %v2355 = vadd.f32 %v2273, %v2301
        %v2356 = vadd.f32 %v2274, %v2305
        %v2357 = vadd.f32 %v2275, %v2309
        %v2358 = vadd.f32 %v2276, %v2297
        %v2359 = vadd.f32 %v2277, %v2301
        %v2360 = vadd.f32 %v2278, %v2305
        %v2361 = vadd.f32 %v2279, %v2309
        %v2362 = vadd.f32 %v2280, %v2297
        %v2363 = vadd.f32 %v2281, %v2301
        %v2364 = vadd.f32 %v2282, %v2305
        %v2365 = vadd.f32 %v2283, %v2309
        %v2366 = vadd.f32 %v2284, %v2297
        %v2367 = vadd.f32 %v2285, %v2301
        %v2368 = vadd.f32 %v2286, %v2305
        %v2369 = vadd.f32 %v2287, %v2309
        %v2370 = vadd.f32 %v2288, %v2297
        %v2371 = vadd.f32 %v2289, %v2301
        %v2372 = vadd.f32 %v2290, %v2305
        %v2373 = vadd.f32 %v2291, %v2309
        %v2374 = vmax.f32 %v2314, 0.0
        %v2375 = vmax.f32 %v2315, 0.0
        %v2376 = vmax.f32 %v2316, 0.0
        %v2377 = vmax.f32 %v2317, 0.0
        %v2378 = vmax.f32 %v2318, 0.0
        %v2379 = vmax.f32 %v2319, 0.0
        %v2380 = vmax.f32 %v2320, 0.0
        %v2381 = vmax.f32 %v2321, 0.0
        %v2382 = vmax.f32 %v2322, 0.0
        %v2383 = vmax.f32 %v2323, 0.0
        %v2384 = vmax.f32 %v2324, 0.0
        %v2385 = vmax.f32 %v2325, 0.0
        %v2386 = vmax.f32 %v2326, 0.0
        %v2387 = vmax.f32 %v2327, 0.0
        %v2388 = vmax.f32 %v2328, 0.0
        %v2389 = vmax.f32 %v2329, 0.0
        %v2390 = vmax.f32 %v2330, 0.0
        %v2391 = vmax.f32 %v2331, 0.0
        %v2392 = vmax.f32 %v2332, 0.0
        %v2393 = vmax.f32 %v2333, 0.0
        %v2394 = vmax.f32 %v2334, 0.0
        %v2395 = vmax.f32 %v2335, 0.0
        %v2396 = vmax.f32 %v2336, 0.0
        %v2397 = vmax.f32 %v2337, 0.0
        %v2398 = vmax.f32 %v2338, 0.0
        %v2399 = vmax.f32 %v2339, 0.0
        %v2400 = vmax.f32 %v2340, 0.0
        %v2401 = vmax.f32 %v2341, 0.0
        %v2402 = vmax.f32 %v2342, 0.0
        %v2403 = vmax.f32 %v2343, 0.0
        %v2404 = vmax.f32 %v2344, 0.0
        %v2405 = vmax.f32 %v2345, 0.0
        %v2406 = vmax.f32 %v2346, 0.0
        %v2407 = vmax.f32 %v2347, 0.0
        %v2408 = vmax.f32 %v2348, 0.0
        %v2409 = vmax.f32 %v2349, 0.0
        %v2410 = vmax.f32 %v2350, 0.0
        %v2411 = vmax.f32 %v2351, 0.0
        %v2412 = vmax.f32 %v2352, 0.0
        %v2413 = vmax.f32 %v2353, 0.0
        %v2414 = vmax.f32 %v2354, 0.0
        %v2415 = vmax.f32 %v2355, 0.0
        %v2416 = vmax.f32 %v2356, 0.0
        %v2417 = vmax.f32 %v2357, 0.0
        %v2418 = vmax.f32 %v2358, 0.0
        %v2419 = vmax.f32 %v2359, 0.0
        %v2420 = vmax.f32 %v2360, 0.0
        %v2421 = vmax.f32 %v2361, 0.0
        %v2422 = vmax.f32 %v2362, 0.0
        %v2423 = vmax.f32 %v2363, 0.0
        %v2424 = vmax.f32 %v2364, 0.0
        %v2425 = vmax.f32 %v2365, 0.0
        %v2426 = vmax.f32 %v2366, 0.0
        %v2427 = vmax.f32 %v2367, 0.0
        %v2428 = vmax.f32 %v2368, 0.0
        %v2429 = vmax.f32 %v2369, 0.0
        %v2430 = vmax.f32 %v2370, 0.0
        %v2431 = vmax.f32 %v2371, 0.0
        %v2432 = vmax.f32 %v2372, 0.0
        %v2433 = vmax.f32 %v2373, 0.0
        %v2434 = vld [vmem:[#allocation2] sm:$0xff]
        %v2435 = vld [vmem:[#allocation2 + $0x8] sm:$0xff]
        %v2436 = vld [vmem:[#allocation2 + $0x10] sm:$0xff]
        %v2437 = vld [vmem:[#allocation2 + $0x18] sm:$0xff]
        %v2438 = vld [vmem:[#allocation2 + $0x20] sm:$0xff]
        %v2439 = vld [vmem:[#allocation2 + $0x28] sm:$0xff]
        %v2440 = vld [vmem:[#allocation2 + $0x30] sm:$0xff]
        %vm2441 = vcmask 982016
        %v2443 = vsel %vm2441, %v2434, 0
        %v2446 = vsel %vm2441, %v2435, 0
        %v2449 = vsel %vm2441, %v2436, 0
        %v2452 = vsel %vm2441, %v2437, 0
        %v2455 = vsel %vm2441, %v2438, 0
        %v2458 = vsel %vm2441, %v2439, 0
        %v2461 = vsel %vm2441, %v2440, 0
        %2463 = vmatprep.subr.mxu0 %v2375
        %2464 = vmatpush1.msra.mxu0 %v2374
        %2465 = vmatprep.subr.mxu0 %v2379
        %2466 = vmatpush1.msra.mxu0 %v2378
        %2467 = vmatprep.subr.mxu0 %v2383
        %2468 = vmatpush1.msra.mxu0 %v2382
        %2469 = vmatprep.subr.mxu0 %v2387
        %2470 = vmatpush1.msra.mxu0 %v2386
        %2471 = vmatprep.subr.mxu0 %v2391
        %2472 = vmatpush1.msra.mxu0 %v2390
        %2473 = vmatprep.subr.mxu0 %v2395
        %2474 = vmatpush1.msra.mxu0 %v2394
        %2475 = vmatprep.subr.mxu0 %v2399
        %2476 = vmatpush1.msra.mxu0 %v2398
        %2477 = vmatprep.subr.mxu0 %v2403
        %2478 = vmatpush1.msra.mxu0 %v2402
        %2479 = vmatprep.subr.mxu0 %v2407
        %2480 = vmatpush1.msra.mxu0 %v2406
        %2481 = vmatprep.subr.mxu0 %v2411
        %2482 = vmatpush1.msra.mxu0 %v2410
        %2483 = vmatprep.subr.mxu0 %v2415
        %2484 = vmatpush1.msra.mxu0 %v2414
        %2485 = vmatprep.subr.mxu0 %v2419
        %2486 = vmatpush1.msra.mxu0 %v2418
        %2487 = vmatprep.subr.mxu0 %v2423
        %2488 = vmatpush1.msra.mxu0 %v2422
        %2489 = vmatprep.subr.mxu0 %v2427
        %2490 = vmatpush1.msra.mxu0 %v2426
        %2491 = vmatprep.subr.mxu0 %v2431
        %2492 = vmatpush1.msra.mxu0 %v2430
        %2493 = vmatprep.subr.mxu0 0.0
        %2494 = vmatpush1.msra.mxu0 0.0
        %2495 = vmatprep.subr.mxu0 0.0
        %2496 = vmatpush1.msra.mxu0 0.0
        %2497 = vmatprep.subr.mxu0 0.0
        %2498 = vmatpush1.msra.mxu0 0.0
        %2499 = vmatprep.subr.mxu0 0.0
        %2500 = vmatpush1.msra.mxu0 0.0
        %2501 = vmatprep.subr.mxu0 0.0
        %2502 = vmatpush1.msra.mxu0 0.0
        %2503 = vmatprep.subr.mxu0 0.0
        %2504 = vmatpush1.msra.mxu0 0.0
        %2505 = vmatprep.subr.mxu0 0.0
        %2506 = vmatpush1.msra.mxu0 0.0
        %2507 = vmatprep.subr.mxu0 0.0
        %2508 = vmatpush1.msra.mxu0 0.0
        %2509 = vmatprep.subr.mxu0 0.0
        %2510 = vmatpush1.msra.mxu0 0.0
        %2511 = vmatprep.subr.mxu0 0.0
        %2512 = vmatpush1.msra.mxu0 0.0
        %2513 = vmatprep.subr.mxu0 0.0
        %2514 = vmatpush1.msra.mxu0 0.0
        %2515 = vmatprep.subr.mxu0 0.0
        %2516 = vmatpush1.msra.mxu0 0.0
        %2517 = vmatprep.subr.mxu0 0.0
        %2518 = vmatpush1.msra.mxu0 0.0
        %2519 = vmatprep.subr.mxu0 0.0
        %2520 = vmatpush1.msra.mxu0 0.0
        %2521 = vmatprep.subr.mxu0 0.0
        %2522 = vmatpush1.msra.mxu0 0.0
        %2523 = vmatprep.subr.mxu0 0.0
        %2524 = vmatpush1.msra.mxu0 0.0
        %2525 = vmatprep.subr.mxu0 0.0
        %2526 = vmatpush1.msra.mxu0 0.0
        %2527 = vmatprep.mubr.f32.mxu0 0.0
        %2528 = vmatmul.mubr.f32.gmra.mrb[0].mxu0 %v2443
        %v2529 = vpop.f32.mrb[0].mxu0
        %v2530 = vadd.f32 0.0, %v2529
        %v2531 = vpop.f32.mrb[0].mxu0
        %v2532 = vadd.f32 0.0, %v2531
        %2533 = vmatprep.mubr.f32.mxu0 0.0
        %2534 = vmatmul.mubr.f32.gmra.mrb[0].mxu0 %v2446
        %v2535 = vpop.f32.mrb[0].mxu0
        %v2536 = vadd.f32 0.0, %v2535
        %v2537 = vpop.f32.mrb[0].mxu0
        %v2538 = vadd.f32 0.0, %v2537
        %2539 = vmatprep.mubr.f32.mxu0 0.0
        %2540 = vmatmul.mubr.f32.gmra.mrb[0].mxu0 %v2449
        %v2541 = vpop.f32.mrb[0].mxu0
        %v2542 = vadd.f32 0.0, %v2541
        %v2543 = vpop.f32.mrb[0].mxu0
        %v2544 = vadd.f32 0.0, %v2543
        %2545 = vmatprep.mubr.f32.mxu0 0.0
        %2546 = vmatmul.mubr.f32.gmra.mrb[0].mxu0 %v2452
        %v2547 = vpop.f32.mrb[0].mxu0
        %v2548 = vadd.f32 0.0, %v2547
        %v2549 = vpop.f32.mrb[0].mxu0
        %v2550 = vadd.f32 0.0, %v2549
        %2551 = vmatprep.mubr.f32.mxu0 0.0
        %2552 = vmatmul.mubr.f32.gmra.mrb[0].mxu0 %v2455
        %v2553 = vpop.f32.mrb[0].mxu0
        %v2554 = vadd.f32 0.0, %v2553
        %v2555 = vpop.f32.mrb[0].mxu0
        %v2556 = vadd.f32 0.0, %v2555
        %2557 = vmatprep.mubr.f32.mxu0 0.0
        %2558 = vmatmul.mubr.f32.gmra.mrb[0].mxu0 %v2458
        %v2559 = vpop.f32.mrb[0].mxu0
        %v2560 = vadd.f32 0.0, %v2559
        %v2561 = vpop.f32.mrb[0].mxu0
        %v2562 = vadd.f32 0.0, %v2561
        %2563 = vmatprep.mubr.f32.mxu0 0.0
        %2564 = vmatmul.mubr.f32.gmra.mrb[0].mxu0 %v2461
        %v2565 = vpop.f32.mrb[0].mxu0
        %v2566 = vadd.f32 0.0, %v2565
        %v2567 = vpop.f32.mrb[0].mxu0
        %v2568 = vadd.f32 0.0, %v2567
        %2569 = vdwg.mxu0
        %2570 = vmatprep.subr.mxu0 %v2377
        %2571 = vmatpush1.msra.mxu0 %v2376
        %2572 = vmatprep.subr.mxu0 %v2381
        %2573 = vmatpush1.msra.mxu0 %v2380
        %2574 = vmatprep.subr.mxu0 %v2385
        %2575 = vmatpush1.msra.mxu0 %v2384
        %2576 = vmatprep.subr.mxu0 %v2389
        %2577 = vmatpush1.msra.mxu0 %v2388
        %2578 = vmatprep.subr.mxu0 %v2393
        %2579 = vmatpush1.msra.mxu0 %v2392
        %2580 = vmatprep.subr.mxu0 %v2397
        %2581 = vmatpush1.msra.mxu0 %v2396
        %2582 = vmatprep.subr.mxu0 %v2401
        %2583 = vmatpush1.msra.mxu0 %v2400
        %2584 = vmatprep.subr.mxu0 %v2405
        %2585 = vmatpush1.msra.mxu0 %v2404
        %2586 = vmatprep.subr.mxu0 %v2409
        %2587 = vmatpush1.msra.mxu0 %v2408
        %2588 = vmatprep.subr.mxu0 %v2413
        %2589 = vmatpush1.msra.mxu0 %v2412
        %2590 = vmatprep.subr.mxu0 %v2417
        %2591 = vmatpush1.msra.mxu0 %v2416
        %2592 = vmatprep.subr.mxu0 %v2421
        %2593 = vmatpush1.msra.mxu0 %v2420
        %2594 = vmatprep.subr.mxu0 %v2425
        %2595 = vmatpush1.msra.mxu0 %v2424
        %2596 = vmatprep.subr.mxu0 %v2429
        %2597 = vmatpush1.msra.mxu0 %v2428
        %2598 = vmatprep.subr.mxu0 %v2433
        %2599 = vmatpush1.msra.mxu0 %v2432
        %2600 = vmatprep.subr.mxu0 0.0
        %2601 = vmatpush1.msra.mxu0 0.0
        %2602 = vmatprep.subr.mxu0 0.0
        %2603 = vmatpush1.msra.mxu0 0.0
        %2604 = vmatprep.subr.mxu0 0.0
        %2605 = vmatpush1.msra.mxu0 0.0
        %2606 = vmatprep.subr.mxu0 0.0
        %2607 = vmatpush1.msra.mxu0 0.0
        %2608 = vmatprep.subr.mxu0 0.0
        %2609 = vmatpush1.msra.mxu0 0.0
        %2610 = vmatprep.subr.mxu0 0.0
        %2611 = vmatpush1.msra.mxu0 0.0
        %2612 = vmatprep.subr.mxu0 0.0
        %2613 = vmatpush1.msra.mxu0 0.0
        %2614 = vmatprep.subr.mxu0 0.0
        %2615 = vmatpush1.msra.mxu0 0.0
        %2616 = vmatprep.subr.mxu0 0.0
        %2617 = vmatpush1.msra.mxu0 0.0
        %2618 = vmatprep.subr.mxu0 0.0
        %2619 = vmatpush1.msra.mxu0 0.0
        %2620 = vmatprep.subr.mxu0 0.0
        %2621 = vmatpush1.msra.mxu0 0.0
        %2622 = vmatprep.subr.mxu0 0.0
        %2623 = vmatpush1.msra.mxu0 0.0
        %2624 = vmatprep.subr.mxu0 0.0
        %2625 = vmatpush1.msra.mxu0 0.0
        %2626 = vmatprep.subr.mxu0 0.0
        %2627 = vmatpush1.msra.mxu0 0.0
        %2628 = vmatprep.subr.mxu0 0.0
        %2629 = vmatpush1.msra.mxu0 0.0
        %2630 = vmatprep.subr.mxu0 0.0
        %2631 = vmatpush1.msra.mxu0 0.0
        %2632 = vmatprep.subr.mxu0 0.0
        %2633 = vmatpush1.msra.mxu0 0.0
        %2634 = vmatprep.mubr.f32.mxu0 0.0
        %2635 = vmatmul.mubr.f32.gmra.mrb[0].mxu0 %v2443
        %v2636 = vpop.f32.mrb[0].mxu0
        %v2637 = vadd.f32 0.0, %v2636
        %v2638 = vpop.f32.mrb[0].mxu0
        %v2639 = vadd.f32 0.0, %v2638
        %2640 = vmatprep.mubr.f32.mxu0 0.0
        %2641 = vmatmul.mubr.f32.gmra.mrb[0].mxu0 %v2446
        %v2642 = vpop.f32.mrb[0].mxu0
        %v2643 = vadd.f32 0.0, %v2642
        %v2644 = vpop.f32.mrb[0].mxu0
        %v2645 = vadd.f32 0.0, %v2644
        %2646 = vmatprep.mubr.f32.mxu0 0.0
        %2647 = vmatmul.mubr.f32.gmra.mrb[0].mxu0 %v2449
        %v2648 = vpop.f32.mrb[0].mxu0
        %v2649 = vadd.f32 0.0, %v2648
        %v2650 = vpop.f32.mrb[0].mxu0
        %v2651 = vadd.f32 0.0, %v2650
        %2652 = vmatprep.mubr.f32.mxu0 0.0
        %2653 = vmatmul.mubr.f32.gmra.mrb[0].mxu0 %v2452
        %v2654 = vpop.f32.mrb[0].mxu0
        %v2655 = vadd.f32 0.0, %v2654
        %v2656 = vpop.f32.mrb[0].mxu0
        %v2657 = vadd.f32 0.0, %v2656
        %2658 = vmatprep.mubr.f32.mxu0 0.0
        %2659 = vmatmul.mubr.f32.gmra.mrb[0].mxu0 %v2455
        %v2660 = vpop.f32.mrb[0].mxu0
        %v2661 = vadd.f32 0.0, %v2660
        %v2662 = vpop.f32.mrb[0].mxu0
        %v2663 = vadd.f32 0.0, %v2662
        %2664 = vmatprep.mubr.f32.mxu0 0.0
        %2665 = vmatmul.mubr.f32.gmra.mrb[0].mxu0 %v2458
        %v2666 = vpop.f32.mrb[0].mxu0
        %v2667 = vadd.f32 0.0, %v2666
        %v2668 = vpop.f32.mrb[0].mxu0
        %v2669 = vadd.f32 0.0, %v2668
        %2670 = vmatprep.mubr.f32.mxu0 0.0
        %2671 = vmatmul.mubr.f32.gmra.mrb[0].mxu0 %v2461
        %v2672 = vpop.f32.mrb[0].mxu0
        %v2673 = vadd.f32 0.0, %v2672
        %v2674 = vpop.f32.mrb[0].mxu0
        %v2675 = vadd.f32 0.0, %v2674
        %2676 = vdwg.mxu0
        %v2677 = vld [vmem:[%s5] sm:$0xff]
        %v2678 = vld [vmem:[%s5 + $0x8] sm:$0xff]
        %v2679 = vld [vmem:[%s5 + $0x10] sm:$0xff]
        %v2680 = vld [vmem:[%s5 + $0x18] sm:$0xff]
        %v2681 = vld [vmem:[%s5 + $0x20] sm:$0xff]
        %v2682 = vld [vmem:[%s5 + $0x28] sm:$0xff]
        %v2683 = vld [vmem:[%s5 + $0x30] sm:$0xff]
        %v2684 = vld [vmem:[%s5 + $0x38] sm:$0xff]
        %v2685 = vld [vmem:[%s5 + $0x40] sm:$0xff]
        %v2686 = vld [vmem:[%s5 + $0x48] sm:$0xff]
        %v2687 = vld [vmem:[%s5 + $0x50] sm:$0xff]
        %v2688 = vld [vmem:[%s5 + $0x58] sm:$0xff]
        %v2689 = vld [vmem:[%s5 + $0x60] sm:$0xff]
        %v2690 = vld [vmem:[%s5 + $0x68] sm:$0xff]
        %v2691 = vld [vmem:[%s5 + $0x70] sm:$0xff]
        %v2692 = vld [vmem:[%s5 + $0x78] sm:$0xff]
        %v2693 = vld [vmem:[%s5 + $0x80] sm:$0xff]
        %v2694 = vld [vmem:[%s5 + $0x88] sm:$0xff]
        %v2695 = vld [vmem:[%s5 + $0x90] sm:$0xff]
        %v2696 = vld [vmem:[%s5 + $0x98] sm:$0xff]
        %v2697 = vld [vmem:[%s5 + $0xa0] sm:$0xff]
        %v2698 = vld [vmem:[%s5 + $0xa8] sm:$0xff]
        %v2699 = vld [vmem:[%s5 + $0xb0] sm:$0xff]
        %v2700 = vld [vmem:[%s5 + $0xb8] sm:$0xff]
        %v2701 = vld [vmem:[%s5 + $0xc0] sm:$0xff]
        %v2702 = vld [vmem:[%s5 + $0xc8] sm:$0xff]
        %v2703 = vld [vmem:[%s5 + $0xd0] sm:$0xff]
        %v2704 = vld [vmem:[%s5 + $0xd8] sm:$0xff]
        %v2705 = vld [vmem:[%s5 + $0xe0] sm:$0xff]
        %v2706 = vld [vmem:[%s5 + $0xe8] sm:$0xff]
        %v2707 = vld [vmem:[%s5 + $0xf0] sm:$0xff]
        %v2708 = vld [vmem:[%s5 + $0xf8] sm:$0xff]
        %v2709 = vld [vmem:[%s5 + $0x100] sm:$0xff]
        %v2710 = vld [vmem:[%s5 + $0x108] sm:$0xff]
        %v2711 = vld [vmem:[%s5 + $0x110] sm:$0xff]
        %v2712 = vld [vmem:[%s5 + $0x118] sm:$0xff]
        %v2713 = vld [vmem:[%s5 + $0x120] sm:$0xff]
        %v2714 = vld [vmem:[%s5 + $0x128] sm:$0xff]
        %v2715 = vld [vmem:[%s5 + $0x130] sm:$0xff]
        %v2716 = vld [vmem:[%s5 + $0x138] sm:$0xff]
        %v2717 = vld [vmem:[%s5 + $0x140] sm:$0xff]
        %v2718 = vld [vmem:[%s5 + $0x148] sm:$0xff]
        %v2719 = vld [vmem:[%s5 + $0x150] sm:$0xff]
        %v2720 = vld [vmem:[%s5 + $0x158] sm:$0xff]
        %v2721 = vld [vmem:[%s5 + $0x160] sm:$0xff]
        %v2722 = vld [vmem:[%s5 + $0x168] sm:$0xff]
        %v2723 = vld [vmem:[%s5 + $0x170] sm:$0xff]
        %v2724 = vld [vmem:[%s5 + $0x178] sm:$0xff]
        %v2725 = vld [vmem:[%s5 + $0x180] sm:$0xff]
        %v2726 = vld [vmem:[%s5 + $0x188] sm:$0xff]
        %v2727 = vld [vmem:[%s5 + $0x190] sm:$0xff]
        %v2728 = vld [vmem:[%s5 + $0x198] sm:$0xff]
        %v2729 = vld [vmem:[%s5 + $0x1a0] sm:$0xff]
        %v2730 = vld [vmem:[%s5 + $0x1a8] sm:$0xff]
        %v2731 = vld [vmem:[%s5 + $0x1b0] sm:$0xff]
        %v2732 = vld [vmem:[%s5 + $0x1b8] sm:$0xff]
        %v2733 = vld [vmem:[%s5 + $0x1c0] sm:$0xff]
        %v2734 = vld [vmem:[%s5 + $0x1c8] sm:$0xff]
        %v2735 = vld [vmem:[%s5 + $0x1d0] sm:$0xff]
        %v2736 = vld [vmem:[%s5 + $0x1d8] sm:$0xff]
        %v2737 = vld [vmem:[%s5 + $0x1e0] sm:$0xff]
        %v2738 = vld [vmem:[%s5 + $0x1e8] sm:$0xff]
        %v2739 = vld [vmem:[%s5 + $0x1f0] sm:$0xff]
        %v2740 = vld [vmem:[%s5 + $0x1f8] sm:$0xff]
        %v2741 = vld [vmem:[%s5 + $0x200] sm:$0xff]
        %v2742 = vld [vmem:[%s5 + $0x208] sm:$0xff]
        %v2743 = vld [vmem:[%s5 + $0x210] sm:$0xff]
        %v2744 = vld [vmem:[%s5 + $0x218] sm:$0xff]
        %v2745 = vld [vmem:[%s5 + $0x220] sm:$0xff]
        %v2746 = vld [vmem:[%s5 + $0x228] sm:$0xff]
        %v2747 = vld [vmem:[%s5 + $0x230] sm:$0xff]
        %v2748 = vld [vmem:[%s5 + $0x238] sm:$0xff]
        %v2749 = vld [vmem:[%s5 + $0x240] sm:$0xff]
        %v2750 = vld [vmem:[%s5 + $0x248] sm:$0xff]
        %v2751 = vld [vmem:[%s5 + $0x250] sm:$0xff]
        %v2752 = vld [vmem:[%s5 + $0x258] sm:$0xff]
        %v2753 = vld [vmem:[%s5 + $0x260] sm:$0xff]
        %v2754 = vld [vmem:[%s5 + $0x268] sm:$0xff]
        %v2755 = vld [vmem:[%s5 + $0x270] sm:$0xff]
        %v2756 = vld [vmem:[%s5 + $0x278] sm:$0xff]
        %v2757 = vld [vmem:[%s5 + $0x280] sm:$0xff]
        %v2758 = vld [vmem:[%s5 + $0x288] sm:$0xff]
        %v2759 = vld [vmem:[%s5 + $0x290] sm:$0xff]
        %v2760 = vld [vmem:[%s5 + $0x298] sm:$0xff]
        %v2761 = vld [vmem:[%s5 + $0x2a0] sm:$0xff]
        %v2762 = vld [vmem:[%s5 + $0x2a8] sm:$0xff]
        %v2763 = vld [vmem:[%s5 + $0x2b0] sm:$0xff]
        %v2764 = vld [vmem:[%s5 + $0x2b8] sm:$0xff]
        %v2765 = vld [vmem:[%s5 + $0x2c0] sm:$0xff]
        %v2766 = vld [vmem:[%s5 + $0x2c8] sm:$0xff]
        %v2767 = vld [vmem:[%s5 + $0x2d0] sm:$0xff]
        %v2768 = vld [vmem:[%s5 + $0x2d8] sm:$0xff]
        %v2769 = vld [vmem:[%s5 + $0x2e0] sm:$0xff]
        %v2770 = vld [vmem:[%s5 + $0x2e8] sm:$0xff]
        %v2771 = vld [vmem:[%s5 + $0x2f0] sm:$0xff]
        %v2772 = vld [vmem:[%s5 + $0x2f8] sm:$0xff]
        %v2773 = vld [vmem:[%s5 + $0x300] sm:$0xff]
        %v2774 = vld [vmem:[%s5 + $0x308] sm:$0xff]
        %v2775 = vld [vmem:[%s5 + $0x310] sm:$0xff]
        %v2776 = vld [vmem:[%s5 + $0x318] sm:$0xff]
        %v2777 = vld [vmem:[%s5 + $0x320] sm:$0xff]
        %v2778 = vld [vmem:[%s5 + $0x328] sm:$0xff]
        %v2779 = vld [vmem:[%s5 + $0x330] sm:$0xff]
        %v2780 = vld [vmem:[%s5 + $0x338] sm:$0xff]
        %v2781 = vld [vmem:[%s5 + $0x340] sm:$0xff]
        %v2782 = vld [vmem:[%s5 + $0x348] sm:$0xff]
        %v2783 = vld [vmem:[%s5 + $0x350] sm:$0xff]
        %v2784 = vld [vmem:[%s5 + $0x358] sm:$0xff]
        %v2785 = vld [vmem:[%s5 + $0x360] sm:$0xff]
        %v2786 = vld [vmem:[%s5 + $0x368] sm:$0xff]
        %v2787 = vld [vmem:[%s5 + $0x370] sm:$0xff]
        %v2788 = vld [vmem:[%s5 + $0x378] sm:$0xff]
        %v2789 = vld [vmem:[%s5 + $0x380] sm:$0xff]
        %v2790 = vld [vmem:[%s5 + $0x388] sm:$0xff]
        %v2791 = vld [vmem:[%s5 + $0x390] sm:$0xff]
        %v2792 = vld [vmem:[%s5 + $0x398] sm:$0xff]
        %v2793 = vld [vmem:[%s5 + $0x3a0] sm:$0xff]
        %v2794 = vld [vmem:[%s5 + $0x3a8] sm:$0xff]
        %v2795 = vld [vmem:[%s5 + $0x3b0] sm:$0xff]
        %v2796 = vld [vmem:[%s5 + $0x3b8] sm:$0xff]
        %v2797 = vld [vmem:[%s5 + $0x3c0] sm:$0xff]
        %v2798 = vld [vmem:[%s5 + $0x3c8] sm:$0xff]
        %v2799 = vld [vmem:[%s5 + $0x3d0] sm:$0xff]
        %v2800 = vld [vmem:[%s5 + $0x3d8] sm:$0xff]
        %v2801 = vld [vmem:[%s5 + $0x3e0] sm:$0xff]
        %v2802 = vld [vmem:[%s5 + $0x3e8] sm:$0xff]
        %v2803 = vld [vmem:[%s5 + $0x3f0] sm:$0xff]
        %v2804 = vld [vmem:[%s5 + $0x3f8] sm:$0xff]
        %s2805 = scalar_lea.vmem [#allocation2], 56
        %v2806 = vld [vmem:[%s2805] sm:$0xff]
        %v2807 = vld [vmem:[%s2805 + $0x8] sm:$0xff]
        %v2808 = vld [vmem:[%s2805 + $0x10] sm:$0xff]
        %v2809 = vld [vmem:[%s2805 + $0x18] sm:$0xff]
        %v2810 = vld [vmem:[%s2805 + $0x20] sm:$0xff]
        %v2811 = vld [vmem:[%s2805 + $0x28] sm:$0xff]
        %v2812 = vld [vmem:[%s2805 + $0x30] sm:$0xff]
        %v2814 = vsel %vm2441, %v2806, 0
        %v2817 = vsel %vm2441, %v2807, 0
        %v2820 = vsel %vm2441, %v2808, 0
        %v2823 = vsel %vm2441, %v2809, 0
        %v2826 = vsel %vm2441, %v2810, 0
        %v2829 = vsel %vm2441, %v2811, 0
        %v2832 = vsel %vm2441, %v2812, 0
        %2834 = vmatprep.subr.mxu0 %v2375
        %2835 = vmatpush1.msra.mxu0 %v2374
        %2836 = vmatprep.subr.mxu0 %v2379
        %2837 = vmatpush1.msra.mxu0 %v2378
        %2838 = vmatprep.subr.mxu0 %v2383
        %2839 = vmatpush1.msra.mxu0 %v2382
        %2840 = vmatprep.subr.mxu0 %v2387
        %2841 = vmatpush1.msra.mxu0 %v2386
        %2842 = vmatprep.subr.mxu0 %v2391
        %2843 = vmatpush1.msra.mxu0 %v2390
        %2844 = vmatprep.subr.mxu0 %v2395
        %2845 = vmatpush1.msra.mxu0 %v2394
        %2846 = vmatprep.subr.mxu0 %v2399
        %2847 = vmatpush1.msra.mxu0 %v2398
        %2848 = vmatprep.subr.mxu0 %v2403
        %2849 = vmatpush1.msra.mxu0 %v2402
        %2850 = vmatprep.subr.mxu0 %v2407
        %2851 = vmatpush1.msra.mxu0 %v2406
        %2852 = vmatprep.subr.mxu0 %v2411
        %2853 = vmatpush1.msra.mxu0 %v2410
        %2854 = vmatprep.subr.mxu0 %v2415
        %2855 = vmatpush1.msra.mxu0 %v2414
        %2856 = vmatprep.subr.mxu0 %v2419
        %2857 = vmatpush1.msra.mxu0 %v2418
        %2858 = vmatprep.subr.mxu0 %v2423
        %2859 = vmatpush1.msra.mxu0 %v2422
        %2860 = vmatprep.subr.mxu0 %v2427
        %2861 = vmatpush1.msra.mxu0 %v2426
        %2862 = vmatprep.subr.mxu0 %v2431
        %2863 = vmatpush1.msra.mxu0 %v2430
        %2864 = vmatprep.subr.mxu0 0.0
        %2865 = vmatpush1.msra.mxu0 0.0
        %2866 = vmatprep.subr.mxu0 0.0
        %2867 = vmatpush1.msra.mxu0 0.0
        %2868 = vmatprep.subr.mxu0 0.0
        %2869 = vmatpush1.msra.mxu0 0.0
        %2870 = vmatprep.subr.mxu0 0.0
        %2871 = vmatpush1.msra.mxu0 0.0
        %2872 = vmatprep.subr.mxu0 0.0
        %2873 = vmatpush1.msra.mxu0 0.0
        %2874 = vmatprep.subr.mxu0 0.0
        %2875 = vmatpush1.msra.mxu0 0.0
        %2876 = vmatprep.subr.mxu0 0.0
        %2877 = vmatpush1.msra.mxu0 0.0
        %2878 = vmatprep.subr.mxu0 0.0
        %2879 = vmatpush1.msra.mxu0 0.0
        %2880 = vmatprep.subr.mxu0 0.0
        %2881 = vmatpush1.msra.mxu0 0.0
        %2882 = vmatprep.subr.mxu0 0.0
        %2883 = vmatpush1.msra.mxu0 0.0
        %2884 = vmatprep.subr.mxu0 0.0
        %2885 = vmatpush1.msra.mxu0 0.0
        %2886 = vmatprep.subr.mxu0 0.0
        %2887 = vmatpush1.msra.mxu0 0.0
        %2888 = vmatprep.subr.mxu0 0.0
        %2889 = vmatpush1.msra.mxu0 0.0
        %2890 = vmatprep.subr.mxu0 0.0
        %2891 = vmatpush1.msra.mxu0 0.0
        %2892 = vmatprep.subr.mxu0 0.0
        %2893 = vmatpush1.msra.mxu0 0.0
        %2894 = vmatprep.subr.mxu0 0.0
        %2895 = vmatpush1.msra.mxu0 0.0
        %2896 = vmatprep.subr.mxu0 0.0
        %2897 = vmatpush1.msra.mxu0 0.0
        %2898 = vmatprep.mubr.f32.mxu0 0.0
        %2899 = vmatmul.mubr.f32.gmra.mrb[0].mxu0 %v2814
        %v2900 = vpop.f32.mrb[0].mxu0
        %v2901 = vadd.f32 0.0, %v2900
        %v2902 = vpop.f32.mrb[0].mxu0
        %v2903 = vadd.f32 0.0, %v2902
        %2904 = vmatprep.mubr.f32.mxu0 0.0
        %2905 = vmatmul.mubr.f32.gmra.mrb[0].mxu0 %v2817
        %v2906 = vpop.f32.mrb[0].mxu0
        %v2907 = vadd.f32 0.0, %v2906
        %v2908 = vpop.f32.mrb[0].mxu0
        %v2909 = vadd.f32 0.0, %v2908
        %2910 = vmatprep.mubr.f32.mxu0 0.0
        %2911 = vmatmul.mubr.f32.gmra.mrb[0].mxu0 %v2820
        %v2912 = vpop.f32.mrb[0].mxu0
        %v2913 = vadd.f32 0.0, %v2912
        %v2914 = vpop.f32.mrb[0].mxu0
        %v2915 = vadd.f32 0.0, %v2914
        %2916 = vmatprep.mubr.f32.mxu0 0.0
        %2917 = vmatmul.mubr.f32.gmra.mrb[0].mxu0 %v2823
        %v2918 = vpop.f32.mrb[0].mxu0
        %v2919 = vadd.f32 0.0, %v2918
        %v2920 = vpop.f32.mrb[0].mxu0
        %v2921 = vadd.f32 0.0, %v2920
        %2922 = vmatprep.mubr.f32.mxu0 0.0
        %2923 = vmatmul.mubr.f32.gmra.mrb[0].mxu0 %v2826
        %v2924 = vpop.f32.mrb[0].mxu0
        %v2925 = vadd.f32 0.0, %v2924
        %v2926 = vpop.f32.mrb[0].mxu0
        %v2927 = vadd.f32 0.0, %v2926
        %2928 = vmatprep.mubr.f32.mxu0 0.0
        %2929 = vmatmul.mubr.f32.gmra.mrb[0].mxu0 %v2829
        %v2930 = vpop.f32.mrb[0].mxu0
        %v2931 = vadd.f32 0.0, %v2930
        %v2932 = vpop.f32.mrb[0].mxu0
        %v2933 = vadd.f32 0.0, %v2932
        %2934 = vmatprep.mubr.f32.mxu0 0.0
        %2935 = vmatmul.mubr.f32.gmra.mrb[0].mxu0 %v2832
        %v2936 = vpop.f32.mrb[0].mxu0
        %v2937 = vadd.f32 0.0, %v2936
        %v2938 = vpop.f32.mrb[0].mxu0
        %v2939 = vadd.f32 0.0, %v2938
        %2940 = vdwg.mxu0
        %2941 = vmatprep.subr.mxu0 %v2377
        %2942 = vmatpush1.msra.mxu0 %v2376
        %2943 = vmatprep.subr.mxu0 %v2381
        %2944 = vmatpush1.msra.mxu0 %v2380
        %2945 = vmatprep.subr.mxu0 %v2385
        %2946 = vmatpush1.msra.mxu0 %v2384
        %2947 = vmatprep.subr.mxu0 %v2389
        %2948 = vmatpush1.msra.mxu0 %v2388
        %2949 = vmatprep.subr.mxu0 %v2393
        %2950 = vmatpush1.msra.mxu0 %v2392
        %2951 = vmatprep.subr.mxu0 %v2397
        %2952 = vmatpush1.msra.mxu0 %v2396
        %2953 = vmatprep.subr.mxu0 %v2401
        %2954 = vmatpush1.msra.mxu0 %v2400
        %2955 = vmatprep.subr.mxu0 %v2405
        %2956 = vmatpush1.msra.mxu0 %v2404
        %2957 = vmatprep.subr.mxu0 %v2409
        %2958 = vmatpush1.msra.mxu0 %v2408
        %2959 = vmatprep.subr.mxu0 %v2413
        %2960 = vmatpush1.msra.mxu0 %v2412
        %2961 = vmatprep.subr.mxu0 %v2417
        %2962 = vmatpush1.msra.mxu0 %v2416
        %2963 = vmatprep.subr.mxu0 %v2421
        %2964 = vmatpush1.msra.mxu0 %v2420
        %2965 = vmatprep.subr.mxu0 %v2425
        %2966 = vmatpush1.msra.mxu0 %v2424
        %2967 = vmatprep.subr.mxu0 %v2429
        %2968 = vmatpush1.msra.mxu0 %v2428
        %2969 = vmatprep.subr.mxu0 %v2433
        %2970 = vmatpush1.msra.mxu0 %v2432
        %2971 = vmatprep.subr.mxu0 0.0
        %2972 = vmatpush1.msra.mxu0 0.0
        %2973 = vmatprep.subr.mxu0 0.0
        %2974 = vmatpush1.msra.mxu0 0.0
        %2975 = vmatprep.subr.mxu0 0.0
        %2976 = vmatpush1.msra.mxu0 0.0
        %2977 = vmatprep.subr.mxu0 0.0
        %2978 = vmatpush1.msra.mxu0 0.0
        %2979 = vmatprep.subr.mxu0 0.0
        %2980 = vmatpush1.msra.mxu0 0.0
        %2981 = vmatprep.subr.mxu0 0.0
        %2982 = vmatpush1.msra.mxu0 0.0
        %2983 = vmatprep.subr.mxu0 0.0
        %2984 = vmatpush1.msra.mxu0 0.0
        %2985 = vmatprep.subr.mxu0 0.0
        %2986 = vmatpush1.msra.mxu0 0.0
        %2987 = vmatprep.subr.mxu0 0.0
        %2988 = vmatpush1.msra.mxu0 0.0
        %2989 = vmatprep.subr.mxu0 0.0
        %2990 = vmatpush1.msra.mxu0 0.0
        %2991 = vmatprep.subr.mxu0 0.0
        %2992 = vmatpush1.msra.mxu0 0.0
        %2993 = vmatprep.subr.mxu0 0.0
        %2994 = vmatpush1.msra.mxu0 0.0
        %2995 = vmatprep.subr.mxu0 0.0
        %2996 = vmatpush1.msra.mxu0 0.0
        %2997 = vmatprep.subr.mxu0 0.0
        %2998 = vmatpush1.msra.mxu0 0.0
        %2999 = vmatprep.subr.mxu0 0.0
        %3000 = vmatpush1.msra.mxu0 0.0
        %3001 = vmatprep.subr.mxu0 0.0
        %3002 = vmatpush1.msra.mxu0 0.0
        %3003 = vmatprep.subr.mxu0 0.0
        %3004 = vmatpush1.msra.mxu0 0.0
        %3005 = vmatprep.mubr.f32.mxu0 0.0
        %3006 = vmatmul.mubr.f32.gmra.mrb[0].mxu0 %v2814
        %v3007 = vpop.f32.mrb[0].mxu0
        %v3008 = vadd.f32 0.0, %v3007
        %v3009 = vpop.f32.mrb[0].mxu0
        %v3010 = vadd.f32 0.0, %v3009
        %3011 = vmatprep.mubr.f32.mxu0 0.0
        %3012 = vmatmul.mubr.f32.gmra.mrb[0].mxu0 %v2817
        %v3013 = vpop.f32.mrb[0].mxu0
        %v3014 = vadd.f32 0.0, %v3013
        %v3015 = vpop.f32.mrb[0].mxu0
        %v3016 = vadd.f32 0.0, %v3015
        %3017 = vmatprep.mubr.f32.mxu0 0.0
        %3018 = vmatmul.mubr.f32.gmra.mrb[0].mxu0 %v2820
        %v3019 = vpop.f32.mrb[0].mxu0
        %v3020 = vadd.f32 0.0, %v3019
        %v3021 = vpop.f32.mrb[0].mxu0
        %v3022 = vadd.f32 0.0, %v3021
        %3023 = vmatprep.mubr.f32.mxu0 0.0
        %3024 = vmatmul.mubr.f32.gmra.mrb[0].mxu0 %v2823
        %v3025 = vpop.f32.mrb[0].mxu0
        %v3026 = vadd.f32 0.0, %v3025
        %v3027 = vpop.f32.mrb[0].mxu0
        %v3028 = vadd.f32 0.0, %v3027
        %3029 = vmatprep.mubr.f32.mxu0 0.0
        %3030 = vmatmul.mubr.f32.gmra.mrb[0].mxu0 %v2826
        %v3031 = vpop.f32.mrb[0].mxu0
        %v3032 = vadd.f32 0.0, %v3031
        %v3033 = vpop.f32.mrb[0].mxu0
        %v3034 = vadd.f32 0.0, %v3033
        %3035 = vmatprep.mubr.f32.mxu0 0.0
        %3036 = vmatmul.mubr.f32.gmra.mrb[0].mxu0 %v2829
        %v3037 = vpop.f32.mrb[0].mxu0
        %v3038 = vadd.f32 0.0, %v3037
        %v3039 = vpop.f32.mrb[0].mxu0
        %v3040 = vadd.f32 0.0, %v3039
        %3041 = vmatprep.mubr.f32.mxu0 0.0
        %3042 = vmatmul.mubr.f32.gmra.mrb[0].mxu0 %v2832
        %v3043 = vpop.f32.mrb[0].mxu0
        %v3044 = vadd.f32 0.0, %v3043
        %v3045 = vpop.f32.mrb[0].mxu0
        %v3046 = vadd.f32 0.0, %v3045
        %3047 = vdwg.mxu0
        %s3048 = scalar_lea.vmem %s5, 1024
        %v3049 = vld [vmem:[%s3048] sm:$0xff]
        %v3050 = vld [vmem:[%s3048 + $0x8] sm:$0xff]
        %v3051 = vld [vmem:[%s3048 + $0x10] sm:$0xff]
        %v3052 = vld [vmem:[%s3048 + $0x18] sm:$0xff]
        %v3053 = vld [vmem:[%s3048 + $0x20] sm:$0xff]
        %v3054 = vld [vmem:[%s3048 + $0x28] sm:$0xff]
        %v3055 = vld [vmem:[%s3048 + $0x30] sm:$0xff]
        %v3056 = vld [vmem:[%s3048 + $0x38] sm:$0xff]
        %v3057 = vld [vmem:[%s3048 + $0x40] sm:$0xff]
        %v3058 = vld [vmem:[%s3048 + $0x48] sm:$0xff]
        %v3059 = vld [vmem:[%s3048 + $0x50] sm:$0xff]
        %v3060 = vld [vmem:[%s3048 + $0x58] sm:$0xff]
        %v3061 = vld [vmem:[%s3048 + $0x60] sm:$0xff]
        %v3062 = vld [vmem:[%s3048 + $0x68] sm:$0xff]
        %v3063 = vld [vmem:[%s3048 + $0x70] sm:$0xff]
        %v3064 = vld [vmem:[%s3048 + $0x78] sm:$0xff]
        %v3065 = vld [vmem:[%s3048 + $0x80] sm:$0xff]
        %v3066 = vld [vmem:[%s3048 + $0x88] sm:$0xff]
        %v3067 = vld [vmem:[%s3048 + $0x90] sm:$0xff]
        %v3068 = vld [vmem:[%s3048 + $0x98] sm:$0xff]
        %v3069 = vld [vmem:[%s3048 + $0xa0] sm:$0xff]
        %v3070 = vld [vmem:[%s3048 + $0xa8] sm:$0xff]
        %v3071 = vld [vmem:[%s3048 + $0xb0] sm:$0xff]
        %v3072 = vld [vmem:[%s3048 + $0xb8] sm:$0xff]
        %v3073 = vld [vmem:[%s3048 + $0xc0] sm:$0xff]
        %v3074 = vld [vmem:[%s3048 + $0xc8] sm:$0xff]
        %v3075 = vld [vmem:[%s3048 + $0xd0] sm:$0xff]
        %v3076 = vld [vmem:[%s3048 + $0xd8] sm:$0xff]
        %v3077 = vld [vmem:[%s3048 + $0xe0] sm:$0xff]
        %v3078 = vld [vmem:[%s3048 + $0xe8] sm:$0xff]
        %v3079 = vld [vmem:[%s3048 + $0xf0] sm:$0xff]
        %v3080 = vld [vmem:[%s3048 + $0xf8] sm:$0xff]
        %v3081 = vld [vmem:[%s3048 + $0x100] sm:$0xff]
        %v3082 = vld [vmem:[%s3048 + $0x108] sm:$0xff]
        %v3083 = vld [vmem:[%s3048 + $0x110] sm:$0xff]
        %v3084 = vld [vmem:[%s3048 + $0x118] sm:$0xff]
        %v3085 = vld [vmem:[%s3048 + $0x120] sm:$0xff]
        %v3086 = vld [vmem:[%s3048 + $0x128] sm:$0xff]
        %v3087 = vld [vmem:[%s3048 + $0x130] sm:$0xff]
        %v3088 = vld [vmem:[%s3048 + $0x138] sm:$0xff]
        %v3089 = vld [vmem:[%s3048 + $0x140] sm:$0xff]
        %v3090 = vld [vmem:[%s3048 + $0x148] sm:$0xff]
        %v3091 = vld [vmem:[%s3048 + $0x150] sm:$0xff]
        %v3092 = vld [vmem:[%s3048 + $0x158] sm:$0xff]
        %v3093 = vld [vmem:[%s3048 + $0x160] sm:$0xff]
        %v3094 = vld [vmem:[%s3048 + $0x168] sm:$0xff]
        %v3095 = vld [vmem:[%s3048 + $0x170] sm:$0xff]
        %v3096 = vld [vmem:[%s3048 + $0x178] sm:$0xff]
        %v3097 = vld [vmem:[%s3048 + $0x180] sm:$0xff]
        %v3098 = vld [vmem:[%s3048 + $0x188] sm:$0xff]
        %v3099 = vld [vmem:[%s3048 + $0x190] sm:$0xff]
        %v3100 = vld [vmem:[%s3048 + $0x198] sm:$0xff]
        %v3101 = vld [vmem:[%s3048 + $0x1a0] sm:$0xff]
        %v3102 = vld [vmem:[%s3048 + $0x1a8] sm:$0xff]
        %v3103 = vld [vmem:[%s3048 + $0x1b0] sm:$0xff]
        %v3104 = vld [vmem:[%s3048 + $0x1b8] sm:$0xff]
        %v3105 = vld [vmem:[%s3048 + $0x1c0] sm:$0xff]
        %v3106 = vld [vmem:[%s3048 + $0x1c8] sm:$0xff]
        %v3107 = vld [vmem:[%s3048 + $0x1d0] sm:$0xff]
        %v3108 = vld [vmem:[%s3048 + $0x1d8] sm:$0xff]
        %v3109 = vld [vmem:[%s3048 + $0x1e0] sm:$0xff]
        %v3110 = vld [vmem:[%s3048 + $0x1e8] sm:$0xff]
        %v3111 = vld [vmem:[%s3048 + $0x1f0] sm:$0xff]
        %v3112 = vld [vmem:[%s3048 + $0x1f8] sm:$0xff]
        %v3113 = vld [vmem:[%s3048 + $0x200] sm:$0xff]
        %v3114 = vld [vmem:[%s3048 + $0x208] sm:$0xff]
        %v3115 = vld [vmem:[%s3048 + $0x210] sm:$0xff]
        %v3116 = vld [vmem:[%s3048 + $0x218] sm:$0xff]
        %v3117 = vld [vmem:[%s3048 + $0x220] sm:$0xff]
        %v3118 = vld [vmem:[%s3048 + $0x228] sm:$0xff]
        %v3119 = vld [vmem:[%s3048 + $0x230] sm:$0xff]
        %v3120 = vld [vmem:[%s3048 + $0x238] sm:$0xff]
        %v3121 = vld [vmem:[%s3048 + $0x240] sm:$0xff]
        %v3122 = vld [vmem:[%s3048 + $0x248] sm:$0xff]
        %v3123 = vld [vmem:[%s3048 + $0x250] sm:$0xff]
        %v3124 = vld [vmem:[%s3048 + $0x258] sm:$0xff]
        %v3125 = vld [vmem:[%s3048 + $0x260] sm:$0xff]
        %v3126 = vld [vmem:[%s3048 + $0x268] sm:$0xff]
        %v3127 = vld [vmem:[%s3048 + $0x270] sm:$0xff]
        %v3128 = vld [vmem:[%s3048 + $0x278] sm:$0xff]
        %v3129 = vld [vmem:[%s3048 + $0x280] sm:$0xff]
        %v3130 = vld [vmem:[%s3048 + $0x288] sm:$0xff]
        %v3131 = vld [vmem:[%s3048 + $0x290] sm:$0xff]
        %v3132 = vld [vmem:[%s3048 + $0x298] sm:$0xff]
        %v3133 = vld [vmem:[%s3048 + $0x2a0] sm:$0xff]
        %v3134 = vld [vmem:[%s3048 + $0x2a8] sm:$0xff]
        %v3135 = vld [vmem:[%s3048 + $0x2b0] sm:$0xff]
        %v3136 = vld [vmem:[%s3048 + $0x2b8] sm:$0xff]
        %v3137 = vld [vmem:[%s3048 + $0x2c0] sm:$0xff]
        %v3138 = vld [vmem:[%s3048 + $0x2c8] sm:$0xff]
        %v3139 = vld [vmem:[%s3048 + $0x2d0] sm:$0xff]
        %v3140 = vld [vmem:[%s3048 + $0x2d8] sm:$0xff]
        %v3141 = vld [vmem:[%s3048 + $0x2e0] sm:$0xff]
        %v3142 = vld [vmem:[%s3048 + $0x2e8] sm:$0xff]
        %v3143 = vld [vmem:[%s3048 + $0x2f0] sm:$0xff]
        %v3144 = vld [vmem:[%s3048 + $0x2f8] sm:$0xff]
        %v3145 = vld [vmem:[%s3048 + $0x300] sm:$0xff]
        %v3146 = vld [vmem:[%s3048 + $0x308] sm:$0xff]
        %v3147 = vld [vmem:[%s3048 + $0x310] sm:$0xff]
        %v3148 = vld [vmem:[%s3048 + $0x318] sm:$0xff]
        %v3149 = vld [vmem:[%s3048 + $0x320] sm:$0xff]
        %v3150 = vld [vmem:[%s3048 + $0x328] sm:$0xff]
        %v3151 = vld [vmem:[%s3048 + $0x330] sm:$0xff]
        %v3152 = vld [vmem:[%s3048 + $0x338] sm:$0xff]
        %v3153 = vld [vmem:[%s3048 + $0x340] sm:$0xff]
        %v3154 = vld [vmem:[%s3048 + $0x348] sm:$0xff]
        %v3155 = vld [vmem:[%s3048 + $0x350] sm:$0xff]
        %v3156 = vld [vmem:[%s3048 + $0x358] sm:$0xff]
        %v3157 = vld [vmem:[%s3048 + $0x360] sm:$0xff]
        %v3158 = vld [vmem:[%s3048 + $0x368] sm:$0xff]
        %v3159 = vld [vmem:[%s3048 + $0x370] sm:$0xff]
        %v3160 = vld [vmem:[%s3048 + $0x378] sm:$0xff]
        %v3161 = vld [vmem:[%s3048 + $0x380] sm:$0xff]
        %v3162 = vld [vmem:[%s3048 + $0x388] sm:$0xff]
        %v3163 = vld [vmem:[%s3048 + $0x390] sm:$0xff]
        %v3164 = vld [vmem:[%s3048 + $0x398] sm:$0xff]
        %v3165 = vld [vmem:[%s3048 + $0x3a0] sm:$0xff]
        %v3166 = vld [vmem:[%s3048 + $0x3a8] sm:$0xff]
        %v3167 = vld [vmem:[%s3048 + $0x3b0] sm:$0xff]
        %v3168 = vld [vmem:[%s3048 + $0x3b8] sm:$0xff]
        %v3169 = vld [vmem:[%s3048 + $0x3c0] sm:$0xff]
        %v3170 = vld [vmem:[%s3048 + $0x3c8] sm:$0xff]
        %v3171 = vld [vmem:[%s3048 + $0x3d0] sm:$0xff]
        %v3172 = vld [vmem:[%s3048 + $0x3d8] sm:$0xff]
        %v3173 = vld [vmem:[%s3048 + $0x3e0] sm:$0xff]
        %v3174 = vld [vmem:[%s3048 + $0x3e8] sm:$0xff]
        %v3175 = vld [vmem:[%s3048 + $0x3f0] sm:$0xff]
        %v3176 = vld [vmem:[%s3048 + $0x3f8] sm:$0xff]
        %3177 = vmatprep.subr.mxu0 %v3050
        %3178 = vmatpush1.msra.mxu0 %v3049
        %3179 = vmatprep.subr.mxu0 %v3052
        %3180 = vmatpush1.msra.mxu0 %v3051
        %3181 = vmatprep.subr.mxu0 %v3054
        %3182 = vmatpush1.msra.mxu0 %v3053
        %3183 = vmatprep.subr.mxu0 %v3056
        %3184 = vmatpush1.msra.mxu0 %v3055
        %3185 = vmatprep.subr.mxu0 %v3058
        %3186 = vmatpush1.msra.mxu0 %v3057
        %3187 = vmatprep.subr.mxu0 %v3060
        %3188 = vmatpush1.msra.mxu0 %v3059
        %3189 = vmatprep.subr.mxu0 %v3062
        %3190 = vmatpush1.msra.mxu0 %v3061
        %3191 = vmatprep.subr.mxu0 %v3064
        %3192 = vmatpush1.msra.mxu0 %v3063
        %3193 = vmatprep.subr.mxu0 %v3066
        %3194 = vmatpush1.msra.mxu0 %v3065
        %3195 = vmatprep.subr.mxu0 %v3068
        %3196 = vmatpush1.msra.mxu0 %v3067
        %3197 = vmatprep.subr.mxu0 %v3070
        %3198 = vmatpush1.msra.mxu0 %v3069
        %3199 = vmatprep.subr.mxu0 %v3072
        %3200 = vmatpush1.msra.mxu0 %v3071
        %3201 = vmatprep.subr.mxu0 %v3074
        %3202 = vmatpush1.msra.mxu0 %v3073
        %3203 = vmatprep.subr.mxu0 %v3076
        %3204 = vmatpush1.msra.mxu0 %v3075
        %3205 = vmatprep.subr.mxu0 %v3078
        %3206 = vmatpush1.msra.mxu0 %v3077
        %3207 = vmatprep.subr.mxu0 %v3080
        %3208 = vmatpush1.msra.mxu0 %v3079
        %3209 = vmatprep.subr.mxu0 %v3082
        %3210 = vmatpush1.msra.mxu0 %v3081
        %3211 = vmatprep.subr.mxu0 %v3084
        %3212 = vmatpush1.msra.mxu0 %v3083
        %3213 = vmatprep.subr.mxu0 %v3086
        %3214 = vmatpush1.msra.mxu0 %v3085
        %3215 = vmatprep.subr.mxu0 %v3088
        %3216 = vmatpush1.msra.mxu0 %v3087
        %3217 = vmatprep.subr.mxu0 %v3090
        %3218 = vmatpush1.msra.mxu0 %v3089
        %3219 = vmatprep.subr.mxu0 %v3092
        %3220 = vmatpush1.msra.mxu0 %v3091
        %3221 = vmatprep.subr.mxu0 %v3094
        %3222 = vmatpush1.msra.mxu0 %v3093
        %3223 = vmatprep.subr.mxu0 %v3096
        %3224 = vmatpush1.msra.mxu0 %v3095
        %3225 = vmatprep.subr.mxu0 %v3098
        %3226 = vmatpush1.msra.mxu0 %v3097
        %3227 = vmatprep.subr.mxu0 %v3100
        %3228 = vmatpush1.msra.mxu0 %v3099
        %3229 = vmatprep.subr.mxu0 %v3102
        %3230 = vmatpush1.msra.mxu0 %v3101
        %3231 = vmatprep.subr.mxu0 %v3104
        %3232 = vmatpush1.msra.mxu0 %v3103
        %3233 = vmatprep.subr.mxu0 %v3106
        %3234 = vmatpush1.msra.mxu0 %v3105
        %3235 = vmatprep.subr.mxu0 %v3108
        %3236 = vmatpush1.msra.mxu0 %v3107
        %3237 = vmatprep.subr.mxu0 %v3110
        %3238 = vmatpush1.msra.mxu0 %v3109
        %3239 = vmatprep.subr.mxu0 %v3112
        %3240 = vmatpush1.msra.mxu0 %v3111
        %3241 = vmatprep.mubr.f32.mxu0 %v2903
        %3242 = vmatmul.mubr.f32.gmra.mrb[0].mxu0 %v2901
        %v3243 = vpop.f32.mrb[0].mxu0
        %v3244 = vadd.f32 0.0, %v3243
        %v3245 = vpop.f32.mrb[0].mxu0
        %v3246 = vadd.f32 0.0, %v3245
        %3247 = vmatprep.mubr.f32.mxu0 %v2909
        %3248 = vmatmul.mubr.f32.gmra.mrb[0].mxu0 %v2907
        %v3249 = vpop.f32.mrb[0].mxu0
        %v3250 = vadd.f32 0.0, %v3249
        %v3251 = vpop.f32.mrb[0].mxu0
        %v3252 = vadd.f32 0.0, %v3251
        %3253 = vmatprep.mubr.f32.mxu0 %v2915
        %3254 = vmatmul.mubr.f32.gmra.mrb[0].mxu0 %v2913
        %v3255 = vpop.f32.mrb[0].mxu0
        %v3256 = vadd.f32 0.0, %v3255
        %v3257 = vpop.f32.mrb[0].mxu0
        %v3258 = vadd.f32 0.0, %v3257
        %3259 = vmatprep.mubr.f32.mxu0 %v2921
        %3260 = vmatmul.mubr.f32.gmra.mrb[0].mxu0 %v2919
        %v3261 = vpop.f32.mrb[0].mxu0
        %v3262 = vadd.f32 0.0, %v3261
        %v3263 = vpop.f32.mrb[0].mxu0
        %v3264 = vadd.f32 0.0, %v3263
        %3265 = vmatprep.mubr.f32.mxu0 %v2927
        %3266 = vmatmul.mubr.f32.gmra.mrb[0].mxu0 %v2925
        %v3267 = vpop.f32.mrb[0].mxu0
        %v3268 = vadd.f32 0.0, %v3267
        %v3269 = vpop.f32.mrb[0].mxu0
        %v3270 = vadd.f32 0.0, %v3269
        %3271 = vmatprep.mubr.f32.mxu0 %v2933
        %3272 = vmatmul.mubr.f32.gmra.mrb[0].mxu0 %v2931
        %v3273 = vpop.f32.mrb[0].mxu0
        %v3274 = vadd.f32 0.0, %v3273
        %v3275 = vpop.f32.mrb[0].mxu0
        %v3276 = vadd.f32 0.0, %v3275
        %3277 = vmatprep.mubr.f32.mxu0 %v2939
        %3278 = vmatmul.mubr.f32.gmra.mrb[0].mxu0 %v2937
        %v3279 = vpop.f32.mrb[0].mxu0
        %v3280 = vadd.f32 0.0, %v3279
        %v3281 = vpop.f32.mrb[0].mxu0
        %v3282 = vadd.f32 0.0, %v3281
        %3283 = vdwg.mxu0
        %3284 = vmatprep.subr.mxu0 %v3114
        %3285 = vmatpush1.msra.mxu0 %v3113
        %3286 = vmatprep.subr.mxu0 %v3116
        %3287 = vmatpush1.msra.mxu0 %v3115
        %3288 = vmatprep.subr.mxu0 %v3118
        %3289 = vmatpush1.msra.mxu0 %v3117
        %3290 = vmatprep.subr.mxu0 %v3120
        %3291 = vmatpush1.msra.mxu0 %v3119
        %3292 = vmatprep.subr.mxu0 %v3122
        %3293 = vmatpush1.msra.mxu0 %v3121
        %3294 = vmatprep.subr.mxu0 %v3124
        %3295 = vmatpush1.msra.mxu0 %v3123
        %3296 = vmatprep.subr.mxu0 %v3126
        %3297 = vmatpush1.msra.mxu0 %v3125
        %3298 = vmatprep.subr.mxu0 %v3128
        %3299 = vmatpush1.msra.mxu0 %v3127
        %3300 = vmatprep.subr.mxu0 %v3130
        %3301 = vmatpush1.msra.mxu0 %v3129
        %3302 = vmatprep.subr.mxu0 %v3132
        %3303 = vmatpush1.msra.mxu0 %v3131
        %3304 = vmatprep.subr.mxu0 %v3134
        %3305 = vmatpush1.msra.mxu0 %v3133
        %3306 = vmatprep.subr.mxu0 %v3136
        %3307 = vmatpush1.msra.mxu0 %v3135
        %3308 = vmatprep.subr.mxu0 %v3138
        %3309 = vmatpush1.msra.mxu0 %v3137
        %3310 = vmatprep.subr.mxu0 %v3140
        %3311 = vmatpush1.msra.mxu0 %v3139
        %3312 = vmatprep.subr.mxu0 %v3142
        %3313 = vmatpush1.msra.mxu0 %v3141
        %3314 = vmatprep.subr.mxu0 %v3144
        %3315 = vmatpush1.msra.mxu0 %v3143
        %3316 = vmatprep.subr.mxu0 %v3146
        %3317 = vmatpush1.msra.mxu0 %v3145
        %3318 = vmatprep.subr.mxu0 %v3148
        %3319 = vmatpush1.msra.mxu0 %v3147
        %3320 = vmatprep.subr.mxu0 %v3150
        %3321 = vmatpush1.msra.mxu0 %v3149
        %3322 = vmatprep.subr.mxu0 %v3152
        %3323 = vmatpush1.msra.mxu0 %v3151
        %3324 = vmatprep.subr.mxu0 %v3154
        %3325 = vmatpush1.msra.mxu0 %v3153
        %3326 = vmatprep.subr.mxu0 %v3156
        %3327 = vmatpush1.msra.mxu0 %v3155
        %3328 = vmatprep.subr.mxu0 %v3158
        %3329 = vmatpush1.msra.mxu0 %v3157
        %3330 = vmatprep.subr.mxu0 %v3160
        %3331 = vmatpush1.msra.mxu0 %v3159
        %3332 = vmatprep.subr.mxu0 %v3162
        %3333 = vmatpush1.msra.mxu0 %v3161
        %3334 = vmatprep.subr.mxu0 %v3164
        %3335 = vmatpush1.msra.mxu0 %v3163
        %3336 = vmatprep.subr.mxu0 %v3166
        %3337 = vmatpush1.msra.mxu0 %v3165
        %3338 = vmatprep.subr.mxu0 %v3168
        %3339 = vmatpush1.msra.mxu0 %v3167
        %3340 = vmatprep.subr.mxu0 %v3170
        %3341 = vmatpush1.msra.mxu0 %v3169
        %3342 = vmatprep.subr.mxu0 %v3172
        %3343 = vmatpush1.msra.mxu0 %v3171
        %3344 = vmatprep.subr.mxu0 %v3174
        %3345 = vmatpush1.msra.mxu0 %v3173
        %3346 = vmatprep.subr.mxu0 %v3176
        %3347 = vmatpush1.msra.mxu0 %v3175
        %3348 = vmatprep.mubr.f32.mxu0 %v3010
        %3349 = vmatmul.mubr.f32.gmra.mrb[0].mxu0 %v3008
        %v3350 = vpop.f32.mrb[0].mxu0
        %v3351 = vadd.f32 %v3244, %v3350
        %v3352 = vpop.f32.mrb[0].mxu0
        %v3353 = vadd.f32 %v3246, %v3352
        %3354 = vmatprep.mubr.f32.mxu0 %v3016
        %3355 = vmatmul.mubr.f32.gmra.mrb[0].mxu0 %v3014
        %v3356 = vpop.f32.mrb[0].mxu0
        %v3357 = vadd.f32 %v3250, %v3356
        %v3358 = vpop.f32.mrb[0].mxu0
        %v3359 = vadd.f32 %v3252, %v3358
        %3360 = vmatprep.mubr.f32.mxu0 %v3022
        %3361 = vmatmul.mubr.f32.gmra.mrb[0].mxu0 %v3020
        %v3362 = vpop.f32.mrb[0].mxu0
        %v3363 = vadd.f32 %v3256, %v3362
        %v3364 = vpop.f32.mrb[0].mxu0
        %v3365 = vadd.f32 %v3258, %v3364
        %3366 = vmatprep.mubr.f32.mxu0 %v3028
        %3367 = vmatmul.mubr.f32.gmra.mrb[0].mxu0 %v3026
        %v3368 = vpop.f32.mrb[0].mxu0
        %v3369 = vadd.f32 %v3262, %v3368
        %v3370 = vpop.f32.mrb[0].mxu0
        %v3371 = vadd.f32 %v3264, %v3370
        %3372 = vmatprep.mubr.f32.mxu0 %v3034
        %3373 = vmatmul.mubr.f32.gmra.mrb[0].mxu0 %v3032
        %v3374 = vpop.f32.mrb[0].mxu0
        %v3375 = vadd.f32 %v3268, %v3374
        %v3376 = vpop.f32.mrb[0].mxu0
        %v3377 = vadd.f32 %v3270, %v3376
        %3378 = vmatprep.mubr.f32.mxu0 %v3040
        %3379 = vmatmul.mubr.f32.gmra.mrb[0].mxu0 %v3038
        %v3380 = vpop.f32.mrb[0].mxu0
        %v3381 = vadd.f32 %v3274, %v3380
        %v3382 = vpop.f32.mrb[0].mxu0
        %v3383 = vadd.f32 %v3276, %v3382
        %3384 = vmatprep.mubr.f32.mxu0 %v3046
        %3385 = vmatmul.mubr.f32.gmra.mrb[0].mxu0 %v3044
        %v3386 = vpop.f32.mrb[0].mxu0
        %v3387 = vadd.f32 %v3280, %v3386
        %v3388 = vpop.f32.mrb[0].mxu0
        %v3389 = vadd.f32 %v3282, %v3388
        %3390 = vdwg.mxu0
        %3391 = vmatprep.subr.mxu0 %v2678
        %3392 = vmatpush1.msra.mxu0 %v2677
        %3393 = vmatprep.subr.mxu0 %v2680
        %3394 = vmatpush1.msra.mxu0 %v2679
        %3395 = vmatprep.subr.mxu0 %v2682
        %3396 = vmatpush1.msra.mxu0 %v2681
        %3397 = vmatprep.subr.mxu0 %v2684
        %3398 = vmatpush1.msra.mxu0 %v2683
        %3399 = vmatprep.subr.mxu0 %v2686
        %3400 = vmatpush1.msra.mxu0 %v2685
        %3401 = vmatprep.subr.mxu0 %v2688
        %3402 = vmatpush1.msra.mxu0 %v2687
        %3403 = vmatprep.subr.mxu0 %v2690
        %3404 = vmatpush1.msra.mxu0 %v2689
        %3405 = vmatprep.subr.mxu0 %v2692
        %3406 = vmatpush1.msra.mxu0 %v2691
        %3407 = vmatprep.subr.mxu0 %v2694
        %3408 = vmatpush1.msra.mxu0 %v2693
        %3409 = vmatprep.subr.mxu0 %v2696
        %3410 = vmatpush1.msra.mxu0 %v2695
        %3411 = vmatprep.subr.mxu0 %v2698
        %3412 = vmatpush1.msra.mxu0 %v2697
        %3413 = vmatprep.subr.mxu0 %v2700
        %3414 = vmatpush1.msra.mxu0 %v2699
        %3415 = vmatprep.subr.mxu0 %v2702
        %3416 = vmatpush1.msra.mxu0 %v2701
        %3417 = vmatprep.subr.mxu0 %v2704
        %3418 = vmatpush1.msra.mxu0 %v2703
        %3419 = vmatprep.subr.mxu0 %v2706
        %3420 = vmatpush1.msra.mxu0 %v2705
        %3421 = vmatprep.subr.mxu0 %v2708
        %3422 = vmatpush1.msra.mxu0 %v2707
        %3423 = vmatprep.subr.mxu0 %v2710
        %3424 = vmatpush1.msra.mxu0 %v2709
        %3425 = vmatprep.subr.mxu0 %v2712
        %3426 = vmatpush1.msra.mxu0 %v2711
        %3427 = vmatprep.subr.mxu0 %v2714
        %3428 = vmatpush1.msra.mxu0 %v2713
        %3429 = vmatprep.subr.mxu0 %v2716
        %3430 = vmatpush1.msra.mxu0 %v2715
        %3431 = vmatprep.subr.mxu0 %v2718
        %3432 = vmatpush1.msra.mxu0 %v2717
        %3433 = vmatprep.subr.mxu0 %v2720
        %3434 = vmatpush1.msra.mxu0 %v2719
        %3435 = vmatprep.subr.mxu0 %v2722
        %3436 = vmatpush1.msra.mxu0 %v2721
        %3437 = vmatprep.subr.mxu0 %v2724
        %3438 = vmatpush1.msra.mxu0 %v2723
        %3439 = vmatprep.subr.mxu0 %v2726
        %3440 = vmatpush1.msra.mxu0 %v2725
        %3441 = vmatprep.subr.mxu0 %v2728
        %3442 = vmatpush1.msra.mxu0 %v2727
        %3443 = vmatprep.subr.mxu0 %v2730
        %3444 = vmatpush1.msra.mxu0 %v2729
        %3445 = vmatprep.subr.mxu0 %v2732
        %3446 = vmatpush1.msra.mxu0 %v2731
        %3447 = vmatprep.subr.mxu0 %v2734
        %3448 = vmatpush1.msra.mxu0 %v2733
        %3449 = vmatprep.subr.mxu0 %v2736
        %3450 = vmatpush1.msra.mxu0 %v2735
        %3451 = vmatprep.subr.mxu0 %v2738
        %3452 = vmatpush1.msra.mxu0 %v2737
        %3453 = vmatprep.subr.mxu0 %v2740
        %3454 = vmatpush1.msra.mxu0 %v2739
        %3455 = vmatprep.mubr.f32.mxu0 %v2532
        %3456 = vmatmul.mubr.f32.gmra.mrb[0].mxu0 %v2530
        %v3457 = vpop.f32.mrb[0].mxu0
        %v3458 = vadd.f32 %v3351, %v3457
        %v3459 = vpop.f32.mrb[0].mxu0
        %v3460 = vadd.f32 %v3353, %v3459
        %3461 = vmatprep.mubr.f32.mxu0 %v2538
        %3462 = vmatmul.mubr.f32.gmra.mrb[0].mxu0 %v2536
        %v3463 = vpop.f32.mrb[0].mxu0
        %v3464 = vadd.f32 %v3357, %v3463
        %v3465 = vpop.f32.mrb[0].mxu0
        %v3466 = vadd.f32 %v3359, %v3465
        %3467 = vmatprep.mubr.f32.mxu0 %v2544
        %3468 = vmatmul.mubr.f32.gmra.mrb[0].mxu0 %v2542
        %v3469 = vpop.f32.mrb[0].mxu0
        %v3470 = vadd.f32 %v3363, %v3469
        %v3471 = vpop.f32.mrb[0].mxu0
        %v3472 = vadd.f32 %v3365, %v3471
        %3473 = vmatprep.mubr.f32.mxu0 %v2550
        %3474 = vmatmul.mubr.f32.gmra.mrb[0].mxu0 %v2548
        %v3475 = vpop.f32.mrb[0].mxu0
        %v3476 = vadd.f32 %v3369, %v3475
        %v3477 = vpop.f32.mrb[0].mxu0
        %v3478 = vadd.f32 %v3371, %v3477
        %3479 = vmatprep.mubr.f32.mxu0 %v2556
        %3480 = vmatmul.mubr.f32.gmra.mrb[0].mxu0 %v2554
        %v3481 = vpop.f32.mrb[0].mxu0
        %v3482 = vadd.f32 %v3375, %v3481
        %v3483 = vpop.f32.mrb[0].mxu0
        %v3484 = vadd.f32 %v3377, %v3483
        %3485 = vmatprep.mubr.f32.mxu0 %v2562
        %3486 = vmatmul.mubr.f32.gmra.mrb[0].mxu0 %v2560
        %v3487 = vpop.f32.mrb[0].mxu0
        %v3488 = vadd.f32 %v3381, %v3487
        %v3489 = vpop.f32.mrb[0].mxu0
        %v3490 = vadd.f32 %v3383, %v3489
        %3491 = vmatprep.mubr.f32.mxu0 %v2568
        %3492 = vmatmul.mubr.f32.gmra.mrb[0].mxu0 %v2566
        %v3493 = vpop.f32.mrb[0].mxu0
        %v3494 = vadd.f32 %v3387, %v3493
        %v3495 = vpop.f32.mrb[0].mxu0
        %v3496 = vadd.f32 %v3389, %v3495
        %3497 = vdwg.mxu0
        %3498 = vmatprep.subr.mxu0 %v2742
        %3499 = vmatpush1.msra.mxu0 %v2741
        %3500 = vmatprep.subr.mxu0 %v2744
        %3501 = vmatpush1.msra.mxu0 %v2743
        %3502 = vmatprep.subr.mxu0 %v2746
        %3503 = vmatpush1.msra.mxu0 %v2745
        %3504 = vmatprep.subr.mxu0 %v2748
        %3505 = vmatpush1.msra.mxu0 %v2747
        %3506 = vmatprep.subr.mxu0 %v2750
        %3507 = vmatpush1.msra.mxu0 %v2749
        %3508 = vmatprep.subr.mxu0 %v2752
        %3509 = vmatpush1.msra.mxu0 %v2751
        %3510 = vmatprep.subr.mxu0 %v2754
        %3511 = vmatpush1.msra.mxu0 %v2753
        %3512 = vmatprep.subr.mxu0 %v2756
        %3513 = vmatpush1.msra.mxu0 %v2755
        %3514 = vmatprep.subr.mxu0 %v2758
        %3515 = vmatpush1.msra.mxu0 %v2757
        %3516 = vmatprep.subr.mxu0 %v2760
        %3517 = vmatpush1.msra.mxu0 %v2759
        %3518 = vmatprep.subr.mxu0 %v2762
        %3519 = vmatpush1.msra.mxu0 %v2761
        %3520 = vmatprep.subr.mxu0 %v2764
        %3521 = vmatpush1.msra.mxu0 %v2763
        %3522 = vmatprep.subr.mxu0 %v2766
        %3523 = vmatpush1.msra.mxu0 %v2765
        %3524 = vmatprep.subr.mxu0 %v2768
        %3525 = vmatpush1.msra.mxu0 %v2767
        %3526 = vmatprep.subr.mxu0 %v2770
        %3527 = vmatpush1.msra.mxu0 %v2769
        %3528 = vmatprep.subr.mxu0 %v2772
        %3529 = vmatpush1.msra.mxu0 %v2771
        %3530 = vmatprep.subr.mxu0 %v2774
        %3531 = vmatpush1.msra.mxu0 %v2773
        %3532 = vmatprep.subr.mxu0 %v2776
        %3533 = vmatpush1.msra.mxu0 %v2775
        %3534 = vmatprep.subr.mxu0 %v2778
        %3535 = vmatpush1.msra.mxu0 %v2777
        %3536 = vmatprep.subr.mxu0 %v2780
        %3537 = vmatpush1.msra.mxu0 %v2779
        %3538 = vmatprep.subr.mxu0 %v2782
        %3539 = vmatpush1.msra.mxu0 %v2781
        %3540 = vmatprep.subr.mxu0 %v2784
        %3541 = vmatpush1.msra.mxu0 %v2783
        %3542 = vmatprep.subr.mxu0 %v2786
        %3543 = vmatpush1.msra.mxu0 %v2785
        %3544 = vmatprep.subr.mxu0 %v2788
        %3545 = vmatpush1.msra.mxu0 %v2787
        %3546 = vmatprep.subr.mxu0 %v2790
        %3547 = vmatpush1.msra.mxu0 %v2789
        %3548 = vmatprep.subr.mxu0 %v2792
        %3549 = vmatpush1.msra.mxu0 %v2791
        %3550 = vmatprep.subr.mxu0 %v2794
        %3551 = vmatpush1.msra.mxu0 %v2793
        %3552 = vmatprep.subr.mxu0 %v2796
        %3553 = vmatpush1.msra.mxu0 %v2795
        %3554 = vmatprep.subr.mxu0 %v2798
        %3555 = vmatpush1.msra.mxu0 %v2797
        %3556 = vmatprep.subr.mxu0 %v2800
        %3557 = vmatpush1.msra.mxu0 %v2799
        %3558 = vmatprep.subr.mxu0 %v2802
        %3559 = vmatpush1.msra.mxu0 %v2801
        %3560 = vmatprep.subr.mxu0 %v2804
        %3561 = vmatpush1.msra.mxu0 %v2803
        %3562 = vmatprep.mubr.f32.mxu0 %v2639
        %3563 = vmatmul.mubr.f32.gmra.mrb[0].mxu0 %v2637
        %v3564 = vpop.f32.mrb[0].mxu0
        %v3565 = vadd.f32 %v3458, %v3564
        %v3566 = vpop.f32.mrb[0].mxu0
        %v3567 = vadd.f32 %v3460, %v3566
        %3568 = vmatprep.mubr.f32.mxu0 %v2645
        %3569 = vmatmul.mubr.f32.gmra.mrb[0].mxu0 %v2643
        %v3570 = vpop.f32.mrb[0].mxu0
        %v3571 = vadd.f32 %v3464, %v3570
        %v3572 = vpop.f32.mrb[0].mxu0
        %v3573 = vadd.f32 %v3466, %v3572
        %3574 = vmatprep.mubr.f32.mxu0 %v2651
        %3575 = vmatmul.mubr.f32.gmra.mrb[0].mxu0 %v2649
        %v3576 = vpop.f32.mrb[0].mxu0
        %v3577 = vadd.f32 %v3470, %v3576
        %v3578 = vpop.f32.mrb[0].mxu0
        %v3579 = vadd.f32 %v3472, %v3578
        %3580 = vmatprep.mubr.f32.mxu0 %v2657
        %3581 = vmatmul.mubr.f32.gmra.mrb[0].mxu0 %v2655
        %v3582 = vpop.f32.mrb[0].mxu0
        %v3583 = vadd.f32 %v3476, %v3582
        %v3584 = vpop.f32.mrb[0].mxu0
        %v3585 = vadd.f32 %v3478, %v3584
        %3586 = vmatprep.mubr.f32.mxu0 %v2663
        %3587 = vmatmul.mubr.f32.gmra.mrb[0].mxu0 %v2661
        %v3588 = vpop.f32.mrb[0].mxu0
        %v3589 = vadd.f32 %v3482, %v3588
        %v3590 = vpop.f32.mrb[0].mxu0
        %v3591 = vadd.f32 %v3484, %v3590
        %3592 = vmatprep.mubr.f32.mxu0 %v2669
        %3593 = vmatmul.mubr.f32.gmra.mrb[0].mxu0 %v2667
        %v3594 = vpop.f32.mrb[0].mxu0
        %v3595 = vadd.f32 %v3488, %v3594
        %v3596 = vpop.f32.mrb[0].mxu0
        %v3597 = vadd.f32 %v3490, %v3596
        %3598 = vmatprep.mubr.f32.mxu0 %v2675
        %3599 = vmatmul.mubr.f32.gmra.mrb[0].mxu0 %v2673
        %v3600 = vpop.f32.mrb[0].mxu0
        %v3601 = vadd.f32 %v3494, %v3600
        %v3602 = vpop.f32.mrb[0].mxu0
        %v3603 = vadd.f32 %v3496, %v3602
        %3604 = vdwg.mxu0
        %s3605 = scalar_lea.vmem [#allocation2], 112
        %v3606 = vld [vmem:[%s3605] sm:$0xff]
        %v3607 = vld [vmem:[%s3605 + $0x8] sm:$0xff]
        %v3608 = vld [vmem:[%s3605 + $0x10] sm:$0xff]
        %v3609 = vld [vmem:[%s3605 + $0x18] sm:$0xff]
        %v3610 = vld [vmem:[%s3605 + $0x20] sm:$0xff]
        %v3611 = vld [vmem:[%s3605 + $0x28] sm:$0xff]
        %v3612 = vld [vmem:[%s3605 + $0x30] sm:$0xff]
        %v3614 = vsel %vm2441, %v3606, 0
        %v3617 = vsel %vm2441, %v3607, 0
        %v3620 = vsel %vm2441, %v3608, 0
        %v3623 = vsel %vm2441, %v3609, 0
        %v3626 = vsel %vm2441, %v3610, 0
        %v3629 = vsel %vm2441, %v3611, 0
        %v3632 = vsel %vm2441, %v3612, 0
        %3634 = vmatprep.subr.mxu0 %v2375
        %3635 = vmatpush1.msra.mxu0 %v2374
        %3636 = vmatprep.subr.mxu0 %v2379
        %3637 = vmatpush1.msra.mxu0 %v2378
        %3638 = vmatprep.subr.mxu0 %v2383
        %3639 = vmatpush1.msra.mxu0 %v2382
        %3640 = vmatprep.subr.mxu0 %v2387
        %3641 = vmatpush1.msra.mxu0 %v2386
        %3642 = vmatprep.subr.mxu0 %v2391
        %3643 = vmatpush1.msra.mxu0 %v2390
        %3644 = vmatprep.subr.mxu0 %v2395
        %3645 = vmatpush1.msra.mxu0 %v2394
        %3646 = vmatprep.subr.mxu0 %v2399
        %3647 = vmatpush1.msra.mxu0 %v2398
        %3648 = vmatprep.subr.mxu0 %v2403
        %3649 = vmatpush1.msra.mxu0 %v2402
        %3650 = vmatprep.subr.mxu0 %v2407
        %3651 = vmatpush1.msra.mxu0 %v2406
        %3652 = vmatprep.subr.mxu0 %v2411
        %3653 = vmatpush1.msra.mxu0 %v2410
        %3654 = vmatprep.subr.mxu0 %v2415
        %3655 = vmatpush1.msra.mxu0 %v2414
        %3656 = vmatprep.subr.mxu0 %v2419
        %3657 = vmatpush1.msra.mxu0 %v2418
        %3658 = vmatprep.subr.mxu0 %v2423
        %3659 = vmatpush1.msra.mxu0 %v2422
        %3660 = vmatprep.subr.mxu0 %v2427
        %3661 = vmatpush1.msra.mxu0 %v2426
        %3662 = vmatprep.subr.mxu0 %v2431
        %3663 = vmatpush1.msra.mxu0 %v2430
        %3664 = vmatprep.subr.mxu0 0.0
        %3665 = vmatpush1.msra.mxu0 0.0
        %3666 = vmatprep.subr.mxu0 0.0
        %3667 = vmatpush1.msra.mxu0 0.0
        %3668 = vmatprep.subr.mxu0 0.0
        %3669 = vmatpush1.msra.mxu0 0.0
        %3670 = vmatprep.subr.mxu0 0.0
        %3671 = vmatpush1.msra.mxu0 0.0
        %3672 = vmatprep.subr.mxu0 0.0
        %3673 = vmatpush1.msra.mxu0 0.0
        %3674 = vmatprep.subr.mxu0 0.0
        %3675 = vmatpush1.msra.mxu0 0.0
        %3676 = vmatprep.subr.mxu0 0.0
        %3677 = vmatpush1.msra.mxu0 0.0
        %3678 = vmatprep.subr.mxu0 0.0
        %3679 = vmatpush1.msra.mxu0 0.0
        %3680 = vmatprep.subr.mxu0 0.0
        %3681 = vmatpush1.msra.mxu0 0.0
        %3682 = vmatprep.subr.mxu0 0.0
        %3683 = vmatpush1.msra.mxu0 0.0
        %3684 = vmatprep.subr.mxu0 0.0
        %3685 = vmatpush1.msra.mxu0 0.0
        %3686 = vmatprep.subr.mxu0 0.0
        %3687 = vmatpush1.msra.mxu0 0.0
        %3688 = vmatprep.subr.mxu0 0.0
        %3689 = vmatpush1.msra.mxu0 0.0
        %3690 = vmatprep.subr.mxu0 0.0
        %3691 = vmatpush1.msra.mxu0 0.0
        %3692 = vmatprep.subr.mxu0 0.0
        %3693 = vmatpush1.msra.mxu0 0.0
        %3694 = vmatprep.subr.mxu0 0.0
        %3695 = vmatpush1.msra.mxu0 0.0
        %3696 = vmatprep.subr.mxu0 0.0
        %3697 = vmatpush1.msra.mxu0 0.0
        %3698 = vmatprep.mubr.f32.mxu0 0.0
        %3699 = vmatmul.mubr.f32.gmra.mrb[0].mxu0 %v3614
        %v3700 = vpop.f32.mrb[0].mxu0
        %v3701 = vadd.f32 0.0, %v3700
        %v3702 = vpop.f32.mrb[0].mxu0
        %v3703 = vadd.f32 0.0, %v3702
        %3704 = vmatprep.mubr.f32.mxu0 0.0
        %3705 = vmatmul.mubr.f32.gmra.mrb[0].mxu0 %v3617
        %v3706 = vpop.f32.mrb[0].mxu0
        %v3707 = vadd.f32 0.0, %v3706
        %v3708 = vpop.f32.mrb[0].mxu0
        %v3709 = vadd.f32 0.0, %v3708
        %3710 = vmatprep.mubr.f32.mxu0 0.0
        %3711 = vmatmul.mubr.f32.gmra.mrb[0].mxu0 %v3620
        %v3712 = vpop.f32.mrb[0].mxu0
        %v3713 = vadd.f32 0.0, %v3712
        %v3714 = vpop.f32.mrb[0].mxu0
        %v3715 = vadd.f32 0.0, %v3714
        %3716 = vmatprep.mubr.f32.mxu0 0.0
        %3717 = vmatmul.mubr.f32.gmra.mrb[0].mxu0 %v3623
        %v3718 = vpop.f32.mrb[0].mxu0
        %v3719 = vadd.f32 0.0, %v3718
        %v3720 = vpop.f32.mrb[0].mxu0
        %v3721 = vadd.f32 0.0, %v3720
        %3722 = vmatprep.mubr.f32.mxu0 0.0
        %3723 = vmatmul.mubr.f32.gmra.mrb[0].mxu0 %v3626
        %v3724 = vpop.f32.mrb[0].mxu0
        %v3725 = vadd.f32 0.0, %v3724
        %v3726 = vpop.f32.mrb[0].mxu0
        %v3727 = vadd.f32 0.0, %v3726
        %3728 = vmatprep.mubr.f32.mxu0 0.0
        %3729 = vmatmul.mubr.f32.gmra.mrb[0].mxu0 %v3629
        %v3730 = vpop.f32.mrb[0].mxu0
        %v3731 = vadd.f32 0.0, %v3730
        %v3732 = vpop.f32.mrb[0].mxu0
        %v3733 = vadd.f32 0.0, %v3732
        %3734 = vmatprep.mubr.f32.mxu0 0.0
        %3735 = vmatmul.mubr.f32.gmra.mrb[0].mxu0 %v3632
        %v3736 = vpop.f32.mrb[0].mxu0
        %v3737 = vadd.f32 0.0, %v3736
        %v3738 = vpop.f32.mrb[0].mxu0
        %v3739 = vadd.f32 0.0, %v3738
        %3740 = vdwg.mxu0
        %3741 = vmatprep.subr.mxu0 %v2377
        %3742 = vmatpush1.msra.mxu0 %v2376
        %3743 = vmatprep.subr.mxu0 %v2381
        %3744 = vmatpush1.msra.mxu0 %v2380
        %3745 = vmatprep.subr.mxu0 %v2385
        %3746 = vmatpush1.msra.mxu0 %v2384
        %3747 = vmatprep.subr.mxu0 %v2389
        %3748 = vmatpush1.msra.mxu0 %v2388
        %3749 = vmatprep.subr.mxu0 %v2393
        %3750 = vmatpush1.msra.mxu0 %v2392
        %3751 = vmatprep.subr.mxu0 %v2397
        %3752 = vmatpush1.msra.mxu0 %v2396
        %3753 = vmatprep.subr.mxu0 %v2401
        %3754 = vmatpush1.msra.mxu0 %v2400
        %3755 = vmatprep.subr.mxu0 %v2405
        %3756 = vmatpush1.msra.mxu0 %v2404
        %3757 = vmatprep.subr.mxu0 %v2409
        %3758 = vmatpush1.msra.mxu0 %v2408
        %3759 = vmatprep.subr.mxu0 %v2413
        %3760 = vmatpush1.msra.mxu0 %v2412
        %3761 = vmatprep.subr.mxu0 %v2417
        %3762 = vmatpush1.msra.mxu0 %v2416
        %3763 = vmatprep.subr.mxu0 %v2421
        %3764 = vmatpush1.msra.mxu0 %v2420
        %3765 = vmatprep.subr.mxu0 %v2425
        %3766 = vmatpush1.msra.mxu0 %v2424
        %3767 = vmatprep.subr.mxu0 %v2429
        %3768 = vmatpush1.msra.mxu0 %v2428
        %3769 = vmatprep.subr.mxu0 %v2433
        %3770 = vmatpush1.msra.mxu0 %v2432
        %3771 = vmatprep.subr.mxu0 0.0
        %3772 = vmatpush1.msra.mxu0 0.0
        %3773 = vmatprep.subr.mxu0 0.0
        %3774 = vmatpush1.msra.mxu0 0.0
        %3775 = vmatprep.subr.mxu0 0.0
        %3776 = vmatpush1.msra.mxu0 0.0
        %3777 = vmatprep.subr.mxu0 0.0
        %3778 = vmatpush1.msra.mxu0 0.0
        %3779 = vmatprep.subr.mxu0 0.0
        %3780 = vmatpush1.msra.mxu0 0.0
        %3781 = vmatprep.subr.mxu0 0.0
        %3782 = vmatpush1.msra.mxu0 0.0
        %3783 = vmatprep.subr.mxu0 0.0
        %3784 = vmatpush1.msra.mxu0 0.0
        %3785 = vmatprep.subr.mxu0 0.0
        %3786 = vmatpush1.msra.mxu0 0.0
        %3787 = vmatprep.subr.mxu0 0.0
        %3788 = vmatpush1.msra.mxu0 0.0
        %3789 = vmatprep.subr.mxu0 0.0
        %3790 = vmatpush1.msra.mxu0 0.0
        %3791 = vmatprep.subr.mxu0 0.0
        %3792 = vmatpush1.msra.mxu0 0.0
        %3793 = vmatprep.subr.mxu0 0.0
        %3794 = vmatpush1.msra.mxu0 0.0
        %3795 = vmatprep.subr.mxu0 0.0
        %3796 = vmatpush1.msra.mxu0 0.0
        %3797 = vmatprep.subr.mxu0 0.0
        %3798 = vmatpush1.msra.mxu0 0.0
        %3799 = vmatprep.subr.mxu0 0.0
        %3800 = vmatpush1.msra.mxu0 0.0
        %3801 = vmatprep.subr.mxu0 0.0
        %3802 = vmatpush1.msra.mxu0 0.0
        %3803 = vmatprep.subr.mxu0 0.0
        %3804 = vmatpush1.msra.mxu0 0.0
        %3805 = vmatprep.mubr.f32.mxu0 0.0
        %3806 = vmatmul.mubr.f32.gmra.mrb[0].mxu0 %v3614
        %v3807 = vpop.f32.mrb[0].mxu0
        %v3808 = vadd.f32 0.0, %v3807
        %v3809 = vpop.f32.mrb[0].mxu0
        %v3810 = vadd.f32 0.0, %v3809
        %3811 = vmatprep.mubr.f32.mxu0 0.0
        %3812 = vmatmul.mubr.f32.gmra.mrb[0].mxu0 %v3617
        %v3813 = vpop.f32.mrb[0].mxu0
        %v3814 = vadd.f32 0.0, %v3813
        %v3815 = vpop.f32.mrb[0].mxu0
        %v3816 = vadd.f32 0.0, %v3815
        %3817 = vmatprep.mubr.f32.mxu0 0.0
        %3818 = vmatmul.mubr.f32.gmra.mrb[0].mxu0 %v3620
        %v3819 = vpop.f32.mrb[0].mxu0
        %v3820 = vadd.f32 0.0, %v3819
        %v3821 = vpop.f32.mrb[0].mxu0
        %v3822 = vadd.f32 0.0, %v3821
        %3823 = vmatprep.mubr.f32.mxu0 0.0
        %3824 = vmatmul.mubr.f32.gmra.mrb[0].mxu0 %v3623
        %v3825 = vpop.f32.mrb[0].mxu0
        %v3826 = vadd.f32 0.0, %v3825
        %v3827 = vpop.f32.mrb[0].mxu0
        %v3828 = vadd.f32 0.0, %v3827
        %3829 = vmatprep.mubr.f32.mxu0 0.0
        %3830 = vmatmul.mubr.f32.gmra.mrb[0].mxu0 %v3626
        %v3831 = vpop.f32.mrb[0].mxu0
        %v3832 = vadd.f32 0.0, %v3831
        %v3833 = vpop.f32.mrb[0].mxu0
        %v3834 = vadd.f32 0.0, %v3833
        %3835 = vmatprep.mubr.f32.mxu0 0.0
        %3836 = vmatmul.mubr.f32.gmra.mrb[0].mxu0 %v3629
        %v3837 = vpop.f32.mrb[0].mxu0
        %v3838 = vadd.f32 0.0, %v3837
        %v3839 = vpop.f32.mrb[0].mxu0
        %v3840 = vadd.f32 0.0, %v3839
        %3841 = vmatprep.mubr.f32.mxu0 0.0
        %3842 = vmatmul.mubr.f32.gmra.mrb[0].mxu0 %v3632
        %v3843 = vpop.f32.mrb[0].mxu0
        %v3844 = vadd.f32 0.0, %v3843
        %v3845 = vpop.f32.mrb[0].mxu0
        %v3846 = vadd.f32 0.0, %v3845
        %3847 = vdwg.mxu0
        %s3848 = scalar_lea.vmem %s5, 2048
        %v3849 = vld [vmem:[%s3848] sm:$0xff]
        %v3850 = vld [vmem:[%s3848 + $0x8] sm:$0xff]
        %v3851 = vld [vmem:[%s3848 + $0x10] sm:$0xff]
        %v3852 = vld [vmem:[%s3848 + $0x18] sm:$0xff]
        %v3853 = vld [vmem:[%s3848 + $0x20] sm:$0xff]
        %v3854 = vld [vmem:[%s3848 + $0x28] sm:$0xff]
        %v3855 = vld [vmem:[%s3848 + $0x30] sm:$0xff]
        %v3856 = vld [vmem:[%s3848 + $0x38] sm:$0xff]
        %v3857 = vld [vmem:[%s3848 + $0x40] sm:$0xff]
        %v3858 = vld [vmem:[%s3848 + $0x48] sm:$0xff]
        %v3859 = vld [vmem:[%s3848 + $0x50] sm:$0xff]
        %v3860 = vld [vmem:[%s3848 + $0x58] sm:$0xff]
        %v3861 = vld [vmem:[%s3848 + $0x60] sm:$0xff]
        %v3862 = vld [vmem:[%s3848 + $0x68] sm:$0xff]
        %v3863 = vld [vmem:[%s3848 + $0x70] sm:$0xff]
        %v3864 = vld [vmem:[%s3848 + $0x78] sm:$0xff]
        %v3865 = vld [vmem:[%s3848 + $0x80] sm:$0xff]
        %v3866 = vld [vmem:[%s3848 + $0x88] sm:$0xff]
        %v3867 = vld [vmem:[%s3848 + $0x90] sm:$0xff]
        %v3868 = vld [vmem:[%s3848 + $0x98] sm:$0xff]
        %v3869 = vld [vmem:[%s3848 + $0xa0] sm:$0xff]
        %v3870 = vld [vmem:[%s3848 + $0xa8] sm:$0xff]
        %v3871 = vld [vmem:[%s3848 + $0xb0] sm:$0xff]
        %v3872 = vld [vmem:[%s3848 + $0xb8] sm:$0xff]
        %v3873 = vld [vmem:[%s3848 + $0xc0] sm:$0xff]
        %v3874 = vld [vmem:[%s3848 + $0xc8] sm:$0xff]
        %v3875 = vld [vmem:[%s3848 + $0xd0] sm:$0xff]
        %v3876 = vld [vmem:[%s3848 + $0xd8] sm:$0xff]
        %v3877 = vld [vmem:[%s3848 + $0xe0] sm:$0xff]
        %v3878 = vld [vmem:[%s3848 + $0xe8] sm:$0xff]
        %v3879 = vld [vmem:[%s3848 + $0xf0] sm:$0xff]
        %v3880 = vld [vmem:[%s3848 + $0xf8] sm:$0xff]
        %v3881 = vld [vmem:[%s3848 + $0x100] sm:$0xff]
        %v3882 = vld [vmem:[%s3848 + $0x108] sm:$0xff]
        %v3883 = vld [vmem:[%s3848 + $0x110] sm:$0xff]
        %v3884 = vld [vmem:[%s3848 + $0x118] sm:$0xff]
        %v3885 = vld [vmem:[%s3848 + $0x120] sm:$0xff]
        %v3886 = vld [vmem:[%s3848 + $0x128] sm:$0xff]
        %v3887 = vld [vmem:[%s3848 + $0x130] sm:$0xff]
        %v3888 = vld [vmem:[%s3848 + $0x138] sm:$0xff]
        %v3889 = vld [vmem:[%s3848 + $0x140] sm:$0xff]
        %v3890 = vld [vmem:[%s3848 + $0x148] sm:$0xff]
        %v3891 = vld [vmem:[%s3848 + $0x150] sm:$0xff]
        %v3892 = vld [vmem:[%s3848 + $0x158] sm:$0xff]
        %v3893 = vld [vmem:[%s3848 + $0x160] sm:$0xff]
        %v3894 = vld [vmem:[%s3848 + $0x168] sm:$0xff]
        %v3895 = vld [vmem:[%s3848 + $0x170] sm:$0xff]
        %v3896 = vld [vmem:[%s3848 + $0x178] sm:$0xff]
        %v3897 = vld [vmem:[%s3848 + $0x180] sm:$0xff]
        %v3898 = vld [vmem:[%s3848 + $0x188] sm:$0xff]
        %v3899 = vld [vmem:[%s3848 + $0x190] sm:$0xff]
        %v3900 = vld [vmem:[%s3848 + $0x198] sm:$0xff]
        %v3901 = vld [vmem:[%s3848 + $0x1a0] sm:$0xff]
        %v3902 = vld [vmem:[%s3848 + $0x1a8] sm:$0xff]
        %v3903 = vld [vmem:[%s3848 + $0x1b0] sm:$0xff]
        %v3904 = vld [vmem:[%s3848 + $0x1b8] sm:$0xff]
        %v3905 = vld [vmem:[%s3848 + $0x1c0] sm:$0xff]
        %v3906 = vld [vmem:[%s3848 + $0x1c8] sm:$0xff]
        %v3907 = vld [vmem:[%s3848 + $0x1d0] sm:$0xff]
        %v3908 = vld [vmem:[%s3848 + $0x1d8] sm:$0xff]
        %v3909 = vld [vmem:[%s3848 + $0x1e0] sm:$0xff]
        %v3910 = vld [vmem:[%s3848 + $0x1e8] sm:$0xff]
        %v3911 = vld [vmem:[%s3848 + $0x1f0] sm:$0xff]
        %v3912 = vld [vmem:[%s3848 + $0x1f8] sm:$0xff]
        %v3913 = vld [vmem:[%s3848 + $0x200] sm:$0xff]
        %v3914 = vld [vmem:[%s3848 + $0x208] sm:$0xff]
        %v3915 = vld [vmem:[%s3848 + $0x210] sm:$0xff]
        %v3916 = vld [vmem:[%s3848 + $0x218] sm:$0xff]
        %v3917 = vld [vmem:[%s3848 + $0x220] sm:$0xff]
        %v3918 = vld [vmem:[%s3848 + $0x228] sm:$0xff]
        %v3919 = vld [vmem:[%s3848 + $0x230] sm:$0xff]
        %v3920 = vld [vmem:[%s3848 + $0x238] sm:$0xff]
        %v3921 = vld [vmem:[%s3848 + $0x240] sm:$0xff]
        %v3922 = vld [vmem:[%s3848 + $0x248] sm:$0xff]
        %v3923 = vld [vmem:[%s3848 + $0x250] sm:$0xff]
        %v3924 = vld [vmem:[%s3848 + $0x258] sm:$0xff]
        %v3925 = vld [vmem:[%s3848 + $0x260] sm:$0xff]
        %v3926 = vld [vmem:[%s3848 + $0x268] sm:$0xff]
        %v3927 = vld [vmem:[%s3848 + $0x270] sm:$0xff]
        %v3928 = vld [vmem:[%s3848 + $0x278] sm:$0xff]
        %v3929 = vld [vmem:[%s3848 + $0x280] sm:$0xff]
        %v3930 = vld [vmem:[%s3848 + $0x288] sm:$0xff]
        %v3931 = vld [vmem:[%s3848 + $0x290] sm:$0xff]
        %v3932 = vld [vmem:[%s3848 + $0x298] sm:$0xff]
        %v3933 = vld [vmem:[%s3848 + $0x2a0] sm:$0xff]
        %v3934 = vld [vmem:[%s3848 + $0x2a8] sm:$0xff]
        %v3935 = vld [vmem:[%s3848 + $0x2b0] sm:$0xff]
        %v3936 = vld [vmem:[%s3848 + $0x2b8] sm:$0xff]
        %v3937 = vld [vmem:[%s3848 + $0x2c0] sm:$0xff]
        %v3938 = vld [vmem:[%s3848 + $0x2c8] sm:$0xff]
        %v3939 = vld [vmem:[%s3848 + $0x2d0] sm:$0xff]
        %v3940 = vld [vmem:[%s3848 + $0x2d8] sm:$0xff]
        %v3941 = vld [vmem:[%s3848 + $0x2e0] sm:$0xff]
        %v3942 = vld [vmem:[%s3848 + $0x2e8] sm:$0xff]
        %v3943 = vld [vmem:[%s3848 + $0x2f0] sm:$0xff]
        %v3944 = vld [vmem:[%s3848 + $0x2f8] sm:$0xff]
        %v3945 = vld [vmem:[%s3848 + $0x300] sm:$0xff]
        %v3946 = vld [vmem:[%s3848 + $0x308] sm:$0xff]
        %v3947 = vld [vmem:[%s3848 + $0x310] sm:$0xff]
        %v3948 = vld [vmem:[%s3848 + $0x318] sm:$0xff]
        %v3949 = vld [vmem:[%s3848 + $0x320] sm:$0xff]
        %v3950 = vld [vmem:[%s3848 + $0x328] sm:$0xff]
        %v3951 = vld [vmem:[%s3848 + $0x330] sm:$0xff]
        %v3952 = vld [vmem:[%s3848 + $0x338] sm:$0xff]
        %v3953 = vld [vmem:[%s3848 + $0x340] sm:$0xff]
        %v3954 = vld [vmem:[%s3848 + $0x348] sm:$0xff]
        %v3955 = vld [vmem:[%s3848 + $0x350] sm:$0xff]
        %v3956 = vld [vmem:[%s3848 + $0x358] sm:$0xff]
        %v3957 = vld [vmem:[%s3848 + $0x360] sm:$0xff]
        %v3958 = vld [vmem:[%s3848 + $0x368] sm:$0xff]
        %v3959 = vld [vmem:[%s3848 + $0x370] sm:$0xff]
        %v3960 = vld [vmem:[%s3848 + $0x378] sm:$0xff]
        %v3961 = vld [vmem:[%s3848 + $0x380] sm:$0xff]
        %v3962 = vld [vmem:[%s3848 + $0x388] sm:$0xff]
        %v3963 = vld [vmem:[%s3848 + $0x390] sm:$0xff]
        %v3964 = vld [vmem:[%s3848 + $0x398] sm:$0xff]
        %v3965 = vld [vmem:[%s3848 + $0x3a0] sm:$0xff]
        %v3966 = vld [vmem:[%s3848 + $0x3a8] sm:$0xff]
        %v3967 = vld [vmem:[%s3848 + $0x3b0] sm:$0xff]
        %v3968 = vld [vmem:[%s3848 + $0x3b8] sm:$0xff]
        %v3969 = vld [vmem:[%s3848 + $0x3c0] sm:$0xff]
        %v3970 = vld [vmem:[%s3848 + $0x3c8] sm:$0xff]
        %v3971 = vld [vmem:[%s3848 + $0x3d0] sm:$0xff]
        %v3972 = vld [vmem:[%s3848 + $0x3d8] sm:$0xff]
        %v3973 = vld [vmem:[%s3848 + $0x3e0] sm:$0xff]
        %v3974 = vld [vmem:[%s3848 + $0x3e8] sm:$0xff]
        %v3975 = vld [vmem:[%s3848 + $0x3f0] sm:$0xff]
        %v3976 = vld [vmem:[%s3848 + $0x3f8] sm:$0xff]
        %3977 = vmatprep.subr.mxu0 %v3850
        %3978 = vmatpush1.msra.mxu0 %v3849
        %3979 = vmatprep.subr.mxu0 %v3852
        %3980 = vmatpush1.msra.mxu0 %v3851
        %3981 = vmatprep.subr.mxu0 %v3854
        %3982 = vmatpush1.msra.mxu0 %v3853
        %3983 = vmatprep.subr.mxu0 %v3856
        %3984 = vmatpush1.msra.mxu0 %v3855
        %3985 = vmatprep.subr.mxu0 %v3858
        %3986 = vmatpush1.msra.mxu0 %v3857
        %3987 = vmatprep.subr.mxu0 %v3860
        %3988 = vmatpush1.msra.mxu0 %v3859
        %3989 = vmatprep.subr.mxu0 %v3862
        %3990 = vmatpush1.msra.mxu0 %v3861
        %3991 = vmatprep.subr.mxu0 %v3864
        %3992 = vmatpush1.msra.mxu0 %v3863
        %3993 = vmatprep.subr.mxu0 %v3866
        %3994 = vmatpush1.msra.mxu0 %v3865
        %3995 = vmatprep.subr.mxu0 %v3868
        %3996 = vmatpush1.msra.mxu0 %v3867
        %3997 = vmatprep.subr.mxu0 %v3870
        %3998 = vmatpush1.msra.mxu0 %v3869
        %3999 = vmatprep.subr.mxu0 %v3872
        %4000 = vmatpush1.msra.mxu0 %v3871
        %4001 = vmatprep.subr.mxu0 %v3874
        %4002 = vmatpush1.msra.mxu0 %v3873
        %4003 = vmatprep.subr.mxu0 %v3876
        %4004 = vmatpush1.msra.mxu0 %v3875
        %4005 = vmatprep.subr.mxu0 %v3878
        %4006 = vmatpush1.msra.mxu0 %v3877
        %4007 = vmatprep.subr.mxu0 %v3880
        %4008 = vmatpush1.msra.mxu0 %v3879
        %4009 = vmatprep.subr.mxu0 %v3882
        %4010 = vmatpush1.msra.mxu0 %v3881
        %4011 = vmatprep.subr.mxu0 %v3884
        %4012 = vmatpush1.msra.mxu0 %v3883
        %4013 = vmatprep.subr.mxu0 %v3886
        %4014 = vmatpush1.msra.mxu0 %v3885
        %4015 = vmatprep.subr.mxu0 %v3888
        %4016 = vmatpush1.msra.mxu0 %v3887
        %4017 = vmatprep.subr.mxu0 %v3890
        %4018 = vmatpush1.msra.mxu0 %v3889
        %4019 = vmatprep.subr.mxu0 %v3892
        %4020 = vmatpush1.msra.mxu0 %v3891
        %4021 = vmatprep.subr.mxu0 %v3894
        %4022 = vmatpush1.msra.mxu0 %v3893
        %4023 = vmatprep.subr.mxu0 %v3896
        %4024 = vmatpush1.msra.mxu0 %v3895
        %4025 = vmatprep.subr.mxu0 %v3898
        %4026 = vmatpush1.msra.mxu0 %v3897
        %4027 = vmatprep.subr.mxu0 %v3900
        %4028 = vmatpush1.msra.mxu0 %v3899
        %4029 = vmatprep.subr.mxu0 %v3902
        %4030 = vmatpush1.msra.mxu0 %v3901
        %4031 = vmatprep.subr.mxu0 %v3904
        %4032 = vmatpush1.msra.mxu0 %v3903
        %4033 = vmatprep.subr.mxu0 %v3906
        %4034 = vmatpush1.msra.mxu0 %v3905
        %4035 = vmatprep.subr.mxu0 %v3908
        %4036 = vmatpush1.msra.mxu0 %v3907
        %4037 = vmatprep.subr.mxu0 %v3910
        %4038 = vmatpush1.msra.mxu0 %v3909
        %4039 = vmatprep.subr.mxu0 %v3912
        %4040 = vmatpush1.msra.mxu0 %v3911
        %4041 = vmatprep.mubr.f32.mxu0 %v3703
        %4042 = vmatmul.mubr.f32.gmra.mrb[0].mxu0 %v3701
        %v4043 = vpop.f32.mrb[0].mxu0
        %v4044 = vadd.f32 0.0, %v4043
        %v4045 = vpop.f32.mrb[0].mxu0
        %v4046 = vadd.f32 0.0, %v4045
        %4047 = vmatprep.mubr.f32.mxu0 %v3709
        %4048 = vmatmul.mubr.f32.gmra.mrb[0].mxu0 %v3707
        %v4049 = vpop.f32.mrb[0].mxu0
        %v4050 = vadd.f32 0.0, %v4049
        %v4051 = vpop.f32.mrb[0].mxu0
        %v4052 = vadd.f32 0.0, %v4051
        %4053 = vmatprep.mubr.f32.mxu0 %v3715
        %4054 = vmatmul.mubr.f32.gmra.mrb[0].mxu0 %v3713
        %v4055 = vpop.f32.mrb[0].mxu0
        %v4056 = vadd.f32 0.0, %v4055
        %v4057 = vpop.f32.mrb[0].mxu0
        %v4058 = vadd.f32 0.0, %v4057
        %4059 = vmatprep.mubr.f32.mxu0 %v3721
        %4060 = vmatmul.mubr.f32.gmra.mrb[0].mxu0 %v3719
        %v4061 = vpop.f32.mrb[0].mxu0
        %v4062 = vadd.f32 0.0, %v4061
        %v4063 = vpop.f32.mrb[0].mxu0
        %v4064 = vadd.f32 0.0, %v4063
        %4065 = vmatprep.mubr.f32.mxu0 %v3727
        %4066 = vmatmul.mubr.f32.gmra.mrb[0].mxu0 %v3725
        %v4067 = vpop.f32.mrb[0].mxu0
        %v4068 = vadd.f32 0.0, %v4067
        %v4069 = vpop.f32.mrb[0].mxu0
        %v4070 = vadd.f32 0.0, %v4069
        %4071 = vmatprep.mubr.f32.mxu0 %v3733
        %4072 = vmatmul.mubr.f32.gmra.mrb[0].mxu0 %v3731
        %v4073 = vpop.f32.mrb[0].mxu0
        %v4074 = vadd.f32 0.0, %v4073
        %v4075 = vpop.f32.mrb[0].mxu0
        %v4076 = vadd.f32 0.0, %v4075
        %4077 = vmatprep.mubr.f32.mxu0 %v3739
        %4078 = vmatmul.mubr.f32.gmra.mrb[0].mxu0 %v3737
        %v4079 = vpop.f32.mrb[0].mxu0
        %v4080 = vadd.f32 0.0, %v4079
        %v4081 = vpop.f32.mrb[0].mxu0
        %v4082 = vadd.f32 0.0, %v4081
        %4083 = vdwg.mxu0
        %4084 = vmatprep.subr.mxu0 %v3914
        %4085 = vmatpush1.msra.mxu0 %v3913
        %4086 = vmatprep.subr.mxu0 %v3916
        %4087 = vmatpush1.msra.mxu0 %v3915
        %4088 = vmatprep.subr.mxu0 %v3918
        %4089 = vmatpush1.msra.mxu0 %v3917
        %4090 = vmatprep.subr.mxu0 %v3920
        %4091 = vmatpush1.msra.mxu0 %v3919
        %4092 = vmatprep.subr.mxu0 %v3922
        %4093 = vmatpush1.msra.mxu0 %v3921
        %4094 = vmatprep.subr.mxu0 %v3924
        %4095 = vmatpush1.msra.mxu0 %v3923
        %4096 = vmatprep.subr.mxu0 %v3926
        %4097 = vmatpush1.msra.mxu0 %v3925
        %4098 = vmatprep.subr.mxu0 %v3928
        %4099 = vmatpush1.msra.mxu0 %v3927
        %4100 = vmatprep.subr.mxu0 %v3930
        %4101 = vmatpush1.msra.mxu0 %v3929
        %4102 = vmatprep.subr.mxu0 %v3932
        %4103 = vmatpush1.msra.mxu0 %v3931
        %4104 = vmatprep.subr.mxu0 %v3934
        %4105 = vmatpush1.msra.mxu0 %v3933
        %4106 = vmatprep.subr.mxu0 %v3936
        %4107 = vmatpush1.msra.mxu0 %v3935
        %4108 = vmatprep.subr.mxu0 %v3938
        %4109 = vmatpush1.msra.mxu0 %v3937
        %4110 = vmatprep.subr.mxu0 %v3940
        %4111 = vmatpush1.msra.mxu0 %v3939
        %4112 = vmatprep.subr.mxu0 %v3942
        %4113 = vmatpush1.msra.mxu0 %v3941
        %4114 = vmatprep.subr.mxu0 %v3944
        %4115 = vmatpush1.msra.mxu0 %v3943
        %4116 = vmatprep.subr.mxu0 %v3946
        %4117 = vmatpush1.msra.mxu0 %v3945
        %4118 = vmatprep.subr.mxu0 %v3948
        %4119 = vmatpush1.msra.mxu0 %v3947
        %4120 = vmatprep.subr.mxu0 %v3950
        %4121 = vmatpush1.msra.mxu0 %v3949
        %4122 = vmatprep.subr.mxu0 %v3952
        %4123 = vmatpush1.msra.mxu0 %v3951
        %4124 = vmatprep.subr.mxu0 %v3954
        %4125 = vmatpush1.msra.mxu0 %v3953
        %4126 = vmatprep.subr.mxu0 %v3956
        %4127 = vmatpush1.msra.mxu0 %v3955
        %4128 = vmatprep.subr.mxu0 %v3958
        %4129 = vmatpush1.msra.mxu0 %v3957
        %4130 = vmatprep.subr.mxu0 %v3960
        %4131 = vmatpush1.msra.mxu0 %v3959
        %4132 = vmatprep.subr.mxu0 %v3962
        %4133 = vmatpush1.msra.mxu0 %v3961
        %4134 = vmatprep.subr.mxu0 %v3964
        %4135 = vmatpush1.msra.mxu0 %v3963
        %4136 = vmatprep.subr.mxu0 %v3966
        %4137 = vmatpush1.msra.mxu0 %v3965
        %4138 = vmatprep.subr.mxu0 %v3968
        %4139 = vmatpush1.msra.mxu0 %v3967
        %4140 = vmatprep.subr.mxu0 %v3970
        %4141 = vmatpush1.msra.mxu0 %v3969
        %4142 = vmatprep.subr.mxu0 %v3972
        %4143 = vmatpush1.msra.mxu0 %v3971
        %4144 = vmatprep.subr.mxu0 %v3974
        %4145 = vmatpush1.msra.mxu0 %v3973
        %4146 = vmatprep.subr.mxu0 %v3976
        %4147 = vmatpush1.msra.mxu0 %v3975
        %4148 = vmatprep.mubr.f32.mxu0 %v3810
        %4149 = vmatmul.mubr.f32.gmra.mrb[0].mxu0 %v3808
        %v4150 = vpop.f32.mrb[0].mxu0
        %v4151 = vadd.f32 %v4044, %v4150
        %v4152 = vpop.f32.mrb[0].mxu0
        %v4153 = vadd.f32 %v4046, %v4152
        %4154 = vmatprep.mubr.f32.mxu0 %v3816
        %4155 = vmatmul.mubr.f32.gmra.mrb[0].mxu0 %v3814
        %v4156 = vpop.f32.mrb[0].mxu0
        %v4157 = vadd.f32 %v4050, %v4156
        %v4158 = vpop.f32.mrb[0].mxu0
        %v4159 = vadd.f32 %v4052, %v4158
        %4160 = vmatprep.mubr.f32.mxu0 %v3822
        %4161 = vmatmul.mubr.f32.gmra.mrb[0].mxu0 %v3820
        %v4162 = vpop.f32.mrb[0].mxu0
        %v4163 = vadd.f32 %v4056, %v4162
        %v4164 = vpop.f32.mrb[0].mxu0
        %v4165 = vadd.f32 %v4058, %v4164
        %4166 = vmatprep.mubr.f32.mxu0 %v3828
        %4167 = vmatmul.mubr.f32.gmra.mrb[0].mxu0 %v3826
        %v4168 = vpop.f32.mrb[0].mxu0
        %v4169 = vadd.f32 %v4062, %v4168
        %v4170 = vpop.f32.mrb[0].mxu0
        %v4171 = vadd.f32 %v4064, %v4170
        %4172 = vmatprep.mubr.f32.mxu0 %v3834
        %4173 = vmatmul.mubr.f32.gmra.mrb[0].mxu0 %v3832
        %v4174 = vpop.f32.mrb[0].mxu0
        %v4175 = vadd.f32 %v4068, %v4174
        %v4176 = vpop.f32.mrb[0].mxu0
        %v4177 = vadd.f32 %v4070, %v4176
        %4178 = vmatprep.mubr.f32.mxu0 %v3840
        %4179 = vmatmul.mubr.f32.gmra.mrb[0].mxu0 %v3838
        %v4180 = vpop.f32.mrb[0].mxu0
        %v4181 = vadd.f32 %v4074, %v4180
        %v4182 = vpop.f32.mrb[0].mxu0
        %v4183 = vadd.f32 %v4076, %v4182
        %4184 = vmatprep.mubr.f32.mxu0 %v3846
        %4185 = vmatmul.mubr.f32.gmra.mrb[0].mxu0 %v3844
        %v4186 = vpop.f32.mrb[0].mxu0
        %v4187 = vadd.f32 %v4080, %v4186
        %v4188 = vpop.f32.mrb[0].mxu0
        %v4189 = vadd.f32 %v4082, %v4188
        %4190 = vdwg.mxu0
        %v4191 = vadd.f32 %v3565, %v4151
        %v4192 = vadd.f32 %v3567, %v4153
        %v4193 = vadd.f32 %v3571, %v4157
        %v4194 = vadd.f32 %v3573, %v4159
        %v4195 = vadd.f32 %v3577, %v4163
        %v4196 = vadd.f32 %v3579, %v4165
        %v4197 = vadd.f32 %v3583, %v4169
        %v4198 = vadd.f32 %v3585, %v4171
        %v4199 = vadd.f32 %v3589, %v4175
        %v4200 = vadd.f32 %v3591, %v4177
        %v4201 = vadd.f32 %v3595, %v4181
        %v4202 = vadd.f32 %v3597, %v4183
        %v4203 = vadd.f32 %v3601, %v4187
        %v4204 = vadd.f32 %v3603, %v4189
        %v4205 = vld [vmem:[%s6] sm:$0x3]
        %v4207 = vlaneseq
        %v4208 = vshrl.u32 %v4207, 7
        %v4209 = vsub.s32 0, %v4208
        %v4210 = vrot.slane %v4205, %v4209
        %v4211 = vlaneseq
        %v4212 = vshrl.u32 %v4211, 7
        %v4213 = vsub.s32 1, %v4212
        %v4214 = vrot.slane %v4205, %v4213
        %v4217 = vadd.f32 %v4191, %v4210
        %v4218 = vadd.f32 %v4192, %v4214
        %v4219 = vadd.f32 %v4193, %v4210
        %v4220 = vadd.f32 %v4194, %v4214
        %v4221 = vadd.f32 %v4195, %v4210
        %v4222 = vadd.f32 %v4196, %v4214
        %v4223 = vadd.f32 %v4197, %v4210
        %v4224 = vadd.f32 %v4198, %v4214
        %v4225 = vadd.f32 %v4199, %v4210
        %v4226 = vadd.f32 %v4200, %v4214
        %v4227 = vadd.f32 %v4201, %v4210
        %v4228 = vadd.f32 %v4202, %v4214
        %v4229 = vadd.f32 %v4203, %v4210
        %v4230 = vadd.f32 %v4204, %v4214
        %v4231 = vmax.f32 %v4217, 0.0
        %v4232 = vmax.f32 %v4218, 0.0
        %v4233 = vmax.f32 %v4219, 0.0
        %v4234 = vmax.f32 %v4220, 0.0
        %v4235 = vmax.f32 %v4221, 0.0
        %v4236 = vmax.f32 %v4222, 0.0
        %v4237 = vmax.f32 %v4223, 0.0
        %v4238 = vmax.f32 %v4224, 0.0
        %v4239 = vmax.f32 %v4225, 0.0
        %v4240 = vmax.f32 %v4226, 0.0
        %v4241 = vmax.f32 %v4227, 0.0
        %v4242 = vmax.f32 %v4228, 0.0
        %v4243 = vmax.f32 %v4229, 0.0
        %v4244 = vmax.f32 %v4230, 0.0
        %v4245 = vld [vmem:[%s7] sm:$0xff]
        %v4246 = vld [vmem:[%s7 + $0x8] sm:$0xff]
        %v4247 = vld [vmem:[%s7 + $0x10] sm:$0xff]
        %vm4248 = vcmask 457728
        %v4250 = vsel %vm4248, %v4245, 0
        %v4253 = vsel %vm4248, %v4246, 0
        %v4256 = vsel %vm4248, %v4247, 0
        %4258 = vmatprep.subr.mxu0 %v4232
        %4259 = vmatpush1.msra.mxu0 %v4231
        %4260 = vmatprep.subr.mxu0 %v4234
        %4261 = vmatpush1.msra.mxu0 %v4233
        %4262 = vmatprep.subr.mxu0 %v4236
        %4263 = vmatpush1.msra.mxu0 %v4235
        %4264 = vmatprep.subr.mxu0 %v4238
        %4265 = vmatpush1.msra.mxu0 %v4237
        %4266 = vmatprep.subr.mxu0 %v4240
        %4267 = vmatpush1.msra.mxu0 %v4239
        %4268 = vmatprep.subr.mxu0 %v4242
        %4269 = vmatpush1.msra.mxu0 %v4241
        %4270 = vmatprep.subr.mxu0 %v4244
        %4271 = vmatpush1.msra.mxu0 %v4243
        %4272 = vmatprep.subr.mxu0 0.0
        %4273 = vmatpush1.msra.mxu0 0.0
        %4274 = vmatprep.subr.mxu0 0.0
        %4275 = vmatpush1.msra.mxu0 0.0
        %4276 = vmatprep.subr.mxu0 0.0
        %4277 = vmatpush1.msra.mxu0 0.0
        %4278 = vmatprep.subr.mxu0 0.0
        %4279 = vmatpush1.msra.mxu0 0.0
        %4280 = vmatprep.subr.mxu0 0.0
        %4281 = vmatpush1.msra.mxu0 0.0
        %4282 = vmatprep.subr.mxu0 0.0
        %4283 = vmatpush1.msra.mxu0 0.0
        %4284 = vmatprep.subr.mxu0 0.0
        %4285 = vmatpush1.msra.mxu0 0.0
        %4286 = vmatprep.subr.mxu0 0.0
        %4287 = vmatpush1.msra.mxu0 0.0
        %4288 = vmatprep.subr.mxu0 0.0
        %4289 = vmatpush1.msra.mxu0 0.0
        %4290 = vmatprep.subr.mxu0 0.0
        %4291 = vmatpush1.msra.mxu0 0.0
        %4292 = vmatprep.subr.mxu0 0.0
        %4293 = vmatpush1.msra.mxu0 0.0
        %4294 = vmatprep.subr.mxu0 0.0
        %4295 = vmatpush1.msra.mxu0 0.0
        %4296 = vmatprep.subr.mxu0 0.0
        %4297 = vmatpush1.msra.mxu0 0.0
        %4298 = vmatprep.subr.mxu0 0.0
        %4299 = vmatpush1.msra.mxu0 0.0
        %4300 = vmatprep.subr.mxu0 0.0
        %4301 = vmatpush1.msra.mxu0 0.0
        %4302 = vmatprep.subr.mxu0 0.0
        %4303 = vmatpush1.msra.mxu0 0.0
        %4304 = vmatprep.subr.mxu0 0.0
        %4305 = vmatpush1.msra.mxu0 0.0
        %4306 = vmatprep.subr.mxu0 0.0
        %4307 = vmatpush1.msra.mxu0 0.0
        %4308 = vmatprep.subr.mxu0 0.0
        %4309 = vmatpush1.msra.mxu0 0.0
        %4310 = vmatprep.subr.mxu0 0.0
        %4311 = vmatpush1.msra.mxu0 0.0
        %4312 = vmatprep.subr.mxu0 0.0
        %4313 = vmatpush1.msra.mxu0 0.0
        %4314 = vmatprep.subr.mxu0 0.0
        %4315 = vmatpush1.msra.mxu0 0.0
        %4316 = vmatprep.subr.mxu0 0.0
        %4317 = vmatpush1.msra.mxu0 0.0
        %4318 = vmatprep.subr.mxu0 0.0
        %4319 = vmatpush1.msra.mxu0 0.0
        %4320 = vmatprep.subr.mxu0 0.0
        %4321 = vmatpush1.msra.mxu0 0.0
        %4322 = vmatprep.mubr.f32.mxu0 0.0
        %4323 = vmatmul.mubr.f32.gmra.mrb[0].mxu0 %v4250
        %v4324 = vpop.f32.mrb[0].mxu0
        %v4325 = vadd.f32 0.0, %v4324
        %v4326 = vpop.f32.mrb[0].mxu0
        %v4327 = vadd.f32 0.0, %v4326
        %4328 = vmatprep.mubr.f32.mxu0 0.0
        %4329 = vmatmul.mubr.f32.gmra.mrb[0].mxu0 %v4253
        %v4330 = vpop.f32.mrb[0].mxu0
        %v4331 = vadd.f32 0.0, %v4330
        %v4332 = vpop.f32.mrb[0].mxu0
        %v4333 = vadd.f32 0.0, %v4332
        %4334 = vmatprep.mubr.f32.mxu0 0.0
        %4335 = vmatmul.mubr.f32.gmra.mrb[0].mxu0 %v4256
        %v4336 = vpop.f32.mrb[0].mxu0
        %v4337 = vadd.f32 0.0, %v4336
        %v4338 = vpop.f32.mrb[0].mxu0
        %v4339 = vadd.f32 0.0, %v4338
        %4340 = vdwg.mxu0
        %v4341 = vld [vmem:[%s8] sm:$0xff]
        %v4342 = vld [vmem:[%s8 + $0x8] sm:$0xff]
        %v4343 = vld [vmem:[%s8 + $0x10] sm:$0xff]
        %v4344 = vld [vmem:[%s8 + $0x18] sm:$0xff]
        %v4345 = vld [vmem:[%s8 + $0x20] sm:$0xff]
        %v4346 = vld [vmem:[%s8 + $0x28] sm:$0xff]
        %v4347 = vld [vmem:[%s8 + $0x30] sm:$0xff]
        %v4348 = vld [vmem:[%s8 + $0x38] sm:$0xff]
        %v4349 = vld [vmem:[%s8 + $0x40] sm:$0xff]
        %v4350 = vld [vmem:[%s8 + $0x48] sm:$0xff]
        %v4351 = vld [vmem:[%s8 + $0x50] sm:$0xff]
        %v4352 = vld [vmem:[%s8 + $0x58] sm:$0xff]
        %v4353 = vld [vmem:[%s8 + $0x60] sm:$0xff]
        %v4354 = vld [vmem:[%s8 + $0x68] sm:$0xff]
        %v4355 = vld [vmem:[%s8 + $0x70] sm:$0xff]
        %v4356 = vld [vmem:[%s8 + $0x78] sm:$0xff]
        %v4357 = vld [vmem:[%s8 + $0x80] sm:$0xff]
        %v4358 = vld [vmem:[%s8 + $0x88] sm:$0xff]
        %v4359 = vld [vmem:[%s8 + $0x90] sm:$0xff]
        %v4360 = vld [vmem:[%s8 + $0x98] sm:$0xff]
        %v4361 = vld [vmem:[%s8 + $0xa0] sm:$0xff]
        %v4362 = vld [vmem:[%s8 + $0xa8] sm:$0xff]
        %v4363 = vld [vmem:[%s8 + $0xb0] sm:$0xff]
        %v4364 = vld [vmem:[%s8 + $0xb8] sm:$0xff]
        %v4365 = vld [vmem:[%s8 + $0xc0] sm:$0xff]
        %v4366 = vld [vmem:[%s8 + $0xc8] sm:$0xff]
        %v4367 = vld [vmem:[%s8 + $0xd0] sm:$0xff]
        %v4368 = vld [vmem:[%s8 + $0xd8] sm:$0xff]
        %v4369 = vld [vmem:[%s8 + $0xe0] sm:$0xff]
        %v4370 = vld [vmem:[%s8 + $0xe8] sm:$0xff]
        %v4371 = vld [vmem:[%s8 + $0xf0] sm:$0xff]
        %v4372 = vld [vmem:[%s8 + $0xf8] sm:$0xff]
        %v4373 = vld [vmem:[%s8 + $0x100] sm:$0xff]
        %v4374 = vld [vmem:[%s8 + $0x108] sm:$0xff]
        %v4375 = vld [vmem:[%s8 + $0x110] sm:$0xff]
        %v4376 = vld [vmem:[%s8 + $0x118] sm:$0xff]
        %v4377 = vld [vmem:[%s8 + $0x120] sm:$0xff]
        %v4378 = vld [vmem:[%s8 + $0x128] sm:$0xff]
        %v4379 = vld [vmem:[%s8 + $0x130] sm:$0xff]
        %v4380 = vld [vmem:[%s8 + $0x138] sm:$0xff]
        %v4381 = vld [vmem:[%s8 + $0x140] sm:$0xff]
        %v4382 = vld [vmem:[%s8 + $0x148] sm:$0xff]
        %v4383 = vld [vmem:[%s8 + $0x150] sm:$0xff]
        %v4384 = vld [vmem:[%s8 + $0x158] sm:$0xff]
        %v4385 = vld [vmem:[%s8 + $0x160] sm:$0xff]
        %v4386 = vld [vmem:[%s8 + $0x168] sm:$0xff]
        %v4387 = vld [vmem:[%s8 + $0x170] sm:$0xff]
        %v4388 = vld [vmem:[%s8 + $0x178] sm:$0xff]
        %v4389 = vld [vmem:[%s8 + $0x180] sm:$0xff]
        %v4390 = vld [vmem:[%s8 + $0x188] sm:$0xff]
        %v4391 = vld [vmem:[%s8 + $0x190] sm:$0xff]
        %v4392 = vld [vmem:[%s8 + $0x198] sm:$0xff]
        %v4393 = vld [vmem:[%s8 + $0x1a0] sm:$0xff]
        %v4394 = vld [vmem:[%s8 + $0x1a8] sm:$0xff]
        %v4395 = vld [vmem:[%s8 + $0x1b0] sm:$0xff]
        %v4396 = vld [vmem:[%s8 + $0x1b8] sm:$0xff]
        %v4397 = vld [vmem:[%s8 + $0x1c0] sm:$0xff]
        %v4398 = vld [vmem:[%s8 + $0x1c8] sm:$0xff]
        %v4399 = vld [vmem:[%s8 + $0x1d0] sm:$0xff]
        %v4400 = vld [vmem:[%s8 + $0x1d8] sm:$0xff]
        %v4401 = vld [vmem:[%s8 + $0x1e0] sm:$0xff]
        %v4402 = vld [vmem:[%s8 + $0x1e8] sm:$0xff]
        %v4403 = vld [vmem:[%s8 + $0x1f0] sm:$0xff]
        %v4404 = vld [vmem:[%s8 + $0x1f8] sm:$0xff]
        %s4405 = scalar_lea.vmem %s7, 24
        %v4406 = vld [vmem:[%s4405] sm:$0xff]
        %v4407 = vld [vmem:[%s4405 + $0x8] sm:$0xff]
        %v4408 = vld [vmem:[%s4405 + $0x10] sm:$0xff]
        %v4410 = vsel %vm4248, %v4406, 0
        %v4413 = vsel %vm4248, %v4407, 0
        %v4416 = vsel %vm4248, %v4408, 0
        %4418 = vmatprep.subr.mxu0 %v4232
        %4419 = vmatpush1.msra.mxu0 %v4231
        %4420 = vmatprep.subr.mxu0 %v4234
        %4421 = vmatpush1.msra.mxu0 %v4233
        %4422 = vmatprep.subr.mxu0 %v4236
        %4423 = vmatpush1.msra.mxu0 %v4235
        %4424 = vmatprep.subr.mxu0 %v4238
        %4425 = vmatpush1.msra.mxu0 %v4237
        %4426 = vmatprep.subr.mxu0 %v4240
        %4427 = vmatpush1.msra.mxu0 %v4239
        %4428 = vmatprep.subr.mxu0 %v4242
        %4429 = vmatpush1.msra.mxu0 %v4241
        %4430 = vmatprep.subr.mxu0 %v4244
        %4431 = vmatpush1.msra.mxu0 %v4243
        %4432 = vmatprep.subr.mxu0 0.0
        %4433 = vmatpush1.msra.mxu0 0.0
        %4434 = vmatprep.subr.mxu0 0.0
        %4435 = vmatpush1.msra.mxu0 0.0
        %4436 = vmatprep.subr.mxu0 0.0
        %4437 = vmatpush1.msra.mxu0 0.0
        %4438 = vmatprep.subr.mxu0 0.0
        %4439 = vmatpush1.msra.mxu0 0.0
        %4440 = vmatprep.subr.mxu0 0.0
        %4441 = vmatpush1.msra.mxu0 0.0
        %4442 = vmatprep.subr.mxu0 0.0
        %4443 = vmatpush1.msra.mxu0 0.0
        %4444 = vmatprep.subr.mxu0 0.0
        %4445 = vmatpush1.msra.mxu0 0.0
        %4446 = vmatprep.subr.mxu0 0.0
        %4447 = vmatpush1.msra.mxu0 0.0
        %4448 = vmatprep.subr.mxu0 0.0
        %4449 = vmatpush1.msra.mxu0 0.0
        %4450 = vmatprep.subr.mxu0 0.0
        %4451 = vmatpush1.msra.mxu0 0.0
        %4452 = vmatprep.subr.mxu0 0.0
        %4453 = vmatpush1.msra.mxu0 0.0
        %4454 = vmatprep.subr.mxu0 0.0
        %4455 = vmatpush1.msra.mxu0 0.0
        %4456 = vmatprep.subr.mxu0 0.0
        %4457 = vmatpush1.msra.mxu0 0.0
        %4458 = vmatprep.subr.mxu0 0.0
        %4459 = vmatpush1.msra.mxu0 0.0
        %4460 = vmatprep.subr.mxu0 0.0
        %4461 = vmatpush1.msra.mxu0 0.0
        %4462 = vmatprep.subr.mxu0 0.0
        %4463 = vmatpush1.msra.mxu0 0.0
        %4464 = vmatprep.subr.mxu0 0.0
        %4465 = vmatpush1.msra.mxu0 0.0
        %4466 = vmatprep.subr.mxu0 0.0
        %4467 = vmatpush1.msra.mxu0 0.0
        %4468 = vmatprep.subr.mxu0 0.0
        %4469 = vmatpush1.msra.mxu0 0.0
        %4470 = vmatprep.subr.mxu0 0.0
        %4471 = vmatpush1.msra.mxu0 0.0
        %4472 = vmatprep.subr.mxu0 0.0
        %4473 = vmatpush1.msra.mxu0 0.0
        %4474 = vmatprep.subr.mxu0 0.0
        %4475 = vmatpush1.msra.mxu0 0.0
        %4476 = vmatprep.subr.mxu0 0.0
        %4477 = vmatpush1.msra.mxu0 0.0
        %4478 = vmatprep.subr.mxu0 0.0
        %4479 = vmatpush1.msra.mxu0 0.0
        %4480 = vmatprep.subr.mxu0 0.0
        %4481 = vmatpush1.msra.mxu0 0.0
        %4482 = vmatprep.mubr.f32.mxu0 0.0
        %4483 = vmatmul.mubr.f32.gmra.mrb[0].mxu0 %v4410
        %v4484 = vpop.f32.mrb[0].mxu0
        %v4485 = vadd.f32 0.0, %v4484
        %v4486 = vpop.f32.mrb[0].mxu0
        %v4487 = vadd.f32 0.0, %v4486
        %4488 = vmatprep.mubr.f32.mxu0 0.0
        %4489 = vmatmul.mubr.f32.gmra.mrb[0].mxu0 %v4413
        %v4490 = vpop.f32.mrb[0].mxu0
        %v4491 = vadd.f32 0.0, %v4490
        %v4492 = vpop.f32.mrb[0].mxu0
        %v4493 = vadd.f32 0.0, %v4492
        %4494 = vmatprep.mubr.f32.mxu0 0.0
        %4495 = vmatmul.mubr.f32.gmra.mrb[0].mxu0 %v4416
        %v4496 = vpop.f32.mrb[0].mxu0
        %v4497 = vadd.f32 0.0, %v4496
        %v4498 = vpop.f32.mrb[0].mxu0
        %v4499 = vadd.f32 0.0, %v4498
        %4500 = vdwg.mxu0
        %s4501 = scalar_lea.vmem %s8, 512
        %v4502 = vld [vmem:[%s4501] sm:$0xff]
        %v4503 = vld [vmem:[%s4501 + $0x8] sm:$0xff]
        %v4504 = vld [vmem:[%s4501 + $0x10] sm:$0xff]
        %v4505 = vld [vmem:[%s4501 + $0x18] sm:$0xff]
        %v4506 = vld [vmem:[%s4501 + $0x20] sm:$0xff]
        %v4507 = vld [vmem:[%s4501 + $0x28] sm:$0xff]
        %v4508 = vld [vmem:[%s4501 + $0x30] sm:$0xff]
        %v4509 = vld [vmem:[%s4501 + $0x38] sm:$0xff]
        %v4510 = vld [vmem:[%s4501 + $0x40] sm:$0xff]
        %v4511 = vld [vmem:[%s4501 + $0x48] sm:$0xff]
        %v4512 = vld [vmem:[%s4501 + $0x50] sm:$0xff]
        %v4513 = vld [vmem:[%s4501 + $0x58] sm:$0xff]
        %v4514 = vld [vmem:[%s4501 + $0x60] sm:$0xff]
        %v4515 = vld [vmem:[%s4501 + $0x68] sm:$0xff]
        %v4516 = vld [vmem:[%s4501 + $0x70] sm:$0xff]
        %v4517 = vld [vmem:[%s4501 + $0x78] sm:$0xff]
        %v4518 = vld [vmem:[%s4501 + $0x80] sm:$0xff]
        %v4519 = vld [vmem:[%s4501 + $0x88] sm:$0xff]
        %v4520 = vld [vmem:[%s4501 + $0x90] sm:$0xff]
        %v4521 = vld [vmem:[%s4501 + $0x98] sm:$0xff]
        %v4522 = vld [vmem:[%s4501 + $0xa0] sm:$0xff]
        %v4523 = vld [vmem:[%s4501 + $0xa8] sm:$0xff]
        %v4524 = vld [vmem:[%s4501 + $0xb0] sm:$0xff]
        %v4525 = vld [vmem:[%s4501 + $0xb8] sm:$0xff]
        %v4526 = vld [vmem:[%s4501 + $0xc0] sm:$0xff]
        %v4527 = vld [vmem:[%s4501 + $0xc8] sm:$0xff]
        %v4528 = vld [vmem:[%s4501 + $0xd0] sm:$0xff]
        %v4529 = vld [vmem:[%s4501 + $0xd8] sm:$0xff]
        %v4530 = vld [vmem:[%s4501 + $0xe0] sm:$0xff]
        %v4531 = vld [vmem:[%s4501 + $0xe8] sm:$0xff]
        %v4532 = vld [vmem:[%s4501 + $0xf0] sm:$0xff]
        %v4533 = vld [vmem:[%s4501 + $0xf8] sm:$0xff]
        %v4534 = vld [vmem:[%s4501 + $0x100] sm:$0xff]
        %v4535 = vld [vmem:[%s4501 + $0x108] sm:$0xff]
        %v4536 = vld [vmem:[%s4501 + $0x110] sm:$0xff]
        %v4537 = vld [vmem:[%s4501 + $0x118] sm:$0xff]
        %v4538 = vld [vmem:[%s4501 + $0x120] sm:$0xff]
        %v4539 = vld [vmem:[%s4501 + $0x128] sm:$0xff]
        %v4540 = vld [vmem:[%s4501 + $0x130] sm:$0xff]
        %v4541 = vld [vmem:[%s4501 + $0x138] sm:$0xff]
        %v4542 = vld [vmem:[%s4501 + $0x140] sm:$0xff]
        %v4543 = vld [vmem:[%s4501 + $0x148] sm:$0xff]
        %v4544 = vld [vmem:[%s4501 + $0x150] sm:$0xff]
        %v4545 = vld [vmem:[%s4501 + $0x158] sm:$0xff]
        %v4546 = vld [vmem:[%s4501 + $0x160] sm:$0xff]
        %v4547 = vld [vmem:[%s4501 + $0x168] sm:$0xff]
        %v4548 = vld [vmem:[%s4501 + $0x170] sm:$0xff]
        %v4549 = vld [vmem:[%s4501 + $0x178] sm:$0xff]
        %v4550 = vld [vmem:[%s4501 + $0x180] sm:$0xff]
        %v4551 = vld [vmem:[%s4501 + $0x188] sm:$0xff]
        %v4552 = vld [vmem:[%s4501 + $0x190] sm:$0xff]
        %v4553 = vld [vmem:[%s4501 + $0x198] sm:$0xff]
        %v4554 = vld [vmem:[%s4501 + $0x1a0] sm:$0xff]
        %v4555 = vld [vmem:[%s4501 + $0x1a8] sm:$0xff]
        %v4556 = vld [vmem:[%s4501 + $0x1b0] sm:$0xff]
        %v4557 = vld [vmem:[%s4501 + $0x1b8] sm:$0xff]
        %v4558 = vld [vmem:[%s4501 + $0x1c0] sm:$0xff]
        %v4559 = vld [vmem:[%s4501 + $0x1c8] sm:$0xff]
        %v4560 = vld [vmem:[%s4501 + $0x1d0] sm:$0xff]
        %v4561 = vld [vmem:[%s4501 + $0x1d8] sm:$0xff]
        %v4562 = vld [vmem:[%s4501 + $0x1e0] sm:$0xff]
        %v4563 = vld [vmem:[%s4501 + $0x1e8] sm:$0xff]
        %v4564 = vld [vmem:[%s4501 + $0x1f0] sm:$0xff]
        %v4565 = vld [vmem:[%s4501 + $0x1f8] sm:$0xff]
        %4566 = vmatprep.subr.mxu0 %v4503
        %4567 = vmatpush1.msra.mxu0 %v4502
        %4568 = vmatprep.subr.mxu0 %v4505
        %4569 = vmatpush1.msra.mxu0 %v4504
        %4570 = vmatprep.subr.mxu0 %v4507
        %4571 = vmatpush1.msra.mxu0 %v4506
        %4572 = vmatprep.subr.mxu0 %v4509
        %4573 = vmatpush1.msra.mxu0 %v4508
        %4574 = vmatprep.subr.mxu0 %v4511
        %4575 = vmatpush1.msra.mxu0 %v4510
        %4576 = vmatprep.subr.mxu0 %v4513
        %4577 = vmatpush1.msra.mxu0 %v4512
        %4578 = vmatprep.subr.mxu0 %v4515
        %4579 = vmatpush1.msra.mxu0 %v4514
        %4580 = vmatprep.subr.mxu0 %v4517
        %4581 = vmatpush1.msra.mxu0 %v4516
        %4582 = vmatprep.subr.mxu0 %v4519
        %4583 = vmatpush1.msra.mxu0 %v4518
        %4584 = vmatprep.subr.mxu0 %v4521
        %4585 = vmatpush1.msra.mxu0 %v4520
        %4586 = vmatprep.subr.mxu0 %v4523
        %4587 = vmatpush1.msra.mxu0 %v4522
        %4588 = vmatprep.subr.mxu0 %v4525
        %4589 = vmatpush1.msra.mxu0 %v4524
        %4590 = vmatprep.subr.mxu0 %v4527
        %4591 = vmatpush1.msra.mxu0 %v4526
        %4592 = vmatprep.subr.mxu0 %v4529
        %4593 = vmatpush1.msra.mxu0 %v4528
        %4594 = vmatprep.subr.mxu0 %v4531
        %4595 = vmatpush1.msra.mxu0 %v4530
        %4596 = vmatprep.subr.mxu0 %v4533
        %4597 = vmatpush1.msra.mxu0 %v4532
        %4598 = vmatprep.subr.mxu0 %v4535
        %4599 = vmatpush1.msra.mxu0 %v4534
        %4600 = vmatprep.subr.mxu0 %v4537
        %4601 = vmatpush1.msra.mxu0 %v4536
        %4602 = vmatprep.subr.mxu0 %v4539
        %4603 = vmatpush1.msra.mxu0 %v4538
        %4604 = vmatprep.subr.mxu0 %v4541
        %4605 = vmatpush1.msra.mxu0 %v4540
        %4606 = vmatprep.subr.mxu0 %v4543
        %4607 = vmatpush1.msra.mxu0 %v4542
        %4608 = vmatprep.subr.mxu0 %v4545
        %4609 = vmatpush1.msra.mxu0 %v4544
        %4610 = vmatprep.subr.mxu0 %v4547
        %4611 = vmatpush1.msra.mxu0 %v4546
        %4612 = vmatprep.subr.mxu0 %v4549
        %4613 = vmatpush1.msra.mxu0 %v4548
        %4614 = vmatprep.subr.mxu0 %v4551
        %4615 = vmatpush1.msra.mxu0 %v4550
        %4616 = vmatprep.subr.mxu0 %v4553
        %4617 = vmatpush1.msra.mxu0 %v4552
        %4618 = vmatprep.subr.mxu0 %v4555
        %4619 = vmatpush1.msra.mxu0 %v4554
        %4620 = vmatprep.subr.mxu0 %v4557
        %4621 = vmatpush1.msra.mxu0 %v4556
        %4622 = vmatprep.subr.mxu0 %v4559
        %4623 = vmatpush1.msra.mxu0 %v4558
        %4624 = vmatprep.subr.mxu0 %v4561
        %4625 = vmatpush1.msra.mxu0 %v4560
        %4626 = vmatprep.subr.mxu0 %v4563
        %4627 = vmatpush1.msra.mxu0 %v4562
        %4628 = vmatprep.subr.mxu0 %v4565
        %4629 = vmatpush1.msra.mxu0 %v4564
        %4630 = vmatprep.mubr.f32.mxu0 %v4487
        %4631 = vmatmul.mubr.f32.gmra.mrb[0].mxu0 %v4485
        %v4632 = vpop.f32.mrb[0].mxu0
        %v4633 = vadd.f32 0.0, %v4632
        %v4634 = vpop.f32.mrb[0].mxu0
        %v4635 = vadd.f32 0.0, %v4634
        %4636 = vmatprep.mubr.f32.mxu0 %v4493
        %4637 = vmatmul.mubr.f32.gmra.mrb[0].mxu0 %v4491
        %v4638 = vpop.f32.mrb[0].mxu0
        %v4639 = vadd.f32 0.0, %v4638
        %v4640 = vpop.f32.mrb[0].mxu0
        %v4641 = vadd.f32 0.0, %v4640
        %4642 = vmatprep.mubr.f32.mxu0 %v4499
        %4643 = vmatmul.mubr.f32.gmra.mrb[0].mxu0 %v4497
        %v4644 = vpop.f32.mrb[0].mxu0
        %v4645 = vadd.f32 0.0, %v4644
        %v4646 = vpop.f32.mrb[0].mxu0
        %v4647 = vadd.f32 0.0, %v4646
        %4648 = vdwg.mxu0
        %4649 = vmatprep.subr.mxu0 %v4342
        %4650 = vmatpush1.msra.mxu0 %v4341
        %4651 = vmatprep.subr.mxu0 %v4344
        %4652 = vmatpush1.msra.mxu0 %v4343
        %4653 = vmatprep.subr.mxu0 %v4346
        %4654 = vmatpush1.msra.mxu0 %v4345
        %4655 = vmatprep.subr.mxu0 %v4348
        %4656 = vmatpush1.msra.mxu0 %v4347
        %4657 = vmatprep.subr.mxu0 %v4350
        %4658 = vmatpush1.msra.mxu0 %v4349
        %4659 = vmatprep.subr.mxu0 %v4352
        %4660 = vmatpush1.msra.mxu0 %v4351
        %4661 = vmatprep.subr.mxu0 %v4354
        %4662 = vmatpush1.msra.mxu0 %v4353
        %4663 = vmatprep.subr.mxu0 %v4356
        %4664 = vmatpush1.msra.mxu0 %v4355
        %4665 = vmatprep.subr.mxu0 %v4358
        %4666 = vmatpush1.msra.mxu0 %v4357
        %4667 = vmatprep.subr.mxu0 %v4360
        %4668 = vmatpush1.msra.mxu0 %v4359
        %4669 = vmatprep.subr.mxu0 %v4362
        %4670 = vmatpush1.msra.mxu0 %v4361
        %4671 = vmatprep.subr.mxu0 %v4364
        %4672 = vmatpush1.msra.mxu0 %v4363
        %4673 = vmatprep.subr.mxu0 %v4366
        %4674 = vmatpush1.msra.mxu0 %v4365
        %4675 = vmatprep.subr.mxu0 %v4368
        %4676 = vmatpush1.msra.mxu0 %v4367
        %4677 = vmatprep.subr.mxu0 %v4370
        %4678 = vmatpush1.msra.mxu0 %v4369
        %4679 = vmatprep.subr.mxu0 %v4372
        %4680 = vmatpush1.msra.mxu0 %v4371
        %4681 = vmatprep.subr.mxu0 %v4374
        %4682 = vmatpush1.msra.mxu0 %v4373
        %4683 = vmatprep.subr.mxu0 %v4376
        %4684 = vmatpush1.msra.mxu0 %v4375
        %4685 = vmatprep.subr.mxu0 %v4378
        %4686 = vmatpush1.msra.mxu0 %v4377
        %4687 = vmatprep.subr.mxu0 %v4380
        %4688 = vmatpush1.msra.mxu0 %v4379
        %4689 = vmatprep.subr.mxu0 %v4382
        %4690 = vmatpush1.msra.mxu0 %v4381
        %4691 = vmatprep.subr.mxu0 %v4384
        %4692 = vmatpush1.msra.mxu0 %v4383
        %4693 = vmatprep.subr.mxu0 %v4386
        %4694 = vmatpush1.msra.mxu0 %v4385
        %4695 = vmatprep.subr.mxu0 %v4388
        %4696 = vmatpush1.msra.mxu0 %v4387
        %4697 = vmatprep.subr.mxu0 %v4390
        %4698 = vmatpush1.msra.mxu0 %v4389
        %4699 = vmatprep.subr.mxu0 %v4392
        %4700 = vmatpush1.msra.mxu0 %v4391
        %4701 = vmatprep.subr.mxu0 %v4394
        %4702 = vmatpush1.msra.mxu0 %v4393
        %4703 = vmatprep.subr.mxu0 %v4396
        %4704 = vmatpush1.msra.mxu0 %v4395
        %4705 = vmatprep.subr.mxu0 %v4398
        %4706 = vmatpush1.msra.mxu0 %v4397
        %4707 = vmatprep.subr.mxu0 %v4400
        %4708 = vmatpush1.msra.mxu0 %v4399
        %4709 = vmatprep.subr.mxu0 %v4402
        %4710 = vmatpush1.msra.mxu0 %v4401
        %4711 = vmatprep.subr.mxu0 %v4404
        %4712 = vmatpush1.msra.mxu0 %v4403
        %4713 = vmatprep.mubr.f32.mxu0 %v4327
        %4714 = vmatmul.mubr.f32.gmra.mrb[0].mxu0 %v4325
        %v4715 = vpop.f32.mrb[0].mxu0
        %v4716 = vadd.f32 %v4633, %v4715
        %v4717 = vpop.f32.mrb[0].mxu0
        %v4718 = vadd.f32 %v4635, %v4717
        %4719 = vmatprep.mubr.f32.mxu0 %v4333
        %4720 = vmatmul.mubr.f32.gmra.mrb[0].mxu0 %v4331
        %v4721 = vpop.f32.mrb[0].mxu0
        %v4722 = vadd.f32 %v4639, %v4721
        %v4723 = vpop.f32.mrb[0].mxu0
        %v4724 = vadd.f32 %v4641, %v4723
        %4725 = vmatprep.mubr.f32.mxu0 %v4339
        %4726 = vmatmul.mubr.f32.gmra.mrb[0].mxu0 %v4337
        %v4727 = vpop.f32.mrb[0].mxu0
        %v4728 = vadd.f32 %v4645, %v4727
        %v4729 = vpop.f32.mrb[0].mxu0
        %v4730 = vadd.f32 %v4647, %v4729
        %4731 = vdwg.mxu0
        %s4732 = scalar_lea.vmem %s7, 48
        %v4733 = vld [vmem:[%s4732] sm:$0xff]
        %v4734 = vld [vmem:[%s4732 + $0x8] sm:$0xff]
        %v4735 = vld [vmem:[%s4732 + $0x10] sm:$0xff]
        %v4737 = vsel %vm4248, %v4733, 0
        %v4740 = vsel %vm4248, %v4734, 0
        %v4743 = vsel %vm4248, %v4735, 0
        %4745 = vmatprep.subr.mxu0 %v4232
        %4746 = vmatpush1.msra.mxu0 %v4231
        %4747 = vmatprep.subr.mxu0 %v4234
        %4748 = vmatpush1.msra.mxu0 %v4233
        %4749 = vmatprep.subr.mxu0 %v4236
        %4750 = vmatpush1.msra.mxu0 %v4235
        %4751 = vmatprep.subr.mxu0 %v4238
        %4752 = vmatpush1.msra.mxu0 %v4237
        %4753 = vmatprep.subr.mxu0 %v4240
        %4754 = vmatpush1.msra.mxu0 %v4239
        %4755 = vmatprep.subr.mxu0 %v4242
        %4756 = vmatpush1.msra.mxu0 %v4241
        %4757 = vmatprep.subr.mxu0 %v4244
        %4758 = vmatpush1.msra.mxu0 %v4243
        %4759 = vmatprep.subr.mxu0 0.0
        %4760 = vmatpush1.msra.mxu0 0.0
        %4761 = vmatprep.subr.mxu0 0.0
        %4762 = vmatpush1.msra.mxu0 0.0
        %4763 = vmatprep.subr.mxu0 0.0
        %4764 = vmatpush1.msra.mxu0 0.0
        %4765 = vmatprep.subr.mxu0 0.0
        %4766 = vmatpush1.msra.mxu0 0.0
        %4767 = vmatprep.subr.mxu0 0.0
        %4768 = vmatpush1.msra.mxu0 0.0
        %4769 = vmatprep.subr.mxu0 0.0
        %4770 = vmatpush1.msra.mxu0 0.0
        %4771 = vmatprep.subr.mxu0 0.0
        %4772 = vmatpush1.msra.mxu0 0.0
        %4773 = vmatprep.subr.mxu0 0.0
        %4774 = vmatpush1.msra.mxu0 0.0
        %4775 = vmatprep.subr.mxu0 0.0
        %4776 = vmatpush1.msra.mxu0 0.0
        %4777 = vmatprep.subr.mxu0 0.0
        %4778 = vmatpush1.msra.mxu0 0.0
        %4779 = vmatprep.subr.mxu0 0.0
        %4780 = vmatpush1.msra.mxu0 0.0
        %4781 = vmatprep.subr.mxu0 0.0
        %4782 = vmatpush1.msra.mxu0 0.0
        %4783 = vmatprep.subr.mxu0 0.0
        %4784 = vmatpush1.msra.mxu0 0.0
        %4785 = vmatprep.subr.mxu0 0.0
        %4786 = vmatpush1.msra.mxu0 0.0
        %4787 = vmatprep.subr.mxu0 0.0
        %4788 = vmatpush1.msra.mxu0 0.0
        %4789 = vmatprep.subr.mxu0 0.0
        %4790 = vmatpush1.msra.mxu0 0.0
        %4791 = vmatprep.subr.mxu0 0.0
        %4792 = vmatpush1.msra.mxu0 0.0
        %4793 = vmatprep.subr.mxu0 0.0
        %4794 = vmatpush1.msra.mxu0 0.0
        %4795 = vmatprep.subr.mxu0 0.0
        %4796 = vmatpush1.msra.mxu0 0.0
        %4797 = vmatprep.subr.mxu0 0.0
        %4798 = vmatpush1.msra.mxu0 0.0
        %4799 = vmatprep.subr.mxu0 0.0
        %4800 = vmatpush1.msra.mxu0 0.0
        %4801 = vmatprep.subr.mxu0 0.0
        %4802 = vmatpush1.msra.mxu0 0.0
        %4803 = vmatprep.subr.mxu0 0.0
        %4804 = vmatpush1.msra.mxu0 0.0
        %4805 = vmatprep.subr.mxu0 0.0
        %4806 = vmatpush1.msra.mxu0 0.0
        %4807 = vmatprep.subr.mxu0 0.0
        %4808 = vmatpush1.msra.mxu0 0.0
        %4809 = vmatprep.mubr.f32.mxu0 0.0
        %4810 = vmatmul.mubr.f32.gmra.mrb[0].mxu0 %v4737
        %v4811 = vpop.f32.mrb[0].mxu0
        %v4812 = vadd.f32 0.0, %v4811
        %v4813 = vpop.f32.mrb[0].mxu0
        %v4814 = vadd.f32 0.0, %v4813
        %4815 = vmatprep.mubr.f32.mxu0 0.0
        %4816 = vmatmul.mubr.f32.gmra.mrb[0].mxu0 %v4740
        %v4817 = vpop.f32.mrb[0].mxu0
        %v4818 = vadd.f32 0.0, %v4817
        %v4819 = vpop.f32.mrb[0].mxu0
        %v4820 = vadd.f32 0.0, %v4819
        %4821 = vmatprep.mubr.f32.mxu0 0.0
        %4822 = vmatmul.mubr.f32.gmra.mrb[0].mxu0 %v4743
        %v4823 = vpop.f32.mrb[0].mxu0
        %v4824 = vadd.f32 0.0, %v4823
        %v4825 = vpop.f32.mrb[0].mxu0
        %v4826 = vadd.f32 0.0, %v4825
        %4827 = vdwg.mxu0
        %s4828 = scalar_lea.vmem %s8, 1024
        %v4829 = vld [vmem:[%s4828] sm:$0xff]
        %v4830 = vld [vmem:[%s4828 + $0x8] sm:$0xff]
        %v4831 = vld [vmem:[%s4828 + $0x10] sm:$0xff]
        %v4832 = vld [vmem:[%s4828 + $0x18] sm:$0xff]
        %v4833 = vld [vmem:[%s4828 + $0x20] sm:$0xff]
        %v4834 = vld [vmem:[%s4828 + $0x28] sm:$0xff]
        %v4835 = vld [vmem:[%s4828 + $0x30] sm:$0xff]
        %v4836 = vld [vmem:[%s4828 + $0x38] sm:$0xff]
        %v4837 = vld [vmem:[%s4828 + $0x40] sm:$0xff]
        %v4838 = vld [vmem:[%s4828 + $0x48] sm:$0xff]
        %v4839 = vld [vmem:[%s4828 + $0x50] sm:$0xff]
        %v4840 = vld [vmem:[%s4828 + $0x58] sm:$0xff]
        %v4841 = vld [vmem:[%s4828 + $0x60] sm:$0xff]
        %v4842 = vld [vmem:[%s4828 + $0x68] sm:$0xff]
        %v4843 = vld [vmem:[%s4828 + $0x70] sm:$0xff]
        %v4844 = vld [vmem:[%s4828 + $0x78] sm:$0xff]
        %v4845 = vld [vmem:[%s4828 + $0x80] sm:$0xff]
        %v4846 = vld [vmem:[%s4828 + $0x88] sm:$0xff]
        %v4847 = vld [vmem:[%s4828 + $0x90] sm:$0xff]
        %v4848 = vld [vmem:[%s4828 + $0x98] sm:$0xff]
        %v4849 = vld [vmem:[%s4828 + $0xa0] sm:$0xff]
        %v4850 = vld [vmem:[%s4828 + $0xa8] sm:$0xff]
        %v4851 = vld [vmem:[%s4828 + $0xb0] sm:$0xff]
        %v4852 = vld [vmem:[%s4828 + $0xb8] sm:$0xff]
        %v4853 = vld [vmem:[%s4828 + $0xc0] sm:$0xff]
        %v4854 = vld [vmem:[%s4828 + $0xc8] sm:$0xff]
        %v4855 = vld [vmem:[%s4828 + $0xd0] sm:$0xff]
        %v4856 = vld [vmem:[%s4828 + $0xd8] sm:$0xff]
        %v4857 = vld [vmem:[%s4828 + $0xe0] sm:$0xff]
        %v4858 = vld [vmem:[%s4828 + $0xe8] sm:$0xff]
        %v4859 = vld [vmem:[%s4828 + $0xf0] sm:$0xff]
        %v4860 = vld [vmem:[%s4828 + $0xf8] sm:$0xff]
        %v4861 = vld [vmem:[%s4828 + $0x100] sm:$0xff]
        %v4862 = vld [vmem:[%s4828 + $0x108] sm:$0xff]
        %v4863 = vld [vmem:[%s4828 + $0x110] sm:$0xff]
        %v4864 = vld [vmem:[%s4828 + $0x118] sm:$0xff]
        %v4865 = vld [vmem:[%s4828 + $0x120] sm:$0xff]
        %v4866 = vld [vmem:[%s4828 + $0x128] sm:$0xff]
        %v4867 = vld [vmem:[%s4828 + $0x130] sm:$0xff]
        %v4868 = vld [vmem:[%s4828 + $0x138] sm:$0xff]
        %v4869 = vld [vmem:[%s4828 + $0x140] sm:$0xff]
        %v4870 = vld [vmem:[%s4828 + $0x148] sm:$0xff]
        %v4871 = vld [vmem:[%s4828 + $0x150] sm:$0xff]
        %v4872 = vld [vmem:[%s4828 + $0x158] sm:$0xff]
        %v4873 = vld [vmem:[%s4828 + $0x160] sm:$0xff]
        %v4874 = vld [vmem:[%s4828 + $0x168] sm:$0xff]
        %v4875 = vld [vmem:[%s4828 + $0x170] sm:$0xff]
        %v4876 = vld [vmem:[%s4828 + $0x178] sm:$0xff]
        %v4877 = vld [vmem:[%s4828 + $0x180] sm:$0xff]
        %v4878 = vld [vmem:[%s4828 + $0x188] sm:$0xff]
        %v4879 = vld [vmem:[%s4828 + $0x190] sm:$0xff]
        %v4880 = vld [vmem:[%s4828 + $0x198] sm:$0xff]
        %v4881 = vld [vmem:[%s4828 + $0x1a0] sm:$0xff]
        %v4882 = vld [vmem:[%s4828 + $0x1a8] sm:$0xff]
        %v4883 = vld [vmem:[%s4828 + $0x1b0] sm:$0xff]
        %v4884 = vld [vmem:[%s4828 + $0x1b8] sm:$0xff]
        %v4885 = vld [vmem:[%s4828 + $0x1c0] sm:$0xff]
        %v4886 = vld [vmem:[%s4828 + $0x1c8] sm:$0xff]
        %v4887 = vld [vmem:[%s4828 + $0x1d0] sm:$0xff]
        %v4888 = vld [vmem:[%s4828 + $0x1d8] sm:$0xff]
        %v4889 = vld [vmem:[%s4828 + $0x1e0] sm:$0xff]
        %v4890 = vld [vmem:[%s4828 + $0x1e8] sm:$0xff]
        %v4891 = vld [vmem:[%s4828 + $0x1f0] sm:$0xff]
        %v4892 = vld [vmem:[%s4828 + $0x1f8] sm:$0xff]
        %4893 = vmatprep.subr.mxu0 %v4830
        %4894 = vmatpush1.msra.mxu0 %v4829
        %4895 = vmatprep.subr.mxu0 %v4832
        %4896 = vmatpush1.msra.mxu0 %v4831
        %4897 = vmatprep.subr.mxu0 %v4834
        %4898 = vmatpush1.msra.mxu0 %v4833
        %4899 = vmatprep.subr.mxu0 %v4836
        %4900 = vmatpush1.msra.mxu0 %v4835
        %4901 = vmatprep.subr.mxu0 %v4838
        %4902 = vmatpush1.msra.mxu0 %v4837
        %4903 = vmatprep.subr.mxu0 %v4840
        %4904 = vmatpush1.msra.mxu0 %v4839
        %4905 = vmatprep.subr.mxu0 %v4842
        %4906 = vmatpush1.msra.mxu0 %v4841
        %4907 = vmatprep.subr.mxu0 %v4844
        %4908 = vmatpush1.msra.mxu0 %v4843
        %4909 = vmatprep.subr.mxu0 %v4846
        %4910 = vmatpush1.msra.mxu0 %v4845
        %4911 = vmatprep.subr.mxu0 %v4848
        %4912 = vmatpush1.msra.mxu0 %v4847
        %4913 = vmatprep.subr.mxu0 %v4850
        %4914 = vmatpush1.msra.mxu0 %v4849
        %4915 = vmatprep.subr.mxu0 %v4852
        %4916 = vmatpush1.msra.mxu0 %v4851
        %4917 = vmatprep.subr.mxu0 %v4854
        %4918 = vmatpush1.msra.mxu0 %v4853
        %4919 = vmatprep.subr.mxu0 %v4856
        %4920 = vmatpush1.msra.mxu0 %v4855
        %4921 = vmatprep.subr.mxu0 %v4858
        %4922 = vmatpush1.msra.mxu0 %v4857
        %4923 = vmatprep.subr.mxu0 %v4860
        %4924 = vmatpush1.msra.mxu0 %v4859
        %4925 = vmatprep.subr.mxu0 %v4862
        %4926 = vmatpush1.msra.mxu0 %v4861
        %4927 = vmatprep.subr.mxu0 %v4864
        %4928 = vmatpush1.msra.mxu0 %v4863
        %4929 = vmatprep.subr.mxu0 %v4866
        %4930 = vmatpush1.msra.mxu0 %v4865
        %4931 = vmatprep.subr.mxu0 %v4868
        %4932 = vmatpush1.msra.mxu0 %v4867
        %4933 = vmatprep.subr.mxu0 %v4870
        %4934 = vmatpush1.msra.mxu0 %v4869
        %4935 = vmatprep.subr.mxu0 %v4872
        %4936 = vmatpush1.msra.mxu0 %v4871
        %4937 = vmatprep.subr.mxu0 %v4874
        %4938 = vmatpush1.msra.mxu0 %v4873
        %4939 = vmatprep.subr.mxu0 %v4876
        %4940 = vmatpush1.msra.mxu0 %v4875
        %4941 = vmatprep.subr.mxu0 %v4878
        %4942 = vmatpush1.msra.mxu0 %v4877
        %4943 = vmatprep.subr.mxu0 %v4880
        %4944 = vmatpush1.msra.mxu0 %v4879
        %4945 = vmatprep.subr.mxu0 %v4882
        %4946 = vmatpush1.msra.mxu0 %v4881
        %4947 = vmatprep.subr.mxu0 %v4884
        %4948 = vmatpush1.msra.mxu0 %v4883
        %4949 = vmatprep.subr.mxu0 %v4886
        %4950 = vmatpush1.msra.mxu0 %v4885
        %4951 = vmatprep.subr.mxu0 %v4888
        %4952 = vmatpush1.msra.mxu0 %v4887
        %4953 = vmatprep.subr.mxu0 %v4890
        %4954 = vmatpush1.msra.mxu0 %v4889
        %4955 = vmatprep.subr.mxu0 %v4892
        %4956 = vmatpush1.msra.mxu0 %v4891
        %4957 = vmatprep.mubr.f32.mxu0 %v4814
        %4958 = vmatmul.mubr.f32.gmra.mrb[0].mxu0 %v4812
        %v4959 = vpop.f32.mrb[0].mxu0
        %v4960 = vadd.f32 0.0, %v4959
        %v4961 = vpop.f32.mrb[0].mxu0
        %v4962 = vadd.f32 0.0, %v4961
        %4963 = vmatprep.mubr.f32.mxu0 %v4820
        %4964 = vmatmul.mubr.f32.gmra.mrb[0].mxu0 %v4818
        %v4965 = vpop.f32.mrb[0].mxu0
        %v4966 = vadd.f32 0.0, %v4965
        %v4967 = vpop.f32.mrb[0].mxu0
        %v4968 = vadd.f32 0.0, %v4967
        %4969 = vmatprep.mubr.f32.mxu0 %v4826
        %4970 = vmatmul.mubr.f32.gmra.mrb[0].mxu0 %v4824
        %v4971 = vpop.f32.mrb[0].mxu0
        %v4972 = vadd.f32 0.0, %v4971
        %v4973 = vpop.f32.mrb[0].mxu0
        %v4974 = vadd.f32 0.0, %v4973
        %4975 = vdwg.mxu0
        %v4976 = vadd.f32 %v4716, %v4960
        %v4977 = vadd.f32 %v4718, %v4962
        %v4978 = vadd.f32 %v4722, %v4966
        %v4979 = vadd.f32 %v4724, %v4968
        %v4980 = vadd.f32 %v4728, %v4972
        %v4981 = vadd.f32 %v4730, %v4974
        %v4982 = vld [vmem:[%s9] sm:$0x3]
        %v4984 = vlaneseq
        %v4985 = vshrl.u32 %v4984, 7
        %v4986 = vsub.s32 0, %v4985
        %v4987 = vrot.slane %v4982, %v4986
        %v4988 = vlaneseq
        %v4989 = vshrl.u32 %v4988, 7
        %v4990 = vsub.s32 1, %v4989
        %v4991 = vrot.slane %v4982, %v4990
        %v4994 = vadd.f32 %v4976, %v4987
        %v4995 = vadd.f32 %v4977, %v4991
        %v4996 = vadd.f32 %v4978, %v4987
        %v4997 = vadd.f32 %v4979, %v4991
        %v4998 = vadd.f32 %v4980, %v4987
        %v4999 = vadd.f32 %v4981, %v4991
        %v5000 = vmax.f32 %v4994, 0.0
        %v5001 = vmax.f32 %v4995, 0.0
        %v5002 = vmax.f32 %v4996, 0.0
        %v5003 = vmax.f32 %v4997, 0.0
        %v5004 = vmax.f32 %v4998, 0.0
        %v5005 = vmax.f32 %v4999, 0.0
        %v5006 = vld [vmem:[%s10] sm:$0xff]
        %vm5007 = vcmask 195584
        %v5009 = vsel %vm5007, %v5006, 0
        %5011 = vmatprep.subr.mxu0 %v5001
        %5012 = vmatpush1.msra.mxu0 %v5000
        %5013 = vmatprep.subr.mxu0 %v5003
        %5014 = vmatpush1.msra.mxu0 %v5002
        %5015 = vmatprep.subr.mxu0 %v5005
        %5016 = vmatpush1.msra.mxu0 %v5004
        %5017 = vmatprep.subr.mxu0 0.0
        %5018 = vmatpush1.msra.mxu0 0.0
        %5019 = vmatprep.subr.mxu0 0.0
        %5020 = vmatpush1.msra.mxu0 0.0
        %5021 = vmatprep.subr.mxu0 0.0
        %5022 = vmatpush1.msra.mxu0 0.0
        %5023 = vmatprep.subr.mxu0 0.0
        %5024 = vmatpush1.msra.mxu0 0.0
        %5025 = vmatprep.subr.mxu0 0.0
        %5026 = vmatpush1.msra.mxu0 0.0
        %5027 = vmatprep.subr.mxu0 0.0
        %5028 = vmatpush1.msra.mxu0 0.0
        %5029 = vmatprep.subr.mxu0 0.0
        %5030 = vmatpush1.msra.mxu0 0.0
        %5031 = vmatprep.subr.mxu0 0.0
        %5032 = vmatpush1.msra.mxu0 0.0
        %5033 = vmatprep.subr.mxu0 0.0
        %5034 = vmatpush1.msra.mxu0 0.0
        %5035 = vmatprep.subr.mxu0 0.0
        %5036 = vmatpush1.msra.mxu0 0.0
        %5037 = vmatprep.subr.mxu0 0.0
        %5038 = vmatpush1.msra.mxu0 0.0
        %5039 = vmatprep.subr.mxu0 0.0
        %5040 = vmatpush1.msra.mxu0 0.0
        %5041 = vmatprep.subr.mxu0 0.0
        %5042 = vmatpush1.msra.mxu0 0.0
        %5043 = vmatprep.subr.mxu0 0.0
        %5044 = vmatpush1.msra.mxu0 0.0
        %5045 = vmatprep.subr.mxu0 0.0
        %5046 = vmatpush1.msra.mxu0 0.0
        %5047 = vmatprep.subr.mxu0 0.0
        %5048 = vmatpush1.msra.mxu0 0.0
        %5049 = vmatprep.subr.mxu0 0.0
        %5050 = vmatpush1.msra.mxu0 0.0
        %5051 = vmatprep.subr.mxu0 0.0
        %5052 = vmatpush1.msra.mxu0 0.0
        %5053 = vmatprep.subr.mxu0 0.0
        %5054 = vmatpush1.msra.mxu0 0.0
        %5055 = vmatprep.subr.mxu0 0.0
        %5056 = vmatpush1.msra.mxu0 0.0
        %5057 = vmatprep.subr.mxu0 0.0
        %5058 = vmatpush1.msra.mxu0 0.0
        %5059 = vmatprep.subr.mxu0 0.0
        %5060 = vmatpush1.msra.mxu0 0.0
        %5061 = vmatprep.subr.mxu0 0.0
        %5062 = vmatpush1.msra.mxu0 0.0
        %5063 = vmatprep.subr.mxu0 0.0
        %5064 = vmatpush1.msra.mxu0 0.0
        %5065 = vmatprep.subr.mxu0 0.0
        %5066 = vmatpush1.msra.mxu0 0.0
        %5067 = vmatprep.subr.mxu0 0.0
        %5068 = vmatpush1.msra.mxu0 0.0
        %5069 = vmatprep.subr.mxu0 0.0
        %5070 = vmatpush1.msra.mxu0 0.0
        %5071 = vmatprep.subr.mxu0 0.0
        %5072 = vmatpush1.msra.mxu0 0.0
        %5073 = vmatprep.subr.mxu0 0.0
        %5074 = vmatpush1.msra.mxu0 0.0
        %5075 = vmatprep.mubr.f32.mxu0 0.0
        %5076 = vmatmul.mubr.f32.gmra.mrb[0].mxu0 %v5009
        %v5077 = vpop.f32.mrb[0].mxu0
        %v5078 = vadd.f32 0.0, %v5077
        %v5079 = vpop.f32.mrb[0].mxu0
        %v5080 = vadd.f32 0.0, %v5079
        %5081 = vdwg.mxu0
        %v5082 = vld [vmem:[%s11] sm:$0xff]
        %v5083 = vld [vmem:[%s11 + $0x8] sm:$0xff]
        %v5084 = vld [vmem:[%s11 + $0x10] sm:$0xff]
        %v5085 = vld [vmem:[%s11 + $0x18] sm:$0xff]
        %v5086 = vld [vmem:[%s11 + $0x20] sm:$0xff]
        %v5087 = vld [vmem:[%s11 + $0x28] sm:$0xff]
        %v5088 = vld [vmem:[%s11 + $0x30] sm:$0xff]
        %v5089 = vld [vmem:[%s11 + $0x38] sm:$0xff]
        %v5090 = vld [vmem:[%s11 + $0x40] sm:$0xff]
        %v5091 = vld [vmem:[%s11 + $0x48] sm:$0xff]
        %v5092 = vld [vmem:[%s11 + $0x50] sm:$0xff]
        %v5093 = vld [vmem:[%s11 + $0x58] sm:$0xff]
        %v5094 = vld [vmem:[%s11 + $0x60] sm:$0xff]
        %v5095 = vld [vmem:[%s11 + $0x68] sm:$0xff]
        %v5096 = vld [vmem:[%s11 + $0x70] sm:$0xff]
        %v5097 = vld [vmem:[%s11 + $0x78] sm:$0xff]
        %v5098 = vld [vmem:[%s11 + $0x80] sm:$0xff]
        %v5099 = vld [vmem:[%s11 + $0x88] sm:$0xff]
        %v5100 = vld [vmem:[%s11 + $0x90] sm:$0xff]
        %v5101 = vld [vmem:[%s11 + $0x98] sm:$0xff]
        %v5102 = vld [vmem:[%s11 + $0xa0] sm:$0xff]
        %v5103 = vld [vmem:[%s11 + $0xa8] sm:$0xff]
        %v5104 = vld [vmem:[%s11 + $0xb0] sm:$0xff]
        %v5105 = vld [vmem:[%s11 + $0xb8] sm:$0xff]
        %v5106 = vld [vmem:[%s11 + $0xc0] sm:$0xff]
        %v5107 = vld [vmem:[%s11 + $0xc8] sm:$0xff]
        %v5108 = vld [vmem:[%s11 + $0xd0] sm:$0xff]
        %v5109 = vld [vmem:[%s11 + $0xd8] sm:$0xff]
        %v5110 = vld [vmem:[%s11 + $0xe0] sm:$0xff]
        %v5111 = vld [vmem:[%s11 + $0xe8] sm:$0xff]
        %v5112 = vld [vmem:[%s11 + $0xf0] sm:$0xff]
        %v5113 = vld [vmem:[%s11 + $0xf8] sm:$0xff]
        %s5114 = scalar_lea.vmem %s10, 8
        %v5115 = vld [vmem:[%s5114] sm:$0xff]
        %v5117 = vsel %vm5007, %v5115, 0
        %5119 = vmatprep.subr.mxu0 %v5001
        %5120 = vmatpush1.msra.mxu0 %v5000
        %5121 = vmatprep.subr.mxu0 %v5003
        %5122 = vmatpush1.msra.mxu0 %v5002
        %5123 = vmatprep.subr.mxu0 %v5005
        %5124 = vmatpush1.msra.mxu0 %v5004
        %5125 = vmatprep.subr.mxu0 0.0
        %5126 = vmatpush1.msra.mxu0 0.0
        %5127 = vmatprep.subr.mxu0 0.0
        %5128 = vmatpush1.msra.mxu0 0.0
        %5129 = vmatprep.subr.mxu0 0.0
        %5130 = vmatpush1.msra.mxu0 0.0
        %5131 = vmatprep.subr.mxu0 0.0
        %5132 = vmatpush1.msra.mxu0 0.0
        %5133 = vmatprep.subr.mxu0 0.0
        %5134 = vmatpush1.msra.mxu0 0.0
        %5135 = vmatprep.subr.mxu0 0.0
        %5136 = vmatpush1.msra.mxu0 0.0
        %5137 = vmatprep.subr.mxu0 0.0
        %5138 = vmatpush1.msra.mxu0 0.0
        %5139 = vmatprep.subr.mxu0 0.0
        %5140 = vmatpush1.msra.mxu0 0.0
        %5141 = vmatprep.subr.mxu0 0.0
        %5142 = vmatpush1.msra.mxu0 0.0
        %5143 = vmatprep.subr.mxu0 0.0
        %5144 = vmatpush1.msra.mxu0 0.0
        %5145 = vmatprep.subr.mxu0 0.0
        %5146 = vmatpush1.msra.mxu0 0.0
        %5147 = vmatprep.subr.mxu0 0.0
        %5148 = vmatpush1.msra.mxu0 0.0
        %5149 = vmatprep.subr.mxu0 0.0
        %5150 = vmatpush1.msra.mxu0 0.0
        %5151 = vmatprep.subr.mxu0 0.0
        %5152 = vmatpush1.msra.mxu0 0.0
        %5153 = vmatprep.subr.mxu0 0.0
        %5154 = vmatpush1.msra.mxu0 0.0
        %5155 = vmatprep.subr.mxu0 0.0
        %5156 = vmatpush1.msra.mxu0 0.0
        %5157 = vmatprep.subr.mxu0 0.0
        %5158 = vmatpush1.msra.mxu0 0.0
        %5159 = vmatprep.subr.mxu0 0.0
        %5160 = vmatpush1.msra.mxu0 0.0
        %5161 = vmatprep.subr.mxu0 0.0
        %5162 = vmatpush1.msra.mxu0 0.0
        %5163 = vmatprep.subr.mxu0 0.0
        %5164 = vmatpush1.msra.mxu0 0.0
        %5165 = vmatprep.subr.mxu0 0.0
        %5166 = vmatpush1.msra.mxu0 0.0
        %5167 = vmatprep.subr.mxu0 0.0
        %5168 = vmatpush1.msra.mxu0 0.0
        %5169 = vmatprep.subr.mxu0 0.0
        %5170 = vmatpush1.msra.mxu0 0.0
        %5171 = vmatprep.subr.mxu0 0.0
        %5172 = vmatpush1.msra.mxu0 0.0
        %5173 = vmatprep.subr.mxu0 0.0
        %5174 = vmatpush1.msra.mxu0 0.0
        %5175 = vmatprep.subr.mxu0 0.0
        %5176 = vmatpush1.msra.mxu0 0.0
        %5177 = vmatprep.subr.mxu0 0.0
        %5178 = vmatpush1.msra.mxu0 0.0
        %5179 = vmatprep.subr.mxu0 0.0
        %5180 = vmatpush1.msra.mxu0 0.0
        %5181 = vmatprep.subr.mxu0 0.0
        %5182 = vmatpush1.msra.mxu0 0.0
        %5183 = vmatprep.mubr.f32.mxu0 0.0
        %5184 = vmatmul.mubr.f32.gmra.mrb[0].mxu0 %v5117
        %v5185 = vpop.f32.mrb[0].mxu0
        %v5186 = vadd.f32 0.0, %v5185
        %v5187 = vpop.f32.mrb[0].mxu0
        %v5188 = vadd.f32 0.0, %v5187
        %5189 = vdwg.mxu0
        %s5190 = scalar_lea.vmem %s11, 256
        %v5191 = vld [vmem:[%s5190] sm:$0xff]
        %v5192 = vld [vmem:[%s5190 + $0x8] sm:$0xff]
        %v5193 = vld [vmem:[%s5190 + $0x10] sm:$0xff]
        %v5194 = vld [vmem:[%s5190 + $0x18] sm:$0xff]
        %v5195 = vld [vmem:[%s5190 + $0x20] sm:$0xff]
        %v5196 = vld [vmem:[%s5190 + $0x28] sm:$0xff]
        %v5197 = vld [vmem:[%s5190 + $0x30] sm:$0xff]
        %v5198 = vld [vmem:[%s5190 + $0x38] sm:$0xff]
        %v5199 = vld [vmem:[%s5190 + $0x40] sm:$0xff]
        %v5200 = vld [vmem:[%s5190 + $0x48] sm:$0xff]
        %v5201 = vld [vmem:[%s5190 + $0x50] sm:$0xff]
        %v5202 = vld [vmem:[%s5190 + $0x58] sm:$0xff]
        %v5203 = vld [vmem:[%s5190 + $0x60] sm:$0xff]
        %v5204 = vld [vmem:[%s5190 + $0x68] sm:$0xff]
        %v5205 = vld [vmem:[%s5190 + $0x70] sm:$0xff]
        %v5206 = vld [vmem:[%s5190 + $0x78] sm:$0xff]
        %v5207 = vld [vmem:[%s5190 + $0x80] sm:$0xff]
        %v5208 = vld [vmem:[%s5190 + $0x88] sm:$0xff]
        %v5209 = vld [vmem:[%s5190 + $0x90] sm:$0xff]
        %v5210 = vld [vmem:[%s5190 + $0x98] sm:$0xff]
        %v5211 = vld [vmem:[%s5190 + $0xa0] sm:$0xff]
        %v5212 = vld [vmem:[%s5190 + $0xa8] sm:$0xff]
        %v5213 = vld [vmem:[%s5190 + $0xb0] sm:$0xff]
        %v5214 = vld [vmem:[%s5190 + $0xb8] sm:$0xff]
        %v5215 = vld [vmem:[%s5190 + $0xc0] sm:$0xff]
        %v5216 = vld [vmem:[%s5190 + $0xc8] sm:$0xff]
        %v5217 = vld [vmem:[%s5190 + $0xd0] sm:$0xff]
        %v5218 = vld [vmem:[%s5190 + $0xd8] sm:$0xff]
        %v5219 = vld [vmem:[%s5190 + $0xe0] sm:$0xff]
        %v5220 = vld [vmem:[%s5190 + $0xe8] sm:$0xff]
        %v5221 = vld [vmem:[%s5190 + $0xf0] sm:$0xff]
        %v5222 = vld [vmem:[%s5190 + $0xf8] sm:$0xff]
        %5223 = vmatprep.subr.mxu0 0.0
        %5224 = vmatpush1.msra.mxu0 %v5191
        %5225 = vmatprep.subr.mxu0 0.0
        %5226 = vmatpush1.msra.mxu0 %v5192
        %5227 = vmatprep.subr.mxu0 0.0
        %5228 = vmatpush1.msra.mxu0 %v5193
        %5229 = vmatprep.subr.mxu0 0.0
        %5230 = vmatpush1.msra.mxu0 %v5194
        %5231 = vmatprep.subr.mxu0 0.0
        %5232 = vmatpush1.msra.mxu0 %v5195
        %5233 = vmatprep.subr.mxu0 0.0
        %5234 = vmatpush1.msra.mxu0 %v5196
        %5235 = vmatprep.subr.mxu0 0.0
        %5236 = vmatpush1.msra.mxu0 %v5197
        %5237 = vmatprep.subr.mxu0 0.0
        %5238 = vmatpush1.msra.mxu0 %v5198
        %5239 = vmatprep.subr.mxu0 0.0
        %5240 = vmatpush1.msra.mxu0 %v5199
        %5241 = vmatprep.subr.mxu0 0.0
        %5242 = vmatpush1.msra.mxu0 %v5200
        %5243 = vmatprep.subr.mxu0 0.0
        %5244 = vmatpush1.msra.mxu0 %v5201
        %5245 = vmatprep.subr.mxu0 0.0
        %5246 = vmatpush1.msra.mxu0 %v5202
        %5247 = vmatprep.subr.mxu0 0.0
        %5248 = vmatpush1.msra.mxu0 %v5203
        %5249 = vmatprep.subr.mxu0 0.0
        %5250 = vmatpush1.msra.mxu0 %v5204
        %5251 = vmatprep.subr.mxu0 0.0
        %5252 = vmatpush1.msra.mxu0 %v5205
        %5253 = vmatprep.subr.mxu0 0.0
        %5254 = vmatpush1.msra.mxu0 %v5206
        %5255 = vmatprep.subr.mxu0 0.0
        %5256 = vmatpush1.msra.mxu0 %v5207
        %5257 = vmatprep.subr.mxu0 0.0
        %5258 = vmatpush1.msra.mxu0 %v5208
        %5259 = vmatprep.subr.mxu0 0.0
        %5260 = vmatpush1.msra.mxu0 %v5209
        %5261 = vmatprep.subr.mxu0 0.0
        %5262 = vmatpush1.msra.mxu0 %v5210
        %5263 = vmatprep.subr.mxu0 0.0
        %5264 = vmatpush1.msra.mxu0 %v5211
        %5265 = vmatprep.subr.mxu0 0.0
        %5266 = vmatpush1.msra.mxu0 %v5212
        %5267 = vmatprep.subr.mxu0 0.0
        %5268 = vmatpush1.msra.mxu0 %v5213
        %5269 = vmatprep.subr.mxu0 0.0
        %5270 = vmatpush1.msra.mxu0 %v5214
        %5271 = vmatprep.subr.mxu0 0.0
        %5272 = vmatpush1.msra.mxu0 %v5215
        %5273 = vmatprep.subr.mxu0 0.0
        %5274 = vmatpush1.msra.mxu0 %v5216
        %5275 = vmatprep.subr.mxu0 0.0
        %5276 = vmatpush1.msra.mxu0 %v5217
        %5277 = vmatprep.subr.mxu0 0.0
        %5278 = vmatpush1.msra.mxu0 %v5218
        %5279 = vmatprep.subr.mxu0 0.0
        %5280 = vmatpush1.msra.mxu0 %v5219
        %5281 = vmatprep.subr.mxu0 0.0
        %5282 = vmatpush1.msra.mxu0 %v5220
        %5283 = vmatprep.subr.mxu0 0.0
        %5284 = vmatpush1.msra.mxu0 %v5221
        %5285 = vmatprep.subr.mxu0 0.0
        %5286 = vmatpush1.msra.mxu0 %v5222
        %5287 = vmatprep.mubr.f32.mxu0 %v5188
        %5288 = vmatmul.mubr.f32.gmra.mrb[0].mxu0 %v5186
        %v5289 = vpop.f32.mrb[0].mxu0
        %v5290 = vadd.f32 0.0, %v5289
        %v5291 = vpop.f32.mrb[0].mxu0
        %5292 = vdwg.mxu0
        %5293 = vmatprep.subr.mxu0 0.0
        %5294 = vmatpush1.msra.mxu0 %v5082
        %5295 = vmatprep.subr.mxu0 0.0
        %5296 = vmatpush1.msra.mxu0 %v5083
        %5297 = vmatprep.subr.mxu0 0.0
        %5298 = vmatpush1.msra.mxu0 %v5084
        %5299 = vmatprep.subr.mxu0 0.0
        %5300 = vmatpush1.msra.mxu0 %v5085
        %5301 = vmatprep.subr.mxu0 0.0
        %5302 = vmatpush1.msra.mxu0 %v5086
        %5303 = vmatprep.subr.mxu0 0.0
        %5304 = vmatpush1.msra.mxu0 %v5087
        %5305 = vmatprep.subr.mxu0 0.0
        %5306 = vmatpush1.msra.mxu0 %v5088
        %5307 = vmatprep.subr.mxu0 0.0
        %5308 = vmatpush1.msra.mxu0 %v5089
        %5309 = vmatprep.subr.mxu0 0.0
        %5310 = vmatpush1.msra.mxu0 %v5090
        %5311 = vmatprep.subr.mxu0 0.0
        %5312 = vmatpush1.msra.mxu0 %v5091
        %5313 = vmatprep.subr.mxu0 0.0
        %5314 = vmatpush1.msra.mxu0 %v5092
        %5315 = vmatprep.subr.mxu0 0.0
        %5316 = vmatpush1.msra.mxu0 %v5093
        %5317 = vmatprep.subr.mxu0 0.0
        %5318 = vmatpush1.msra.mxu0 %v5094
        %5319 = vmatprep.subr.mxu0 0.0
        %5320 = vmatpush1.msra.mxu0 %v5095
        %5321 = vmatprep.subr.mxu0 0.0
        %5322 = vmatpush1.msra.mxu0 %v5096
        %5323 = vmatprep.subr.mxu0 0.0
        %5324 = vmatpush1.msra.mxu0 %v5097
        %5325 = vmatprep.subr.mxu0 0.0
        %5326 = vmatpush1.msra.mxu0 %v5098
        %5327 = vmatprep.subr.mxu0 0.0
        %5328 = vmatpush1.msra.mxu0 %v5099
        %5329 = vmatprep.subr.mxu0 0.0
        %5330 = vmatpush1.msra.mxu0 %v5100
        %5331 = vmatprep.subr.mxu0 0.0
        %5332 = vmatpush1.msra.mxu0 %v5101
        %5333 = vmatprep.subr.mxu0 0.0
        %5334 = vmatpush1.msra.mxu0 %v5102
        %5335 = vmatprep.subr.mxu0 0.0
        %5336 = vmatpush1.msra.mxu0 %v5103
        %5337 = vmatprep.subr.mxu0 0.0
        %5338 = vmatpush1.msra.mxu0 %v5104
        %5339 = vmatprep.subr.mxu0 0.0
        %5340 = vmatpush1.msra.mxu0 %v5105
        %5341 = vmatprep.subr.mxu0 0.0
        %5342 = vmatpush1.msra.mxu0 %v5106
        %5343 = vmatprep.subr.mxu0 0.0
        %5344 = vmatpush1.msra.mxu0 %v5107
        %5345 = vmatprep.subr.mxu0 0.0
        %5346 = vmatpush1.msra.mxu0 %v5108
        %5347 = vmatprep.subr.mxu0 0.0
        %5348 = vmatpush1.msra.mxu0 %v5109
        %5349 = vmatprep.subr.mxu0 0.0
        %5350 = vmatpush1.msra.mxu0 %v5110
        %5351 = vmatprep.subr.mxu0 0.0
        %5352 = vmatpush1.msra.mxu0 %v5111
        %5353 = vmatprep.subr.mxu0 0.0
        %5354 = vmatpush1.msra.mxu0 %v5112
        %5355 = vmatprep.subr.mxu0 0.0
        %5356 = vmatpush1.msra.mxu0 %v5113
        %5357 = vmatprep.mubr.f32.mxu0 %v5080
        %5358 = vmatmul.mubr.f32.gmra.mrb[0].mxu0 %v5078
        %v5359 = vpop.f32.mrb[0].mxu0
        %v5360 = vadd.f32 %v5290, %v5359
        %v5361 = vpop.f32.mrb[0].mxu0
        %5362 = vdwg.mxu0
        %s5363 = scalar_lea.vmem %s10, 16
        %v5364 = vld [vmem:[%s5363] sm:$0xff]
        %v5366 = vsel %vm5007, %v5364, 0
        %5368 = vmatprep.subr.mxu0 %v5001
        %5369 = vmatpush1.msra.mxu0 %v5000
        %5370 = vmatprep.subr.mxu0 %v5003
        %5371 = vmatpush1.msra.mxu0 %v5002
        %5372 = vmatprep.subr.mxu0 %v5005
        %5373 = vmatpush1.msra.mxu0 %v5004
        %5374 = vmatprep.subr.mxu0 0.0
        %5375 = vmatpush1.msra.mxu0 0.0
        %5376 = vmatprep.subr.mxu0 0.0
        %5377 = vmatpush1.msra.mxu0 0.0
        %5378 = vmatprep.subr.mxu0 0.0
        %5379 = vmatpush1.msra.mxu0 0.0
        %5380 = vmatprep.subr.mxu0 0.0
        %5381 = vmatpush1.msra.mxu0 0.0
        %5382 = vmatprep.subr.mxu0 0.0
        %5383 = vmatpush1.msra.mxu0 0.0
        %5384 = vmatprep.subr.mxu0 0.0
        %5385 = vmatpush1.msra.mxu0 0.0
        %5386 = vmatprep.subr.mxu0 0.0
        %5387 = vmatpush1.msra.mxu0 0.0
        %5388 = vmatprep.subr.mxu0 0.0
        %5389 = vmatpush1.msra.mxu0 0.0
        %5390 = vmatprep.subr.mxu0 0.0
        %5391 = vmatpush1.msra.mxu0 0.0
        %5392 = vmatprep.subr.mxu0 0.0
        %5393 = vmatpush1.msra.mxu0 0.0
        %5394 = vmatprep.subr.mxu0 0.0
        %5395 = vmatpush1.msra.mxu0 0.0
        %5396 = vmatprep.subr.mxu0 0.0
        %5397 = vmatpush1.msra.mxu0 0.0
        %5398 = vmatprep.subr.mxu0 0.0
        %5399 = vmatpush1.msra.mxu0 0.0
        %5400 = vmatprep.subr.mxu0 0.0
        %5401 = vmatpush1.msra.mxu0 0.0
        %5402 = vmatprep.subr.mxu0 0.0
        %5403 = vmatpush1.msra.mxu0 0.0
        %5404 = vmatprep.subr.mxu0 0.0
        %5405 = vmatpush1.msra.mxu0 0.0
        %5406 = vmatprep.subr.mxu0 0.0
        %5407 = vmatpush1.msra.mxu0 0.0
        %5408 = vmatprep.subr.mxu0 0.0
        %5409 = vmatpush1.msra.mxu0 0.0
        %5410 = vmatprep.subr.mxu0 0.0
        %5411 = vmatpush1.msra.mxu0 0.0
        %5412 = vmatprep.subr.mxu0 0.0
        %5413 = vmatpush1.msra.mxu0 0.0
        %5414 = vmatprep.subr.mxu0 0.0
        %5415 = vmatpush1.msra.mxu0 0.0
        %5416 = vmatprep.subr.mxu0 0.0
        %5417 = vmatpush1.msra.mxu0 0.0
        %5418 = vmatprep.subr.mxu0 0.0
        %5419 = vmatpush1.msra.mxu0 0.0
        %5420 = vmatprep.subr.mxu0 0.0
        %5421 = vmatpush1.msra.mxu0 0.0
        %5422 = vmatprep.subr.mxu0 0.0
        %5423 = vmatpush1.msra.mxu0 0.0
        %5424 = vmatprep.subr.mxu0 0.0
        %5425 = vmatpush1.msra.mxu0 0.0
        %5426 = vmatprep.subr.mxu0 0.0
        %5427 = vmatpush1.msra.mxu0 0.0
        %5428 = vmatprep.subr.mxu0 0.0
        %5429 = vmatpush1.msra.mxu0 0.0
        %5430 = vmatprep.subr.mxu0 0.0
        %5431 = vmatpush1.msra.mxu0 0.0
        %5432 = vmatprep.mubr.f32.mxu0 0.0
        %5433 = vmatmul.mubr.f32.gmra.mrb[0].mxu0 %v5366
        %v5434 = vpop.f32.mrb[0].mxu0
        %v5435 = vadd.f32 0.0, %v5434
        %v5436 = vpop.f32.mrb[0].mxu0
        %v5437 = vadd.f32 0.0, %v5436
        %5438 = vdwg.mxu0
        %s5439 = scalar_lea.vmem %s11, 512
        %v5440 = vld [vmem:[%s5439] sm:$0xff]
        %v5441 = vld [vmem:[%s5439 + $0x8] sm:$0xff]
        %v5442 = vld [vmem:[%s5439 + $0x10] sm:$0xff]
        %v5443 = vld [vmem:[%s5439 + $0x18] sm:$0xff]
        %v5444 = vld [vmem:[%s5439 + $0x20] sm:$0xff]
        %v5445 = vld [vmem:[%s5439 + $0x28] sm:$0xff]
        %v5446 = vld [vmem:[%s5439 + $0x30] sm:$0xff]
        %v5447 = vld [vmem:[%s5439 + $0x38] sm:$0xff]
        %v5448 = vld [vmem:[%s5439 + $0x40] sm:$0xff]
        %v5449 = vld [vmem:[%s5439 + $0x48] sm:$0xff]
        %v5450 = vld [vmem:[%s5439 + $0x50] sm:$0xff]
        %v5451 = vld [vmem:[%s5439 + $0x58] sm:$0xff]
        %v5452 = vld [vmem:[%s5439 + $0x60] sm:$0xff]
        %v5453 = vld [vmem:[%s5439 + $0x68] sm:$0xff]
        %v5454 = vld [vmem:[%s5439 + $0x70] sm:$0xff]
        %v5455 = vld [vmem:[%s5439 + $0x78] sm:$0xff]
        %v5456 = vld [vmem:[%s5439 + $0x80] sm:$0xff]
        %v5457 = vld [vmem:[%s5439 + $0x88] sm:$0xff]
        %v5458 = vld [vmem:[%s5439 + $0x90] sm:$0xff]
        %v5459 = vld [vmem:[%s5439 + $0x98] sm:$0xff]
        %v5460 = vld [vmem:[%s5439 + $0xa0] sm:$0xff]
        %v5461 = vld [vmem:[%s5439 + $0xa8] sm:$0xff]
        %v5462 = vld [vmem:[%s5439 + $0xb0] sm:$0xff]
        %v5463 = vld [vmem:[%s5439 + $0xb8] sm:$0xff]
        %v5464 = vld [vmem:[%s5439 + $0xc0] sm:$0xff]
        %v5465 = vld [vmem:[%s5439 + $0xc8] sm:$0xff]
        %v5466 = vld [vmem:[%s5439 + $0xd0] sm:$0xff]
        %v5467 = vld [vmem:[%s5439 + $0xd8] sm:$0xff]
        %v5468 = vld [vmem:[%s5439 + $0xe0] sm:$0xff]
        %v5469 = vld [vmem:[%s5439 + $0xe8] sm:$0xff]
        %v5470 = vld [vmem:[%s5439 + $0xf0] sm:$0xff]
        %v5471 = vld [vmem:[%s5439 + $0xf8] sm:$0xff]
        %5472 = vmatprep.subr.mxu0 0.0
        %5473 = vmatpush1.msra.mxu0 %v5440
        %5474 = vmatprep.subr.mxu0 0.0
        %5475 = vmatpush1.msra.mxu0 %v5441
        %5476 = vmatprep.subr.mxu0 0.0
        %5477 = vmatpush1.msra.mxu0 %v5442
        %5478 = vmatprep.subr.mxu0 0.0
        %5479 = vmatpush1.msra.mxu0 %v5443
        %5480 = vmatprep.subr.mxu0 0.0
        %5481 = vmatpush1.msra.mxu0 %v5444
        %5482 = vmatprep.subr.mxu0 0.0
        %5483 = vmatpush1.msra.mxu0 %v5445
        %5484 = vmatprep.subr.mxu0 0.0
        %5485 = vmatpush1.msra.mxu0 %v5446
        %5486 = vmatprep.subr.mxu0 0.0
        %5487 = vmatpush1.msra.mxu0 %v5447
        %5488 = vmatprep.subr.mxu0 0.0
        %5489 = vmatpush1.msra.mxu0 %v5448
        %5490 = vmatprep.subr.mxu0 0.0
        %5491 = vmatpush1.msra.mxu0 %v5449
        %5492 = vmatprep.subr.mxu0 0.0
        %5493 = vmatpush1.msra.mxu0 %v5450
        %5494 = vmatprep.subr.mxu0 0.0
        %5495 = vmatpush1.msra.mxu0 %v5451
        %5496 = vmatprep.subr.mxu0 0.0
        %5497 = vmatpush1.msra.mxu0 %v5452
        %5498 = vmatprep.subr.mxu0 0.0
        %5499 = vmatpush1.msra.mxu0 %v5453
        %5500 = vmatprep.subr.mxu0 0.0
        %5501 = vmatpush1.msra.mxu0 %v5454
        %5502 = vmatprep.subr.mxu0 0.0
        %5503 = vmatpush1.msra.mxu0 %v5455
        %5504 = vmatprep.subr.mxu0 0.0
        %5505 = vmatpush1.msra.mxu0 %v5456
        %5506 = vmatprep.subr.mxu0 0.0
        %5507 = vmatpush1.msra.mxu0 %v5457
        %5508 = vmatprep.subr.mxu0 0.0
        %5509 = vmatpush1.msra.mxu0 %v5458
        %5510 = vmatprep.subr.mxu0 0.0
        %5511 = vmatpush1.msra.mxu0 %v5459
        %5512 = vmatprep.subr.mxu0 0.0
        %5513 = vmatpush1.msra.mxu0 %v5460
        %5514 = vmatprep.subr.mxu0 0.0
        %5515 = vmatpush1.msra.mxu0 %v5461
        %5516 = vmatprep.subr.mxu0 0.0
        %5517 = vmatpush1.msra.mxu0 %v5462
        %5518 = vmatprep.subr.mxu0 0.0
        %5519 = vmatpush1.msra.mxu0 %v5463
        %5520 = vmatprep.subr.mxu0 0.0
        %5521 = vmatpush1.msra.mxu0 %v5464
        %5522 = vmatprep.subr.mxu0 0.0
        %5523 = vmatpush1.msra.mxu0 %v5465
        %5524 = vmatprep.subr.mxu0 0.0
        %5525 = vmatpush1.msra.mxu0 %v5466
        %5526 = vmatprep.subr.mxu0 0.0
        %5527 = vmatpush1.msra.mxu0 %v5467
        %5528 = vmatprep.subr.mxu0 0.0
        %5529 = vmatpush1.msra.mxu0 %v5468
        %5530 = vmatprep.subr.mxu0 0.0
        %5531 = vmatpush1.msra.mxu0 %v5469
        %5532 = vmatprep.subr.mxu0 0.0
        %5533 = vmatpush1.msra.mxu0 %v5470
        %5534 = vmatprep.subr.mxu0 0.0
        %5535 = vmatpush1.msra.mxu0 %v5471
        %5536 = vmatprep.mubr.f32.mxu0 %v5437
        %5537 = vmatmul.mubr.f32.gmra.mrb[0].mxu0 %v5435
        %v5538 = vpop.f32.mrb[0].mxu0
        %v5539 = vadd.f32 0.0, %v5538
        %v5540 = vpop.f32.mrb[0].mxu0
        %5541 = vdwg.mxu0
        %v5542 = vadd.f32 %v5360, %v5539
        %v5543 = vld [vmem:[%s12] sm:$0x1]
        %v5545 = vlaneseq
        %v5546 = vshrl.u32 %v5545, 7
        %v5547 = vsub.s32 0, %v5546
        %v5548 = vrot.slane %v5543, %v5547
        %v5550 = vadd.f32 %v5542, %v5548
        %v5551 = vmax.f32 %v5550, 0.0
        %v5552 = vld [vmem:[%s13] sm:$0xff]
        %v5553 = vld [vmem:[%s13 + $0x8] sm:$0xff]
        %v5554 = vld [vmem:[%s13 + $0x10] sm:$0xff]
        %v5555 = vld [vmem:[%s13 + $0x18] sm:$0xff]
        %v5556 = vld [vmem:[%s13 + $0x20] sm:$0xff]
        %v5557 = vld [vmem:[%s13 + $0x28] sm:$0xff]
        %v5558 = vld [vmem:[%s13 + $0x30] sm:$0xff]
        %v5559 = vld [vmem:[%s13 + $0x38] sm:$0xff]
        %v5560 = vld [vmem:[%s13 + $0x40] sm:$0xff]
        %v5561 = vld [vmem:[%s13 + $0x48] sm:$0xff]
        %v5562 = vld [vmem:[%s13 + $0x50] sm:$0xff]
        %v5563 = vld [vmem:[%s13 + $0x58] sm:$0xff]
        %v5564 = vld [vmem:[%s13 + $0x60] sm:$0xff]
        %v5565 = vld [vmem:[%s13 + $0x68] sm:$0xff]
        %v5566 = vld [vmem:[%s13 + $0x70] sm:$0xff]
        %v5567 = vld [vmem:[%s13 + $0x78] sm:$0xff]
        %v5568 = vld [vmem:[%s13 + $0x80] sm:$0xff]
        %v5569 = vld [vmem:[%s13 + $0x88] sm:$0xff]
        %v5570 = vld [vmem:[%s13 + $0x90] sm:$0xff]
        %v5571 = vld [vmem:[%s13 + $0x98] sm:$0xff]
        %v5572 = vld [vmem:[%s13 + $0xa0] sm:$0xff]
        %v5573 = vld [vmem:[%s13 + $0xa8] sm:$0xff]
        %v5574 = vld [vmem:[%s13 + $0xb0] sm:$0xff]
        %v5575 = vld [vmem:[%s13 + $0xb8] sm:$0xff]
        %v5576 = vld [vmem:[%s13 + $0xc0] sm:$0xff]
        %v5577 = vld [vmem:[%s13 + $0xc8] sm:$0xff]
        %v5578 = vld [vmem:[%s13 + $0xd0] sm:$0xff]
        %v5579 = vld [vmem:[%s13 + $0xd8] sm:$0xff]
        %v5580 = vld [vmem:[%s13 + $0xe0] sm:$0xff]
        %v5581 = vld [vmem:[%s13 + $0xe8] sm:$0xff]
        %v5582 = vld [vmem:[%s13 + $0xf0] sm:$0xff]
        %v5583 = vld [vmem:[%s13 + $0xf8] sm:$0xff]
        %v5584 = vld [vmem:[%s14] sm:$0x3]
        %v5586 = vlaneseq
        %v5587 = vshrl.u32 %v5586, 7
        %v5588 = vsub.s32 0, %v5587
        %v5589 = vrot.slane %v5584, %v5588
        %v5590 = vlaneseq
        %v5591 = vshrl.u32 %v5590, 7
        %v5592 = vsub.s32 1, %v5591
        %v5593 = vrot.slane %v5584, %v5592
        %5596 = vmatprep.subr.mxu0 %v5553
        %5597 = vmatpush1.msra.mxu0 %v5552
        %5598 = vmatprep.subr.mxu0 %v5555
        %5599 = vmatpush1.msra.mxu0 %v5554
        %5600 = vmatprep.subr.mxu0 %v5557
        %5601 = vmatpush1.msra.mxu0 %v5556
        %5602 = vmatprep.subr.mxu0 %v5559
        %5603 = vmatpush1.msra.mxu0 %v5558
        %5604 = vmatprep.subr.mxu0 %v5561
        %5605 = vmatpush1.msra.mxu0 %v5560
        %5606 = vmatprep.subr.mxu0 %v5563
        %5607 = vmatpush1.msra.mxu0 %v5562
        %5608 = vmatprep.subr.mxu0 %v5565
        %5609 = vmatpush1.msra.mxu0 %v5564
        %5610 = vmatprep.subr.mxu0 %v5567
        %5611 = vmatpush1.msra.mxu0 %v5566
        %5612 = vmatprep.subr.mxu0 %v5569
        %5613 = vmatpush1.msra.mxu0 %v5568
        %5614 = vmatprep.subr.mxu0 %v5571
        %5615 = vmatpush1.msra.mxu0 %v5570
        %5616 = vmatprep.subr.mxu0 %v5573
        %5617 = vmatpush1.msra.mxu0 %v5572
        %5618 = vmatprep.subr.mxu0 %v5575
        %5619 = vmatpush1.msra.mxu0 %v5574
        %5620 = vmatprep.subr.mxu0 %v5577
        %5621 = vmatpush1.msra.mxu0 %v5576
        %5622 = vmatprep.subr.mxu0 %v5579
        %5623 = vmatpush1.msra.mxu0 %v5578
        %5624 = vmatprep.subr.mxu0 %v5581
        %5625 = vmatpush1.msra.mxu0 %v5580
        %5626 = vmatprep.subr.mxu0 %v5583
        %5627 = vmatpush1.msra.mxu0 %v5582
        %5628 = vmatprep.subr.mxu0 0.0
        %5629 = vmatpush1.msra.mxu0 0.0
        %5630 = vmatprep.subr.mxu0 0.0
        %5631 = vmatpush1.msra.mxu0 0.0
        %5632 = vmatprep.subr.mxu0 0.0
        %5633 = vmatpush1.msra.mxu0 0.0
        %5634 = vmatprep.subr.mxu0 0.0
        %5635 = vmatpush1.msra.mxu0 0.0
        %5636 = vmatprep.subr.mxu0 0.0
        %5637 = vmatpush1.msra.mxu0 0.0
        %5638 = vmatprep.subr.mxu0 0.0
        %5639 = vmatpush1.msra.mxu0 0.0
        %5640 = vmatprep.subr.mxu0 0.0
        %5641 = vmatpush1.msra.mxu0 0.0
        %5642 = vmatprep.subr.mxu0 0.0
        %5643 = vmatpush1.msra.mxu0 0.0
        %5644 = vmatprep.subr.mxu0 0.0
        %5645 = vmatpush1.msra.mxu0 0.0
        %5646 = vmatprep.subr.mxu0 0.0
        %5647 = vmatpush1.msra.mxu0 0.0
        %5648 = vmatprep.subr.mxu0 0.0
        %5649 = vmatpush1.msra.mxu0 0.0
        %5650 = vmatprep.subr.mxu0 0.0
        %5651 = vmatpush1.msra.mxu0 0.0
        %5652 = vmatprep.subr.mxu0 0.0
        %5653 = vmatpush1.msra.mxu0 0.0
        %5654 = vmatprep.subr.mxu0 0.0
        %5655 = vmatpush1.msra.mxu0 0.0
        %5656 = vmatprep.subr.mxu0 0.0
        %5657 = vmatpush1.msra.mxu0 0.0
        %5658 = vmatprep.subr.mxu0 0.0
        %5659 = vmatpush1.msra.mxu0 0.0
        %5660 = vmatprep.mubr.f32.mxu0 0.0
        %5661 = vmatmul.mubr.f32.gmra.mrb[0].mxu0 %v5551
        %v5662 = vpop.f32.mrb[0].mxu0
        %v5663 = vadd.f32 %v5589, %v5662
        %v5664 = vpop.f32.mrb[0].mxu0
        %v5665 = vadd.f32 %v5593, %v5664
        %5666 = vdwg.mxu0
        %v5667 = vmax.f32 %v5663, 0.0
        %v5668 = vmax.f32 %v5665, 0.0
        %v5669 = vld [vmem:[%s15] sm:$0xff]
        %v5670 = vld [vmem:[%s15 + $0x8] sm:$0xff]
        %v5671 = vld [vmem:[%s15 + $0x10] sm:$0xff]
        %v5672 = vld [vmem:[%s15 + $0x18] sm:$0xff]
        %v5673 = vld [vmem:[%s15 + $0x20] sm:$0xff]
        %v5674 = vld [vmem:[%s15 + $0x28] sm:$0xff]
        %v5675 = vld [vmem:[%s15 + $0x30] sm:$0xff]
        %v5676 = vld [vmem:[%s15 + $0x38] sm:$0xff]
        %v5677 = vld [vmem:[%s15 + $0x40] sm:$0xff]
        %v5678 = vld [vmem:[%s15 + $0x48] sm:$0xff]
        %v5679 = vld [vmem:[%s15 + $0x50] sm:$0xff]
        %v5680 = vld [vmem:[%s15 + $0x58] sm:$0xff]
        %v5681 = vld [vmem:[%s15 + $0x60] sm:$0xff]
        %v5682 = vld [vmem:[%s15 + $0x68] sm:$0xff]
        %v5683 = vld [vmem:[%s15 + $0x70] sm:$0xff]
        %v5684 = vld [vmem:[%s15 + $0x78] sm:$0xff]
        %v5685 = vld [vmem:[%s15 + $0x80] sm:$0xff]
        %v5686 = vld [vmem:[%s15 + $0x88] sm:$0xff]
        %v5687 = vld [vmem:[%s15 + $0x90] sm:$0xff]
        %v5688 = vld [vmem:[%s15 + $0x98] sm:$0xff]
        %v5689 = vld [vmem:[%s15 + $0xa0] sm:$0xff]
        %v5690 = vld [vmem:[%s15 + $0xa8] sm:$0xff]
        %v5691 = vld [vmem:[%s15 + $0xb0] sm:$0xff]
        %v5692 = vld [vmem:[%s15 + $0xb8] sm:$0xff]
        %v5693 = vld [vmem:[%s15 + $0xc0] sm:$0xff]
        %v5694 = vld [vmem:[%s15 + $0xc8] sm:$0xff]
        %v5695 = vld [vmem:[%s15 + $0xd0] sm:$0xff]
        %v5696 = vld [vmem:[%s15 + $0xd8] sm:$0xff]
        %v5697 = vld [vmem:[%s15 + $0xe0] sm:$0xff]
        %v5698 = vld [vmem:[%s15 + $0xe8] sm:$0xff]
        %v5699 = vld [vmem:[%s15 + $0xf0] sm:$0xff]
        %v5700 = vld [vmem:[%s15 + $0xf8] sm:$0xff]
        %v5701 = vld [vmem:[%s16] sm:$0x1]
        %v5703 = vlaneseq
        %v5704 = vshrl.u32 %v5703, 7
        %v5705 = vsub.s32 0, %v5704
        %v5706 = vrot.slane %v5701, %v5705
        %5708 = vmatprep.subr.mxu0 0.0
        %5709 = vmatpush1.msra.mxu0 %v5669
        %5710 = vmatprep.subr.mxu0 0.0
        %5711 = vmatpush1.msra.mxu0 %v5670
        %5712 = vmatprep.subr.mxu0 0.0
        %5713 = vmatpush1.msra.mxu0 %v5671
        %5714 = vmatprep.subr.mxu0 0.0
        %5715 = vmatpush1.msra.mxu0 %v5672
        %5716 = vmatprep.subr.mxu0 0.0
        %5717 = vmatpush1.msra.mxu0 %v5673
        %5718 = vmatprep.subr.mxu0 0.0
        %5719 = vmatpush1.msra.mxu0 %v5674
        %5720 = vmatprep.subr.mxu0 0.0
        %5721 = vmatpush1.msra.mxu0 %v5675
        %5722 = vmatprep.subr.mxu0 0.0
        %5723 = vmatpush1.msra.mxu0 %v5676
        %5724 = vmatprep.subr.mxu0 0.0
        %5725 = vmatpush1.msra.mxu0 %v5677
        %5726 = vmatprep.subr.mxu0 0.0
        %5727 = vmatpush1.msra.mxu0 %v5678
        %5728 = vmatprep.subr.mxu0 0.0
        %5729 = vmatpush1.msra.mxu0 %v5679
        %5730 = vmatprep.subr.mxu0 0.0
        %5731 = vmatpush1.msra.mxu0 %v5680
        %5732 = vmatprep.subr.mxu0 0.0
        %5733 = vmatpush1.msra.mxu0 %v5681
        %5734 = vmatprep.subr.mxu0 0.0
        %5735 = vmatpush1.msra.mxu0 %v5682
        %5736 = vmatprep.subr.mxu0 0.0
        %5737 = vmatpush1.msra.mxu0 %v5683
        %5738 = vmatprep.subr.mxu0 0.0
        %5739 = vmatpush1.msra.mxu0 %v5684
        %5740 = vmatprep.subr.mxu0 0.0
        %5741 = vmatpush1.msra.mxu0 %v5685
        %5742 = vmatprep.subr.mxu0 0.0
        %5743 = vmatpush1.msra.mxu0 %v5686
        %5744 = vmatprep.subr.mxu0 0.0
        %5745 = vmatpush1.msra.mxu0 %v5687
        %5746 = vmatprep.subr.mxu0 0.0
        %5747 = vmatpush1.msra.mxu0 %v5688
        %5748 = vmatprep.subr.mxu0 0.0
        %5749 = vmatpush1.msra.mxu0 %v5689
        %5750 = vmatprep.subr.mxu0 0.0
        %5751 = vmatpush1.msra.mxu0 %v5690
        %5752 = vmatprep.subr.mxu0 0.0
        %5753 = vmatpush1.msra.mxu0 %v5691
        %5754 = vmatprep.subr.mxu0 0.0
        %5755 = vmatpush1.msra.mxu0 %v5692
        %5756 = vmatprep.subr.mxu0 0.0
        %5757 = vmatpush1.msra.mxu0 %v5693
        %5758 = vmatprep.subr.mxu0 0.0
        %5759 = vmatpush1.msra.mxu0 %v5694
        %5760 = vmatprep.subr.mxu0 0.0
        %5761 = vmatpush1.msra.mxu0 %v5695
        %5762 = vmatprep.subr.mxu0 0.0
        %5763 = vmatpush1.msra.mxu0 %v5696
        %5764 = vmatprep.subr.mxu0 0.0
        %5765 = vmatpush1.msra.mxu0 %v5697
        %5766 = vmatprep.subr.mxu0 0.0
        %5767 = vmatpush1.msra.mxu0 %v5698
        %5768 = vmatprep.subr.mxu0 0.0
        %5769 = vmatpush1.msra.mxu0 %v5699
        %5770 = vmatprep.subr.mxu0 0.0
        %5771 = vmatpush1.msra.mxu0 %v5700
        %5772 = vmatprep.mubr.f32.mxu0 %v5668
        %5773 = vmatmul.mubr.f32.gmra.mrb[0].mxu0 %v5667
        %v5774 = vpop.f32.mrb[0].mxu0
        %v5775 = vadd.f32 %v5706, %v5774
        %v5776 = vpop.f32.mrb[0].mxu0
        %5777 = vdwg.mxu0
        %vm5778 = vcmask 261120
        %5779 = vst.msk [vmem:[%s557] sm:$0xff] %vm5778, %v5775
        %s5780 = sand.u32 %s402, 1
        %s5781 = scalar_lea.sflag [#allocation4], %s5780
        %s5782 = sand.u32 %s402, 1
        %s5783 = smul.addr %s5782, 8
        %s5784 = scalar_lea.vmem [#allocation5], %s5783
        // Predicated region
        $region93: #{encoder_net_forward.1} parent=87 // pred_check
          %p5785 = pneg %p412
        $region94: #{encoder_net_forward.1} parent=87 // pred_check_branch
          %5787 = sbr.rel (%p5785) target = $region96
        $region95: #{encoder_net_forward.1} parent=87 // pred_region
          %s5789 = ssub.s32 128, 128
          %5790 = vsyncadd %s5781, %s5789
          %s5791 = smul.addr %s32, 128
          %s5792 = scalar_lea.hbm %s17, %s5791
          %s5794 = sshll.u32 %s5784, 4
          %s5795 = int_to_ptr.vmem [resolvable:$true] %s5794
          %5797 = dma.vmem_to_hbm [thread:$0]  %s5795, 128, %s5792, %s5781
        $region96: #{encoder_net_forward.1} parent=87 // pred_fallthru
          _
      $region88: #{encoder_net_forward.1} parent=5 // pred_fallthru
        _
      %p5798 = scmp.le.s32.totalorder 2, %s27
      // Predicated region
      $region97: #{encoder_net_forward.1} parent=5 // pred_check
        %p5799 = pneg %p5798
      $region98: #{encoder_net_forward.1} parent=5 // pred_check_branch
        %5801 = sbr.rel (%p5799) target = $region100
      $region99: #{encoder_net_forward.1} parent=5 // pred_region
        %s5802 = ssub.s32 %s27, 2
        // Predicated region
        $region101: #{encoder_net_forward.1} parent=99 // pred_check
          %p5803 = pneg %p418
        $region102: #{encoder_net_forward.1} parent=99 // pred_check_branch
          %5805 = sbr.rel (%p5803) target = $region104
        $region103: #{encoder_net_forward.1} parent=99 // pred_region
          %s5806 = sand.u32 %s403, 1
          %s5807 = scalar_lea.sflag [#allocation4], %s5806
          %s5808 = sand.u32 %s403, 1
          %s5809 = smul.addr %s5808, 8
          %s5810 = scalar_lea.vmem [#allocation5], %s5809
          %5811 = dma.done %s5807, 128
        $region104: #{encoder_net_forward.1} parent=99 // pred_fallthru
          _
      $region100: #{encoder_net_forward.1} parent=5 // pred_fallthru
        _
    $region6: #{encoder_net_forward.1} parent=1 // loop_footer
      %s31 = sadd.s32 1, %s27
    $region7: #{encoder_net_forward.1} parent=1 // loop_footer_branch
      %26 = sbr.rel target = $region3
    $region8: #{encoder_net_forward.1} parent=1 // loop_exit
      _
    %5812 = vsyncpa [#allocation3], 1
    %s5813 = scalar_lea.sflag [#allocation3], 1
    %5814 = vsyncpa %s5813, 1
    %5815 = vsyncpa [#allocation4], 1
    %s5816 = scalar_lea.sflag [#allocation4], 1
    %5817 = vsyncpa %s5816, 1

</llo_original>
